<compile_context>
chip_gen: v7x
topology: tpu7x:2x2x1
jax: 0.10.0
libtpu: 0.0.40
codegen_flags: <defaults>
</compile_context>

<pallas_src>
import jax
import jax.numpy as jnp
from jax.experimental import pallas as pl
from jax.experimental.pallas import tpu as pltpu

# ----- model hyper-parameters (small, consistent with the module's __init__) -----
LATENT_DIM = 32
OBS_DIM = 8
ODE_NHIDDEN = 32
DEC_NHIDDEN = 64
ODE_LAYERS = 3           # -> exactly one middle layer in ODEFunc
NUM_DECODER_LAYERS = 2   # -> exactly one extra hidden layer in the decoder
REG_WEIGHT = 0.0
N_SUB = 2                # fixed RK4 substeps per evolve interval (dopri5 tol is 0.1)

B = 4
T_OBS = 6
T_TGT = 4
T_WIN = T_OBS + T_TGT

GRU_IN = 2 * LATENT_DIM    # 64 : concat([x_emb, h])
GRU_OUT = 4 * LATENT_DIM   # 128: [ r(x+h) | z(x+h) | n_x | n_h ]


def ode_rnn_kernel(
    obs_ref, tgt_ref, dt_ref,
    emb_w_ref, emb_b_ref,
    gru_w_ref, gru_b_ref,
    ode_w1_ref, ode_b1_ref, ode_wm_ref, ode_bm_ref, ode_wf_ref, ode_bf_ref,
    wfw1_ref, bfw1_ref,
    dec_w0_ref, dec_b0_ref, dec_w1_ref, dec_b1_ref, dec_wf_ref, dec_bf_ref,
    pred_ref, loss_recon_ref, loss_pred_ref,
    emb_sc_ref, allh_ref,
):
    f32 = jnp.float32
    bf16 = jnp.bfloat16

    # ---- load small params once; pre-broadcast biases (no broadcast inside loops) ----
    emb_w = emb_w_ref[...]     # bf16 (OBS_DIM, LATENT)
    gru_w = gru_w_ref[...]     # bf16 (GRU_IN, GRU_OUT)
    ode_w1 = ode_w1_ref[...]   # bf16 (LATENT, NH)
    ode_wm = ode_wm_ref[...]   # bf16 (NH, NH)
    ode_wf = ode_wf_ref[...]   # bf16 (NH, LATENT)
    wfw1 = wfw1_ref[...]       # bf16 (NH, NH)  == Wf @ W1
    dec_w0 = dec_w0_ref[...]   # bf16 (LATENT, DEC)
    dec_w1 = dec_w1_ref[...]   # bf16 (DEC, DEC)
    dec_wf = dec_wf_ref[...]   # bf16 (DEC, OBS_DIM)

    emb_b = jnp.broadcast_to(emb_b_ref[...], (T_OBS * B, LATENT_DIM))
    gru_b = jnp.broadcast_to(gru_b_ref[...], (B, GRU_OUT))
    ode_b1 = jnp.broadcast_to(ode_b1_ref[...], (B, ODE_NHIDDEN))
    ode_bm = jnp.broadcast_to(ode_bm_ref[...], (B, ODE_NHIDDEN))
    ode_bf = jnp.broadcast_to(ode_bf_ref[...], (B, LATENT_DIM))
    bfw1 = jnp.broadcast_to(bfw1_ref[...], (B, ODE_NHIDDEN))     # bf @ W1
    dec_b0 = jnp.broadcast_to(dec_b0_ref[...], (T_WIN * B, DEC_NHIDDEN))
    dec_b1 = jnp.broadcast_to(dec_b1_ref[...], (T_WIN * B, DEC_NHIDDEN))
    dec_bf = jnp.broadcast_to(dec_bf_ref[...], (T_WIN * B, OBS_DIM))

    def mm(x, w):
        # bf16 MXU operands, f32 accumulation; element-wise math stays f32.
        return jnp.dot(x.astype(bf16), w, preferred_element_type=f32)

    def mid(pre):
        # ODEFunc: relu -> middle layer -> relu  (pre is the fc1 pre-activation)
        return jnp.maximum(mm(jnp.maximum(pre, 0.0), ode_wm) + ode_bm, 0.0)

    def rk4_evolve(y, dt):
        # Fixed-step RK4 over [0, dt], N_SUB statically unrolled substeps.
        # Stage-boundary fusion: pre_i = a1 + c_i*(m_{i-1} @ (Wf@W1) + bf@W1),
        # final combine uses a single Wf matmul of the weighted m-sum.
        hstep = dt * (1.0 / N_SUB)
        half = 0.5 * hstep
        sixth = hstep * (1.0 / 6.0)
        for _ in range(N_SUB):
            a1 = mm(y, ode_w1) + ode_b1                      # fc1 pre-activation of stage 1
            m1 = mid(a1)
            m2 = mid(a1 + half * (mm(m1, wfw1) + bfw1))
            m3 = mid(a1 + half * (mm(m2, wfw1) + bfw1))
            m4 = mid(a1 + hstep * (mm(m3, wfw1) + bfw1))
            # y += (h/6)*(k1+2k2+2k3+k4) with k_i = m_i@Wf + bf  ==>  one matmul + h*bf
            y = y + sixth * mm(m1 + 2.0 * (m2 + m3) + m4, ode_wf) + hstep * ode_bf
        return y

    def gru_cell(x, h):
        # nn.GRUCell semantics, fused single (B,64)@(64,128) matmul.
        # cols: [0:32]=r (x+h summed), [32:64]=z (summed), [64:96]=n_x, [96:128]=n_h
        xh = jnp.concatenate([x, h], axis=1)                 # (B, 64)
        g = mm(xh, gru_w) + gru_b                            # (B, 128)
        r = jax.nn.sigmoid(g[:, 0:LATENT_DIM])
        z = jax.nn.sigmoid(g[:, LATENT_DIM:2 * LATENT_DIM])
        n = jnp.tanh(g[:, 2 * LATENT_DIM:3 * LATENT_DIM]
                     + r * g[:, 3 * LATENT_DIM:4 * LATENT_DIM])
        return (1.0 - z) * n + z * h

    # ---- hoisted input embedding: one matmul over the whole observed window ----
    emb_sc_ref[...] = mm(obs_ref[...], emb_w) + emb_b        # (T_OBS*B, LATENT)

    # ---- encoder: ODE-RNN over the observed trajectory (t = 0 peeled, no evolve) ----
    h = gru_cell(emb_sc_ref[0:B, :], jnp.zeros((B, LATENT_DIM), f32))
    allh_ref[0:B, :] = h

    for t in range(1, T_OBS):
        h = rk4_evolve(h, dt_ref[t])                         # dt==0 (duplicate time) is a no-op
        h = gru_cell(emb_sc_ref[t * B:(t + 1) * B, :], h)
        allh_ref[t * B:(t + 1) * B, :] = h

    # ---- target side: odeint(func, h, target_times - last_obs_time) semantics ----
    # odeint's first output equals h0 (ys[0] == y0), so the first target point is h
    # unchanged; subsequent points evolve over consecutive target-time gaps (the ODE is
    # autonomous, so only the differences matter). Duplicate times -> dt==0 no-ops.
    allh_ref[T_OBS * B:(T_OBS + 1) * B, :] = h
    for i in range(1, T_TGT):
        h = rk4_evolve(h, dt_ref[T_OBS + i])
        allh_ref[(T_OBS + i) * B:(T_OBS + i + 1) * B, :] = h

    # ---- decoder: batched over all T_WIN*B rows (3 matmuls, one contiguous store) ----
    d = jnp.maximum(mm(allh_ref[...], dec_w0) + dec_b0, 0.0)
    d = jnp.maximum(mm(d, dec_w1) + dec_b1, 0.0)
    pred = mm(d, dec_wf) + dec_bf                            # (T_WIN*B, OBS_DIM) f32
    pred_ref[...] = pred

    # ---- MSE losses (mean over all elements, matching F.mse_loss) ----
    d_obs = pred[0:T_OBS * B] - obs_ref[...]
    d_tgt = pred[T_OBS * B:T_WIN * B] - tgt_ref[...]
    loss_recon_ref[0] = jnp.sum(d_obs * d_obs) * (1.0 / float(T_OBS * B * OBS_DIM))
    loss_pred_ref[0] = jnp.sum(d_tgt * d_tgt) * (1.0 / float(T_TGT * B * OBS_DIM))


def init_params(key):
    """Deterministic init ~ PyTorch default U(-1/sqrt(fan_in), 1/sqrt(fan_in))."""

    def linear(k, fan_in, fan_out):
        kw, kb = jax.random.split(k)
        bound = 1.0 / float(fan_in) ** 0.5
        w = jax.random.uniform(kw, (fan_in, fan_out), jnp.float32, -bound, bound)
        b = jax.random.uniform(kb, (1, fan_out), jnp.float32, -bound, bound)
        return w, b

    keys = jax.random.split(key, 16)
    p = {}
    p["emb_w"], p["emb_b"] = linear(keys[0], OBS_DIM, LATENT_DIM)
    wih, bih, whh, bhh = [], [], [], []
    for g in range(3):  # gate order r, z, n
        w, b = linear(keys[1 + g], LATENT_DIM, LATENT_DIM)
        wih.append(w); bih.append(b)
        w, b = linear(keys[4 + g], LATENT_DIM, LATENT_DIM)
        whh.append(w); bhh.append(b)
    p["gru_wih"] = jnp.stack(wih); p["gru_bih"] = jnp.stack(bih)
    p["gru_whh"] = jnp.stack(whh); p["gru_bhh"] = jnp.stack(bhh)
    p["ode_w1"], p["ode_b1"] = linear(keys[7], LATENT_DIM, ODE_NHIDDEN)
    p["ode_wm"], p["ode_bm"] = linear(keys[8], ODE_NHIDDEN, ODE_NHIDDEN)
    p["ode_wf"], p["ode_bf"] = linear(keys[9], ODE_NHIDDEN, LATENT_DIM)
    p["dec_w0"], p["dec_b0"] = linear(keys[10], LATENT_DIM, DEC_NHIDDEN)
    p["dec_w1"], p["dec_b1"] = linear(keys[11], DEC_NHIDDEN, DEC_NHIDDEN)
    p["dec_wf"], p["dec_bf"] = linear(keys[12], DEC_NHIDDEN, OBS_DIM)
    return p


def _pack_gru(params):
    """Fuse the 6 GRU gate weights into one (64, 128) matrix (trace time).

    Columns: [0:32]  = r gate, x- and h-contributions pre-summed by the matmul
             [32:64] = z gate, pre-summed
             [64:96] = n gate, x-contribution only
             [96:128]= n gate, h-contribution only (multiplied by r post-matmul)
    """
    Wir, Wiz, Win = (params["gru_wih"][g] for g in range(3))
    Whr, Whz, Whn = (params["gru_whh"][g] for g in range(3))
    bir, biz, bin_ = (params["gru_bih"][g] for g in range(3))
    bhr, bhz, bhn = (params["gru_bhh"][g] for g in range(3))

    w = jnp.zeros((GRU_IN, GRU_OUT), jnp.float32)
    w = w.at[0:LATENT_DIM, 0:LATENT_DIM].set(Wir)
    w = w.at[LATENT_DIM:GRU_IN, 0:LATENT_DIM].set(Whr)
    w = w.at[0:LATENT_DIM, LATENT_DIM:2 * LATENT_DIM].set(Wiz)
    w = w.at[LATENT_DIM:GRU_IN, LATENT_DIM:2 * LATENT_DIM].set(Whz)
    w = w.at[0:LATENT_DIM, 2 * LATENT_DIM:3 * LATENT_DIM].set(Win)
    w = w.at[LATENT_DIM:GRU_IN, 3 * LATENT_DIM:4 * LATENT_DIM].set(Whn)

    b = jnp.zeros((1, GRU_OUT), jnp.float32)
    b = b.at[:, 0:LATENT_DIM].set(bir + bhr)
    b = b.at[:, LATENT_DIM:2 * LATENT_DIM].set(biz + bhz)
    b = b.at[:, 2 * LATENT_DIM:3 * LATENT_DIM].set(bin_)
    b = b.at[:, 3 * LATENT_DIM:4 * LATENT_DIM].set(bhn)
    return w, b


@jax.jit
def ode_rnn_forward(obs_traj, target_traj, full_time, params):
    # obs_traj: (B, T_OBS, OBS_DIM), target_traj: (B, T_TGT, OBS_DIM), full_time: (B, T_WIN)
    t_vec = full_time[0].astype(jnp.float32)                 # matches `full_time = full_time[0]`
    obs_flat = jnp.transpose(obs_traj, (1, 0, 2)).reshape(T_OBS * B, OBS_DIM).astype(jnp.float32)
    tgt_flat = jnp.transpose(target_traj, (1, 0, 2)).reshape(T_TGT * B, OBS_DIM).astype(jnp.float32)

    # Per-interval dt, precomputed on the XLA side and read from SMEM in-kernel.
    dt_vec = jnp.concatenate([jnp.zeros((1,), jnp.float32), t_vec[1:] - t_vec[:-1]])
    dt_vec = dt_vec.at[T_OBS].set(0.0)            # odeint's first target output equals h0
    dt_vec = jnp.maximum(dt_vec, 0.0)             # module skips dt<=0; dt==0 RK4 is a no-op

    gru_w, gru_b = _pack_gru(params)
    wfw1 = jnp.dot(params["ode_wf"], params["ode_w1"])   # (NH, NH) stage-boundary fusion
    bfw1 = jnp.dot(params["ode_bf"], params["ode_w1"])   # (1, NH)

    bf16 = jnp.bfloat16
    param_args = [
        params["emb_w"].astype(bf16), params["emb_b"],
        gru_w.astype(bf16), gru_b,
        params["ode_w1"].astype(bf16), params["ode_b1"],
        params["ode_wm"].astype(bf16), params["ode_bm"],
        params["ode_wf"].astype(bf16), params["ode_bf"],
        wfw1.astype(bf16), bfw1,
        params["dec_w0"].astype(bf16), params["dec_b0"],
        params["dec_w1"].astype(bf16), params["dec_b1"],
        params["dec_wf"].astype(bf16), params["dec_bf"],
    ]

    vmem = pl.BlockSpec(memory_space=pltpu.MemorySpace.VMEM)
    smem = pl.BlockSpec(memory_space=pltpu.MemorySpace.SMEM)

    pred_flat, recon, predl = pl.pallas_call(
        ode_rnn_kernel,
        out_shape=(
            jax.ShapeDtypeStruct((T_WIN * B, OBS_DIM), jnp.float32),
            jax.ShapeDtypeStruct((1,), jnp.float32),
            jax.ShapeDtypeStruct((1,), jnp.float32),
        ),
        in_specs=[vmem, vmem, smem] + [vmem] * len(param_args),
        out_specs=(vmem, smem, smem),
        scratch_shapes=[
            pltpu.VMEM((T_OBS * B, LATENT_DIM), jnp.float32),   # hoisted embeddings
            pltpu.VMEM((T_WIN * B, LATENT_DIM), jnp.float32),   # all_h (flat, time-major)
        ],
    )(obs_flat, tgt_flat, dt_vec, *param_args)

    recon_loss = recon[0]
    pred_loss = predl[0]
    reg_loss = jnp.float32(0.0)   # REG_WEIGHT == 0.0
    kl_loss = jnp.float32(0.0)
    loss = recon_loss + pred_loss + reg_loss
    pred_x = jnp.transpose(pred_flat.reshape(T_WIN, B, OBS_DIM), (1, 0, 2))  # (B, T_WIN, OBS_DIM)
    return loss, recon_loss, pred_loss, kl_loss, reg_loss, pred_x


if __name__ == "__main__":
    key = jax.random.PRNGKey(0)
    k_obs, k_tgt, k_par = jax.random.split(key, 3)
    obs_traj = jax.random.normal(k_obs, (B, T_OBS, OBS_DIM), jnp.float32)
    target_traj = jax.random.normal(k_tgt, (B, T_TGT, OBS_DIM), jnp.float32)
    times = jnp.cumsum(jnp.full((T_WIN,), 0.1, jnp.float32))
    full_time = jnp.broadcast_to(times, (B, T_WIN))
    params = init_params(k_par)

    out = ode_rnn_forward(obs_traj, target_traj, full_time, params)
    out = jax.block_until_ready(out)
    loss, recon_loss, pred_loss, kl_loss, reg_loss, pred_x = out
    assert pred_x.shape == (B, T_WIN, OBS_DIM)
    assert jnp.isfinite(loss)
    print("KERNEL_OK")
</pallas_src>

<mosaic_0001>
module attributes {stable_mosaic.version = 11 : i64} {
  func.func @ode_rnn_kernel(%arg0: memref<24x8xf32, #tpu.memory_space<vmem>>, %arg1: memref<16x8xf32, #tpu.memory_space<vmem>>, %arg2: memref<10xf32, #tpu.memory_space<smem>>, %arg3: memref<8x32xbf16, #tpu.memory_space<vmem>>, %arg4: memref<1x32xf32, #tpu.memory_space<vmem>>, %arg5: memref<64x128xbf16, #tpu.memory_space<vmem>>, %arg6: memref<1x128xf32, #tpu.memory_space<vmem>>, %arg7: memref<32x32xbf16, #tpu.memory_space<vmem>>, %arg8: memref<1x32xf32, #tpu.memory_space<vmem>>, %arg9: memref<32x32xbf16, #tpu.memory_space<vmem>>, %arg10: memref<1x32xf32, #tpu.memory_space<vmem>>, %arg11: memref<32x32xbf16, #tpu.memory_space<vmem>>, %arg12: memref<1x32xf32, #tpu.memory_space<vmem>>, %arg13: memref<32x32xbf16, #tpu.memory_space<vmem>>, %arg14: memref<1x32xf32, #tpu.memory_space<vmem>>, %arg15: memref<32x64xbf16, #tpu.memory_space<vmem>>, %arg16: memref<1x64xf32, #tpu.memory_space<vmem>>, %arg17: memref<64x64xbf16, #tpu.memory_space<vmem>>, %arg18: memref<1x64xf32, #tpu.memory_space<vmem>>, %arg19: memref<64x8xbf16, #tpu.memory_space<vmem>>, %arg20: memref<1x8xf32, #tpu.memory_space<vmem>>, %arg21: memref<40x8xf32, #tpu.memory_space<vmem>>, %arg22: memref<1xf32, #tpu.memory_space<smem>>, %arg23: memref<1xf32, #tpu.memory_space<smem>>, %arg24: memref<24x32xf32, #tpu.memory_space<vmem>>, %arg25: memref<40x32xf32, #tpu.memory_space<vmem>>) attributes {dimension_semantics = [], scalar_prefetch = 0 : i64, scratch_operands = 2 : i64, tpu.core_type = #tpu.core_type<tc>} {
    %c0 = arith.constant 0 : index
    %c0_0 = arith.constant 0 : index
    %0 = vector.load %arg3[%c0, %c0_0] : memref<8x32xbf16, #tpu.memory_space<vmem>>, vector<8x32xbf16>
    %c0_1 = arith.constant 0 : index
    %c0_2 = arith.constant 0 : index
    %1 = vector.load %arg5[%c0_1, %c0_2] : memref<64x128xbf16, #tpu.memory_space<vmem>>, vector<64x128xbf16>
    %c0_3 = arith.constant 0 : index
    %c0_4 = arith.constant 0 : index
    %2 = vector.load %arg7[%c0_3, %c0_4] : memref<32x32xbf16, #tpu.memory_space<vmem>>, vector<32x32xbf16>
    %c0_5 = arith.constant 0 : index
    %c0_6 = arith.constant 0 : index
    %3 = vector.load %arg9[%c0_5, %c0_6] : memref<32x32xbf16, #tpu.memory_space<vmem>>, vector<32x32xbf16>
    %c0_7 = arith.constant 0 : index
    %c0_8 = arith.constant 0 : index
    %4 = vector.load %arg11[%c0_7, %c0_8] : memref<32x32xbf16, #tpu.memory_space<vmem>>, vector<32x32xbf16>
    %c0_9 = arith.constant 0 : index
    %c0_10 = arith.constant 0 : index
    %5 = vector.load %arg13[%c0_9, %c0_10] : memref<32x32xbf16, #tpu.memory_space<vmem>>, vector<32x32xbf16>
    %c0_11 = arith.constant 0 : index
    %c0_12 = arith.constant 0 : index
    %6 = vector.load %arg15[%c0_11, %c0_12] : memref<32x64xbf16, #tpu.memory_space<vmem>>, vector<32x64xbf16>
    %c0_13 = arith.constant 0 : index
    %c0_14 = arith.constant 0 : index
    %7 = vector.load %arg17[%c0_13, %c0_14] : memref<64x64xbf16, #tpu.memory_space<vmem>>, vector<64x64xbf16>
    %c0_15 = arith.constant 0 : index
    %c0_16 = arith.constant 0 : index
    %8 = vector.load %arg19[%c0_15, %c0_16] : memref<64x8xbf16, #tpu.memory_space<vmem>>, vector<64x8xbf16>
    %c0_17 = arith.constant 0 : index
    %c0_18 = arith.constant 0 : index
    %9 = vector.load %arg4[%c0_17, %c0_18] : memref<1x32xf32, #tpu.memory_space<vmem>>, vector<1x32xf32>
    %10 = vector.shape_cast %9 : vector<1x32xf32> to vector<1x32xf32>
    %11 = vector.broadcast %10 : vector<1x32xf32> to vector<24x32xf32>
    %c0_19 = arith.constant 0 : index
    %c0_20 = arith.constant 0 : index
    %12 = vector.load %arg6[%c0_19, %c0_20] : memref<1x128xf32, #tpu.memory_space<vmem>>, vector<1x128xf32>
    %13 = vector.shape_cast %12 : vector<1x128xf32> to vector<1x128xf32>
    %14 = vector.broadcast %13 : vector<1x128xf32> to vector<4x128xf32>
    %c0_21 = arith.constant 0 : index
    %c0_22 = arith.constant 0 : index
    %15 = vector.load %arg8[%c0_21, %c0_22] : memref<1x32xf32, #tpu.memory_space<vmem>>, vector<1x32xf32>
    %16 = vector.shape_cast %15 : vector<1x32xf32> to vector<1x32xf32>
    %17 = vector.broadcast %16 : vector<1x32xf32> to vector<4x32xf32>
    %c0_23 = arith.constant 0 : index
    %c0_24 = arith.constant 0 : index
    %18 = vector.load %arg10[%c0_23, %c0_24] : memref<1x32xf32, #tpu.memory_space<vmem>>, vector<1x32xf32>
    %19 = vector.shape_cast %18 : vector<1x32xf32> to vector<1x32xf32>
    %20 = vector.broadcast %19 : vector<1x32xf32> to vector<4x32xf32>
    %c0_25 = arith.constant 0 : index
    %c0_26 = arith.constant 0 : index
    %21 = vector.load %arg12[%c0_25, %c0_26] : memref<1x32xf32, #tpu.memory_space<vmem>>, vector<1x32xf32>
    %22 = vector.shape_cast %21 : vector<1x32xf32> to vector<1x32xf32>
    %23 = vector.broadcast %22 : vector<1x32xf32> to vector<4x32xf32>
    %c0_27 = arith.constant 0 : index
    %c0_28 = arith.constant 0 : index
    %24 = vector.load %arg14[%c0_27, %c0_28] : memref<1x32xf32, #tpu.memory_space<vmem>>, vector<1x32xf32>
    %25 = vector.shape_cast %24 : vector<1x32xf32> to vector<1x32xf32>
    %26 = vector.broadcast %25 : vector<1x32xf32> to vector<4x32xf32>
    %c0_29 = arith.constant 0 : index
    %c0_30 = arith.constant 0 : index
    %27 = vector.load %arg16[%c0_29, %c0_30] : memref<1x64xf32, #tpu.memory_space<vmem>>, vector<1x64xf32>
    %28 = vector.shape_cast %27 : vector<1x64xf32> to vector<1x64xf32>
    %29 = vector.broadcast %28 : vector<1x64xf32> to vector<40x64xf32>
    %c0_31 = arith.constant 0 : index
    %c0_32 = arith.constant 0 : index
    %30 = vector.load %arg18[%c0_31, %c0_32] : memref<1x64xf32, #tpu.memory_space<vmem>>, vector<1x64xf32>
    %31 = vector.shape_cast %30 : vector<1x64xf32> to vector<1x64xf32>
    %32 = vector.broadcast %31 : vector<1x64xf32> to vector<40x64xf32>
    %c0_33 = arith.constant 0 : index
    %c0_34 = arith.constant 0 : index
    %33 = vector.load %arg20[%c0_33, %c0_34] : memref<1x8xf32, #tpu.memory_space<vmem>>, vector<1x8xf32>
    %34 = vector.shape_cast %33 : vector<1x8xf32> to vector<1x8xf32>
    %35 = vector.broadcast %34 : vector<1x8xf32> to vector<40x8xf32>
    %c0_35 = arith.constant 0 : index
    %c0_36 = arith.constant 0 : index
    %36 = vector.load %arg0[%c0_35, %c0_36] : memref<24x8xf32, #tpu.memory_space<vmem>>, vector<24x8xf32>
    %37 = arith.truncf %36 : vector<24x8xf32> to vector<24x8xbf16>
    %cst = arith.constant dense<0.000000e+00> : vector<24x32xf32>
    %38 = tpu.matmul %37, %0, %cst {dimension_numbers = #tpu.dot_dimension_numbers<[1], [0], [0], [1], [0, 0, 1, 1], [], []>} : vector<24x8xbf16>, vector<8x32xbf16>, vector<24x32xf32> -> vector<24x32xf32>
    %39 = arith.addf %38, %11 : vector<24x32xf32>
    %c0_37 = arith.constant 0 : index
    %c0_38 = arith.constant 0 : index
    %40 = vector.load %arg24[%c0_37, %c0_38] : memref<24x32xf32, #tpu.memory_space<vmem>>, vector<24x32xf32>
    tpu.vector_store %arg24[%c0_37, %c0_38], %39 {strides = array<i32>} : memref<24x32xf32, #tpu.memory_space<vmem>>, vector<24x32xf32>,
    %c0_39 = arith.constant 0 : index
    %c0_40 = arith.constant 0 : index
    %41 = vector.load %arg24[%c0_39, %c0_40] : memref<24x32xf32, #tpu.memory_space<vmem>>, vector<4x32xf32>
    %cst_41 = arith.constant 0.000000e+00 : f32
    %42 = vector.broadcast %cst_41 : f32 to vector<4x32xf32>
    %43 = tpu.concatenate %41, %42 in 1 : vector<4x32xf32>, vector<4x32xf32> -> vector<4x64xf32>
    %44 = arith.truncf %43 : vector<4x64xf32> to vector<4x64xbf16>
    %cst_42 = arith.constant dense<0.000000e+00> : vector<4x128xf32>
    %45 = tpu.matmul %44, %1, %cst_42 {dimension_numbers = #tpu.dot_dimension_numbers<[1], [0], [0], [1], [0, 0, 1, 1], [], []>} : vector<4x64xbf16>, vector<64x128xbf16>, vector<4x128xf32> -> vector<4x128xf32>
    %46 = arith.addf %45, %14 : vector<4x128xf32>
    %47 = vector.extract_strided_slice %46 {offsets = [0, 0], sizes = [4, 32], strides = [1, 1]} : vector<4x128xf32> to vector<4x32xf32>
    %48 = arith.negf %47 : vector<4x32xf32>
    %49 = math.exp %48 : vector<4x32xf32>
    %cst_43 = arith.constant 1.000000e+00 : f32
    %50 = vector.broadcast %cst_43 : f32 to vector<4x32xf32>
    %51 = arith.addf %50, %49 : vector<4x32xf32>
    %52 = arith.divf %50, %51 : vector<4x32xf32>
    %53 = vector.extract_strided_slice %46 {offsets = [0, 32], sizes = [4, 32], strides = [1, 1]} : vector<4x128xf32> to vector<4x32xf32>
    %54 = arith.negf %53 : vector<4x32xf32>
    %55 = math.exp %54 : vector<4x32xf32>
    %cst_44 = arith.constant 1.000000e+00 : f32
    %56 = vector.broadcast %cst_44 : f32 to vector<4x32xf32>
    %57 = arith.addf %56, %55 : vector<4x32xf32>
    %58 = arith.divf %56, %57 : vector<4x32xf32>
    %59 = vector.extract_strided_slice %46 {offsets = [0, 64], sizes = [4, 32], strides = [1, 1]} : vector<4x128xf32> to vector<4x32xf32>
    %60 = vector.extract_strided_slice %46 {offsets = [0, 96], sizes = [4, 32], strides = [1, 1]} : vector<4x128xf32> to vector<4x32xf32>
    %61 = arith.mulf %52, %60 : vector<4x32xf32>
    %62 = arith.addf %59, %61 : vector<4x32xf32>
    %63 = math.tanh %62 : vector<4x32xf32>
    %cst_45 = arith.constant 1.000000e+00 : f32
    %64 = vector.broadcast %cst_45 : f32 to vector<4x32xf32>
    %65 = arith.subf %64, %58 : vector<4x32xf32>
    %66 = arith.mulf %65, %63 : vector<4x32xf32>
    %67 = arith.mulf %58, %42 : vector<4x32xf32>
    %68 = arith.addf %66, %67 : vector<4x32xf32>
    %c0_46 = arith.constant 0 : index
    %c0_47 = arith.constant 0 : index
    %69 = vector.load %arg25[%c0_46, %c0_47] : memref<40x32xf32, #tpu.memory_space<vmem>>, vector<4x32xf32>
    tpu.vector_store %arg25[%c0_46, %c0_47], %68 {strides = array<i32>} : memref<40x32xf32, #tpu.memory_space<vmem>>, vector<4x32xf32>,
    %c1 = arith.constant 1 : index
    %70 = memref.load %arg2[%c1] : memref<10xf32, #tpu.memory_space<smem>>
    %cst_48 = arith.constant 5.000000e-01 : f32
    %71 = arith.mulf %70, %cst_48 : f32
    %cst_49 = arith.constant 5.000000e-01 : f32
    %72 = arith.mulf %cst_49, %71 : f32
    %cst_50 = arith.constant 0.166666672 : f32
    %73 = arith.mulf %71, %cst_50 : f32
    %74 = arith.truncf %68 : vector<4x32xf32> to vector<4x32xbf16>
    %cst_51 = arith.constant dense<0.000000e+00> : vector<4x32xf32>
    %75 = tpu.matmul %74, %2, %cst_51 {dimension_numbers = #tpu.dot_dimension_numbers<[1], [0], [0], [1], [0, 0, 1, 1], [], []>} : vector<4x32xbf16>, vector<32x32xbf16>, vector<4x32xf32> -> vector<4x32xf32>
    %76 = arith.addf %75, %17 : vector<4x32xf32>
    %cst_52 = arith.constant 0.000000e+00 : f32
    %77 = vector.broadcast %cst_52 : f32 to vector<4x32xf32>
    %78 = arith.maximumf %76, %77 : vector<4x32xf32>
    %79 = arith.truncf %78 : vector<4x32xf32> to vector<4x32xbf16>
    %cst_53 = arith.constant dense<0.000000e+00> : vector<4x32xf32>
    %80 = tpu.matmul %79, %3, %cst_53 {dimension_numbers = #tpu.dot_dimension_numbers<[1], [0], [0], [1], [0, 0, 1, 1], [], []>} : vector<4x32xbf16>, vector<32x32xbf16>, vector<4x32xf32> -> vector<4x32xf32>
    %81 = arith.addf %80, %20 : vector<4x32xf32>
    %cst_54 = arith.constant 0.000000e+00 : f32
    %82 = vector.broadcast %cst_54 : f32 to vector<4x32xf32>
    %83 = arith.maximumf %81, %82 : vector<4x32xf32>
    %84 = arith.truncf %83 : vector<4x32xf32> to vector<4x32xbf16>
    %cst_55 = arith.constant dense<0.000000e+00> : vector<4x32xf32>
    %85 = tpu.matmul %84, %5, %cst_55 {dimension_numbers = #tpu.dot_dimension_numbers<[1], [0], [0], [1], [0, 0, 1, 1], [], []>} : vector<4x32xbf16>, vector<32x32xbf16>, vector<4x32xf32> -> vector<4x32xf32>
    %86 = arith.addf %85, %26 : vector<4x32xf32>
    %87 = vector.broadcast %72 : f32 to vector<4x32xf32>
    %88 = arith.mulf %87, %86 : vector<4x32xf32>
    %89 = arith.addf %76, %88 : vector<4x32xf32>
    %cst_56 = arith.constant 0.000000e+00 : f32
    %90 = vector.broadcast %cst_56 : f32 to vector<4x32xf32>
    %91 = arith.maximumf %89, %90 : vector<4x32xf32>
    %92 = arith.truncf %91 : vector<4x32xf32> to vector<4x32xbf16>
    %cst_57 = arith.constant dense<0.000000e+00> : vector<4x32xf32>
    %93 = tpu.matmul %92, %3, %cst_57 {dimension_numbers = #tpu.dot_dimension_numbers<[1], [0], [0], [1], [0, 0, 1, 1], [], []>} : vector<4x32xbf16>, vector<32x32xbf16>, vector<4x32xf32> -> vector<4x32xf32>
    %94 = arith.addf %93, %20 : vector<4x32xf32>
    %cst_58 = arith.constant 0.000000e+00 : f32
    %95 = vector.broadcast %cst_58 : f32 to vector<4x32xf32>
    %96 = arith.maximumf %94, %95 : vector<4x32xf32>
    %97 = arith.truncf %96 : vector<4x32xf32> to vector<4x32xbf16>
    %cst_59 = arith.constant dense<0.000000e+00> : vector<4x32xf32>
    %98 = tpu.matmul %97, %5, %cst_59 {dimension_numbers = #tpu.dot_dimension_numbers<[1], [0], [0], [1], [0, 0, 1, 1], [], []>} : vector<4x32xbf16>, vector<32x32xbf16>, vector<4x32xf32> -> vector<4x32xf32>
    %99 = arith.addf %98, %26 : vector<4x32xf32>
    %100 = vector.broadcast %72 : f32 to vector<4x32xf32>
    %101 = arith.mulf %100, %99 : vector<4x32xf32>
    %102 = arith.addf %76, %101 : vector<4x32xf32>
    %cst_60 = arith.constant 0.000000e+00 : f32
    %103 = vector.broadcast %cst_60 : f32 to vector<4x32xf32>
    %104 = arith.maximumf %102, %103 : vector<4x32xf32>
    %105 = arith.truncf %104 : vector<4x32xf32> to vector<4x32xbf16>
    %cst_61 = arith.constant dense<0.000000e+00> : vector<4x32xf32>
    %106 = tpu.matmul %105, %3, %cst_61 {dimension_numbers = #tpu.dot_dimension_numbers<[1], [0], [0], [1], [0, 0, 1, 1], [], []>} : vector<4x32xbf16>, vector<32x32xbf16>, vector<4x32xf32> -> vector<4x32xf32>
    %107 = arith.addf %106, %20 : vector<4x32xf32>
    %cst_62 = arith.constant 0.000000e+00 : f32
    %108 = vector.broadcast %cst_62 : f32 to vector<4x32xf32>
    %109 = arith.maximumf %107, %108 : vector<4x32xf32>
    %110 = arith.truncf %109 : vector<4x32xf32> to vector<4x32xbf16>
    %cst_63 = arith.constant dense<0.000000e+00> : vector<4x32xf32>
    %111 = tpu.matmul %110, %5, %cst_63 {dimension_numbers = #tpu.dot_dimension_numbers<[1], [0], [0], [1], [0, 0, 1, 1], [], []>} : vector<4x32xbf16>, vector<32x32xbf16>, vector<4x32xf32> -> vector<4x32xf32>
    %112 = arith.addf %111, %26 : vector<4x32xf32>
    %113 = vector.broadcast %71 : f32 to vector<4x32xf32>
    %114 = arith.mulf %113, %112 : vector<4x32xf32>
    %115 = arith.addf %76, %114 : vector<4x32xf32>
    %cst_64 = arith.constant 0.000000e+00 : f32
    %116 = vector.broadcast %cst_64 : f32 to vector<4x32xf32>
    %117 = arith.maximumf %115, %116 : vector<4x32xf32>
    %118 = arith.truncf %117 : vector<4x32xf32> to vector<4x32xbf16>
    %cst_65 = arith.constant dense<0.000000e+00> : vector<4x32xf32>
    %119 = tpu.matmul %118, %3, %cst_65 {dimension_numbers = #tpu.dot_dimension_numbers<[1], [0], [0], [1], [0, 0, 1, 1], [], []>} : vector<4x32xbf16>, vector<32x32xbf16>, vector<4x32xf32> -> vector<4x32xf32>
    %120 = arith.addf %119, %20 : vector<4x32xf32>
    %cst_66 = arith.constant 0.000000e+00 : f32
    %121 = vector.broadcast %cst_66 : f32 to vector<4x32xf32>
    %122 = arith.maximumf %120, %121 : vector<4x32xf32>
    %123 = arith.addf %96, %109 : vector<4x32xf32>
    %cst_67 = arith.constant 2.000000e+00 : f32
    %124 = vector.broadcast %cst_67 : f32 to vector<4x32xf32>
    %125 = arith.mulf %124, %123 : vector<4x32xf32>
    %126 = arith.addf %83, %125 : vector<4x32xf32>
    %127 = arith.addf %126, %122 : vector<4x32xf32>
    %128 = arith.truncf %127 : vector<4x32xf32> to vector<4x32xbf16>
    %cst_68 = arith.constant dense<0.000000e+00> : vector<4x32xf32>
    %129 = tpu.matmul %128, %4, %cst_68 {dimension_numbers = #tpu.dot_dimension_numbers<[1], [0], [0], [1], [0, 0, 1, 1], [], []>} : vector<4x32xbf16>, vector<32x32xbf16>, vector<4x32xf32> -> vector<4x32xf32>
    %130 = vector.broadcast %73 : f32 to vector<4x32xf32>
    %131 = arith.mulf %130, %129 : vector<4x32xf32>
    %132 = arith.addf %68, %131 : vector<4x32xf32>
    %133 = vector.broadcast %71 : f32 to vector<4x32xf32>
    %134 = arith.mulf %133, %23 : vector<4x32xf32>
    %135 = arith.addf %132, %134 : vector<4x32xf32>
    %136 = arith.truncf %135 : vector<4x32xf32> to vector<4x32xbf16>
    %cst_69 = arith.constant dense<0.000000e+00> : vector<4x32xf32>
    %137 = tpu.matmul %136, %2, %cst_69 {dimension_numbers = #tpu.dot_dimension_numbers<[1], [0], [0], [1], [0, 0, 1, 1], [], []>} : vector<4x32xbf16>, vector<32x32xbf16>, vector<4x32xf32> -> vector<4x32xf32>
    %138 = arith.addf %137, %17 : vector<4x32xf32>
    %cst_70 = arith.constant 0.000000e+00 : f32
    %139 = vector.broadcast %cst_70 : f32 to vector<4x32xf32>
    %140 = arith.maximumf %138, %139 : vector<4x32xf32>
    %141 = arith.truncf %140 : vector<4x32xf32> to vector<4x32xbf16>
    %cst_71 = arith.constant dense<0.000000e+00> : vector<4x32xf32>
    %142 = tpu.matmul %141, %3, %cst_71 {dimension_numbers = #tpu.dot_dimension_numbers<[1], [0], [0], [1], [0, 0, 1, 1], [], []>} : vector<4x32xbf16>, vector<32x32xbf16>, vector<4x32xf32> -> vector<4x32xf32>
    %143 = arith.addf %142, %20 : vector<4x32xf32>
    %cst_72 = arith.constant 0.000000e+00 : f32
    %144 = vector.broadcast %cst_72 : f32 to vector<4x32xf32>
    %145 = arith.maximumf %143, %144 : vector<4x32xf32>
    %146 = arith.truncf %145 : vector<4x32xf32> to vector<4x32xbf16>
    %cst_73 = arith.constant dense<0.000000e+00> : vector<4x32xf32>
    %147 = tpu.matmul %146, %5, %cst_73 {dimension_numbers = #tpu.dot_dimension_numbers<[1], [0], [0], [1], [0, 0, 1, 1], [], []>} : vector<4x32xbf16>, vector<32x32xbf16>, vector<4x32xf32> -> vector<4x32xf32>
    %148 = arith.addf %147, %26 : vector<4x32xf32>
    %149 = vector.broadcast %72 : f32 to vector<4x32xf32>
    %150 = arith.mulf %149, %148 : vector<4x32xf32>
    %151 = arith.addf %138, %150 : vector<4x32xf32>
    %cst_74 = arith.constant 0.000000e+00 : f32
    %152 = vector.broadcast %cst_74 : f32 to vector<4x32xf32>
    %153 = arith.maximumf %151, %152 : vector<4x32xf32>
    %154 = arith.truncf %153 : vector<4x32xf32> to vector<4x32xbf16>
    %cst_75 = arith.constant dense<0.000000e+00> : vector<4x32xf32>
    %155 = tpu.matmul %154, %3, %cst_75 {dimension_numbers = #tpu.dot_dimension_numbers<[1], [0], [0], [1], [0, 0, 1, 1], [], []>} : vector<4x32xbf16>, vector<32x32xbf16>, vector<4x32xf32> -> vector<4x32xf32>
    %156 = arith.addf %155, %20 : vector<4x32xf32>
    %cst_76 = arith.constant 0.000000e+00 : f32
    %157 = vector.broadcast %cst_76 : f32 to vector<4x32xf32>
    %158 = arith.maximumf %156, %157 : vector<4x32xf32>
    %159 = arith.truncf %158 : vector<4x32xf32> to vector<4x32xbf16>
    %cst_77 = arith.constant dense<0.000000e+00> : vector<4x32xf32>
    %160 = tpu.matmul %159, %5, %cst_77 {dimension_numbers = #tpu.dot_dimension_numbers<[1], [0], [0], [1], [0, 0, 1, 1], [], []>} : vector<4x32xbf16>, vector<32x32xbf16>, vector<4x32xf32> -> vector<4x32xf32>
    %161 = arith.addf %160, %26 : vector<4x32xf32>
    %162 = vector.broadcast %72 : f32 to vector<4x32xf32>
    %163 = arith.mulf %162, %161 : vector<4x32xf32>
    %164 = arith.addf %138, %163 : vector<4x32xf32>
    %cst_78 = arith.constant 0.000000e+00 : f32
    %165 = vector.broadcast %cst_78 : f32 to vector<4x32xf32>
    %166 = arith.maximumf %164, %165 : vector<4x32xf32>
    %167 = arith.truncf %166 : vector<4x32xf32> to vector<4x32xbf16>
    %cst_79 = arith.constant dense<0.000000e+00> : vector<4x32xf32>
    %168 = tpu.matmul %167, %3, %cst_79 {dimension_numbers = #tpu.dot_dimension_numbers<[1], [0], [0], [1], [0, 0, 1, 1], [], []>} : vector<4x32xbf16>, vector<32x32xbf16>, vector<4x32xf32> -> vector<4x32xf32>
    %169 = arith.addf %168, %20 : vector<4x32xf32>
    %cst_80 = arith.constant 0.000000e+00 : f32
    %170 = vector.broadcast %cst_80 : f32 to vector<4x32xf32>
    %171 = arith.maximumf %169, %170 : vector<4x32xf32>
    %172 = arith.truncf %171 : vector<4x32xf32> to vector<4x32xbf16>
    %cst_81 = arith.constant dense<0.000000e+00> : vector<4x32xf32>
    %173 = tpu.matmul %172, %5, %cst_81 {dimension_numbers = #tpu.dot_dimension_numbers<[1], [0], [0], [1], [0, 0, 1, 1], [], []>} : vector<4x32xbf16>, vector<32x32xbf16>, vector<4x32xf32> -> vector<4x32xf32>
    %174 = arith.addf %173, %26 : vector<4x32xf32>
    %175 = vector.broadcast %71 : f32 to vector<4x32xf32>
    %176 = arith.mulf %175, %174 : vector<4x32xf32>
    %177 = arith.addf %138, %176 : vector<4x32xf32>
    %cst_82 = arith.constant 0.000000e+00 : f32
    %178 = vector.broadcast %cst_82 : f32 to vector<4x32xf32>
    %179 = arith.maximumf %177, %178 : vector<4x32xf32>
    %180 = arith.truncf %179 : vector<4x32xf32> to vector<4x32xbf16>
    %cst_83 = arith.constant dense<0.000000e+00> : vector<4x32xf32>
    %181 = tpu.matmul %180, %3, %cst_83 {dimension_numbers = #tpu.dot_dimension_numbers<[1], [0], [0], [1], [0, 0, 1, 1], [], []>} : vector<4x32xbf16>, vector<32x32xbf16>, vector<4x32xf32> -> vector<4x32xf32>
    %182 = arith.addf %181, %20 : vector<4x32xf32>
    %cst_84 = arith.constant 0.000000e+00 : f32
    %183 = vector.broadcast %cst_84 : f32 to vector<4x32xf32>
    %184 = arith.maximumf %182, %183 : vector<4x32xf32>
    %185 = arith.addf %158, %171 : vector<4x32xf32>
    %cst_85 = arith.constant 2.000000e+00 : f32
    %186 = vector.broadcast %cst_85 : f32 to vector<4x32xf32>
    %187 = arith.mulf %186, %185 : vector<4x32xf32>
    %188 = arith.addf %145, %187 : vector<4x32xf32>
    %189 = arith.addf %188, %184 : vector<4x32xf32>
    %190 = arith.truncf %189 : vector<4x32xf32> to vector<4x32xbf16>
    %cst_86 = arith.constant dense<0.000000e+00> : vector<4x32xf32>
    %191 = tpu.matmul %190, %4, %cst_86 {dimension_numbers = #tpu.dot_dimension_numbers<[1], [0], [0], [1], [0, 0, 1, 1], [], []>} : vector<4x32xbf16>, vector<32x32xbf16>, vector<4x32xf32> -> vector<4x32xf32>
    %192 = vector.broadcast %73 : f32 to vector<4x32xf32>
    %193 = arith.mulf %192, %191 : vector<4x32xf32>
    %194 = arith.addf %135, %193 : vector<4x32xf32>
    %195 = vector.broadcast %71 : f32 to vector<4x32xf32>
    %196 = arith.mulf %195, %23 : vector<4x32xf32>
    %197 = arith.addf %194, %196 : vector<4x32xf32>
    %c4 = arith.constant 4 : index
    %c0_87 = arith.constant 0 : index
    %198 = vector.load %arg24[%c4, %c0_87] : memref<24x32xf32, #tpu.memory_space<vmem>>, vector<4x32xf32>
    %199 = tpu.concatenate %198, %197 in 1 : vector<4x32xf32>, vector<4x32xf32> -> vector<4x64xf32>
    %200 = arith.truncf %199 : vector<4x64xf32> to vector<4x64xbf16>
    %cst_88 = arith.constant dense<0.000000e+00> : vector<4x128xf32>
    %201 = tpu.matmul %200, %1, %cst_88 {dimension_numbers = #tpu.dot_dimension_numbers<[1], [0], [0], [1], [0, 0, 1, 1], [], []>} : vector<4x64xbf16>, vector<64x128xbf16>, vector<4x128xf32> -> vector<4x128xf32>
    %202 = arith.addf %201, %14 : vector<4x128xf32>
    %203 = vector.extract_strided_slice %202 {offsets = [0, 0], sizes = [4, 32], strides = [1, 1]} : vector<4x128xf32> to vector<4x32xf32>
    %204 = arith.negf %203 : vector<4x32xf32>
    %205 = math.exp %204 : vector<4x32xf32>
    %cst_89 = arith.constant 1.000000e+00 : f32
    %206 = vector.broadcast %cst_89 : f32 to vector<4x32xf32>
    %207 = arith.addf %206, %205 : vector<4x32xf32>
    %208 = arith.divf %206, %207 : vector<4x32xf32>
    %209 = vector.extract_strided_slice %202 {offsets = [0, 32], sizes = [4, 32], strides = [1, 1]} : vector<4x128xf32> to vector<4x32xf32>
    %210 = arith.negf %209 : vector<4x32xf32>
    %211 = math.exp %210 : vector<4x32xf32>
    %cst_90 = arith.constant 1.000000e+00 : f32
    %212 = vector.broadcast %cst_90 : f32 to vector<4x32xf32>
    %213 = arith.addf %212, %211 : vector<4x32xf32>
    %214 = arith.divf %212, %213 : vector<4x32xf32>
    %215 = vector.extract_strided_slice %202 {offsets = [0, 64], sizes = [4, 32], strides = [1, 1]} : vector<4x128xf32> to vector<4x32xf32>
    %216 = vector.extract_strided_slice %202 {offsets = [0, 96], sizes = [4, 32], strides = [1, 1]} : vector<4x128xf32> to vector<4x32xf32>
    %217 = arith.mulf %208, %216 : vector<4x32xf32>
    %218 = arith.addf %215, %217 : vector<4x32xf32>
    %219 = math.tanh %218 : vector<4x32xf32>
    %cst_91 = arith.constant 1.000000e+00 : f32
    %220 = vector.broadcast %cst_91 : f32 to vector<4x32xf32>
    %221 = arith.subf %220, %214 : vector<4x32xf32>
    %222 = arith.mulf %221, %219 : vector<4x32xf32>
    %223 = arith.mulf %214, %197 : vector<4x32xf32>
    %224 = arith.addf %222, %223 : vector<4x32xf32>
    %c4_92 = arith.constant 4 : index
    %c0_93 = arith.constant 0 : index
    %225 = vector.load %arg25[%c4_92, %c0_93] : memref<40x32xf32, #tpu.memory_space<vmem>>, vector<4x32xf32>
    tpu.vector_store %arg25[%c4_92, %c0_93], %224 {strides = array<i32>} : memref<40x32xf32, #tpu.memory_space<vmem>>, vector<4x32xf32>,
    %c2 = arith.constant 2 : index
    %226 = memref.load %arg2[%c2] : memref<10xf32, #tpu.memory_space<smem>>
    %cst_94 = arith.constant 5.000000e-01 : f32
    %227 = arith.mulf %226, %cst_94 : f32
    %cst_95 = arith.constant 5.000000e-01 : f32
    %228 = arith.mulf %cst_95, %227 : f32
    %cst_96 = arith.constant 0.166666672 : f32
    %229 = arith.mulf %227, %cst_96 : f32
    %230 = arith.truncf %224 : vector<4x32xf32> to vector<4x32xbf16>
    %cst_97 = arith.constant dense<0.000000e+00> : vector<4x32xf32>
    %231 = tpu.matmul %230, %2, %cst_97 {dimension_numbers = #tpu.dot_dimension_numbers<[1], [0], [0], [1], [0, 0, 1, 1], [], []>} : vector<4x32xbf16>, vector<32x32xbf16>, vector<4x32xf32> -> vector<4x32xf32>
    %232 = arith.addf %231, %17 : vector<4x32xf32>
    %cst_98 = arith.constant 0.000000e+00 : f32
    %233 = vector.broadcast %cst_98 : f32 to vector<4x32xf32>
    %234 = arith.maximumf %232, %233 : vector<4x32xf32>
    %235 = arith.truncf %234 : vector<4x32xf32> to vector<4x32xbf16>
    %cst_99 = arith.constant dense<0.000000e+00> : vector<4x32xf32>
    %236 = tpu.matmul %235, %3, %cst_99 {dimension_numbers = #tpu.dot_dimension_numbers<[1], [0], [0], [1], [0, 0, 1, 1], [], []>} : vector<4x32xbf16>, vector<32x32xbf16>, vector<4x32xf32> -> vector<4x32xf32>
    %237 = arith.addf %236, %20 : vector<4x32xf32>
    %cst_100 = arith.constant 0.000000e+00 : f32
    %238 = vector.broadcast %cst_100 : f32 to vector<4x32xf32>
    %239 = arith.maximumf %237, %238 : vector<4x32xf32>
    %240 = arith.truncf %239 : vector<4x32xf32> to vector<4x32xbf16>
    %cst_101 = arith.constant dense<0.000000e+00> : vector<4x32xf32>
    %241 = tpu.matmul %240, %5, %cst_101 {dimension_numbers = #tpu.dot_dimension_numbers<[1], [0], [0], [1], [0, 0, 1, 1], [], []>} : vector<4x32xbf16>, vector<32x32xbf16>, vector<4x32xf32> -> vector<4x32xf32>
    %242 = arith.addf %241, %26 : vector<4x32xf32>
    %243 = vector.broadcast %228 : f32 to vector<4x32xf32>
    %244 = arith.mulf %243, %242 : vector<4x32xf32>
    %245 = arith.addf %232, %244 : vector<4x32xf32>
    %cst_102 = arith.constant 0.000000e+00 : f32
    %246 = vector.broadcast %cst_102 : f32 to vector<4x32xf32>
    %247 = arith.maximumf %245, %246 : vector<4x32xf32>
    %248 = arith.truncf %247 : vector<4x32xf32> to vector<4x32xbf16>
    %cst_103 = arith.constant dense<0.000000e+00> : vector<4x32xf32>
    %249 = tpu.matmul %248, %3, %cst_103 {dimension_numbers = #tpu.dot_dimension_numbers<[1], [0], [0], [1], [0, 0, 1, 1], [], []>} : vector<4x32xbf16>, vector<32x32xbf16>, vector<4x32xf32> -> vector<4x32xf32>
    %250 = arith.addf %249, %20 : vector<4x32xf32>
    %cst_104 = arith.constant 0.000000e+00 : f32
    %251 = vector.broadcast %cst_104 : f32 to vector<4x32xf32>
    %252 = arith.maximumf %250, %251 : vector<4x32xf32>
    %253 = arith.truncf %252 : vector<4x32xf32> to vector<4x32xbf16>
    %cst_105 = arith.constant dense<0.000000e+00> : vector<4x32xf32>
    %254 = tpu.matmul %253, %5, %cst_105 {dimension_numbers = #tpu.dot_dimension_numbers<[1], [0], [0], [1], [0, 0, 1, 1], [], []>} : vector<4x32xbf16>, vector<32x32xbf16>, vector<4x32xf32> -> vector<4x32xf32>
    %255 = arith.addf %254, %26 : vector<4x32xf32>
    %256 = vector.broadcast %228 : f32 to vector<4x32xf32>
    %257 = arith.mulf %256, %255 : vector<4x32xf32>
    %258 = arith.addf %232, %257 : vector<4x32xf32>
    %cst_106 = arith.constant 0.000000e+00 : f32
    %259 = vector.broadcast %cst_106 : f32 to vector<4x32xf32>
    %260 = arith.maximumf %258, %259 : vector<4x32xf32>
    %261 = arith.truncf %260 : vector<4x32xf32> to vector<4x32xbf16>
    %cst_107 = arith.constant dense<0.000000e+00> : vector<4x32xf32>
    %262 = tpu.matmul %261, %3, %cst_107 {dimension_numbers = #tpu.dot_dimension_numbers<[1], [0], [0], [1], [0, 0, 1, 1], [], []>} : vector<4x32xbf16>, vector<32x32xbf16>, vector<4x32xf32> -> vector<4x32xf32>
    %263 = arith.addf %262, %20 : vector<4x32xf32>
    %cst_108 = arith.constant 0.000000e+00 : f32
    %264 = vector.broadcast %cst_108 : f32 to vector<4x32xf32>
    %265 = arith.maximumf %263, %264 : vector<4x32xf32>
    %266 = arith.truncf %265 : vector<4x32xf32> to vector<4x32xbf16>
    %cst_109 = arith.constant dense<0.000000e+00> : vector<4x32xf32>
    %267 = tpu.matmul %266, %5, %cst_109 {dimension_numbers = #tpu.dot_dimension_numbers<[1], [0], [0], [1], [0, 0, 1, 1], [], []>} : vector<4x32xbf16>, vector<32x32xbf16>, vector<4x32xf32> -> vector<4x32xf32>
    %268 = arith.addf %267, %26 : vector<4x32xf32>
    %269 = vector.broadcast %227 : f32 to vector<4x32xf32>
    %270 = arith.mulf %269, %268 : vector<4x32xf32>
    %271 = arith.addf %232, %270 : vector<4x32xf32>
    %cst_110 = arith.constant 0.000000e+00 : f32
    %272 = vector.broadcast %cst_110 : f32 to vector<4x32xf32>
    %273 = arith.maximumf %271, %272 : vector<4x32xf32>
    %274 = arith.truncf %273 : vector<4x32xf32> to vector<4x32xbf16>
    %cst_111 = arith.constant dense<0.000000e+00> : vector<4x32xf32>
    %275 = tpu.matmul %274, %3, %cst_111 {dimension_numbers = #tpu.dot_dimension_numbers<[1], [0], [0], [1], [0, 0, 1, 1], [], []>} : vector<4x32xbf16>, vector<32x32xbf16>, vector<4x32xf32> -> vector<4x32xf32>
    %276 = arith.addf %275, %20 : vector<4x32xf32>
    %cst_112 = arith.constant 0.000000e+00 : f32
    %277 = vector.broadcast %cst_112 : f32 to vector<4x32xf32>
    %278 = arith.maximumf %276, %277 : vector<4x32xf32>
    %279 = arith.addf %252, %265 : vector<4x32xf32>
    %cst_113 = arith.constant 2.000000e+00 : f32
    %280 = vector.broadcast %cst_113 : f32 to vector<4x32xf32>
    %281 = arith.mulf %280, %279 : vector<4x32xf32>
    %282 = arith.addf %239, %281 : vector<4x32xf32>
    %283 = arith.addf %282, %278 : vector<4x32xf32>
    %284 = arith.truncf %283 : vector<4x32xf32> to vector<4x32xbf16>
    %cst_114 = arith.constant dense<0.000000e+00> : vector<4x32xf32>
    %285 = tpu.matmul %284, %4, %cst_114 {dimension_numbers = #tpu.dot_dimension_numbers<[1], [0], [0], [1], [0, 0, 1, 1], [], []>} : vector<4x32xbf16>, vector<32x32xbf16>, vector<4x32xf32> -> vector<4x32xf32>
    %286 = vector.broadcast %229 : f32 to vector<4x32xf32>
    %287 = arith.mulf %286, %285 : vector<4x32xf32>
    %288 = arith.addf %224, %287 : vector<4x32xf32>
    %289 = vector.broadcast %227 : f32 to vector<4x32xf32>
    %290 = arith.mulf %289, %23 : vector<4x32xf32>
    %291 = arith.addf %288, %290 : vector<4x32xf32>
    %292 = arith.truncf %291 : vector<4x32xf32> to vector<4x32xbf16>
    %cst_115 = arith.constant dense<0.000000e+00> : vector<4x32xf32>
    %293 = tpu.matmul %292, %2, %cst_115 {dimension_numbers = #tpu.dot_dimension_numbers<[1], [0], [0], [1], [0, 0, 1, 1], [], []>} : vector<4x32xbf16>, vector<32x32xbf16>, vector<4x32xf32> -> vector<4x32xf32>
    %294 = arith.addf %293, %17 : vector<4x32xf32>
    %cst_116 = arith.constant 0.000000e+00 : f32
    %295 = vector.broadcast %cst_116 : f32 to vector<4x32xf32>
    %296 = arith.maximumf %294, %295 : vector<4x32xf32>
    %297 = arith.truncf %296 : vector<4x32xf32> to vector<4x32xbf16>
    %cst_117 = arith.constant dense<0.000000e+00> : vector<4x32xf32>
    %298 = tpu.matmul %297, %3, %cst_117 {dimension_numbers = #tpu.dot_dimension_numbers<[1], [0], [0], [1], [0, 0, 1, 1], [], []>} : vector<4x32xbf16>, vector<32x32xbf16>, vector<4x32xf32> -> vector<4x32xf32>
    %299 = arith.addf %298, %20 : vector<4x32xf32>
    %cst_118 = arith.constant 0.000000e+00 : f32
    %300 = vector.broadcast %cst_118 : f32 to vector<4x32xf32>
    %301 = arith.maximumf %299, %300 : vector<4x32xf32>
    %302 = arith.truncf %301 : vector<4x32xf32> to vector<4x32xbf16>
    %cst_119 = arith.constant dense<0.000000e+00> : vector<4x32xf32>
    %303 = tpu.matmul %302, %5, %cst_119 {dimension_numbers = #tpu.dot_dimension_numbers<[1], [0], [0], [1], [0, 0, 1, 1], [], []>} : vector<4x32xbf16>, vector<32x32xbf16>, vector<4x32xf32> -> vector<4x32xf32>
    %304 = arith.addf %303, %26 : vector<4x32xf32>
    %305 = vector.broadcast %228 : f32 to vector<4x32xf32>
    %306 = arith.mulf %305, %304 : vector<4x32xf32>
    %307 = arith.addf %294, %306 : vector<4x32xf32>
    %cst_120 = arith.constant 0.000000e+00 : f32
    %308 = vector.broadcast %cst_120 : f32 to vector<4x32xf32>
    %309 = arith.maximumf %307, %308 : vector<4x32xf32>
    %310 = arith.truncf %309 : vector<4x32xf32> to vector<4x32xbf16>
    %cst_121 = arith.constant dense<0.000000e+00> : vector<4x32xf32>
    %311 = tpu.matmul %310, %3, %cst_121 {dimension_numbers = #tpu.dot_dimension_numbers<[1], [0], [0], [1], [0, 0, 1, 1], [], []>} : vector<4x32xbf16>, vector<32x32xbf16>, vector<4x32xf32> -> vector<4x32xf32>
    %312 = arith.addf %311, %20 : vector<4x32xf32>
    %cst_122 = arith.constant 0.000000e+00 : f32
    %313 = vector.broadcast %cst_122 : f32 to vector<4x32xf32>
    %314 = arith.maximumf %312, %313 : vector<4x32xf32>
    %315 = arith.truncf %314 : vector<4x32xf32> to vector<4x32xbf16>
    %cst_123 = arith.constant dense<0.000000e+00> : vector<4x32xf32>
    %316 = tpu.matmul %315, %5, %cst_123 {dimension_numbers = #tpu.dot_dimension_numbers<[1], [0], [0], [1], [0, 0, 1, 1], [], []>} : vector<4x32xbf16>, vector<32x32xbf16>, vector<4x32xf32> -> vector<4x32xf32>
    %317 = arith.addf %316, %26 : vector<4x32xf32>
    %318 = vector.broadcast %228 : f32 to vector<4x32xf32>
    %319 = arith.mulf %318, %317 : vector<4x32xf32>
    %320 = arith.addf %294, %319 : vector<4x32xf32>
    %cst_124 = arith.constant 0.000000e+00 : f32
    %321 = vector.broadcast %cst_124 : f32 to vector<4x32xf32>
    %322 = arith.maximumf %320, %321 : vector<4x32xf32>
    %323 = arith.truncf %322 : vector<4x32xf32> to vector<4x32xbf16>
    %cst_125 = arith.constant dense<0.000000e+00> : vector<4x32xf32>
    %324 = tpu.matmul %323, %3, %cst_125 {dimension_numbers = #tpu.dot_dimension_numbers<[1], [0], [0], [1], [0, 0, 1, 1], [], []>} : vector<4x32xbf16>, vector<32x32xbf16>, vector<4x32xf32> -> vector<4x32xf32>
    %325 = arith.addf %324, %20 : vector<4x32xf32>
    %cst_126 = arith.constant 0.000000e+00 : f32
    %326 = vector.broadcast %cst_126 : f32 to vector<4x32xf32>
    %327 = arith.maximumf %325, %326 : vector<4x32xf32>
    %328 = arith.truncf %327 : vector<4x32xf32> to vector<4x32xbf16>
    %cst_127 = arith.constant dense<0.000000e+00> : vector<4x32xf32>
    %329 = tpu.matmul %328, %5, %cst_127 {dimension_numbers = #tpu.dot_dimension_numbers<[1], [0], [0], [1], [0, 0, 1, 1], [], []>} : vector<4x32xbf16>, vector<32x32xbf16>, vector<4x32xf32> -> vector<4x32xf32>
    %330 = arith.addf %329, %26 : vector<4x32xf32>
    %331 = vector.broadcast %227 : f32 to vector<4x32xf32>
    %332 = arith.mulf %331, %330 : vector<4x32xf32>
    %333 = arith.addf %294, %332 : vector<4x32xf32>
    %cst_128 = arith.constant 0.000000e+00 : f32
    %334 = vector.broadcast %cst_128 : f32 to vector<4x32xf32>
    %335 = arith.maximumf %333, %334 : vector<4x32xf32>
    %336 = arith.truncf %335 : vector<4x32xf32> to vector<4x32xbf16>
    %cst_129 = arith.constant dense<0.000000e+00> : vector<4x32xf32>
    %337 = tpu.matmul %336, %3, %cst_129 {dimension_numbers = #tpu.dot_dimension_numbers<[1], [0], [0], [1], [0, 0, 1, 1], [], []>} : vector<4x32xbf16>, vector<32x32xbf16>, vector<4x32xf32> -> vector<4x32xf32>
    %338 = arith.addf %337, %20 : vector<4x32xf32>
    %cst_130 = arith.constant 0.000000e+00 : f32
    %339 = vector.broadcast %cst_130 : f32 to vector<4x32xf32>
    %340 = arith.maximumf %338, %339 : vector<4x32xf32>
    %341 = arith.addf %314, %327 : vector<4x32xf32>
    %cst_131 = arith.constant 2.000000e+00 : f32
    %342 = vector.broadcast %cst_131 : f32 to vector<4x32xf32>
    %343 = arith.mulf %342, %341 : vector<4x32xf32>
    %344 = arith.addf %301, %343 : vector<4x32xf32>
    %345 = arith.addf %344, %340 : vector<4x32xf32>
    %346 = arith.truncf %345 : vector<4x32xf32> to vector<4x32xbf16>
    %cst_132 = arith.constant dense<0.000000e+00> : vector<4x32xf32>
    %347 = tpu.matmul %346, %4, %cst_132 {dimension_numbers = #tpu.dot_dimension_numbers<[1], [0], [0], [1], [0, 0, 1, 1], [], []>} : vector<4x32xbf16>, vector<32x32xbf16>, vector<4x32xf32> -> vector<4x32xf32>
    %348 = vector.broadcast %229 : f32 to vector<4x32xf32>
    %349 = arith.mulf %348, %347 : vector<4x32xf32>
    %350 = arith.addf %291, %349 : vector<4x32xf32>
    %351 = vector.broadcast %227 : f32 to vector<4x32xf32>
    %352 = arith.mulf %351, %23 : vector<4x32xf32>
    %353 = arith.addf %350, %352 : vector<4x32xf32>
    %c8 = arith.constant 8 : index
    %c0_133 = arith.constant 0 : index
    %354 = vector.load %arg24[%c8, %c0_133] : memref<24x32xf32, #tpu.memory_space<vmem>>, vector<4x32xf32>
    %355 = tpu.concatenate %354, %353 in 1 : vector<4x32xf32>, vector<4x32xf32> -> vector<4x64xf32>
    %356 = arith.truncf %355 : vector<4x64xf32> to vector<4x64xbf16>
    %cst_134 = arith.constant dense<0.000000e+00> : vector<4x128xf32>
    %357 = tpu.matmul %356, %1, %cst_134 {dimension_numbers = #tpu.dot_dimension_numbers<[1], [0], [0], [1], [0, 0, 1, 1], [], []>} : vector<4x64xbf16>, vector<64x128xbf16>, vector<4x128xf32> -> vector<4x128xf32>
    %358 = arith.addf %357, %14 : vector<4x128xf32>
    %359 = vector.extract_strided_slice %358 {offsets = [0, 0], sizes = [4, 32], strides = [1, 1]} : vector<4x128xf32> to vector<4x32xf32>
    %360 = arith.negf %359 : vector<4x32xf32>
    %361 = math.exp %360 : vector<4x32xf32>
    %cst_135 = arith.constant 1.000000e+00 : f32
    %362 = vector.broadcast %cst_135 : f32 to vector<4x32xf32>
    %363 = arith.addf %362, %361 : vector<4x32xf32>
    %364 = arith.divf %362, %363 : vector<4x32xf32>
    %365 = vector.extract_strided_slice %358 {offsets = [0, 32], sizes = [4, 32], strides = [1, 1]} : vector<4x128xf32> to vector<4x32xf32>
    %366 = arith.negf %365 : vector<4x32xf32>
    %367 = math.exp %366 : vector<4x32xf32>
    %cst_136 = arith.constant 1.000000e+00 : f32
    %368 = vector.broadcast %cst_136 : f32 to vector<4x32xf32>
    %369 = arith.addf %368, %367 : vector<4x32xf32>
    %370 = arith.divf %368, %369 : vector<4x32xf32>
    %371 = vector.extract_strided_slice %358 {offsets = [0, 64], sizes = [4, 32], strides = [1, 1]} : vector<4x128xf32> to vector<4x32xf32>
    %372 = vector.extract_strided_slice %358 {offsets = [0, 96], sizes = [4, 32], strides = [1, 1]} : vector<4x128xf32> to vector<4x32xf32>
    %373 = arith.mulf %364, %372 : vector<4x32xf32>
    %374 = arith.addf %371, %373 : vector<4x32xf32>
    %375 = math.tanh %374 : vector<4x32xf32>
    %cst_137 = arith.constant 1.000000e+00 : f32
    %376 = vector.broadcast %cst_137 : f32 to vector<4x32xf32>
    %377 = arith.subf %376, %370 : vector<4x32xf32>
    %378 = arith.mulf %377, %375 : vector<4x32xf32>
    %379 = arith.mulf %370, %353 : vector<4x32xf32>
    %380 = arith.addf %378, %379 : vector<4x32xf32>
    %c8_138 = arith.constant 8 : index
    %c0_139 = arith.constant 0 : index
    %381 = vector.load %arg25[%c8_138, %c0_139] : memref<40x32xf32, #tpu.memory_space<vmem>>, vector<4x32xf32>
    tpu.vector_store %arg25[%c8_138, %c0_139], %380 {strides = array<i32>} : memref<40x32xf32, #tpu.memory_space<vmem>>, vector<4x32xf32>,
    %c3 = arith.constant 3 : index
    %382 = memref.load %arg2[%c3] : memref<10xf32, #tpu.memory_space<smem>>
    %cst_140 = arith.constant 5.000000e-01 : f32
    %383 = arith.mulf %382, %cst_140 : f32
    %cst_141 = arith.constant 5.000000e-01 : f32
    %384 = arith.mulf %cst_141, %383 : f32
    %cst_142 = arith.constant 0.166666672 : f32
    %385 = arith.mulf %383, %cst_142 : f32
    %386 = arith.truncf %380 : vector<4x32xf32> to vector<4x32xbf16>
    %cst_143 = arith.constant dense<0.000000e+00> : vector<4x32xf32>
    %387 = tpu.matmul %386, %2, %cst_143 {dimension_numbers = #tpu.dot_dimension_numbers<[1], [0], [0], [1], [0, 0, 1, 1], [], []>} : vector<4x32xbf16>, vector<32x32xbf16>, vector<4x32xf32> -> vector<4x32xf32>
    %388 = arith.addf %387, %17 : vector<4x32xf32>
    %cst_144 = arith.constant 0.000000e+00 : f32
    %389 = vector.broadcast %cst_144 : f32 to vector<4x32xf32>
    %390 = arith.maximumf %388, %389 : vector<4x32xf32>
    %391 = arith.truncf %390 : vector<4x32xf32> to vector<4x32xbf16>
    %cst_145 = arith.constant dense<0.000000e+00> : vector<4x32xf32>
    %392 = tpu.matmul %391, %3, %cst_145 {dimension_numbers = #tpu.dot_dimension_numbers<[1], [0], [0], [1], [0, 0, 1, 1], [], []>} : vector<4x32xbf16>, vector<32x32xbf16>, vector<4x32xf32> -> vector<4x32xf32>
    %393 = arith.addf %392, %20 : vector<4x32xf32>
    %cst_146 = arith.constant 0.000000e+00 : f32
    %394 = vector.broadcast %cst_146 : f32 to vector<4x32xf32>
    %395 = arith.maximumf %393, %394 : vector<4x32xf32>
    %396 = arith.truncf %395 : vector<4x32xf32> to vector<4x32xbf16>
    %cst_147 = arith.constant dense<0.000000e+00> : vector<4x32xf32>
    %397 = tpu.matmul %396, %5, %cst_147 {dimension_numbers = #tpu.dot_dimension_numbers<[1], [0], [0], [1], [0, 0, 1, 1], [], []>} : vector<4x32xbf16>, vector<32x32xbf16>, vector<4x32xf32> -> vector<4x32xf32>
    %398 = arith.addf %397, %26 : vector<4x32xf32>
    %399 = vector.broadcast %384 : f32 to vector<4x32xf32>
    %400 = arith.mulf %399, %398 : vector<4x32xf32>
    %401 = arith.addf %388, %400 : vector<4x32xf32>
    %cst_148 = arith.constant 0.000000e+00 : f32
    %402 = vector.broadcast %cst_148 : f32 to vector<4x32xf32>
    %403 = arith.maximumf %401, %402 : vector<4x32xf32>
    %404 = arith.truncf %403 : vector<4x32xf32> to vector<4x32xbf16>
    %cst_149 = arith.constant dense<0.000000e+00> : vector<4x32xf32>
    %405 = tpu.matmul %404, %3, %cst_149 {dimension_numbers = #tpu.dot_dimension_numbers<[1], [0], [0], [1], [0, 0, 1, 1], [], []>} : vector<4x32xbf16>, vector<32x32xbf16>, vector<4x32xf32> -> vector<4x32xf32>
    %406 = arith.addf %405, %20 : vector<4x32xf32>
    %cst_150 = arith.constant 0.000000e+00 : f32
    %407 = vector.broadcast %cst_150 : f32 to vector<4x32xf32>
    %408 = arith.maximumf %406, %407 : vector<4x32xf32>
    %409 = arith.truncf %408 : vector<4x32xf32> to vector<4x32xbf16>
    %cst_151 = arith.constant dense<0.000000e+00> : vector<4x32xf32>
    %410 = tpu.matmul %409, %5, %cst_151 {dimension_numbers = #tpu.dot_dimension_numbers<[1], [0], [0], [1], [0, 0, 1, 1], [], []>} : vector<4x32xbf16>, vector<32x32xbf16>, vector<4x32xf32> -> vector<4x32xf32>
    %411 = arith.addf %410, %26 : vector<4x32xf32>
    %412 = vector.broadcast %384 : f32 to vector<4x32xf32>
    %413 = arith.mulf %412, %411 : vector<4x32xf32>
    %414 = arith.addf %388, %413 : vector<4x32xf32>
    %cst_152 = arith.constant 0.000000e+00 : f32
    %415 = vector.broadcast %cst_152 : f32 to vector<4x32xf32>
    %416 = arith.maximumf %414, %415 : vector<4x32xf32>
    %417 = arith.truncf %416 : vector<4x32xf32> to vector<4x32xbf16>
    %cst_153 = arith.constant dense<0.000000e+00> : vector<4x32xf32>
    %418 = tpu.matmul %417, %3, %cst_153 {dimension_numbers = #tpu.dot_dimension_numbers<[1], [0], [0], [1], [0, 0, 1, 1], [], []>} : vector<4x32xbf16>, vector<32x32xbf16>, vector<4x32xf32> -> vector<4x32xf32>
    %419 = arith.addf %418, %20 : vector<4x32xf32>
    %cst_154 = arith.constant 0.000000e+00 : f32
    %420 = vector.broadcast %cst_154 : f32 to vector<4x32xf32>
    %421 = arith.maximumf %419, %420 : vector<4x32xf32>
    %422 = arith.truncf %421 : vector<4x32xf32> to vector<4x32xbf16>
    %cst_155 = arith.constant dense<0.000000e+00> : vector<4x32xf32>
    %423 = tpu.matmul %422, %5, %cst_155 {dimension_numbers = #tpu.dot_dimension_numbers<[1], [0], [0], [1], [0, 0, 1, 1], [], []>} : vector<4x32xbf16>, vector<32x32xbf16>, vector<4x32xf32> -> vector<4x32xf32>
    %424 = arith.addf %423, %26 : vector<4x32xf32>
    %425 = vector.broadcast %383 : f32 to vector<4x32xf32>
    %426 = arith.mulf %425, %424 : vector<4x32xf32>
    %427 = arith.addf %388, %426 : vector<4x32xf32>
    %cst_156 = arith.constant 0.000000e+00 : f32
    %428 = vector.broadcast %cst_156 : f32 to vector<4x32xf32>
    %429 = arith.maximumf %427, %428 : vector<4x32xf32>
    %430 = arith.truncf %429 : vector<4x32xf32> to vector<4x32xbf16>
    %cst_157 = arith.constant dense<0.000000e+00> : vector<4x32xf32>
    %431 = tpu.matmul %430, %3, %cst_157 {dimension_numbers = #tpu.dot_dimension_numbers<[1], [0], [0], [1], [0, 0, 1, 1], [], []>} : vector<4x32xbf16>, vector<32x32xbf16>, vector<4x32xf32> -> vector<4x32xf32>
    %432 = arith.addf %431, %20 : vector<4x32xf32>
    %cst_158 = arith.constant 0.000000e+00 : f32
    %433 = vector.broadcast %cst_158 : f32 to vector<4x32xf32>
    %434 = arith.maximumf %432, %433 : vector<4x32xf32>
    %435 = arith.addf %408, %421 : vector<4x32xf32>
    %cst_159 = arith.constant 2.000000e+00 : f32
    %436 = vector.broadcast %cst_159 : f32 to vector<4x32xf32>
    %437 = arith.mulf %436, %435 : vector<4x32xf32>
    %438 = arith.addf %395, %437 : vector<4x32xf32>
    %439 = arith.addf %438, %434 : vector<4x32xf32>
    %440 = arith.truncf %439 : vector<4x32xf32> to vector<4x32xbf16>
    %cst_160 = arith.constant dense<0.000000e+00> : vector<4x32xf32>
    %441 = tpu.matmul %440, %4, %cst_160 {dimension_numbers = #tpu.dot_dimension_numbers<[1], [0], [0], [1], [0, 0, 1, 1], [], []>} : vector<4x32xbf16>, vector<32x32xbf16>, vector<4x32xf32> -> vector<4x32xf32>
    %442 = vector.broadcast %385 : f32 to vector<4x32xf32>
    %443 = arith.mulf %442, %441 : vector<4x32xf32>
    %444 = arith.addf %380, %443 : vector<4x32xf32>
    %445 = vector.broadcast %383 : f32 to vector<4x32xf32>
    %446 = arith.mulf %445, %23 : vector<4x32xf32>
    %447 = arith.addf %444, %446 : vector<4x32xf32>
    %448 = arith.truncf %447 : vector<4x32xf32> to vector<4x32xbf16>
    %cst_161 = arith.constant dense<0.000000e+00> : vector<4x32xf32>
    %449 = tpu.matmul %448, %2, %cst_161 {dimension_numbers = #tpu.dot_dimension_numbers<[1], [0], [0], [1], [0, 0, 1, 1], [], []>} : vector<4x32xbf16>, vector<32x32xbf16>, vector<4x32xf32> -> vector<4x32xf32>
    %450 = arith.addf %449, %17 : vector<4x32xf32>
    %cst_162 = arith.constant 0.000000e+00 : f32
    %451 = vector.broadcast %cst_162 : f32 to vector<4x32xf32>
    %452 = arith.maximumf %450, %451 : vector<4x32xf32>
    %453 = arith.truncf %452 : vector<4x32xf32> to vector<4x32xbf16>
    %cst_163 = arith.constant dense<0.000000e+00> : vector<4x32xf32>
    %454 = tpu.matmul %453, %3, %cst_163 {dimension_numbers = #tpu.dot_dimension_numbers<[1], [0], [0], [1], [0, 0, 1, 1], [], []>} : vector<4x32xbf16>, vector<32x32xbf16>, vector<4x32xf32> -> vector<4x32xf32>
    %455 = arith.addf %454, %20 : vector<4x32xf32>
    %cst_164 = arith.constant 0.000000e+00 : f32
    %456 = vector.broadcast %cst_164 : f32 to vector<4x32xf32>
    %457 = arith.maximumf %455, %456 : vector<4x32xf32>
    %458 = arith.truncf %457 : vector<4x32xf32> to vector<4x32xbf16>
    %cst_165 = arith.constant dense<0.000000e+00> : vector<4x32xf32>
    %459 = tpu.matmul %458, %5, %cst_165 {dimension_numbers = #tpu.dot_dimension_numbers<[1], [0], [0], [1], [0, 0, 1, 1], [], []>} : vector<4x32xbf16>, vector<32x32xbf16>, vector<4x32xf32> -> vector<4x32xf32>
    %460 = arith.addf %459, %26 : vector<4x32xf32>
    %461 = vector.broadcast %384 : f32 to vector<4x32xf32>
    %462 = arith.mulf %461, %460 : vector<4x32xf32>
    %463 = arith.addf %450, %462 : vector<4x32xf32>
    %cst_166 = arith.constant 0.000000e+00 : f32
    %464 = vector.broadcast %cst_166 : f32 to vector<4x32xf32>
    %465 = arith.maximumf %463, %464 : vector<4x32xf32>
    %466 = arith.truncf %465 : vector<4x32xf32> to vector<4x32xbf16>
    %cst_167 = arith.constant dense<0.000000e+00> : vector<4x32xf32>
    %467 = tpu.matmul %466, %3, %cst_167 {dimension_numbers = #tpu.dot_dimension_numbers<[1], [0], [0], [1], [0, 0, 1, 1], [], []>} : vector<4x32xbf16>, vector<32x32xbf16>, vector<4x32xf32> -> vector<4x32xf32>
    %468 = arith.addf %467, %20 : vector<4x32xf32>
    %cst_168 = arith.constant 0.000000e+00 : f32
    %469 = vector.broadcast %cst_168 : f32 to vector<4x32xf32>
    %470 = arith.maximumf %468, %469 : vector<4x32xf32>
    %471 = arith.truncf %470 : vector<4x32xf32> to vector<4x32xbf16>
    %cst_169 = arith.constant dense<0.000000e+00> : vector<4x32xf32>
    %472 = tpu.matmul %471, %5, %cst_169 {dimension_numbers = #tpu.dot_dimension_numbers<[1], [0], [0], [1], [0, 0, 1, 1], [], []>} : vector<4x32xbf16>, vector<32x32xbf16>, vector<4x32xf32> -> vector<4x32xf32>
    %473 = arith.addf %472, %26 : vector<4x32xf32>
    %474 = vector.broadcast %384 : f32 to vector<4x32xf32>
    %475 = arith.mulf %474, %473 : vector<4x32xf32>
    %476 = arith.addf %450, %475 : vector<4x32xf32>
    %cst_170 = arith.constant 0.000000e+00 : f32
    %477 = vector.broadcast %cst_170 : f32 to vector<4x32xf32>
    %478 = arith.maximumf %476, %477 : vector<4x32xf32>
    %479 = arith.truncf %478 : vector<4x32xf32> to vector<4x32xbf16>
    %cst_171 = arith.constant dense<0.000000e+00> : vector<4x32xf32>
    %480 = tpu.matmul %479, %3, %cst_171 {dimension_numbers = #tpu.dot_dimension_numbers<[1], [0], [0], [1], [0, 0, 1, 1], [], []>} : vector<4x32xbf16>, vector<32x32xbf16>, vector<4x32xf32> -> vector<4x32xf32>
    %481 = arith.addf %480, %20 : vector<4x32xf32>
    %cst_172 = arith.constant 0.000000e+00 : f32
    %482 = vector.broadcast %cst_172 : f32 to vector<4x32xf32>
    %483 = arith.maximumf %481, %482 : vector<4x32xf32>
    %484 = arith.truncf %483 : vector<4x32xf32> to vector<4x32xbf16>
    %cst_173 = arith.constant dense<0.000000e+00> : vector<4x32xf32>
    %485 = tpu.matmul %484, %5, %cst_173 {dimension_numbers = #tpu.dot_dimension_numbers<[1], [0], [0], [1], [0, 0, 1, 1], [], []>} : vector<4x32xbf16>, vector<32x32xbf16>, vector<4x32xf32> -> vector<4x32xf32>
    %486 = arith.addf %485, %26 : vector<4x32xf32>
    %487 = vector.broadcast %383 : f32 to vector<4x32xf32>
    %488 = arith.mulf %487, %486 : vector<4x32xf32>
    %489 = arith.addf %450, %488 : vector<4x32xf32>
    %cst_174 = arith.constant 0.000000e+00 : f32
    %490 = vector.broadcast %cst_174 : f32 to vector<4x32xf32>
    %491 = arith.maximumf %489, %490 : vector<4x32xf32>
    %492 = arith.truncf %491 : vector<4x32xf32> to vector<4x32xbf16>
    %cst_175 = arith.constant dense<0.000000e+00> : vector<4x32xf32>
    %493 = tpu.matmul %492, %3, %cst_175 {dimension_numbers = #tpu.dot_dimension_numbers<[1], [0], [0], [1], [0, 0, 1, 1], [], []>} : vector<4x32xbf16>, vector<32x32xbf16>, vector<4x32xf32> -> vector<4x32xf32>
    %494 = arith.addf %493, %20 : vector<4x32xf32>
    %cst_176 = arith.constant 0.000000e+00 : f32
    %495 = vector.broadcast %cst_176 : f32 to vector<4x32xf32>
    %496 = arith.maximumf %494, %495 : vector<4x32xf32>
    %497 = arith.addf %470, %483 : vector<4x32xf32>
    %cst_177 = arith.constant 2.000000e+00 : f32
    %498 = vector.broadcast %cst_177 : f32 to vector<4x32xf32>
    %499 = arith.mulf %498, %497 : vector<4x32xf32>
    %500 = arith.addf %457, %499 : vector<4x32xf32>
    %501 = arith.addf %500, %496 : vector<4x32xf32>
    %502 = arith.truncf %501 : vector<4x32xf32> to vector<4x32xbf16>
    %cst_178 = arith.constant dense<0.000000e+00> : vector<4x32xf32>
    %503 = tpu.matmul %502, %4, %cst_178 {dimension_numbers = #tpu.dot_dimension_numbers<[1], [0], [0], [1], [0, 0, 1, 1], [], []>} : vector<4x32xbf16>, vector<32x32xbf16>, vector<4x32xf32> -> vector<4x32xf32>
    %504 = vector.broadcast %385 : f32 to vector<4x32xf32>
    %505 = arith.mulf %504, %503 : vector<4x32xf32>
    %506 = arith.addf %447, %505 : vector<4x32xf32>
    %507 = vector.broadcast %383 : f32 to vector<4x32xf32>
    %508 = arith.mulf %507, %23 : vector<4x32xf32>
    %509 = arith.addf %506, %508 : vector<4x32xf32>
    %c12 = arith.constant 12 : index
    %c0_179 = arith.constant 0 : index
    %510 = vector.load %arg24[%c12, %c0_179] : memref<24x32xf32, #tpu.memory_space<vmem>>, vector<4x32xf32>
    %511 = tpu.concatenate %510, %509 in 1 : vector<4x32xf32>, vector<4x32xf32> -> vector<4x64xf32>
    %512 = arith.truncf %511 : vector<4x64xf32> to vector<4x64xbf16>
    %cst_180 = arith.constant dense<0.000000e+00> : vector<4x128xf32>
    %513 = tpu.matmul %512, %1, %cst_180 {dimension_numbers = #tpu.dot_dimension_numbers<[1], [0], [0], [1], [0, 0, 1, 1], [], []>} : vector<4x64xbf16>, vector<64x128xbf16>, vector<4x128xf32> -> vector<4x128xf32>
    %514 = arith.addf %513, %14 : vector<4x128xf32>
    %515 = vector.extract_strided_slice %514 {offsets = [0, 0], sizes = [4, 32], strides = [1, 1]} : vector<4x128xf32> to vector<4x32xf32>
    %516 = arith.negf %515 : vector<4x32xf32>
    %517 = math.exp %516 : vector<4x32xf32>
    %cst_181 = arith.constant 1.000000e+00 : f32
    %518 = vector.broadcast %cst_181 : f32 to vector<4x32xf32>
    %519 = arith.addf %518, %517 : vector<4x32xf32>
    %520 = arith.divf %518, %519 : vector<4x32xf32>
    %521 = vector.extract_strided_slice %514 {offsets = [0, 32], sizes = [4, 32], strides = [1, 1]} : vector<4x128xf32> to vector<4x32xf32>
    %522 = arith.negf %521 : vector<4x32xf32>
    %523 = math.exp %522 : vector<4x32xf32>
    %cst_182 = arith.constant 1.000000e+00 : f32
    %524 = vector.broadcast %cst_182 : f32 to vector<4x32xf32>
    %525 = arith.addf %524, %523 : vector<4x32xf32>
    %526 = arith.divf %524, %525 : vector<4x32xf32>
    %527 = vector.extract_strided_slice %514 {offsets = [0, 64], sizes = [4, 32], strides = [1, 1]} : vector<4x128xf32> to vector<4x32xf32>
    %528 = vector.extract_strided_slice %514 {offsets = [0, 96], sizes = [4, 32], strides = [1, 1]} : vector<4x128xf32> to vector<4x32xf32>
    %529 = arith.mulf %520, %528 : vector<4x32xf32>
    %530 = arith.addf %527, %529 : vector<4x32xf32>
    %531 = math.tanh %530 : vector<4x32xf32>
    %cst_183 = arith.constant 1.000000e+00 : f32
    %532 = vector.broadcast %cst_183 : f32 to vector<4x32xf32>
    %533 = arith.subf %532, %526 : vector<4x32xf32>
    %534 = arith.mulf %533, %531 : vector<4x32xf32>
    %535 = arith.mulf %526, %509 : vector<4x32xf32>
    %536 = arith.addf %534, %535 : vector<4x32xf32>
    %c12_184 = arith.constant 12 : index
    %c0_185 = arith.constant 0 : index
    %537 = vector.load %arg25[%c12_184, %c0_185] : memref<40x32xf32, #tpu.memory_space<vmem>>, vector<4x32xf32>
    tpu.vector_store %arg25[%c12_184, %c0_185], %536 {strides = array<i32>} : memref<40x32xf32, #tpu.memory_space<vmem>>, vector<4x32xf32>,
    %c4_186 = arith.constant 4 : index
    %538 = memref.load %arg2[%c4_186] : memref<10xf32, #tpu.memory_space<smem>>
    %cst_187 = arith.constant 5.000000e-01 : f32
    %539 = arith.mulf %538, %cst_187 : f32
    %cst_188 = arith.constant 5.000000e-01 : f32
    %540 = arith.mulf %cst_188, %539 : f32
    %cst_189 = arith.constant 0.166666672 : f32
    %541 = arith.mulf %539, %cst_189 : f32
    %542 = arith.truncf %536 : vector<4x32xf32> to vector<4x32xbf16>
    %cst_190 = arith.constant dense<0.000000e+00> : vector<4x32xf32>
    %543 = tpu.matmul %542, %2, %cst_190 {dimension_numbers = #tpu.dot_dimension_numbers<[1], [0], [0], [1], [0, 0, 1, 1], [], []>} : vector<4x32xbf16>, vector<32x32xbf16>, vector<4x32xf32> -> vector<4x32xf32>
    %544 = arith.addf %543, %17 : vector<4x32xf32>
    %cst_191 = arith.constant 0.000000e+00 : f32
    %545 = vector.broadcast %cst_191 : f32 to vector<4x32xf32>
    %546 = arith.maximumf %544, %545 : vector<4x32xf32>
    %547 = arith.truncf %546 : vector<4x32xf32> to vector<4x32xbf16>
    %cst_192 = arith.constant dense<0.000000e+00> : vector<4x32xf32>
    %548 = tpu.matmul %547, %3, %cst_192 {dimension_numbers = #tpu.dot_dimension_numbers<[1], [0], [0], [1], [0, 0, 1, 1], [], []>} : vector<4x32xbf16>, vector<32x32xbf16>, vector<4x32xf32> -> vector<4x32xf32>
    %549 = arith.addf %548, %20 : vector<4x32xf32>
    %cst_193 = arith.constant 0.000000e+00 : f32
    %550 = vector.broadcast %cst_193 : f32 to vector<4x32xf32>
    %551 = arith.maximumf %549, %550 : vector<4x32xf32>
    %552 = arith.truncf %551 : vector<4x32xf32> to vector<4x32xbf16>
    %cst_194 = arith.constant dense<0.000000e+00> : vector<4x32xf32>
    %553 = tpu.matmul %552, %5, %cst_194 {dimension_numbers = #tpu.dot_dimension_numbers<[1], [0], [0], [1], [0, 0, 1, 1], [], []>} : vector<4x32xbf16>, vector<32x32xbf16>, vector<4x32xf32> -> vector<4x32xf32>
    %554 = arith.addf %553, %26 : vector<4x32xf32>
    %555 = vector.broadcast %540 : f32 to vector<4x32xf32>
    %556 = arith.mulf %555, %554 : vector<4x32xf32>
    %557 = arith.addf %544, %556 : vector<4x32xf32>
    %cst_195 = arith.constant 0.000000e+00 : f32
    %558 = vector.broadcast %cst_195 : f32 to vector<4x32xf32>
    %559 = arith.maximumf %557, %558 : vector<4x32xf32>
    %560 = arith.truncf %559 : vector<4x32xf32> to vector<4x32xbf16>
    %cst_196 = arith.constant dense<0.000000e+00> : vector<4x32xf32>
    %561 = tpu.matmul %560, %3, %cst_196 {dimension_numbers = #tpu.dot_dimension_numbers<[1], [0], [0], [1], [0, 0, 1, 1], [], []>} : vector<4x32xbf16>, vector<32x32xbf16>, vector<4x32xf32> -> vector<4x32xf32>
    %562 = arith.addf %561, %20 : vector<4x32xf32>
    %cst_197 = arith.constant 0.000000e+00 : f32
    %563 = vector.broadcast %cst_197 : f32 to vector<4x32xf32>
    %564 = arith.maximumf %562, %563 : vector<4x32xf32>
    %565 = arith.truncf %564 : vector<4x32xf32> to vector<4x32xbf16>
    %cst_198 = arith.constant dense<0.000000e+00> : vector<4x32xf32>
    %566 = tpu.matmul %565, %5, %cst_198 {dimension_numbers = #tpu.dot_dimension_numbers<[1], [0], [0], [1], [0, 0, 1, 1], [], []>} : vector<4x32xbf16>, vector<32x32xbf16>, vector<4x32xf32> -> vector<4x32xf32>
    %567 = arith.addf %566, %26 : vector<4x32xf32>
    %568 = vector.broadcast %540 : f32 to vector<4x32xf32>
    %569 = arith.mulf %568, %567 : vector<4x32xf32>
    %570 = arith.addf %544, %569 : vector<4x32xf32>
    %cst_199 = arith.constant 0.000000e+00 : f32
    %571 = vector.broadcast %cst_199 : f32 to vector<4x32xf32>
    %572 = arith.maximumf %570, %571 : vector<4x32xf32>
    %573 = arith.truncf %572 : vector<4x32xf32> to vector<4x32xbf16>
    %cst_200 = arith.constant dense<0.000000e+00> : vector<4x32xf32>
    %574 = tpu.matmul %573, %3, %cst_200 {dimension_numbers = #tpu.dot_dimension_numbers<[1], [0], [0], [1], [0, 0, 1, 1], [], []>} : vector<4x32xbf16>, vector<32x32xbf16>, vector<4x32xf32> -> vector<4x32xf32>
    %575 = arith.addf %574, %20 : vector<4x32xf32>
    %cst_201 = arith.constant 0.000000e+00 : f32
    %576 = vector.broadcast %cst_201 : f32 to vector<4x32xf32>
    %577 = arith.maximumf %575, %576 : vector<4x32xf32>
    %578 = arith.truncf %577 : vector<4x32xf32> to vector<4x32xbf16>
    %cst_202 = arith.constant dense<0.000000e+00> : vector<4x32xf32>
    %579 = tpu.matmul %578, %5, %cst_202 {dimension_numbers = #tpu.dot_dimension_numbers<[1], [0], [0], [1], [0, 0, 1, 1], [], []>} : vector<4x32xbf16>, vector<32x32xbf16>, vector<4x32xf32> -> vector<4x32xf32>
    %580 = arith.addf %579, %26 : vector<4x32xf32>
    %581 = vector.broadcast %539 : f32 to vector<4x32xf32>
    %582 = arith.mulf %581, %580 : vector<4x32xf32>
    %583 = arith.addf %544, %582 : vector<4x32xf32>
    %cst_203 = arith.constant 0.000000e+00 : f32
    %584 = vector.broadcast %cst_203 : f32 to vector<4x32xf32>
    %585 = arith.maximumf %583, %584 : vector<4x32xf32>
    %586 = arith.truncf %585 : vector<4x32xf32> to vector<4x32xbf16>
    %cst_204 = arith.constant dense<0.000000e+00> : vector<4x32xf32>
    %587 = tpu.matmul %586, %3, %cst_204 {dimension_numbers = #tpu.dot_dimension_numbers<[1], [0], [0], [1], [0, 0, 1, 1], [], []>} : vector<4x32xbf16>, vector<32x32xbf16>, vector<4x32xf32> -> vector<4x32xf32>
    %588 = arith.addf %587, %20 : vector<4x32xf32>
    %cst_205 = arith.constant 0.000000e+00 : f32
    %589 = vector.broadcast %cst_205 : f32 to vector<4x32xf32>
    %590 = arith.maximumf %588, %589 : vector<4x32xf32>
    %591 = arith.addf %564, %577 : vector<4x32xf32>
    %cst_206 = arith.constant 2.000000e+00 : f32
    %592 = vector.broadcast %cst_206 : f32 to vector<4x32xf32>
    %593 = arith.mulf %592, %591 : vector<4x32xf32>
    %594 = arith.addf %551, %593 : vector<4x32xf32>
    %595 = arith.addf %594, %590 : vector<4x32xf32>
    %596 = arith.truncf %595 : vector<4x32xf32> to vector<4x32xbf16>
    %cst_207 = arith.constant dense<0.000000e+00> : vector<4x32xf32>
    %597 = tpu.matmul %596, %4, %cst_207 {dimension_numbers = #tpu.dot_dimension_numbers<[1], [0], [0], [1], [0, 0, 1, 1], [], []>} : vector<4x32xbf16>, vector<32x32xbf16>, vector<4x32xf32> -> vector<4x32xf32>
    %598 = vector.broadcast %541 : f32 to vector<4x32xf32>
    %599 = arith.mulf %598, %597 : vector<4x32xf32>
    %600 = arith.addf %536, %599 : vector<4x32xf32>
    %601 = vector.broadcast %539 : f32 to vector<4x32xf32>
    %602 = arith.mulf %601, %23 : vector<4x32xf32>
    %603 = arith.addf %600, %602 : vector<4x32xf32>
    %604 = arith.truncf %603 : vector<4x32xf32> to vector<4x32xbf16>
    %cst_208 = arith.constant dense<0.000000e+00> : vector<4x32xf32>
    %605 = tpu.matmul %604, %2, %cst_208 {dimension_numbers = #tpu.dot_dimension_numbers<[1], [0], [0], [1], [0, 0, 1, 1], [], []>} : vector<4x32xbf16>, vector<32x32xbf16>, vector<4x32xf32> -> vector<4x32xf32>
    %606 = arith.addf %605, %17 : vector<4x32xf32>
    %cst_209 = arith.constant 0.000000e+00 : f32
    %607 = vector.broadcast %cst_209 : f32 to vector<4x32xf32>
    %608 = arith.maximumf %606, %607 : vector<4x32xf32>
    %609 = arith.truncf %608 : vector<4x32xf32> to vector<4x32xbf16>
    %cst_210 = arith.constant dense<0.000000e+00> : vector<4x32xf32>
    %610 = tpu.matmul %609, %3, %cst_210 {dimension_numbers = #tpu.dot_dimension_numbers<[1], [0], [0], [1], [0, 0, 1, 1], [], []>} : vector<4x32xbf16>, vector<32x32xbf16>, vector<4x32xf32> -> vector<4x32xf32>
    %611 = arith.addf %610, %20 : vector<4x32xf32>
    %cst_211 = arith.constant 0.000000e+00 : f32
    %612 = vector.broadcast %cst_211 : f32 to vector<4x32xf32>
    %613 = arith.maximumf %611, %612 : vector<4x32xf32>
    %614 = arith.truncf %613 : vector<4x32xf32> to vector<4x32xbf16>
    %cst_212 = arith.constant dense<0.000000e+00> : vector<4x32xf32>
    %615 = tpu.matmul %614, %5, %cst_212 {dimension_numbers = #tpu.dot_dimension_numbers<[1], [0], [0], [1], [0, 0, 1, 1], [], []>} : vector<4x32xbf16>, vector<32x32xbf16>, vector<4x32xf32> -> vector<4x32xf32>
    %616 = arith.addf %615, %26 : vector<4x32xf32>
    %617 = vector.broadcast %540 : f32 to vector<4x32xf32>
    %618 = arith.mulf %617, %616 : vector<4x32xf32>
    %619 = arith.addf %606, %618 : vector<4x32xf32>
    %cst_213 = arith.constant 0.000000e+00 : f32
    %620 = vector.broadcast %cst_213 : f32 to vector<4x32xf32>
    %621 = arith.maximumf %619, %620 : vector<4x32xf32>
    %622 = arith.truncf %621 : vector<4x32xf32> to vector<4x32xbf16>
    %cst_214 = arith.constant dense<0.000000e+00> : vector<4x32xf32>
    %623 = tpu.matmul %622, %3, %cst_214 {dimension_numbers = #tpu.dot_dimension_numbers<[1], [0], [0], [1], [0, 0, 1, 1], [], []>} : vector<4x32xbf16>, vector<32x32xbf16>, vector<4x32xf32> -> vector<4x32xf32>
    %624 = arith.addf %623, %20 : vector<4x32xf32>
    %cst_215 = arith.constant 0.000000e+00 : f32
    %625 = vector.broadcast %cst_215 : f32 to vector<4x32xf32>
    %626 = arith.maximumf %624, %625 : vector<4x32xf32>
    %627 = arith.truncf %626 : vector<4x32xf32> to vector<4x32xbf16>
    %cst_216 = arith.constant dense<0.000000e+00> : vector<4x32xf32>
    %628 = tpu.matmul %627, %5, %cst_216 {dimension_numbers = #tpu.dot_dimension_numbers<[1], [0], [0], [1], [0, 0, 1, 1], [], []>} : vector<4x32xbf16>, vector<32x32xbf16>, vector<4x32xf32> -> vector<4x32xf32>
    %629 = arith.addf %628, %26 : vector<4x32xf32>
    %630 = vector.broadcast %540 : f32 to vector<4x32xf32>
    %631 = arith.mulf %630, %629 : vector<4x32xf32>
    %632 = arith.addf %606, %631 : vector<4x32xf32>
    %cst_217 = arith.constant 0.000000e+00 : f32
    %633 = vector.broadcast %cst_217 : f32 to vector<4x32xf32>
    %634 = arith.maximumf %632, %633 : vector<4x32xf32>
    %635 = arith.truncf %634 : vector<4x32xf32> to vector<4x32xbf16>
    %cst_218 = arith.constant dense<0.000000e+00> : vector<4x32xf32>
    %636 = tpu.matmul %635, %3, %cst_218 {dimension_numbers = #tpu.dot_dimension_numbers<[1], [0], [0], [1], [0, 0, 1, 1], [], []>} : vector<4x32xbf16>, vector<32x32xbf16>, vector<4x32xf32> -> vector<4x32xf32>
    %637 = arith.addf %636, %20 : vector<4x32xf32>
    %cst_219 = arith.constant 0.000000e+00 : f32
    %638 = vector.broadcast %cst_219 : f32 to vector<4x32xf32>
    %639 = arith.maximumf %637, %638 : vector<4x32xf32>
    %640 = arith.truncf %639 : vector<4x32xf32> to vector<4x32xbf16>
    %cst_220 = arith.constant dense<0.000000e+00> : vector<4x32xf32>
    %641 = tpu.matmul %640, %5, %cst_220 {dimension_numbers = #tpu.dot_dimension_numbers<[1], [0], [0], [1], [0, 0, 1, 1], [], []>} : vector<4x32xbf16>, vector<32x32xbf16>, vector<4x32xf32> -> vector<4x32xf32>
    %642 = arith.addf %641, %26 : vector<4x32xf32>
    %643 = vector.broadcast %539 : f32 to vector<4x32xf32>
    %644 = arith.mulf %643, %642 : vector<4x32xf32>
    %645 = arith.addf %606, %644 : vector<4x32xf32>
    %cst_221 = arith.constant 0.000000e+00 : f32
    %646 = vector.broadcast %cst_221 : f32 to vector<4x32xf32>
    %647 = arith.maximumf %645, %646 : vector<4x32xf32>
    %648 = arith.truncf %647 : vector<4x32xf32> to vector<4x32xbf16>
    %cst_222 = arith.constant dense<0.000000e+00> : vector<4x32xf32>
    %649 = tpu.matmul %648, %3, %cst_222 {dimension_numbers = #tpu.dot_dimension_numbers<[1], [0], [0], [1], [0, 0, 1, 1], [], []>} : vector<4x32xbf16>, vector<32x32xbf16>, vector<4x32xf32> -> vector<4x32xf32>
    %650 = arith.addf %649, %20 : vector<4x32xf32>
    %cst_223 = arith.constant 0.000000e+00 : f32
    %651 = vector.broadcast %cst_223 : f32 to vector<4x32xf32>
    %652 = arith.maximumf %650, %651 : vector<4x32xf32>
    %653 = arith.addf %626, %639 : vector<4x32xf32>
    %cst_224 = arith.constant 2.000000e+00 : f32
    %654 = vector.broadcast %cst_224 : f32 to vector<4x32xf32>
    %655 = arith.mulf %654, %653 : vector<4x32xf32>
    %656 = arith.addf %613, %655 : vector<4x32xf32>
    %657 = arith.addf %656, %652 : vector<4x32xf32>
    %658 = arith.truncf %657 : vector<4x32xf32> to vector<4x32xbf16>
    %cst_225 = arith.constant dense<0.000000e+00> : vector<4x32xf32>
    %659 = tpu.matmul %658, %4, %cst_225 {dimension_numbers = #tpu.dot_dimension_numbers<[1], [0], [0], [1], [0, 0, 1, 1], [], []>} : vector<4x32xbf16>, vector<32x32xbf16>, vector<4x32xf32> -> vector<4x32xf32>
    %660 = vector.broadcast %541 : f32 to vector<4x32xf32>
    %661 = arith.mulf %660, %659 : vector<4x32xf32>
    %662 = arith.addf %603, %661 : vector<4x32xf32>
    %663 = vector.broadcast %539 : f32 to vector<4x32xf32>
    %664 = arith.mulf %663, %23 : vector<4x32xf32>
    %665 = arith.addf %662, %664 : vector<4x32xf32>
    %c16 = arith.constant 16 : index
    %c0_226 = arith.constant 0 : index
    %666 = vector.load %arg24[%c16, %c0_226] : memref<24x32xf32, #tpu.memory_space<vmem>>, vector<4x32xf32>
    %667 = tpu.concatenate %666, %665 in 1 : vector<4x32xf32>, vector<4x32xf32> -> vector<4x64xf32>
    %668 = arith.truncf %667 : vector<4x64xf32> to vector<4x64xbf16>
    %cst_227 = arith.constant dense<0.000000e+00> : vector<4x128xf32>
    %669 = tpu.matmul %668, %1, %cst_227 {dimension_numbers = #tpu.dot_dimension_numbers<[1], [0], [0], [1], [0, 0, 1, 1], [], []>} : vector<4x64xbf16>, vector<64x128xbf16>, vector<4x128xf32> -> vector<4x128xf32>
    %670 = arith.addf %669, %14 : vector<4x128xf32>
    %671 = vector.extract_strided_slice %670 {offsets = [0, 0], sizes = [4, 32], strides = [1, 1]} : vector<4x128xf32> to vector<4x32xf32>
    %672 = arith.negf %671 : vector<4x32xf32>
    %673 = math.exp %672 : vector<4x32xf32>
    %cst_228 = arith.constant 1.000000e+00 : f32
    %674 = vector.broadcast %cst_228 : f32 to vector<4x32xf32>
    %675 = arith.addf %674, %673 : vector<4x32xf32>
    %676 = arith.divf %674, %675 : vector<4x32xf32>
    %677 = vector.extract_strided_slice %670 {offsets = [0, 32], sizes = [4, 32], strides = [1, 1]} : vector<4x128xf32> to vector<4x32xf32>
    %678 = arith.negf %677 : vector<4x32xf32>
    %679 = math.exp %678 : vector<4x32xf32>
    %cst_229 = arith.constant 1.000000e+00 : f32
    %680 = vector.broadcast %cst_229 : f32 to vector<4x32xf32>
    %681 = arith.addf %680, %679 : vector<4x32xf32>
    %682 = arith.divf %680, %681 : vector<4x32xf32>
    %683 = vector.extract_strided_slice %670 {offsets = [0, 64], sizes = [4, 32], strides = [1, 1]} : vector<4x128xf32> to vector<4x32xf32>
    %684 = vector.extract_strided_slice %670 {offsets = [0, 96], sizes = [4, 32], strides = [1, 1]} : vector<4x128xf32> to vector<4x32xf32>
    %685 = arith.mulf %676, %684 : vector<4x32xf32>
    %686 = arith.addf %683, %685 : vector<4x32xf32>
    %687 = math.tanh %686 : vector<4x32xf32>
    %cst_230 = arith.constant 1.000000e+00 : f32
    %688 = vector.broadcast %cst_230 : f32 to vector<4x32xf32>
    %689 = arith.subf %688, %682 : vector<4x32xf32>
    %690 = arith.mulf %689, %687 : vector<4x32xf32>
    %691 = arith.mulf %682, %665 : vector<4x32xf32>
    %692 = arith.addf %690, %691 : vector<4x32xf32>
    %c16_231 = arith.constant 16 : index
    %c0_232 = arith.constant 0 : index
    %693 = vector.load %arg25[%c16_231, %c0_232] : memref<40x32xf32, #tpu.memory_space<vmem>>, vector<4x32xf32>
    tpu.vector_store %arg25[%c16_231, %c0_232], %692 {strides = array<i32>} : memref<40x32xf32, #tpu.memory_space<vmem>>, vector<4x32xf32>,
    %c5 = arith.constant 5 : index
    %694 = memref.load %arg2[%c5] : memref<10xf32, #tpu.memory_space<smem>>
    %cst_233 = arith.constant 5.000000e-01 : f32
    %695 = arith.mulf %694, %cst_233 : f32
    %cst_234 = arith.constant 5.000000e-01 : f32
    %696 = arith.mulf %cst_234, %695 : f32
    %cst_235 = arith.constant 0.166666672 : f32
    %697 = arith.mulf %695, %cst_235 : f32
    %698 = arith.truncf %692 : vector<4x32xf32> to vector<4x32xbf16>
    %cst_236 = arith.constant dense<0.000000e+00> : vector<4x32xf32>
    %699 = tpu.matmul %698, %2, %cst_236 {dimension_numbers = #tpu.dot_dimension_numbers<[1], [0], [0], [1], [0, 0, 1, 1], [], []>} : vector<4x32xbf16>, vector<32x32xbf16>, vector<4x32xf32> -> vector<4x32xf32>
    %700 = arith.addf %699, %17 : vector<4x32xf32>
    %cst_237 = arith.constant 0.000000e+00 : f32
    %701 = vector.broadcast %cst_237 : f32 to vector<4x32xf32>
    %702 = arith.maximumf %700, %701 : vector<4x32xf32>
    %703 = arith.truncf %702 : vector<4x32xf32> to vector<4x32xbf16>
    %cst_238 = arith.constant dense<0.000000e+00> : vector<4x32xf32>
    %704 = tpu.matmul %703, %3, %cst_238 {dimension_numbers = #tpu.dot_dimension_numbers<[1], [0], [0], [1], [0, 0, 1, 1], [], []>} : vector<4x32xbf16>, vector<32x32xbf16>, vector<4x32xf32> -> vector<4x32xf32>
    %705 = arith.addf %704, %20 : vector<4x32xf32>
    %cst_239 = arith.constant 0.000000e+00 : f32
    %706 = vector.broadcast %cst_239 : f32 to vector<4x32xf32>
    %707 = arith.maximumf %705, %706 : vector<4x32xf32>
    %708 = arith.truncf %707 : vector<4x32xf32> to vector<4x32xbf16>
    %cst_240 = arith.constant dense<0.000000e+00> : vector<4x32xf32>
    %709 = tpu.matmul %708, %5, %cst_240 {dimension_numbers = #tpu.dot_dimension_numbers<[1], [0], [0], [1], [0, 0, 1, 1], [], []>} : vector<4x32xbf16>, vector<32x32xbf16>, vector<4x32xf32> -> vector<4x32xf32>
    %710 = arith.addf %709, %26 : vector<4x32xf32>
    %711 = vector.broadcast %696 : f32 to vector<4x32xf32>
    %712 = arith.mulf %711, %710 : vector<4x32xf32>
    %713 = arith.addf %700, %712 : vector<4x32xf32>
    %cst_241 = arith.constant 0.000000e+00 : f32
    %714 = vector.broadcast %cst_241 : f32 to vector<4x32xf32>
    %715 = arith.maximumf %713, %714 : vector<4x32xf32>
    %716 = arith.truncf %715 : vector<4x32xf32> to vector<4x32xbf16>
    %cst_242 = arith.constant dense<0.000000e+00> : vector<4x32xf32>
    %717 = tpu.matmul %716, %3, %cst_242 {dimension_numbers = #tpu.dot_dimension_numbers<[1], [0], [0], [1], [0, 0, 1, 1], [], []>} : vector<4x32xbf16>, vector<32x32xbf16>, vector<4x32xf32> -> vector<4x32xf32>
    %718 = arith.addf %717, %20 : vector<4x32xf32>
    %cst_243 = arith.constant 0.000000e+00 : f32
    %719 = vector.broadcast %cst_243 : f32 to vector<4x32xf32>
    %720 = arith.maximumf %718, %719 : vector<4x32xf32>
    %721 = arith.truncf %720 : vector<4x32xf32> to vector<4x32xbf16>
    %cst_244 = arith.constant dense<0.000000e+00> : vector<4x32xf32>
    %722 = tpu.matmul %721, %5, %cst_244 {dimension_numbers = #tpu.dot_dimension_numbers<[1], [0], [0], [1], [0, 0, 1, 1], [], []>} : vector<4x32xbf16>, vector<32x32xbf16>, vector<4x32xf32> -> vector<4x32xf32>
    %723 = arith.addf %722, %26 : vector<4x32xf32>
    %724 = vector.broadcast %696 : f32 to vector<4x32xf32>
    %725 = arith.mulf %724, %723 : vector<4x32xf32>
    %726 = arith.addf %700, %725 : vector<4x32xf32>
    %cst_245 = arith.constant 0.000000e+00 : f32
    %727 = vector.broadcast %cst_245 : f32 to vector<4x32xf32>
    %728 = arith.maximumf %726, %727 : vector<4x32xf32>
    %729 = arith.truncf %728 : vector<4x32xf32> to vector<4x32xbf16>
    %cst_246 = arith.constant dense<0.000000e+00> : vector<4x32xf32>
    %730 = tpu.matmul %729, %3, %cst_246 {dimension_numbers = #tpu.dot_dimension_numbers<[1], [0], [0], [1], [0, 0, 1, 1], [], []>} : vector<4x32xbf16>, vector<32x32xbf16>, vector<4x32xf32> -> vector<4x32xf32>
    %731 = arith.addf %730, %20 : vector<4x32xf32>
    %cst_247 = arith.constant 0.000000e+00 : f32
    %732 = vector.broadcast %cst_247 : f32 to vector<4x32xf32>
    %733 = arith.maximumf %731, %732 : vector<4x32xf32>
    %734 = arith.truncf %733 : vector<4x32xf32> to vector<4x32xbf16>
    %cst_248 = arith.constant dense<0.000000e+00> : vector<4x32xf32>
    %735 = tpu.matmul %734, %5, %cst_248 {dimension_numbers = #tpu.dot_dimension_numbers<[1], [0], [0], [1], [0, 0, 1, 1], [], []>} : vector<4x32xbf16>, vector<32x32xbf16>, vector<4x32xf32> -> vector<4x32xf32>
    %736 = arith.addf %735, %26 : vector<4x32xf32>
    %737 = vector.broadcast %695 : f32 to vector<4x32xf32>
    %738 = arith.mulf %737, %736 : vector<4x32xf32>
    %739 = arith.addf %700, %738 : vector<4x32xf32>
    %cst_249 = arith.constant 0.000000e+00 : f32
    %740 = vector.broadcast %cst_249 : f32 to vector<4x32xf32>
    %741 = arith.maximumf %739, %740 : vector<4x32xf32>
    %742 = arith.truncf %741 : vector<4x32xf32> to vector<4x32xbf16>
    %cst_250 = arith.constant dense<0.000000e+00> : vector<4x32xf32>
    %743 = tpu.matmul %742, %3, %cst_250 {dimension_numbers = #tpu.dot_dimension_numbers<[1], [0], [0], [1], [0, 0, 1, 1], [], []>} : vector<4x32xbf16>, vector<32x32xbf16>, vector<4x32xf32> -> vector<4x32xf32>
    %744 = arith.addf %743, %20 : vector<4x32xf32>
    %cst_251 = arith.constant 0.000000e+00 : f32
    %745 = vector.broadcast %cst_251 : f32 to vector<4x32xf32>
    %746 = arith.maximumf %744, %745 : vector<4x32xf32>
    %747 = arith.addf %720, %733 : vector<4x32xf32>
    %cst_252 = arith.constant 2.000000e+00 : f32
    %748 = vector.broadcast %cst_252 : f32 to vector<4x32xf32>
    %749 = arith.mulf %748, %747 : vector<4x32xf32>
    %750 = arith.addf %707, %749 : vector<4x32xf32>
    %751 = arith.addf %750, %746 : vector<4x32xf32>
    %752 = arith.truncf %751 : vector<4x32xf32> to vector<4x32xbf16>
    %cst_253 = arith.constant dense<0.000000e+00> : vector<4x32xf32>
    %753 = tpu.matmul %752, %4, %cst_253 {dimension_numbers = #tpu.dot_dimension_numbers<[1], [0], [0], [1], [0, 0, 1, 1], [], []>} : vector<4x32xbf16>, vector<32x32xbf16>, vector<4x32xf32> -> vector<4x32xf32>
    %754 = vector.broadcast %697 : f32 to vector<4x32xf32>
    %755 = arith.mulf %754, %753 : vector<4x32xf32>
    %756 = arith.addf %692, %755 : vector<4x32xf32>
    %757 = vector.broadcast %695 : f32 to vector<4x32xf32>
    %758 = arith.mulf %757, %23 : vector<4x32xf32>
    %759 = arith.addf %756, %758 : vector<4x32xf32>
    %760 = arith.truncf %759 : vector<4x32xf32> to vector<4x32xbf16>
    %cst_254 = arith.constant dense<0.000000e+00> : vector<4x32xf32>
    %761 = tpu.matmul %760, %2, %cst_254 {dimension_numbers = #tpu.dot_dimension_numbers<[1], [0], [0], [1], [0, 0, 1, 1], [], []>} : vector<4x32xbf16>, vector<32x32xbf16>, vector<4x32xf32> -> vector<4x32xf32>
    %762 = arith.addf %761, %17 : vector<4x32xf32>
    %cst_255 = arith.constant 0.000000e+00 : f32
    %763 = vector.broadcast %cst_255 : f32 to vector<4x32xf32>
    %764 = arith.maximumf %762, %763 : vector<4x32xf32>
    %765 = arith.truncf %764 : vector<4x32xf32> to vector<4x32xbf16>
    %cst_256 = arith.constant dense<0.000000e+00> : vector<4x32xf32>
    %766 = tpu.matmul %765, %3, %cst_256 {dimension_numbers = #tpu.dot_dimension_numbers<[1], [0], [0], [1], [0, 0, 1, 1], [], []>} : vector<4x32xbf16>, vector<32x32xbf16>, vector<4x32xf32> -> vector<4x32xf32>
    %767 = arith.addf %766, %20 : vector<4x32xf32>
    %cst_257 = arith.constant 0.000000e+00 : f32
    %768 = vector.broadcast %cst_257 : f32 to vector<4x32xf32>
    %769 = arith.maximumf %767, %768 : vector<4x32xf32>
    %770 = arith.truncf %769 : vector<4x32xf32> to vector<4x32xbf16>
    %cst_258 = arith.constant dense<0.000000e+00> : vector<4x32xf32>
    %771 = tpu.matmul %770, %5, %cst_258 {dimension_numbers = #tpu.dot_dimension_numbers<[1], [0], [0], [1], [0, 0, 1, 1], [], []>} : vector<4x32xbf16>, vector<32x32xbf16>, vector<4x32xf32> -> vector<4x32xf32>
    %772 = arith.addf %771, %26 : vector<4x32xf32>
    %773 = vector.broadcast %696 : f32 to vector<4x32xf32>
    %774 = arith.mulf %773, %772 : vector<4x32xf32>
    %775 = arith.addf %762, %774 : vector<4x32xf32>
    %cst_259 = arith.constant 0.000000e+00 : f32
    %776 = vector.broadcast %cst_259 : f32 to vector<4x32xf32>
    %777 = arith.maximumf %775, %776 : vector<4x32xf32>
    %778 = arith.truncf %777 : vector<4x32xf32> to vector<4x32xbf16>
    %cst_260 = arith.constant dense<0.000000e+00> : vector<4x32xf32>
    %779 = tpu.matmul %778, %3, %cst_260 {dimension_numbers = #tpu.dot_dimension_numbers<[1], [0], [0], [1], [0, 0, 1, 1], [], []>} : vector<4x32xbf16>, vector<32x32xbf16>, vector<4x32xf32> -> vector<4x32xf32>
    %780 = arith.addf %779, %20 : vector<4x32xf32>
    %cst_261 = arith.constant 0.000000e+00 : f32
    %781 = vector.broadcast %cst_261 : f32 to vector<4x32xf32>
    %782 = arith.maximumf %780, %781 : vector<4x32xf32>
    %783 = arith.truncf %782 : vector<4x32xf32> to vector<4x32xbf16>
    %cst_262 = arith.constant dense<0.000000e+00> : vector<4x32xf32>
    %784 = tpu.matmul %783, %5, %cst_262 {dimension_numbers = #tpu.dot_dimension_numbers<[1], [0], [0], [1], [0, 0, 1, 1], [], []>} : vector<4x32xbf16>, vector<32x32xbf16>, vector<4x32xf32> -> vector<4x32xf32>
    %785 = arith.addf %784, %26 : vector<4x32xf32>
    %786 = vector.broadcast %696 : f32 to vector<4x32xf32>
    %787 = arith.mulf %786, %785 : vector<4x32xf32>
    %788 = arith.addf %762, %787 : vector<4x32xf32>
    %cst_263 = arith.constant 0.000000e+00 : f32
    %789 = vector.broadcast %cst_263 : f32 to vector<4x32xf32>
    %790 = arith.maximumf %788, %789 : vector<4x32xf32>
    %791 = arith.truncf %790 : vector<4x32xf32> to vector<4x32xbf16>
    %cst_264 = arith.constant dense<0.000000e+00> : vector<4x32xf32>
    %792 = tpu.matmul %791, %3, %cst_264 {dimension_numbers = #tpu.dot_dimension_numbers<[1], [0], [0], [1], [0, 0, 1, 1], [], []>} : vector<4x32xbf16>, vector<32x32xbf16>, vector<4x32xf32> -> vector<4x32xf32>
    %793 = arith.addf %792, %20 : vector<4x32xf32>
    %cst_265 = arith.constant 0.000000e+00 : f32
    %794 = vector.broadcast %cst_265 : f32 to vector<4x32xf32>
    %795 = arith.maximumf %793, %794 : vector<4x32xf32>
    %796 = arith.truncf %795 : vector<4x32xf32> to vector<4x32xbf16>
    %cst_266 = arith.constant dense<0.000000e+00> : vector<4x32xf32>
    %797 = tpu.matmul %796, %5, %cst_266 {dimension_numbers = #tpu.dot_dimension_numbers<[1], [0], [0], [1], [0, 0, 1, 1], [], []>} : vector<4x32xbf16>, vector<32x32xbf16>, vector<4x32xf32> -> vector<4x32xf32>
    %798 = arith.addf %797, %26 : vector<4x32xf32>
    %799 = vector.broadcast %695 : f32 to vector<4x32xf32>
    %800 = arith.mulf %799, %798 : vector<4x32xf32>
    %801 = arith.addf %762, %800 : vector<4x32xf32>
    %cst_267 = arith.constant 0.000000e+00 : f32
    %802 = vector.broadcast %cst_267 : f32 to vector<4x32xf32>
    %803 = arith.maximumf %801, %802 : vector<4x32xf32>
    %804 = arith.truncf %803 : vector<4x32xf32> to vector<4x32xbf16>
    %cst_268 = arith.constant dense<0.000000e+00> : vector<4x32xf32>
    %805 = tpu.matmul %804, %3, %cst_268 {dimension_numbers = #tpu.dot_dimension_numbers<[1], [0], [0], [1], [0, 0, 1, 1], [], []>} : vector<4x32xbf16>, vector<32x32xbf16>, vector<4x32xf32> -> vector<4x32xf32>
    %806 = arith.addf %805, %20 : vector<4x32xf32>
    %cst_269 = arith.constant 0.000000e+00 : f32
    %807 = vector.broadcast %cst_269 : f32 to vector<4x32xf32>
    %808 = arith.maximumf %806, %807 : vector<4x32xf32>
    %809 = arith.addf %782, %795 : vector<4x32xf32>
    %cst_270 = arith.constant 2.000000e+00 : f32
    %810 = vector.broadcast %cst_270 : f32 to vector<4x32xf32>
    %811 = arith.mulf %810, %809 : vector<4x32xf32>
    %812 = arith.addf %769, %811 : vector<4x32xf32>
    %813 = arith.addf %812, %808 : vector<4x32xf32>
    %814 = arith.truncf %813 : vector<4x32xf32> to vector<4x32xbf16>
    %cst_271 = arith.constant dense<0.000000e+00> : vector<4x32xf32>
    %815 = tpu.matmul %814, %4, %cst_271 {dimension_numbers = #tpu.dot_dimension_numbers<[1], [0], [0], [1], [0, 0, 1, 1], [], []>} : vector<4x32xbf16>, vector<32x32xbf16>, vector<4x32xf32> -> vector<4x32xf32>
    %816 = vector.broadcast %697 : f32 to vector<4x32xf32>
    %817 = arith.mulf %816, %815 : vector<4x32xf32>
    %818 = arith.addf %759, %817 : vector<4x32xf32>
    %819 = vector.broadcast %695 : f32 to vector<4x32xf32>
    %820 = arith.mulf %819, %23 : vector<4x32xf32>
    %821 = arith.addf %818, %820 : vector<4x32xf32>
    %c20 = arith.constant 20 : index
    %c0_272 = arith.constant 0 : index
    %822 = vector.load %arg24[%c20, %c0_272] : memref<24x32xf32, #tpu.memory_space<vmem>>, vector<4x32xf32>
    %823 = tpu.concatenate %822, %821 in 1 : vector<4x32xf32>, vector<4x32xf32> -> vector<4x64xf32>
    %824 = arith.truncf %823 : vector<4x64xf32> to vector<4x64xbf16>
    %cst_273 = arith.constant dense<0.000000e+00> : vector<4x128xf32>
    %825 = tpu.matmul %824, %1, %cst_273 {dimension_numbers = #tpu.dot_dimension_numbers<[1], [0], [0], [1], [0, 0, 1, 1], [], []>} : vector<4x64xbf16>, vector<64x128xbf16>, vector<4x128xf32> -> vector<4x128xf32>
    %826 = arith.addf %825, %14 : vector<4x128xf32>
    %827 = vector.extract_strided_slice %826 {offsets = [0, 0], sizes = [4, 32], strides = [1, 1]} : vector<4x128xf32> to vector<4x32xf32>
    %828 = arith.negf %827 : vector<4x32xf32>
    %829 = math.exp %828 : vector<4x32xf32>
    %cst_274 = arith.constant 1.000000e+00 : f32
    %830 = vector.broadcast %cst_274 : f32 to vector<4x32xf32>
    %831 = arith.addf %830, %829 : vector<4x32xf32>
    %832 = arith.divf %830, %831 : vector<4x32xf32>
    %833 = vector.extract_strided_slice %826 {offsets = [0, 32], sizes = [4, 32], strides = [1, 1]} : vector<4x128xf32> to vector<4x32xf32>
    %834 = arith.negf %833 : vector<4x32xf32>
    %835 = math.exp %834 : vector<4x32xf32>
    %cst_275 = arith.constant 1.000000e+00 : f32
    %836 = vector.broadcast %cst_275 : f32 to vector<4x32xf32>
    %837 = arith.addf %836, %835 : vector<4x32xf32>
    %838 = arith.divf %836, %837 : vector<4x32xf32>
    %839 = vector.extract_strided_slice %826 {offsets = [0, 64], sizes = [4, 32], strides = [1, 1]} : vector<4x128xf32> to vector<4x32xf32>
    %840 = vector.extract_strided_slice %826 {offsets = [0, 96], sizes = [4, 32], strides = [1, 1]} : vector<4x128xf32> to vector<4x32xf32>
    %841 = arith.mulf %832, %840 : vector<4x32xf32>
    %842 = arith.addf %839, %841 : vector<4x32xf32>
    %843 = math.tanh %842 : vector<4x32xf32>
    %cst_276 = arith.constant 1.000000e+00 : f32
    %844 = vector.broadcast %cst_276 : f32 to vector<4x32xf32>
    %845 = arith.subf %844, %838 : vector<4x32xf32>
    %846 = arith.mulf %845, %843 : vector<4x32xf32>
    %847 = arith.mulf %838, %821 : vector<4x32xf32>
    %848 = arith.addf %846, %847 : vector<4x32xf32>
    %c20_277 = arith.constant 20 : index
    %c0_278 = arith.constant 0 : index
    %849 = vector.load %arg25[%c20_277, %c0_278] : memref<40x32xf32, #tpu.memory_space<vmem>>, vector<4x32xf32>
    tpu.vector_store %arg25[%c20_277, %c0_278], %848 {strides = array<i32>} : memref<40x32xf32, #tpu.memory_space<vmem>>, vector<4x32xf32>,
    %c24 = arith.constant 24 : index
    %c0_279 = arith.constant 0 : index
    %850 = vector.load %arg25[%c24, %c0_279] : memref<40x32xf32, #tpu.memory_space<vmem>>, vector<4x32xf32>
    tpu.vector_store %arg25[%c24, %c0_279], %848 {strides = array<i32>} : memref<40x32xf32, #tpu.memory_space<vmem>>, vector<4x32xf32>,
    %c7 = arith.constant 7 : index
    %851 = memref.load %arg2[%c7] : memref<10xf32, #tpu.memory_space<smem>>
    %cst_280 = arith.constant 5.000000e-01 : f32
    %852 = arith.mulf %851, %cst_280 : f32
    %cst_281 = arith.constant 5.000000e-01 : f32
    %853 = arith.mulf %cst_281, %852 : f32
    %cst_282 = arith.constant 0.166666672 : f32
    %854 = arith.mulf %852, %cst_282 : f32
    %855 = arith.truncf %848 : vector<4x32xf32> to vector<4x32xbf16>
    %cst_283 = arith.constant dense<0.000000e+00> : vector<4x32xf32>
    %856 = tpu.matmul %855, %2, %cst_283 {dimension_numbers = #tpu.dot_dimension_numbers<[1], [0], [0], [1], [0, 0, 1, 1], [], []>} : vector<4x32xbf16>, vector<32x32xbf16>, vector<4x32xf32> -> vector<4x32xf32>
    %857 = arith.addf %856, %17 : vector<4x32xf32>
    %cst_284 = arith.constant 0.000000e+00 : f32
    %858 = vector.broadcast %cst_284 : f32 to vector<4x32xf32>
    %859 = arith.maximumf %857, %858 : vector<4x32xf32>
    %860 = arith.truncf %859 : vector<4x32xf32> to vector<4x32xbf16>
    %cst_285 = arith.constant dense<0.000000e+00> : vector<4x32xf32>
    %861 = tpu.matmul %860, %3, %cst_285 {dimension_numbers = #tpu.dot_dimension_numbers<[1], [0], [0], [1], [0, 0, 1, 1], [], []>} : vector<4x32xbf16>, vector<32x32xbf16>, vector<4x32xf32> -> vector<4x32xf32>
    %862 = arith.addf %861, %20 : vector<4x32xf32>
    %cst_286 = arith.constant 0.000000e+00 : f32
    %863 = vector.broadcast %cst_286 : f32 to vector<4x32xf32>
    %864 = arith.maximumf %862, %863 : vector<4x32xf32>
    %865 = arith.truncf %864 : vector<4x32xf32> to vector<4x32xbf16>
    %cst_287 = arith.constant dense<0.000000e+00> : vector<4x32xf32>
    %866 = tpu.matmul %865, %5, %cst_287 {dimension_numbers = #tpu.dot_dimension_numbers<[1], [0], [0], [1], [0, 0, 1, 1], [], []>} : vector<4x32xbf16>, vector<32x32xbf16>, vector<4x32xf32> -> vector<4x32xf32>
    %867 = arith.addf %866, %26 : vector<4x32xf32>
    %868 = vector.broadcast %853 : f32 to vector<4x32xf32>
    %869 = arith.mulf %868, %867 : vector<4x32xf32>
    %870 = arith.addf %857, %869 : vector<4x32xf32>
    %cst_288 = arith.constant 0.000000e+00 : f32
    %871 = vector.broadcast %cst_288 : f32 to vector<4x32xf32>
    %872 = arith.maximumf %870, %871 : vector<4x32xf32>
    %873 = arith.truncf %872 : vector<4x32xf32> to vector<4x32xbf16>
    %cst_289 = arith.constant dense<0.000000e+00> : vector<4x32xf32>
    %874 = tpu.matmul %873, %3, %cst_289 {dimension_numbers = #tpu.dot_dimension_numbers<[1], [0], [0], [1], [0, 0, 1, 1], [], []>} : vector<4x32xbf16>, vector<32x32xbf16>, vector<4x32xf32> -> vector<4x32xf32>
    %875 = arith.addf %874, %20 : vector<4x32xf32>
    %cst_290 = arith.constant 0.000000e+00 : f32
    %876 = vector.broadcast %cst_290 : f32 to vector<4x32xf32>
    %877 = arith.maximumf %875, %876 : vector<4x32xf32>
    %878 = arith.truncf %877 : vector<4x32xf32> to vector<4x32xbf16>
    %cst_291 = arith.constant dense<0.000000e+00> : vector<4x32xf32>
    %879 = tpu.matmul %878, %5, %cst_291 {dimension_numbers = #tpu.dot_dimension_numbers<[1], [0], [0], [1], [0, 0, 1, 1], [], []>} : vector<4x32xbf16>, vector<32x32xbf16>, vector<4x32xf32> -> vector<4x32xf32>
    %880 = arith.addf %879, %26 : vector<4x32xf32>
    %881 = vector.broadcast %853 : f32 to vector<4x32xf32>
    %882 = arith.mulf %881, %880 : vector<4x32xf32>
    %883 = arith.addf %857, %882 : vector<4x32xf32>
    %cst_292 = arith.constant 0.000000e+00 : f32
    %884 = vector.broadcast %cst_292 : f32 to vector<4x32xf32>
    %885 = arith.maximumf %883, %884 : vector<4x32xf32>
    %886 = arith.truncf %885 : vector<4x32xf32> to vector<4x32xbf16>
    %cst_293 = arith.constant dense<0.000000e+00> : vector<4x32xf32>
    %887 = tpu.matmul %886, %3, %cst_293 {dimension_numbers = #tpu.dot_dimension_numbers<[1], [0], [0], [1], [0, 0, 1, 1], [], []>} : vector<4x32xbf16>, vector<32x32xbf16>, vector<4x32xf32> -> vector<4x32xf32>
    %888 = arith.addf %887, %20 : vector<4x32xf32>
    %cst_294 = arith.constant 0.000000e+00 : f32
    %889 = vector.broadcast %cst_294 : f32 to vector<4x32xf32>
    %890 = arith.maximumf %888, %889 : vector<4x32xf32>
    %891 = arith.truncf %890 : vector<4x32xf32> to vector<4x32xbf16>
    %cst_295 = arith.constant dense<0.000000e+00> : vector<4x32xf32>
    %892 = tpu.matmul %891, %5, %cst_295 {dimension_numbers = #tpu.dot_dimension_numbers<[1], [0], [0], [1], [0, 0, 1, 1], [], []>} : vector<4x32xbf16>, vector<32x32xbf16>, vector<4x32xf32> -> vector<4x32xf32>
    %893 = arith.addf %892, %26 : vector<4x32xf32>
    %894 = vector.broadcast %852 : f32 to vector<4x32xf32>
    %895 = arith.mulf %894, %893 : vector<4x32xf32>
    %896 = arith.addf %857, %895 : vector<4x32xf32>
    %cst_296 = arith.constant 0.000000e+00 : f32
    %897 = vector.broadcast %cst_296 : f32 to vector<4x32xf32>
    %898 = arith.maximumf %896, %897 : vector<4x32xf32>
    %899 = arith.truncf %898 : vector<4x32xf32> to vector<4x32xbf16>
    %cst_297 = arith.constant dense<0.000000e+00> : vector<4x32xf32>
    %900 = tpu.matmul %899, %3, %cst_297 {dimension_numbers = #tpu.dot_dimension_numbers<[1], [0], [0], [1], [0, 0, 1, 1], [], []>} : vector<4x32xbf16>, vector<32x32xbf16>, vector<4x32xf32> -> vector<4x32xf32>
    %901 = arith.addf %900, %20 : vector<4x32xf32>
    %cst_298 = arith.constant 0.000000e+00 : f32
    %902 = vector.broadcast %cst_298 : f32 to vector<4x32xf32>
    %903 = arith.maximumf %901, %902 : vector<4x32xf32>
    %904 = arith.addf %877, %890 : vector<4x32xf32>
    %cst_299 = arith.constant 2.000000e+00 : f32
    %905 = vector.broadcast %cst_299 : f32 to vector<4x32xf32>
    %906 = arith.mulf %905, %904 : vector<4x32xf32>
    %907 = arith.addf %864, %906 : vector<4x32xf32>
    %908 = arith.addf %907, %903 : vector<4x32xf32>
    %909 = arith.truncf %908 : vector<4x32xf32> to vector<4x32xbf16>
    %cst_300 = arith.constant dense<0.000000e+00> : vector<4x32xf32>
    %910 = tpu.matmul %909, %4, %cst_300 {dimension_numbers = #tpu.dot_dimension_numbers<[1], [0], [0], [1], [0, 0, 1, 1], [], []>} : vector<4x32xbf16>, vector<32x32xbf16>, vector<4x32xf32> -> vector<4x32xf32>
    %911 = vector.broadcast %854 : f32 to vector<4x32xf32>
    %912 = arith.mulf %911, %910 : vector<4x32xf32>
    %913 = arith.addf %848, %912 : vector<4x32xf32>
    %914 = vector.broadcast %852 : f32 to vector<4x32xf32>
    %915 = arith.mulf %914, %23 : vector<4x32xf32>
    %916 = arith.addf %913, %915 : vector<4x32xf32>
    %917 = arith.truncf %916 : vector<4x32xf32> to vector<4x32xbf16>
    %cst_301 = arith.constant dense<0.000000e+00> : vector<4x32xf32>
    %918 = tpu.matmul %917, %2, %cst_301 {dimension_numbers = #tpu.dot_dimension_numbers<[1], [0], [0], [1], [0, 0, 1, 1], [], []>} : vector<4x32xbf16>, vector<32x32xbf16>, vector<4x32xf32> -> vector<4x32xf32>
    %919 = arith.addf %918, %17 : vector<4x32xf32>
    %cst_302 = arith.constant 0.000000e+00 : f32
    %920 = vector.broadcast %cst_302 : f32 to vector<4x32xf32>
    %921 = arith.maximumf %919, %920 : vector<4x32xf32>
    %922 = arith.truncf %921 : vector<4x32xf32> to vector<4x32xbf16>
    %cst_303 = arith.constant dense<0.000000e+00> : vector<4x32xf32>
    %923 = tpu.matmul %922, %3, %cst_303 {dimension_numbers = #tpu.dot_dimension_numbers<[1], [0], [0], [1], [0, 0, 1, 1], [], []>} : vector<4x32xbf16>, vector<32x32xbf16>, vector<4x32xf32> -> vector<4x32xf32>
    %924 = arith.addf %923, %20 : vector<4x32xf32>
    %cst_304 = arith.constant 0.000000e+00 : f32
    %925 = vector.broadcast %cst_304 : f32 to vector<4x32xf32>
    %926 = arith.maximumf %924, %925 : vector<4x32xf32>
    %927 = arith.truncf %926 : vector<4x32xf32> to vector<4x32xbf16>
    %cst_305 = arith.constant dense<0.000000e+00> : vector<4x32xf32>
    %928 = tpu.matmul %927, %5, %cst_305 {dimension_numbers = #tpu.dot_dimension_numbers<[1], [0], [0], [1], [0, 0, 1, 1], [], []>} : vector<4x32xbf16>, vector<32x32xbf16>, vector<4x32xf32> -> vector<4x32xf32>
    %929 = arith.addf %928, %26 : vector<4x32xf32>
    %930 = vector.broadcast %853 : f32 to vector<4x32xf32>
    %931 = arith.mulf %930, %929 : vector<4x32xf32>
    %932 = arith.addf %919, %931 : vector<4x32xf32>
    %cst_306 = arith.constant 0.000000e+00 : f32
    %933 = vector.broadcast %cst_306 : f32 to vector<4x32xf32>
    %934 = arith.maximumf %932, %933 : vector<4x32xf32>
    %935 = arith.truncf %934 : vector<4x32xf32> to vector<4x32xbf16>
    %cst_307 = arith.constant dense<0.000000e+00> : vector<4x32xf32>
    %936 = tpu.matmul %935, %3, %cst_307 {dimension_numbers = #tpu.dot_dimension_numbers<[1], [0], [0], [1], [0, 0, 1, 1], [], []>} : vector<4x32xbf16>, vector<32x32xbf16>, vector<4x32xf32> -> vector<4x32xf32>
    %937 = arith.addf %936, %20 : vector<4x32xf32>
    %cst_308 = arith.constant 0.000000e+00 : f32
    %938 = vector.broadcast %cst_308 : f32 to vector<4x32xf32>
    %939 = arith.maximumf %937, %938 : vector<4x32xf32>
    %940 = arith.truncf %939 : vector<4x32xf32> to vector<4x32xbf16>
    %cst_309 = arith.constant dense<0.000000e+00> : vector<4x32xf32>
    %941 = tpu.matmul %940, %5, %cst_309 {dimension_numbers = #tpu.dot_dimension_numbers<[1], [0], [0], [1], [0, 0, 1, 1], [], []>} : vector<4x32xbf16>, vector<32x32xbf16>, vector<4x32xf32> -> vector<4x32xf32>
    %942 = arith.addf %941, %26 : vector<4x32xf32>
    %943 = vector.broadcast %853 : f32 to vector<4x32xf32>
    %944 = arith.mulf %943, %942 : vector<4x32xf32>
    %945 = arith.addf %919, %944 : vector<4x32xf32>
    %cst_310 = arith.constant 0.000000e+00 : f32
    %946 = vector.broadcast %cst_310 : f32 to vector<4x32xf32>
    %947 = arith.maximumf %945, %946 : vector<4x32xf32>
    %948 = arith.truncf %947 : vector<4x32xf32> to vector<4x32xbf16>
    %cst_311 = arith.constant dense<0.000000e+00> : vector<4x32xf32>
    %949 = tpu.matmul %948, %3, %cst_311 {dimension_numbers = #tpu.dot_dimension_numbers<[1], [0], [0], [1], [0, 0, 1, 1], [], []>} : vector<4x32xbf16>, vector<32x32xbf16>, vector<4x32xf32> -> vector<4x32xf32>
    %950 = arith.addf %949, %20 : vector<4x32xf32>
    %cst_312 = arith.constant 0.000000e+00 : f32
    %951 = vector.broadcast %cst_312 : f32 to vector<4x32xf32>
    %952 = arith.maximumf %950, %951 : vector<4x32xf32>
    %953 = arith.truncf %952 : vector<4x32xf32> to vector<4x32xbf16>
    %cst_313 = arith.constant dense<0.000000e+00> : vector<4x32xf32>
    %954 = tpu.matmul %953, %5, %cst_313 {dimension_numbers = #tpu.dot_dimension_numbers<[1], [0], [0], [1], [0, 0, 1, 1], [], []>} : vector<4x32xbf16>, vector<32x32xbf16>, vector<4x32xf32> -> vector<4x32xf32>
    %955 = arith.addf %954, %26 : vector<4x32xf32>
    %956 = vector.broadcast %852 : f32 to vector<4x32xf32>
    %957 = arith.mulf %956, %955 : vector<4x32xf32>
    %958 = arith.addf %919, %957 : vector<4x32xf32>
    %cst_314 = arith.constant 0.000000e+00 : f32
    %959 = vector.broadcast %cst_314 : f32 to vector<4x32xf32>
    %960 = arith.maximumf %958, %959 : vector<4x32xf32>
    %961 = arith.truncf %960 : vector<4x32xf32> to vector<4x32xbf16>
    %cst_315 = arith.constant dense<0.000000e+00> : vector<4x32xf32>
    %962 = tpu.matmul %961, %3, %cst_315 {dimension_numbers = #tpu.dot_dimension_numbers<[1], [0], [0], [1], [0, 0, 1, 1], [], []>} : vector<4x32xbf16>, vector<32x32xbf16>, vector<4x32xf32> -> vector<4x32xf32>
    %963 = arith.addf %962, %20 : vector<4x32xf32>
    %cst_316 = arith.constant 0.000000e+00 : f32
    %964 = vector.broadcast %cst_316 : f32 to vector<4x32xf32>
    %965 = arith.maximumf %963, %964 : vector<4x32xf32>
    %966 = arith.addf %939, %952 : vector<4x32xf32>
    %cst_317 = arith.constant 2.000000e+00 : f32
    %967 = vector.broadcast %cst_317 : f32 to vector<4x32xf32>
    %968 = arith.mulf %967, %966 : vector<4x32xf32>
    %969 = arith.addf %926, %968 : vector<4x32xf32>
    %970 = arith.addf %969, %965 : vector<4x32xf32>
    %971 = arith.truncf %970 : vector<4x32xf32> to vector<4x32xbf16>
    %cst_318 = arith.constant dense<0.000000e+00> : vector<4x32xf32>
    %972 = tpu.matmul %971, %4, %cst_318 {dimension_numbers = #tpu.dot_dimension_numbers<[1], [0], [0], [1], [0, 0, 1, 1], [], []>} : vector<4x32xbf16>, vector<32x32xbf16>, vector<4x32xf32> -> vector<4x32xf32>
    %973 = vector.broadcast %854 : f32 to vector<4x32xf32>
    %974 = arith.mulf %973, %972 : vector<4x32xf32>
    %975 = arith.addf %916, %974 : vector<4x32xf32>
    %976 = vector.broadcast %852 : f32 to vector<4x32xf32>
    %977 = arith.mulf %976, %23 : vector<4x32xf32>
    %978 = arith.addf %975, %977 : vector<4x32xf32>
    %c28 = arith.constant 28 : index
    %c0_319 = arith.constant 0 : index
    %979 = vector.load %arg25[%c28, %c0_319] : memref<40x32xf32, #tpu.memory_space<vmem>>, vector<4x32xf32>
    tpu.vector_store %arg25[%c28, %c0_319], %978 {strides = array<i32>} : memref<40x32xf32, #tpu.memory_space<vmem>>, vector<4x32xf32>,
    %c8_320 = arith.constant 8 : index
    %980 = memref.load %arg2[%c8_320] : memref<10xf32, #tpu.memory_space<smem>>
    %cst_321 = arith.constant 5.000000e-01 : f32
    %981 = arith.mulf %980, %cst_321 : f32
    %cst_322 = arith.constant 5.000000e-01 : f32
    %982 = arith.mulf %cst_322, %981 : f32
    %cst_323 = arith.constant 0.166666672 : f32
    %983 = arith.mulf %981, %cst_323 : f32
    %984 = arith.truncf %978 : vector<4x32xf32> to vector<4x32xbf16>
    %cst_324 = arith.constant dense<0.000000e+00> : vector<4x32xf32>
    %985 = tpu.matmul %984, %2, %cst_324 {dimension_numbers = #tpu.dot_dimension_numbers<[1], [0], [0], [1], [0, 0, 1, 1], [], []>} : vector<4x32xbf16>, vector<32x32xbf16>, vector<4x32xf32> -> vector<4x32xf32>
    %986 = arith.addf %985, %17 : vector<4x32xf32>
    %cst_325 = arith.constant 0.000000e+00 : f32
    %987 = vector.broadcast %cst_325 : f32 to vector<4x32xf32>
    %988 = arith.maximumf %986, %987 : vector<4x32xf32>
    %989 = arith.truncf %988 : vector<4x32xf32> to vector<4x32xbf16>
    %cst_326 = arith.constant dense<0.000000e+00> : vector<4x32xf32>
    %990 = tpu.matmul %989, %3, %cst_326 {dimension_numbers = #tpu.dot_dimension_numbers<[1], [0], [0], [1], [0, 0, 1, 1], [], []>} : vector<4x32xbf16>, vector<32x32xbf16>, vector<4x32xf32> -> vector<4x32xf32>
    %991 = arith.addf %990, %20 : vector<4x32xf32>
    %cst_327 = arith.constant 0.000000e+00 : f32
    %992 = vector.broadcast %cst_327 : f32 to vector<4x32xf32>
    %993 = arith.maximumf %991, %992 : vector<4x32xf32>
    %994 = arith.truncf %993 : vector<4x32xf32> to vector<4x32xbf16>
    %cst_328 = arith.constant dense<0.000000e+00> : vector<4x32xf32>
    %995 = tpu.matmul %994, %5, %cst_328 {dimension_numbers = #tpu.dot_dimension_numbers<[1], [0], [0], [1], [0, 0, 1, 1], [], []>} : vector<4x32xbf16>, vector<32x32xbf16>, vector<4x32xf32> -> vector<4x32xf32>
    %996 = arith.addf %995, %26 : vector<4x32xf32>
    %997 = vector.broadcast %982 : f32 to vector<4x32xf32>
    %998 = arith.mulf %997, %996 : vector<4x32xf32>
    %999 = arith.addf %986, %998 : vector<4x32xf32>
    %cst_329 = arith.constant 0.000000e+00 : f32
    %1000 = vector.broadcast %cst_329 : f32 to vector<4x32xf32>
    %1001 = arith.maximumf %999, %1000 : vector<4x32xf32>
    %1002 = arith.truncf %1001 : vector<4x32xf32> to vector<4x32xbf16>
    %cst_330 = arith.constant dense<0.000000e+00> : vector<4x32xf32>
    %1003 = tpu.matmul %1002, %3, %cst_330 {dimension_numbers = #tpu.dot_dimension_numbers<[1], [0], [0], [1], [0, 0, 1, 1], [], []>} : vector<4x32xbf16>, vector<32x32xbf16>, vector<4x32xf32> -> vector<4x32xf32>
    %1004 = arith.addf %1003, %20 : vector<4x32xf32>
    %cst_331 = arith.constant 0.000000e+00 : f32
    %1005 = vector.broadcast %cst_331 : f32 to vector<4x32xf32>
    %1006 = arith.maximumf %1004, %1005 : vector<4x32xf32>
    %1007 = arith.truncf %1006 : vector<4x32xf32> to vector<4x32xbf16>
    %cst_332 = arith.constant dense<0.000000e+00> : vector<4x32xf32>
    %1008 = tpu.matmul %1007, %5, %cst_332 {dimension_numbers = #tpu.dot_dimension_numbers<[1], [0], [0], [1], [0, 0, 1, 1], [], []>} : vector<4x32xbf16>, vector<32x32xbf16>, vector<4x32xf32> -> vector<4x32xf32>
    %1009 = arith.addf %1008, %26 : vector<4x32xf32>
    %1010 = vector.broadcast %982 : f32 to vector<4x32xf32>
    %1011 = arith.mulf %1010, %1009 : vector<4x32xf32>
    %1012 = arith.addf %986, %1011 : vector<4x32xf32>
    %cst_333 = arith.constant 0.000000e+00 : f32
    %1013 = vector.broadcast %cst_333 : f32 to vector<4x32xf32>
    %1014 = arith.maximumf %1012, %1013 : vector<4x32xf32>
    %1015 = arith.truncf %1014 : vector<4x32xf32> to vector<4x32xbf16>
    %cst_334 = arith.constant dense<0.000000e+00> : vector<4x32xf32>
    %1016 = tpu.matmul %1015, %3, %cst_334 {dimension_numbers = #tpu.dot_dimension_numbers<[1], [0], [0], [1], [0, 0, 1, 1], [], []>} : vector<4x32xbf16>, vector<32x32xbf16>, vector<4x32xf32> -> vector<4x32xf32>
    %1017 = arith.addf %1016, %20 : vector<4x32xf32>
    %cst_335 = arith.constant 0.000000e+00 : f32
    %1018 = vector.broadcast %cst_335 : f32 to vector<4x32xf32>
    %1019 = arith.maximumf %1017, %1018 : vector<4x32xf32>
    %1020 = arith.truncf %1019 : vector<4x32xf32> to vector<4x32xbf16>
    %cst_336 = arith.constant dense<0.000000e+00> : vector<4x32xf32>
    %1021 = tpu.matmul %1020, %5, %cst_336 {dimension_numbers = #tpu.dot_dimension_numbers<[1], [0], [0], [1], [0, 0, 1, 1], [], []>} : vector<4x32xbf16>, vector<32x32xbf16>, vector<4x32xf32> -> vector<4x32xf32>
    %1022 = arith.addf %1021, %26 : vector<4x32xf32>
    %1023 = vector.broadcast %981 : f32 to vector<4x32xf32>
    %1024 = arith.mulf %1023, %1022 : vector<4x32xf32>
    %1025 = arith.addf %986, %1024 : vector<4x32xf32>
    %cst_337 = arith.constant 0.000000e+00 : f32
    %1026 = vector.broadcast %cst_337 : f32 to vector<4x32xf32>
    %1027 = arith.maximumf %1025, %1026 : vector<4x32xf32>
    %1028 = arith.truncf %1027 : vector<4x32xf32> to vector<4x32xbf16>
    %cst_338 = arith.constant dense<0.000000e+00> : vector<4x32xf32>
    %1029 = tpu.matmul %1028, %3, %cst_338 {dimension_numbers = #tpu.dot_dimension_numbers<[1], [0], [0], [1], [0, 0, 1, 1], [], []>} : vector<4x32xbf16>, vector<32x32xbf16>, vector<4x32xf32> -> vector<4x32xf32>
    %1030 = arith.addf %1029, %20 : vector<4x32xf32>
    %cst_339 = arith.constant 0.000000e+00 : f32
    %1031 = vector.broadcast %cst_339 : f32 to vector<4x32xf32>
    %1032 = arith.maximumf %1030, %1031 : vector<4x32xf32>
    %1033 = arith.addf %1006, %1019 : vector<4x32xf32>
    %cst_340 = arith.constant 2.000000e+00 : f32
    %1034 = vector.broadcast %cst_340 : f32 to vector<4x32xf32>
    %1035 = arith.mulf %1034, %1033 : vector<4x32xf32>
    %1036 = arith.addf %993, %1035 : vector<4x32xf32>
    %1037 = arith.addf %1036, %1032 : vector<4x32xf32>
    %1038 = arith.truncf %1037 : vector<4x32xf32> to vector<4x32xbf16>
    %cst_341 = arith.constant dense<0.000000e+00> : vector<4x32xf32>
    %1039 = tpu.matmul %1038, %4, %cst_341 {dimension_numbers = #tpu.dot_dimension_numbers<[1], [0], [0], [1], [0, 0, 1, 1], [], []>} : vector<4x32xbf16>, vector<32x32xbf16>, vector<4x32xf32> -> vector<4x32xf32>
    %1040 = vector.broadcast %983 : f32 to vector<4x32xf32>
    %1041 = arith.mulf %1040, %1039 : vector<4x32xf32>
    %1042 = arith.addf %978, %1041 : vector<4x32xf32>
    %1043 = vector.broadcast %981 : f32 to vector<4x32xf32>
    %1044 = arith.mulf %1043, %23 : vector<4x32xf32>
    %1045 = arith.addf %1042, %1044 : vector<4x32xf32>
    %1046 = arith.truncf %1045 : vector<4x32xf32> to vector<4x32xbf16>
    %cst_342 = arith.constant dense<0.000000e+00> : vector<4x32xf32>
    %1047 = tpu.matmul %1046, %2, %cst_342 {dimension_numbers = #tpu.dot_dimension_numbers<[1], [0], [0], [1], [0, 0, 1, 1], [], []>} : vector<4x32xbf16>, vector<32x32xbf16>, vector<4x32xf32> -> vector<4x32xf32>
    %1048 = arith.addf %1047, %17 : vector<4x32xf32>
    %cst_343 = arith.constant 0.000000e+00 : f32
    %1049 = vector.broadcast %cst_343 : f32 to vector<4x32xf32>
    %1050 = arith.maximumf %1048, %1049 : vector<4x32xf32>
    %1051 = arith.truncf %1050 : vector<4x32xf32> to vector<4x32xbf16>
    %cst_344 = arith.constant dense<0.000000e+00> : vector<4x32xf32>
    %1052 = tpu.matmul %1051, %3, %cst_344 {dimension_numbers = #tpu.dot_dimension_numbers<[1], [0], [0], [1], [0, 0, 1, 1], [], []>} : vector<4x32xbf16>, vector<32x32xbf16>, vector<4x32xf32> -> vector<4x32xf32>
    %1053 = arith.addf %1052, %20 : vector<4x32xf32>
    %cst_345 = arith.constant 0.000000e+00 : f32
    %1054 = vector.broadcast %cst_345 : f32 to vector<4x32xf32>
    %1055 = arith.maximumf %1053, %1054 : vector<4x32xf32>
    %1056 = arith.truncf %1055 : vector<4x32xf32> to vector<4x32xbf16>
    %cst_346 = arith.constant dense<0.000000e+00> : vector<4x32xf32>
    %1057 = tpu.matmul %1056, %5, %cst_346 {dimension_numbers = #tpu.dot_dimension_numbers<[1], [0], [0], [1], [0, 0, 1, 1], [], []>} : vector<4x32xbf16>, vector<32x32xbf16>, vector<4x32xf32> -> vector<4x32xf32>
    %1058 = arith.addf %1057, %26 : vector<4x32xf32>
    %1059 = vector.broadcast %982 : f32 to vector<4x32xf32>
    %1060 = arith.mulf %1059, %1058 : vector<4x32xf32>
    %1061 = arith.addf %1048, %1060 : vector<4x32xf32>
    %cst_347 = arith.constant 0.000000e+00 : f32
    %1062 = vector.broadcast %cst_347 : f32 to vector<4x32xf32>
    %1063 = arith.maximumf %1061, %1062 : vector<4x32xf32>
    %1064 = arith.truncf %1063 : vector<4x32xf32> to vector<4x32xbf16>
    %cst_348 = arith.constant dense<0.000000e+00> : vector<4x32xf32>
    %1065 = tpu.matmul %1064, %3, %cst_348 {dimension_numbers = #tpu.dot_dimension_numbers<[1], [0], [0], [1], [0, 0, 1, 1], [], []>} : vector<4x32xbf16>, vector<32x32xbf16>, vector<4x32xf32> -> vector<4x32xf32>
    %1066 = arith.addf %1065, %20 : vector<4x32xf32>
    %cst_349 = arith.constant 0.000000e+00 : f32
    %1067 = vector.broadcast %cst_349 : f32 to vector<4x32xf32>
    %1068 = arith.maximumf %1066, %1067 : vector<4x32xf32>
    %1069 = arith.truncf %1068 : vector<4x32xf32> to vector<4x32xbf16>
    %cst_350 = arith.constant dense<0.000000e+00> : vector<4x32xf32>
    %1070 = tpu.matmul %1069, %5, %cst_350 {dimension_numbers = #tpu.dot_dimension_numbers<[1], [0], [0], [1], [0, 0, 1, 1], [], []>} : vector<4x32xbf16>, vector<32x32xbf16>, vector<4x32xf32> -> vector<4x32xf32>
    %1071 = arith.addf %1070, %26 : vector<4x32xf32>
    %1072 = vector.broadcast %982 : f32 to vector<4x32xf32>
    %1073 = arith.mulf %1072, %1071 : vector<4x32xf32>
    %1074 = arith.addf %1048, %1073 : vector<4x32xf32>
    %cst_351 = arith.constant 0.000000e+00 : f32
    %1075 = vector.broadcast %cst_351 : f32 to vector<4x32xf32>
    %1076 = arith.maximumf %1074, %1075 : vector<4x32xf32>
    %1077 = arith.truncf %1076 : vector<4x32xf32> to vector<4x32xbf16>
    %cst_352 = arith.constant dense<0.000000e+00> : vector<4x32xf32>
    %1078 = tpu.matmul %1077, %3, %cst_352 {dimension_numbers = #tpu.dot_dimension_numbers<[1], [0], [0], [1], [0, 0, 1, 1], [], []>} : vector<4x32xbf16>, vector<32x32xbf16>, vector<4x32xf32> -> vector<4x32xf32>
    %1079 = arith.addf %1078, %20 : vector<4x32xf32>
    %cst_353 = arith.constant 0.000000e+00 : f32
    %1080 = vector.broadcast %cst_353 : f32 to vector<4x32xf32>
    %1081 = arith.maximumf %1079, %1080 : vector<4x32xf32>
    %1082 = arith.truncf %1081 : vector<4x32xf32> to vector<4x32xbf16>
    %cst_354 = arith.constant dense<0.000000e+00> : vector<4x32xf32>
    %1083 = tpu.matmul %1082, %5, %cst_354 {dimension_numbers = #tpu.dot_dimension_numbers<[1], [0], [0], [1], [0, 0, 1, 1], [], []>} : vector<4x32xbf16>, vector<32x32xbf16>, vector<4x32xf32> -> vector<4x32xf32>
    %1084 = arith.addf %1083, %26 : vector<4x32xf32>
    %1085 = vector.broadcast %981 : f32 to vector<4x32xf32>
    %1086 = arith.mulf %1085, %1084 : vector<4x32xf32>
    %1087 = arith.addf %1048, %1086 : vector<4x32xf32>
    %cst_355 = arith.constant 0.000000e+00 : f32
    %1088 = vector.broadcast %cst_355 : f32 to vector<4x32xf32>
    %1089 = arith.maximumf %1087, %1088 : vector<4x32xf32>
    %1090 = arith.truncf %1089 : vector<4x32xf32> to vector<4x32xbf16>
    %cst_356 = arith.constant dense<0.000000e+00> : vector<4x32xf32>
    %1091 = tpu.matmul %1090, %3, %cst_356 {dimension_numbers = #tpu.dot_dimension_numbers<[1], [0], [0], [1], [0, 0, 1, 1], [], []>} : vector<4x32xbf16>, vector<32x32xbf16>, vector<4x32xf32> -> vector<4x32xf32>
    %1092 = arith.addf %1091, %20 : vector<4x32xf32>
    %cst_357 = arith.constant 0.000000e+00 : f32
    %1093 = vector.broadcast %cst_357 : f32 to vector<4x32xf32>
    %1094 = arith.maximumf %1092, %1093 : vector<4x32xf32>
    %1095 = arith.addf %1068, %1081 : vector<4x32xf32>
    %cst_358 = arith.constant 2.000000e+00 : f32
    %1096 = vector.broadcast %cst_358 : f32 to vector<4x32xf32>
    %1097 = arith.mulf %1096, %1095 : vector<4x32xf32>
    %1098 = arith.addf %1055, %1097 : vector<4x32xf32>
    %1099 = arith.addf %1098, %1094 : vector<4x32xf32>
    %1100 = arith.truncf %1099 : vector<4x32xf32> to vector<4x32xbf16>
    %cst_359 = arith.constant dense<0.000000e+00> : vector<4x32xf32>
    %1101 = tpu.matmul %1100, %4, %cst_359 {dimension_numbers = #tpu.dot_dimension_numbers<[1], [0], [0], [1], [0, 0, 1, 1], [], []>} : vector<4x32xbf16>, vector<32x32xbf16>, vector<4x32xf32> -> vector<4x32xf32>
    %1102 = vector.broadcast %983 : f32 to vector<4x32xf32>
    %1103 = arith.mulf %1102, %1101 : vector<4x32xf32>
    %1104 = arith.addf %1045, %1103 : vector<4x32xf32>
    %1105 = vector.broadcast %981 : f32 to vector<4x32xf32>
    %1106 = arith.mulf %1105, %23 : vector<4x32xf32>
    %1107 = arith.addf %1104, %1106 : vector<4x32xf32>
    %c32 = arith.constant 32 : index
    %c0_360 = arith.constant 0 : index
    %1108 = vector.load %arg25[%c32, %c0_360] : memref<40x32xf32, #tpu.memory_space<vmem>>, vector<4x32xf32>
    tpu.vector_store %arg25[%c32, %c0_360], %1107 {strides = array<i32>} : memref<40x32xf32, #tpu.memory_space<vmem>>, vector<4x32xf32>,
    %c9 = arith.constant 9 : index
    %1109 = memref.load %arg2[%c9] : memref<10xf32, #tpu.memory_space<smem>>
    %cst_361 = arith.constant 5.000000e-01 : f32
    %1110 = arith.mulf %1109, %cst_361 : f32
    %cst_362 = arith.constant 5.000000e-01 : f32
    %1111 = arith.mulf %cst_362, %1110 : f32
    %cst_363 = arith.constant 0.166666672 : f32
    %1112 = arith.mulf %1110, %cst_363 : f32
    %1113 = arith.truncf %1107 : vector<4x32xf32> to vector<4x32xbf16>
    %cst_364 = arith.constant dense<0.000000e+00> : vector<4x32xf32>
    %1114 = tpu.matmul %1113, %2, %cst_364 {dimension_numbers = #tpu.dot_dimension_numbers<[1], [0], [0], [1], [0, 0, 1, 1], [], []>} : vector<4x32xbf16>, vector<32x32xbf16>, vector<4x32xf32> -> vector<4x32xf32>
    %1115 = arith.addf %1114, %17 : vector<4x32xf32>
    %cst_365 = arith.constant 0.000000e+00 : f32
    %1116 = vector.broadcast %cst_365 : f32 to vector<4x32xf32>
    %1117 = arith.maximumf %1115, %1116 : vector<4x32xf32>
    %1118 = arith.truncf %1117 : vector<4x32xf32> to vector<4x32xbf16>
    %cst_366 = arith.constant dense<0.000000e+00> : vector<4x32xf32>
    %1119 = tpu.matmul %1118, %3, %cst_366 {dimension_numbers = #tpu.dot_dimension_numbers<[1], [0], [0], [1], [0, 0, 1, 1], [], []>} : vector<4x32xbf16>, vector<32x32xbf16>, vector<4x32xf32> -> vector<4x32xf32>
    %1120 = arith.addf %1119, %20 : vector<4x32xf32>
    %cst_367 = arith.constant 0.000000e+00 : f32
    %1121 = vector.broadcast %cst_367 : f32 to vector<4x32xf32>
    %1122 = arith.maximumf %1120, %1121 : vector<4x32xf32>
    %1123 = arith.truncf %1122 : vector<4x32xf32> to vector<4x32xbf16>
    %cst_368 = arith.constant dense<0.000000e+00> : vector<4x32xf32>
    %1124 = tpu.matmul %1123, %5, %cst_368 {dimension_numbers = #tpu.dot_dimension_numbers<[1], [0], [0], [1], [0, 0, 1, 1], [], []>} : vector<4x32xbf16>, vector<32x32xbf16>, vector<4x32xf32> -> vector<4x32xf32>
    %1125 = arith.addf %1124, %26 : vector<4x32xf32>
    %1126 = vector.broadcast %1111 : f32 to vector<4x32xf32>
    %1127 = arith.mulf %1126, %1125 : vector<4x32xf32>
    %1128 = arith.addf %1115, %1127 : vector<4x32xf32>
    %cst_369 = arith.constant 0.000000e+00 : f32
    %1129 = vector.broadcast %cst_369 : f32 to vector<4x32xf32>
    %1130 = arith.maximumf %1128, %1129 : vector<4x32xf32>
    %1131 = arith.truncf %1130 : vector<4x32xf32> to vector<4x32xbf16>
    %cst_370 = arith.constant dense<0.000000e+00> : vector<4x32xf32>
    %1132 = tpu.matmul %1131, %3, %cst_370 {dimension_numbers = #tpu.dot_dimension_numbers<[1], [0], [0], [1], [0, 0, 1, 1], [], []>} : vector<4x32xbf16>, vector<32x32xbf16>, vector<4x32xf32> -> vector<4x32xf32>
    %1133 = arith.addf %1132, %20 : vector<4x32xf32>
    %cst_371 = arith.constant 0.000000e+00 : f32
    %1134 = vector.broadcast %cst_371 : f32 to vector<4x32xf32>
    %1135 = arith.maximumf %1133, %1134 : vector<4x32xf32>
    %1136 = arith.truncf %1135 : vector<4x32xf32> to vector<4x32xbf16>
    %cst_372 = arith.constant dense<0.000000e+00> : vector<4x32xf32>
    %1137 = tpu.matmul %1136, %5, %cst_372 {dimension_numbers = #tpu.dot_dimension_numbers<[1], [0], [0], [1], [0, 0, 1, 1], [], []>} : vector<4x32xbf16>, vector<32x32xbf16>, vector<4x32xf32> -> vector<4x32xf32>
    %1138 = arith.addf %1137, %26 : vector<4x32xf32>
    %1139 = vector.broadcast %1111 : f32 to vector<4x32xf32>
    %1140 = arith.mulf %1139, %1138 : vector<4x32xf32>
    %1141 = arith.addf %1115, %1140 : vector<4x32xf32>
    %cst_373 = arith.constant 0.000000e+00 : f32
    %1142 = vector.broadcast %cst_373 : f32 to vector<4x32xf32>
    %1143 = arith.maximumf %1141, %1142 : vector<4x32xf32>
    %1144 = arith.truncf %1143 : vector<4x32xf32> to vector<4x32xbf16>
    %cst_374 = arith.constant dense<0.000000e+00> : vector<4x32xf32>
    %1145 = tpu.matmul %1144, %3, %cst_374 {dimension_numbers = #tpu.dot_dimension_numbers<[1], [0], [0], [1], [0, 0, 1, 1], [], []>} : vector<4x32xbf16>, vector<32x32xbf16>, vector<4x32xf32> -> vector<4x32xf32>
    %1146 = arith.addf %1145, %20 : vector<4x32xf32>
    %cst_375 = arith.constant 0.000000e+00 : f32
    %1147 = vector.broadcast %cst_375 : f32 to vector<4x32xf32>
    %1148 = arith.maximumf %1146, %1147 : vector<4x32xf32>
    %1149 = arith.truncf %1148 : vector<4x32xf32> to vector<4x32xbf16>
    %cst_376 = arith.constant dense<0.000000e+00> : vector<4x32xf32>
    %1150 = tpu.matmul %1149, %5, %cst_376 {dimension_numbers = #tpu.dot_dimension_numbers<[1], [0], [0], [1], [0, 0, 1, 1], [], []>} : vector<4x32xbf16>, vector<32x32xbf16>, vector<4x32xf32> -> vector<4x32xf32>
    %1151 = arith.addf %1150, %26 : vector<4x32xf32>
    %1152 = vector.broadcast %1110 : f32 to vector<4x32xf32>
    %1153 = arith.mulf %1152, %1151 : vector<4x32xf32>
    %1154 = arith.addf %1115, %1153 : vector<4x32xf32>
    %cst_377 = arith.constant 0.000000e+00 : f32
    %1155 = vector.broadcast %cst_377 : f32 to vector<4x32xf32>
    %1156 = arith.maximumf %1154, %1155 : vector<4x32xf32>
    %1157 = arith.truncf %1156 : vector<4x32xf32> to vector<4x32xbf16>
    %cst_378 = arith.constant dense<0.000000e+00> : vector<4x32xf32>
    %1158 = tpu.matmul %1157, %3, %cst_378 {dimension_numbers = #tpu.dot_dimension_numbers<[1], [0], [0], [1], [0, 0, 1, 1], [], []>} : vector<4x32xbf16>, vector<32x32xbf16>, vector<4x32xf32> -> vector<4x32xf32>
    %1159 = arith.addf %1158, %20 : vector<4x32xf32>
    %cst_379 = arith.constant 0.000000e+00 : f32
    %1160 = vector.broadcast %cst_379 : f32 to vector<4x32xf32>
    %1161 = arith.maximumf %1159, %1160 : vector<4x32xf32>
    %1162 = arith.addf %1135, %1148 : vector<4x32xf32>
    %cst_380 = arith.constant 2.000000e+00 : f32
    %1163 = vector.broadcast %cst_380 : f32 to vector<4x32xf32>
    %1164 = arith.mulf %1163, %1162 : vector<4x32xf32>
    %1165 = arith.addf %1122, %1164 : vector<4x32xf32>
    %1166 = arith.addf %1165, %1161 : vector<4x32xf32>
    %1167 = arith.truncf %1166 : vector<4x32xf32> to vector<4x32xbf16>
    %cst_381 = arith.constant dense<0.000000e+00> : vector<4x32xf32>
    %1168 = tpu.matmul %1167, %4, %cst_381 {dimension_numbers = #tpu.dot_dimension_numbers<[1], [0], [0], [1], [0, 0, 1, 1], [], []>} : vector<4x32xbf16>, vector<32x32xbf16>, vector<4x32xf32> -> vector<4x32xf32>
    %1169 = vector.broadcast %1112 : f32 to vector<4x32xf32>
    %1170 = arith.mulf %1169, %1168 : vector<4x32xf32>
    %1171 = arith.addf %1107, %1170 : vector<4x32xf32>
    %1172 = vector.broadcast %1110 : f32 to vector<4x32xf32>
    %1173 = arith.mulf %1172, %23 : vector<4x32xf32>
    %1174 = arith.addf %1171, %1173 : vector<4x32xf32>
    %1175 = arith.truncf %1174 : vector<4x32xf32> to vector<4x32xbf16>
    %cst_382 = arith.constant dense<0.000000e+00> : vector<4x32xf32>
    %1176 = tpu.matmul %1175, %2, %cst_382 {dimension_numbers = #tpu.dot_dimension_numbers<[1], [0], [0], [1], [0, 0, 1, 1], [], []>} : vector<4x32xbf16>, vector<32x32xbf16>, vector<4x32xf32> -> vector<4x32xf32>
    %1177 = arith.addf %1176, %17 : vector<4x32xf32>
    %cst_383 = arith.constant 0.000000e+00 : f32
    %1178 = vector.broadcast %cst_383 : f32 to vector<4x32xf32>
    %1179 = arith.maximumf %1177, %1178 : vector<4x32xf32>
    %1180 = arith.truncf %1179 : vector<4x32xf32> to vector<4x32xbf16>
    %cst_384 = arith.constant dense<0.000000e+00> : vector<4x32xf32>
    %1181 = tpu.matmul %1180, %3, %cst_384 {dimension_numbers = #tpu.dot_dimension_numbers<[1], [0], [0], [1], [0, 0, 1, 1], [], []>} : vector<4x32xbf16>, vector<32x32xbf16>, vector<4x32xf32> -> vector<4x32xf32>
    %1182 = arith.addf %1181, %20 : vector<4x32xf32>
    %cst_385 = arith.constant 0.000000e+00 : f32
    %1183 = vector.broadcast %cst_385 : f32 to vector<4x32xf32>
    %1184 = arith.maximumf %1182, %1183 : vector<4x32xf32>
    %1185 = arith.truncf %1184 : vector<4x32xf32> to vector<4x32xbf16>
    %cst_386 = arith.constant dense<0.000000e+00> : vector<4x32xf32>
    %1186 = tpu.matmul %1185, %5, %cst_386 {dimension_numbers = #tpu.dot_dimension_numbers<[1], [0], [0], [1], [0, 0, 1, 1], [], []>} : vector<4x32xbf16>, vector<32x32xbf16>, vector<4x32xf32> -> vector<4x32xf32>
    %1187 = arith.addf %1186, %26 : vector<4x32xf32>
    %1188 = vector.broadcast %1111 : f32 to vector<4x32xf32>
    %1189 = arith.mulf %1188, %1187 : vector<4x32xf32>
    %1190 = arith.addf %1177, %1189 : vector<4x32xf32>
    %cst_387 = arith.constant 0.000000e+00 : f32
    %1191 = vector.broadcast %cst_387 : f32 to vector<4x32xf32>
    %1192 = arith.maximumf %1190, %1191 : vector<4x32xf32>
    %1193 = arith.truncf %1192 : vector<4x32xf32> to vector<4x32xbf16>
    %cst_388 = arith.constant dense<0.000000e+00> : vector<4x32xf32>
    %1194 = tpu.matmul %1193, %3, %cst_388 {dimension_numbers = #tpu.dot_dimension_numbers<[1], [0], [0], [1], [0, 0, 1, 1], [], []>} : vector<4x32xbf16>, vector<32x32xbf16>, vector<4x32xf32> -> vector<4x32xf32>
    %1195 = arith.addf %1194, %20 : vector<4x32xf32>
    %cst_389 = arith.constant 0.000000e+00 : f32
    %1196 = vector.broadcast %cst_389 : f32 to vector<4x32xf32>
    %1197 = arith.maximumf %1195, %1196 : vector<4x32xf32>
    %1198 = arith.truncf %1197 : vector<4x32xf32> to vector<4x32xbf16>
    %cst_390 = arith.constant dense<0.000000e+00> : vector<4x32xf32>
    %1199 = tpu.matmul %1198, %5, %cst_390 {dimension_numbers = #tpu.dot_dimension_numbers<[1], [0], [0], [1], [0, 0, 1, 1], [], []>} : vector<4x32xbf16>, vector<32x32xbf16>, vector<4x32xf32> -> vector<4x32xf32>
    %1200 = arith.addf %1199, %26 : vector<4x32xf32>
    %1201 = vector.broadcast %1111 : f32 to vector<4x32xf32>
    %1202 = arith.mulf %1201, %1200 : vector<4x32xf32>
    %1203 = arith.addf %1177, %1202 : vector<4x32xf32>
    %cst_391 = arith.constant 0.000000e+00 : f32
    %1204 = vector.broadcast %cst_391 : f32 to vector<4x32xf32>
    %1205 = arith.maximumf %1203, %1204 : vector<4x32xf32>
    %1206 = arith.truncf %1205 : vector<4x32xf32> to vector<4x32xbf16>
    %cst_392 = arith.constant dense<0.000000e+00> : vector<4x32xf32>
    %1207 = tpu.matmul %1206, %3, %cst_392 {dimension_numbers = #tpu.dot_dimension_numbers<[1], [0], [0], [1], [0, 0, 1, 1], [], []>} : vector<4x32xbf16>, vector<32x32xbf16>, vector<4x32xf32> -> vector<4x32xf32>
    %1208 = arith.addf %1207, %20 : vector<4x32xf32>
    %cst_393 = arith.constant 0.000000e+00 : f32
    %1209 = vector.broadcast %cst_393 : f32 to vector<4x32xf32>
    %1210 = arith.maximumf %1208, %1209 : vector<4x32xf32>
    %1211 = arith.truncf %1210 : vector<4x32xf32> to vector<4x32xbf16>
    %cst_394 = arith.constant dense<0.000000e+00> : vector<4x32xf32>
    %1212 = tpu.matmul %1211, %5, %cst_394 {dimension_numbers = #tpu.dot_dimension_numbers<[1], [0], [0], [1], [0, 0, 1, 1], [], []>} : vector<4x32xbf16>, vector<32x32xbf16>, vector<4x32xf32> -> vector<4x32xf32>
    %1213 = arith.addf %1212, %26 : vector<4x32xf32>
    %1214 = vector.broadcast %1110 : f32 to vector<4x32xf32>
    %1215 = arith.mulf %1214, %1213 : vector<4x32xf32>
    %1216 = arith.addf %1177, %1215 : vector<4x32xf32>
    %cst_395 = arith.constant 0.000000e+00 : f32
    %1217 = vector.broadcast %cst_395 : f32 to vector<4x32xf32>
    %1218 = arith.maximumf %1216, %1217 : vector<4x32xf32>
    %1219 = arith.truncf %1218 : vector<4x32xf32> to vector<4x32xbf16>
    %cst_396 = arith.constant dense<0.000000e+00> : vector<4x32xf32>
    %1220 = tpu.matmul %1219, %3, %cst_396 {dimension_numbers = #tpu.dot_dimension_numbers<[1], [0], [0], [1], [0, 0, 1, 1], [], []>} : vector<4x32xbf16>, vector<32x32xbf16>, vector<4x32xf32> -> vector<4x32xf32>
    %1221 = arith.addf %1220, %20 : vector<4x32xf32>
    %cst_397 = arith.constant 0.000000e+00 : f32
    %1222 = vector.broadcast %cst_397 : f32 to vector<4x32xf32>
    %1223 = arith.maximumf %1221, %1222 : vector<4x32xf32>
    %1224 = arith.addf %1197, %1210 : vector<4x32xf32>
    %cst_398 = arith.constant 2.000000e+00 : f32
    %1225 = vector.broadcast %cst_398 : f32 to vector<4x32xf32>
    %1226 = arith.mulf %1225, %1224 : vector<4x32xf32>
    %1227 = arith.addf %1184, %1226 : vector<4x32xf32>
    %1228 = arith.addf %1227, %1223 : vector<4x32xf32>
    %1229 = arith.truncf %1228 : vector<4x32xf32> to vector<4x32xbf16>
    %cst_399 = arith.constant dense<0.000000e+00> : vector<4x32xf32>
    %1230 = tpu.matmul %1229, %4, %cst_399 {dimension_numbers = #tpu.dot_dimension_numbers<[1], [0], [0], [1], [0, 0, 1, 1], [], []>} : vector<4x32xbf16>, vector<32x32xbf16>, vector<4x32xf32> -> vector<4x32xf32>
    %1231 = vector.broadcast %1112 : f32 to vector<4x32xf32>
    %1232 = arith.mulf %1231, %1230 : vector<4x32xf32>
    %1233 = arith.addf %1174, %1232 : vector<4x32xf32>
    %1234 = vector.broadcast %1110 : f32 to vector<4x32xf32>
    %1235 = arith.mulf %1234, %23 : vector<4x32xf32>
    %1236 = arith.addf %1233, %1235 : vector<4x32xf32>
    %c36 = arith.constant 36 : index
    %c0_400 = arith.constant 0 : index
    %1237 = vector.load %arg25[%c36, %c0_400] : memref<40x32xf32, #tpu.memory_space<vmem>>, vector<4x32xf32>
    tpu.vector_store %arg25[%c36, %c0_400], %1236 {strides = array<i32>} : memref<40x32xf32, #tpu.memory_space<vmem>>, vector<4x32xf32>,
    %c0_401 = arith.constant 0 : index
    %c0_402 = arith.constant 0 : index
    %1238 = vector.load %arg25[%c0_401, %c0_402] : memref<40x32xf32, #tpu.memory_space<vmem>>, vector<40x32xf32>
    %1239 = arith.truncf %1238 : vector<40x32xf32> to vector<40x32xbf16>
    %cst_403 = arith.constant dense<0.000000e+00> : vector<40x64xf32>
    %1240 = tpu.matmul %1239, %6, %cst_403 {dimension_numbers = #tpu.dot_dimension_numbers<[1], [0], [0], [1], [0, 0, 1, 1], [], []>} : vector<40x32xbf16>, vector<32x64xbf16>, vector<40x64xf32> -> vector<40x64xf32>
    %1241 = arith.addf %1240, %29 : vector<40x64xf32>
    %cst_404 = arith.constant 0.000000e+00 : f32
    %1242 = vector.broadcast %cst_404 : f32 to vector<40x64xf32>
    %1243 = arith.maximumf %1241, %1242 : vector<40x64xf32>
    %1244 = arith.truncf %1243 : vector<40x64xf32> to vector<40x64xbf16>
    %cst_405 = arith.constant dense<0.000000e+00> : vector<40x64xf32>
    %1245 = tpu.matmul %1244, %7, %cst_405 {dimension_numbers = #tpu.dot_dimension_numbers<[1], [0], [0], [1], [0, 0, 1, 1], [], []>} : vector<40x64xbf16>, vector<64x64xbf16>, vector<40x64xf32> -> vector<40x64xf32>
    %1246 = arith.addf %1245, %32 : vector<40x64xf32>
    %cst_406 = arith.constant 0.000000e+00 : f32
    %1247 = vector.broadcast %cst_406 : f32 to vector<40x64xf32>
    %1248 = arith.maximumf %1246, %1247 : vector<40x64xf32>
    %1249 = arith.truncf %1248 : vector<40x64xf32> to vector<40x64xbf16>
    %cst_407 = arith.constant dense<0.000000e+00> : vector<40x8xf32>
    %1250 = tpu.matmul %1249, %8, %cst_407 {dimension_numbers = #tpu.dot_dimension_numbers<[1], [0], [0], [1], [0, 0, 1, 1], [], []>} : vector<40x64xbf16>, vector<64x8xbf16>, vector<40x8xf32> -> vector<40x8xf32>
    %1251 = arith.addf %1250, %35 : vector<40x8xf32>
    %c0_408 = arith.constant 0 : index
    %c0_409 = arith.constant 0 : index
    %1252 = vector.load %arg21[%c0_408, %c0_409] : memref<40x8xf32, #tpu.memory_space<vmem>>, vector<40x8xf32>
    tpu.vector_store %arg21[%c0_408, %c0_409], %1251 {strides = array<i32>} : memref<40x8xf32, #tpu.memory_space<vmem>>, vector<40x8xf32>,
    %1253 = vector.extract_strided_slice %1251 {offsets = [0, 0], sizes = [24, 8], strides = [1, 1]} : vector<40x8xf32> to vector<24x8xf32>
    %c0_410 = arith.constant 0 : index
    %c0_411 = arith.constant 0 : index
    %1254 = vector.load %arg0[%c0_410, %c0_411] : memref<24x8xf32, #tpu.memory_space<vmem>>, vector<24x8xf32>
    %1255 = arith.subf %1253, %1254 : vector<24x8xf32>
    %1256 = vector.extract_strided_slice %1251 {offsets = [24, 0], sizes = [16, 8], strides = [1, 1]} : vector<40x8xf32> to vector<16x8xf32>
    %c0_412 = arith.constant 0 : index
    %c0_413 = arith.constant 0 : index
    %1257 = vector.load %arg1[%c0_412, %c0_413] : memref<16x8xf32, #tpu.memory_space<vmem>>, vector<16x8xf32>
    %1258 = arith.subf %1256, %1257 : vector<16x8xf32>
    %1259 = arith.mulf %1255, %1255 : vector<24x8xf32>
    %1260 = vector.shape_cast %1259 : vector<24x8xf32> to vector<1x24x8xf32>
    %cst_414 = arith.constant dense<0.000000e+00> : vector<1xf32>
    %1261 = vector.multi_reduction <add>, %1260, %cst_414 [1, 2] : vector<1x24x8xf32> to vector<1xf32>
    %1262 = vector.shape_cast %1261 : vector<1xf32> to vector<1x1x1xf32>
    %1263 = vector.extract %1262[0, 0, 0] : f32 from vector<1x1x1xf32>
    %cst_415 = arith.constant 0.00520833349 : f32
    %1264 = arith.mulf %1263, %cst_415 : f32
    %c0_416 = arith.constant 0 : index
    %1265 = memref.load %arg22[%c0_416] : memref<1xf32, #tpu.memory_space<smem>>
    memref.store %1264, %arg22[%c0_416] : memref<1xf32, #tpu.memory_space<smem>>
    %1266 = arith.mulf %1258, %1258 : vector<16x8xf32>
    %1267 = vector.shape_cast %1266 : vector<16x8xf32> to vector<1x16x8xf32>
    %cst_417 = arith.constant dense<0.000000e+00> : vector<1xf32>
    %1268 = vector.multi_reduction <add>, %1267, %cst_417 [1, 2] : vector<1x16x8xf32> to vector<1xf32>
    %1269 = vector.shape_cast %1268 : vector<1xf32> to vector<1x1x1xf32>
    %1270 = vector.extract %1269[0, 0, 0] : f32 from vector<1x1x1xf32>
    %cst_418 = arith.constant 7.812500e-03 : f32
    %1271 = arith.mulf %1270, %cst_418 : f32
    %c0_419 = arith.constant 0 : index
    %1272 = memref.load %arg23[%c0_419] : memref<1xf32, #tpu.memory_space<smem>>
    memref.store %1271, %arg23[%c0_419] : memref<1xf32, #tpu.memory_space<smem>>
    return
  }
}

</mosaic_0001>

<llo_original>
// kernel: ode_rnn_forward.1
$region0: #{ode_rnn_forward.1}
  #allocation0 [shape = 'u32[]', space=smem, size = 0x4, offset = 0x4, fixed_abs, tag = 'smem constant byte address 0x4 - core index']
  #allocation1 [shape = 'u32[144,128]{1,0:T(1,128)}', space=vmem, size = 0x12000, scoped, tag = 'internal scratch']
  #allocation2 [shape = 'f32[24,32]{1,0:T(8,128)}', space=vmem, size = 0x3000, scoped, tag = 'scratch operand']
  #allocation3 [shape = 'f32[40,32]{1,0:T(8,128)}', space=vmem, size = 0x5000, scoped, tag = 'scratch operand']
  %s0 = inlined_call_operand.vmem [shape: f32[24,8], index: 0, kind: input, shape index: {}]
  %s1 = inlined_call_operand.vmem [shape: f32[16,8], index: 1, kind: input, shape index: {}]
  %s2 = inlined_call_operand.vmem [shape: f32[10], index: 2, kind: input, shape index: {}]
  %s3 = inlined_call_operand.vmem [shape: bf16[8,32], index: 3, kind: input, shape index: {}]
  %s4 = inlined_call_operand.vmem [shape: f32[1,32], index: 4, kind: input, shape index: {}]
  %s5 = inlined_call_operand.vmem [shape: bf16[64,128], index: 5, kind: input, shape index: {}]
  %s6 = inlined_call_operand.vmem [shape: f32[1,128], index: 6, kind: input, shape index: {}]
  %s7 = inlined_call_operand.vmem [shape: bf16[32,32], index: 7, kind: input, shape index: {}]
  %s8 = inlined_call_operand.vmem [shape: f32[1,32], index: 8, kind: input, shape index: {}]
  %s9 = inlined_call_operand.vmem [shape: bf16[32,32], index: 9, kind: input, shape index: {}]
  %s10 = inlined_call_operand.vmem [shape: f32[1,32], index: 10, kind: input, shape index: {}]
  %s11 = inlined_call_operand.vmem [shape: bf16[32,32], index: 11, kind: input, shape index: {}]
  %s12 = inlined_call_operand.vmem [shape: f32[1,32], index: 12, kind: input, shape index: {}]
  %s13 = inlined_call_operand.vmem [shape: bf16[32,32], index: 13, kind: input, shape index: {}]
  %s14 = inlined_call_operand.vmem [shape: f32[1,32], index: 14, kind: input, shape index: {}]
  %s15 = inlined_call_operand.vmem [shape: bf16[32,64], index: 15, kind: input, shape index: {}]
  %s16 = inlined_call_operand.vmem [shape: f32[1,64], index: 16, kind: input, shape index: {}]
  %s17 = inlined_call_operand.vmem [shape: bf16[64,64], index: 17, kind: input, shape index: {}]
  %s18 = inlined_call_operand.vmem [shape: f32[1,64], index: 18, kind: input, shape index: {}]
  %s19 = inlined_call_operand.vmem [shape: bf16[64,8], index: 19, kind: input, shape index: {}]
  %s20 = inlined_call_operand.vmem [shape: f32[1,8], index: 20, kind: input, shape index: {}]
  %s21 = inlined_call_operand.vmem [shape: f32[40,8], index: 21, kind: output, shape index: {0}]
  %s22 = inlined_call_operand.hbm [shape: f32[1], index: 22, kind: output, shape index: {1}]
  %s23 = inlined_call_operand.hbm [shape: f32[1], index: 23, kind: output, shape index: {2}]
  %24 = xla_tuple %s21, %s22, %s23
  %s25 = sld [smem:[#allocation0]]
  $region114: #{ode_rnn_forward.1} parent=0
    _
  %s27 = ssub.s32 1, %s25
  %s28 = scalar_select 0, %s27, %s25
  $region1: #{ode_rnn_forward.1} parent=0
    #allocation4 [shape = 'u8[512]{0}', space=smem, size = 0x200, scoped, tag = 'input window, operand 2, single buffered']
    #allocation5 [shape = 's32[1]{0}', space=sflag, size = 0x4, scoped, tag = 'scoped memory for ode_rnn_forward.1']
    #allocation6 [shape = 's32[1]{0}', space=sflag, size = 0x4, scoped, tag = 'scoped memory for ode_rnn_forward.1']
    #allocation7 [shape = 'u8[512]{0}', space=smem, size = 0x200, scoped, tag = 'output window, operand 1, single buffered']
    #allocation8 [shape = 'u8[512]{0}', space=smem, size = 0x200, scoped, tag = 'output window, operand 2, single buffered']
    #allocation9 [shape = 's32[1]{0}', space=sflag, size = 0x4, scoped, tag = 'scoped memory for ode_rnn_forward.1']
    %29 = vsyncpa [#allocation6], 0
    %30 = vsyncpa [#allocation5], 0
    %31 = vsyncpa [#allocation9], 0
    // Predicated region
    $region2: #{ode_rnn_forward.1} parent=1 // pred_check
      _
    $region3: #{ode_rnn_forward.1} parent=1 // pred_check_branch
      %33 = sbr.rel (0) target = $region5
    $region4: #{ode_rnn_forward.1} parent=1 // pred_region
      _
    $region5: #{ode_rnn_forward.1} parent=1 // pred_fallthru
      _
    // Predicated region
    $region6: #{ode_rnn_forward.1} parent=1 // pred_check
      _
    $region7: #{ode_rnn_forward.1} parent=1 // pred_check_branch
      %35 = sbr.rel (0) target = $region9
    $region8: #{ode_rnn_forward.1} parent=1 // pred_region
      _
    $region9: #{ode_rnn_forward.1} parent=1 // pred_fallthru
      _
    // Predicated region
    $region10: #{ode_rnn_forward.1} parent=1 // pred_check
      _
    $region11: #{ode_rnn_forward.1} parent=1 // pred_check_branch
      %37 = sbr.rel (0) target = $region13
    $region12: #{ode_rnn_forward.1} parent=1 // pred_region
      %s39 = ssub.s32 16, 16
      %40 = vsyncadd [#allocation6], %s39
      %s42 = sshll.u32 %s2, 4
      %s43 = int_to_ptr.vmem [resolvable:$true] %s42
      %45 = dma.vmem_to_smem %s43, 16, [#allocation4], [#allocation6]
    $region13: #{ode_rnn_forward.1} parent=1 // pred_fallthru
      _
    // Predicated region
    $region14: #{ode_rnn_forward.1} parent=1 // pred_check
      _
    $region15: #{ode_rnn_forward.1} parent=1 // pred_check_branch
      %47 = sbr.rel (0) target = $region17
    $region16: #{ode_rnn_forward.1} parent=1 // pred_region
      _
    $region17: #{ode_rnn_forward.1} parent=1 // pred_fallthru
      _
    // Predicated region
    $region18: #{ode_rnn_forward.1} parent=1 // pred_check
      _
    $region19: #{ode_rnn_forward.1} parent=1 // pred_check_branch
      %49 = sbr.rel (0) target = $region21
    $region20: #{ode_rnn_forward.1} parent=1 // pred_region
      _
    $region21: #{ode_rnn_forward.1} parent=1 // pred_fallthru
      _
    // Predicated region
    $region22: #{ode_rnn_forward.1} parent=1 // pred_check
      _
    $region23: #{ode_rnn_forward.1} parent=1 // pred_check_branch
      %51 = sbr.rel (0) target = $region25
    $region24: #{ode_rnn_forward.1} parent=1 // pred_region
      _
    $region25: #{ode_rnn_forward.1} parent=1 // pred_fallthru
      _
    // Predicated region
    $region26: #{ode_rnn_forward.1} parent=1 // pred_check
      _
    $region27: #{ode_rnn_forward.1} parent=1 // pred_check_branch
      %53 = sbr.rel (0) target = $region29
    $region28: #{ode_rnn_forward.1} parent=1 // pred_region
      _
    $region29: #{ode_rnn_forward.1} parent=1 // pred_fallthru
      _
    // Predicated region
    $region30: #{ode_rnn_forward.1} parent=1 // pred_check
      _
    $region31: #{ode_rnn_forward.1} parent=1 // pred_check_branch
      %55 = sbr.rel (0) target = $region33
    $region32: #{ode_rnn_forward.1} parent=1 // pred_region
      _
    $region33: #{ode_rnn_forward.1} parent=1 // pred_fallthru
      _
    // Predicated region
    $region34: #{ode_rnn_forward.1} parent=1 // pred_check
      _
    $region35: #{ode_rnn_forward.1} parent=1 // pred_check_branch
      %57 = sbr.rel (0) target = $region37
    $region36: #{ode_rnn_forward.1} parent=1 // pred_region
      _
    $region37: #{ode_rnn_forward.1} parent=1 // pred_fallthru
      _
    // Predicated region
    $region38: #{ode_rnn_forward.1} parent=1 // pred_check
      _
    $region39: #{ode_rnn_forward.1} parent=1 // pred_check_branch
      %59 = sbr.rel (0) target = $region41
    $region40: #{ode_rnn_forward.1} parent=1 // pred_region
      _
    $region41: #{ode_rnn_forward.1} parent=1 // pred_fallthru
      _
    // Predicated region
    $region42: #{ode_rnn_forward.1} parent=1 // pred_check
      _
    $region43: #{ode_rnn_forward.1} parent=1 // pred_check_branch
      %61 = sbr.rel (0) target = $region45
    $region44: #{ode_rnn_forward.1} parent=1 // pred_region
      _
    $region45: #{ode_rnn_forward.1} parent=1 // pred_fallthru
      _
    // Predicated region
    $region46: #{ode_rnn_forward.1} parent=1 // pred_check
      _
    $region47: #{ode_rnn_forward.1} parent=1 // pred_check_branch
      %63 = sbr.rel (0) target = $region49
    $region48: #{ode_rnn_forward.1} parent=1 // pred_region
      _
    $region49: #{ode_rnn_forward.1} parent=1 // pred_fallthru
      _
    // Predicated region
    $region50: #{ode_rnn_forward.1} parent=1 // pred_check
      _
    $region51: #{ode_rnn_forward.1} parent=1 // pred_check_branch
      %65 = sbr.rel (0) target = $region53
    $region52: #{ode_rnn_forward.1} parent=1 // pred_region
      _
    $region53: #{ode_rnn_forward.1} parent=1 // pred_fallthru
      _
    // Predicated region
    $region54: #{ode_rnn_forward.1} parent=1 // pred_check
      _
    $region55: #{ode_rnn_forward.1} parent=1 // pred_check_branch
      %67 = sbr.rel (0) target = $region57
    $region56: #{ode_rnn_forward.1} parent=1 // pred_region
      _
    $region57: #{ode_rnn_forward.1} parent=1 // pred_fallthru
      _
    // Predicated region
    $region58: #{ode_rnn_forward.1} parent=1 // pred_check
      _
    $region59: #{ode_rnn_forward.1} parent=1 // pred_check_branch
      %69 = sbr.rel (0) target = $region61
    $region60: #{ode_rnn_forward.1} parent=1 // pred_region
      _
    $region61: #{ode_rnn_forward.1} parent=1 // pred_fallthru
      _
    // Predicated region
    $region62: #{ode_rnn_forward.1} parent=1 // pred_check
      _
    $region63: #{ode_rnn_forward.1} parent=1 // pred_check_branch
      %71 = sbr.rel (0) target = $region65
    $region64: #{ode_rnn_forward.1} parent=1 // pred_region
      _
    $region65: #{ode_rnn_forward.1} parent=1 // pred_fallthru
      _
    // Predicated region
    $region66: #{ode_rnn_forward.1} parent=1 // pred_check
      _
    $region67: #{ode_rnn_forward.1} parent=1 // pred_check_branch
      %73 = sbr.rel (0) target = $region69
    $region68: #{ode_rnn_forward.1} parent=1 // pred_region
      _
    $region69: #{ode_rnn_forward.1} parent=1 // pred_fallthru
      _
    // Predicated region
    $region70: #{ode_rnn_forward.1} parent=1 // pred_check
      _
    $region71: #{ode_rnn_forward.1} parent=1 // pred_check_branch
      %75 = sbr.rel (0) target = $region73
    $region72: #{ode_rnn_forward.1} parent=1 // pred_region
      _
    $region73: #{ode_rnn_forward.1} parent=1 // pred_fallthru
      _
    // Predicated region
    $region74: #{ode_rnn_forward.1} parent=1 // pred_check
      _
    $region75: #{ode_rnn_forward.1} parent=1 // pred_check_branch
      %77 = sbr.rel (0) target = $region77
    $region76: #{ode_rnn_forward.1} parent=1 // pred_region
      _
    $region77: #{ode_rnn_forward.1} parent=1 // pred_fallthru
      _
    // Predicated region
    $region78: #{ode_rnn_forward.1} parent=1 // pred_check
      _
    $region79: #{ode_rnn_forward.1} parent=1 // pred_check_branch
      %79 = sbr.rel (0) target = $region81
    $region80: #{ode_rnn_forward.1} parent=1 // pred_region
      _
    $region81: #{ode_rnn_forward.1} parent=1 // pred_fallthru
      _
    // Predicated region
    $region82: #{ode_rnn_forward.1} parent=1 // pred_check
      _
    $region83: #{ode_rnn_forward.1} parent=1 // pred_check_branch
      %81 = sbr.rel (0) target = $region85
    $region84: #{ode_rnn_forward.1} parent=1 // pred_region
      _
    $region85: #{ode_rnn_forward.1} parent=1 // pred_fallthru
      _
    // Predicated region
    $region86: #{ode_rnn_forward.1} parent=1 // pred_check
      _
    $region87: #{ode_rnn_forward.1} parent=1 // pred_check_branch
      %83 = sbr.rel (0) target = $region89
    $region88: #{ode_rnn_forward.1} parent=1 // pred_region
      %84 = dma.done [#allocation6], 16
    $region89: #{ode_rnn_forward.1} parent=1 // pred_fallthru
      _
    %85 = sfence
    %v87 = vld [vmem:[%s3] sm:$0xf]
    %v88 = vld [vmem:[%s5] sm:$0xf]
    %v89 = vld [vmem:[%s5 + $0x4] sm:$0xf]
    %v90 = vld [vmem:[%s5 + $0x8] sm:$0xf]
    %v91 = vld [vmem:[%s5 + $0xc] sm:$0xf]
    %v92 = vld [vmem:[%s5 + $0x10] sm:$0xf]
    %v93 = vld [vmem:[%s5 + $0x14] sm:$0xf]
    %v94 = vld [vmem:[%s5 + $0x18] sm:$0xf]
    %v95 = vld [vmem:[%s5 + $0x1c] sm:$0xf]
    %v96 = vld [vmem:[%s7] sm:$0xf]
    %v97 = vld [vmem:[%s7 + $0x4] sm:$0xf]
    %v98 = vld [vmem:[%s7 + $0x8] sm:$0xf]
    %v99 = vld [vmem:[%s7 + $0xc] sm:$0xf]
    %v100 = vld [vmem:[%s9] sm:$0xf]
    %v101 = vld [vmem:[%s9 + $0x4] sm:$0xf]
    %v102 = vld [vmem:[%s9 + $0x8] sm:$0xf]
    %v103 = vld [vmem:[%s9 + $0xc] sm:$0xf]
    %v104 = vld [vmem:[%s11] sm:$0xf]
    %v105 = vld [vmem:[%s11 + $0x4] sm:$0xf]
    %v106 = vld [vmem:[%s11 + $0x8] sm:$0xf]
    %v107 = vld [vmem:[%s11 + $0xc] sm:$0xf]
    %v108 = vld [vmem:[%s13] sm:$0xf]
    %v109 = vld [vmem:[%s13 + $0x4] sm:$0xf]
    %v110 = vld [vmem:[%s13 + $0x8] sm:$0xf]
    %v111 = vld [vmem:[%s13 + $0xc] sm:$0xf]
    %v112 = vld [vmem:[%s15] sm:$0xf]
    %v113 = vld [vmem:[%s15 + $0x4] sm:$0xf]
    %v114 = vld [vmem:[%s15 + $0x8] sm:$0xf]
    %v115 = vld [vmem:[%s15 + $0xc] sm:$0xf]
    %v116 = vld [vmem:[%s17] sm:$0xf]
    %v117 = vld [vmem:[%s17 + $0x4] sm:$0xf]
    %v118 = vld [vmem:[%s17 + $0x8] sm:$0xf]
    %v119 = vld [vmem:[%s17 + $0xc] sm:$0xf]
    %v120 = vld [vmem:[%s17 + $0x10] sm:$0xf]
    %v121 = vld [vmem:[%s17 + $0x14] sm:$0xf]
    %v122 = vld [vmem:[%s17 + $0x18] sm:$0xf]
    %v123 = vld [vmem:[%s17 + $0x1c] sm:$0xf]
    %v124 = vld [vmem:[%s19] sm:$0xf]
    %v125 = vld [vmem:[%s19 + $0x4] sm:$0xf]
    %v126 = vld [vmem:[%s19 + $0x8] sm:$0xf]
    %v127 = vld [vmem:[%s19 + $0xc] sm:$0xf]
    %v128 = vld [vmem:[%s19 + $0x10] sm:$0xf]
    %v129 = vld [vmem:[%s19 + $0x14] sm:$0xf]
    %v130 = vld [vmem:[%s19 + $0x18] sm:$0xf]
    %v131 = vld [vmem:[%s19 + $0x1c] sm:$0xf]
    %v132 = vld [vmem:[%s4] sm:$0x1]
    %v134 = vlaneseq
    %v135 = vshrl.u32 %v134, 7
    %v136 = vsub.s32 0, %v135
    %v137 = vrot.slane %v132, %v136
    %v139 = vld [vmem:[%s6] sm:$0x1]
    %v141 = vlaneseq
    %v142 = vshrl.u32 %v141, 7
    %v143 = vsub.s32 0, %v142
    %v144 = vrot.slane %v139, %v143
    %v146 = vld [vmem:[%s8] sm:$0x1]
    %v148 = vlaneseq
    %v149 = vshrl.u32 %v148, 7
    %v150 = vsub.s32 0, %v149
    %v151 = vrot.slane %v146, %v150
    %v153 = vld [vmem:[%s10] sm:$0x1]
    %v155 = vlaneseq
    %v156 = vshrl.u32 %v155, 7
    %v157 = vsub.s32 0, %v156
    %v158 = vrot.slane %v153, %v157
    %v160 = vld [vmem:[%s12] sm:$0x1]
    %v162 = vlaneseq
    %v163 = vshrl.u32 %v162, 7
    %v164 = vsub.s32 0, %v163
    %v165 = vrot.slane %v160, %v164
    %v167 = vld [vmem:[%s14] sm:$0x1]
    %v169 = vlaneseq
    %v170 = vshrl.u32 %v169, 7
    %v171 = vsub.s32 0, %v170
    %v172 = vrot.slane %v167, %v171
    %v174 = vld [vmem:[%s16] sm:$0x1]
    %v176 = vlaneseq
    %v177 = vshrl.u32 %v176, 7
    %v178 = vsub.s32 0, %v177
    %v179 = vrot.slane %v174, %v178
    %v181 = vld [vmem:[%s18] sm:$0x1]
    %v183 = vlaneseq
    %v184 = vshrl.u32 %v183, 7
    %v185 = vsub.s32 0, %v184
    %v186 = vrot.slane %v181, %v185
    %v188 = vld [vmem:[%s20] sm:$0x1]
    %v190 = vlaneseq
    %v191 = vshrl.u32 %v190, 7
    %v192 = vsub.s32 0, %v191
    %v193 = vrot.slane %v188, %v192
    %v195 = vld [vmem:[%s0] sm:$0xff]
    %v196 = vld [vmem:[%s0 + $0x8] sm:$0xff]
    %v197 = vld [vmem:[%s0 + $0x10] sm:$0xff]
    %v198 = vpack.c.bf16 %v196, %v195
    %v199 = vpack.c.bf16 %v197, %v197
    %vm200 = vcmask 64512
    %v202 = vsel %vm200, %v198, 0
    %v205 = vsel %vm200, %v199, 0
    %vm207 = vcmask 1043456
    %v209 = vsel %vm207, %v87, 0
    %211 = vmatprep.subr.bf16.mxu0 0
    %212 = vmatpush1.bf16.msra.mxu0 %v209
    %213 = vmatprep.subr.bf16.mxu0 0
    %214 = vmatpush1.bf16.msra.mxu0 0
    %215 = vmatprep.subr.bf16.mxu0 0
    %216 = vmatpush1.bf16.msra.mxu0 0
    %217 = vmatprep.subr.bf16.mxu0 0
    %218 = vmatpush1.bf16.msra.mxu0 0
    %219 = vmatprep.subr.bf16.mxu0 0
    %220 = vmatpush1.bf16.msra.mxu0 0
    %221 = vmatprep.subr.bf16.mxu0 0
    %222 = vmatpush1.bf16.msra.mxu0 0
    %223 = vmatprep.subr.bf16.mxu0 0
    %224 = vmatpush1.bf16.msra.mxu0 0
    %225 = vmatprep.subr.bf16.mxu0 0
    %226 = vmatpush1.bf16.msra.mxu0 0
    %227 = vmatprep.subr.bf16.mxu0 0
    %228 = vmatpush1.bf16.msra.mxu0 0
    %229 = vmatprep.subr.bf16.mxu0 0
    %230 = vmatpush1.bf16.msra.mxu0 0
    %231 = vmatprep.subr.bf16.mxu0 0
    %232 = vmatpush1.bf16.msra.mxu0 0
    %233 = vmatprep.subr.bf16.mxu0 0
    %234 = vmatpush1.bf16.msra.mxu0 0
    %235 = vmatprep.subr.bf16.mxu0 0
    %236 = vmatpush1.bf16.msra.mxu0 0
    %237 = vmatprep.subr.bf16.mxu0 0
    %238 = vmatpush1.bf16.msra.mxu0 0
    %239 = vmatprep.subr.bf16.mxu0 0
    %240 = vmatpush1.bf16.msra.mxu0 0
    %241 = vmatprep.subr.bf16.mxu0 0
    %242 = vmatpush1.bf16.msra.mxu0 0
    %243 = vmatprep.mubr.bf16.mxu0 0
    %244 = vmatmul.mubr.bf16.gmra.mrb[0].mxu0 %v202
    %v245 = vpop.f32.mrb[0].mxu0
    %v246 = vadd.f32 %v137, %v245
    %v247 = vpop.f32.mrb[0].mxu0
    %v248 = vpop.f32.mrb[0].mxu0
    %v249 = vadd.f32 %v137, %v248
    %v250 = vpop.f32.mrb[0].mxu0
    %251 = vmatprep.mubr.bf16.mxu0 0
    %252 = vmatmul.mubr.bf16.gmra.mrb[0].mxu0 %v205
    %v253 = vpop.f32.mrb[0].mxu0
    %v254 = vadd.f32 %v137, %v253
    %v255 = vpop.f32.mrb[0].mxu0
    %v256 = vpop.f32.mrb[0].mxu0
    %v257 = vpop.f32.mrb[0].mxu0
    %258 = vdwg.mxu0
    %vm259 = vcmask 261120
    %260 = vst.msk [vmem:[#allocation2] sm:$0xff] %vm259, %v246
    %261 = vst.msk [vmem:[#allocation2 + $0x8] sm:$0xff] %vm259, %v249
    %262 = vst.msk [vmem:[#allocation2 + $0x10] sm:$0xff] %vm259, %v254
    %v263 = vld [vmem:[#allocation2] sm:$0xf]
    %v264 = vsel %vm259, %v263, 0.0
    %v265 = vpack.c.bf16 %v264, %v264
    %v274 = vunpack.c.l.b16 %v88
    %v275 = vunpack.c.l.b16 %v89
    %v276 = vunpack.c.l.b16 %v90
    %v277 = vunpack.c.l.b16 %v91
    %v278 = vunpack.c.l.b16 %v92
    %v279 = vunpack.c.l.b16 %v93
    %v280 = vunpack.c.l.b16 %v94
    %v281 = vunpack.c.l.b16 %v95
    %v282 = vpack.c.b16 %v275, %v274
    %v283 = vpack.c.b16 %v277, %v276
    %v284 = vpack.c.b16 %v279, %v278
    %v285 = vpack.c.b16 %v281, %v280
    %vm290 = vcmask 523264
    %v292 = vsel %vm290, %v265, 0
    %294 = vmatprep.subr.bf16.mxu0 0
    %295 = vmatpush1.bf16.msra.mxu0 %v282
    %296 = vmatprep.subr.bf16.mxu0 0
    %297 = vmatpush1.bf16.msra.mxu0 %v283
    %298 = vmatprep.subr.bf16.mxu0 0
    %299 = vmatpush1.bf16.msra.mxu0 %v284
    %300 = vmatprep.subr.bf16.mxu0 0
    %301 = vmatpush1.bf16.msra.mxu0 %v285
    %302 = vmatprep.subr.bf16.mxu0 0
    %303 = vmatpush1.bf16.msra.mxu0 0
    %304 = vmatprep.subr.bf16.mxu0 0
    %305 = vmatpush1.bf16.msra.mxu0 0
    %306 = vmatprep.subr.bf16.mxu0 0
    %307 = vmatpush1.bf16.msra.mxu0 0
    %308 = vmatprep.subr.bf16.mxu0 0
    %309 = vmatpush1.bf16.msra.mxu0 0
    %310 = vmatprep.subr.bf16.mxu0 0
    %311 = vmatpush1.bf16.msra.mxu0 0
    %312 = vmatprep.subr.bf16.mxu0 0
    %313 = vmatpush1.bf16.msra.mxu0 0
    %314 = vmatprep.subr.bf16.mxu0 0
    %315 = vmatpush1.bf16.msra.mxu0 0
    %316 = vmatprep.subr.bf16.mxu0 0
    %317 = vmatpush1.bf16.msra.mxu0 0
    %318 = vmatprep.subr.bf16.mxu0 0
    %319 = vmatpush1.bf16.msra.mxu0 0
    %320 = vmatprep.subr.bf16.mxu0 0
    %321 = vmatpush1.bf16.msra.mxu0 0
    %322 = vmatprep.subr.bf16.mxu0 0
    %323 = vmatpush1.bf16.msra.mxu0 0
    %324 = vmatprep.subr.bf16.mxu0 0
    %325 = vmatpush1.bf16.msra.mxu0 0
    %326 = vmatprep.mubr.bf16.mxu0 0
    %327 = vmatmul.mubr.bf16.gmra.mrb[0].mxu0 %v292
    %v328 = vpop.f32.mrb[0].mxu0
    %v329 = vadd.f32 %v144, %v328
    %v330 = vpop.f32.mrb[0].mxu0
    %v331 = vpop.f32.mrb[0].mxu0
    %v332 = vpop.f32.mrb[0].mxu0
    %333 = vdwg.mxu0
    %v334 = vxor.u32 %v329, 2147483648
    %v335 = vmul.f32 %v334, 1.442695
    %v336 = vpow.pop %v335
    %v337 = vadd.f32 %v336, 1.0
    %v338 = vrcp.pop %v337
    %v339 = vmul.f32 1.0, %v338
    %341 = vrot.lane.b32.xlu0 %v329, 32
    %v342 = vpop.permute.xlu0 %341
    %v344 = vmul.f32 %v339, %v342
    %346 = vrot.lane.b32.xlu0 %v344, 64
    %v347 = vpop.permute.xlu0 %346
    %v349 = vadd.f32 %v329, %v347
    %v350 = vtanh.pop %v349
    %v351 = vsub.f32 1.0, %v339
    %353 = vrot.lane.b32.xlu0 %v350, 96
    %v354 = vpop.permute.xlu0 %353
    %v356 = vmul.f32 %v351, %v354
    %v357 = vmul.f32 %v339, 0.0
    %v358 = vadd.f32 %v356, %v357
    %360 = vrot.lane.b32.xlu0 %v358, 96
    %v361 = vpop.permute.xlu0 %360
    %vm363 = vcmask 257024
    %364 = vst.msk [vmem:[#allocation3] sm:$0xf] %vm363, %v361
    %s365 = sld [smem:[#allocation4 + $0x1]]
    %s366 = smul.f32 %s365, 0.5
    %s367 = smul.f32 %s366, 0.5
    %s368 = smul.f32 %s366, 0.16666667
    %v369 = vpack.c.bf16 %v358, %v358
    %371 = vrot.lane.b32.xlu0 %v369, 96
    %v372 = vpop.permute.xlu0 %371
    %v377 = vunpack.c.l.b16 %v96
    %v378 = vunpack.c.l.b16 %v97
    %v379 = vunpack.c.l.b16 %v98
    %v380 = vunpack.c.l.b16 %v99
    %v381 = vpack.c.b16 %v378, %v377
    %v382 = vpack.c.b16 %v380, %v379
    %v386 = vsel %vm259, %v372, 0
    %388 = vmatprep.subr.bf16.mxu0 0
    %389 = vmatpush1.bf16.msra.mxu0 %v381
    %390 = vmatprep.subr.bf16.mxu0 0
    %391 = vmatpush1.bf16.msra.mxu0 %v382
    %392 = vmatprep.subr.bf16.mxu0 0
    %393 = vmatpush1.bf16.msra.mxu0 0
    %394 = vmatprep.subr.bf16.mxu0 0
    %395 = vmatpush1.bf16.msra.mxu0 0
    %396 = vmatprep.subr.bf16.mxu0 0
    %397 = vmatpush1.bf16.msra.mxu0 0
    %398 = vmatprep.subr.bf16.mxu0 0
    %399 = vmatpush1.bf16.msra.mxu0 0
    %400 = vmatprep.subr.bf16.mxu0 0
    %401 = vmatpush1.bf16.msra.mxu0 0
    %402 = vmatprep.subr.bf16.mxu0 0
    %403 = vmatpush1.bf16.msra.mxu0 0
    %404 = vmatprep.subr.bf16.mxu0 0
    %405 = vmatpush1.bf16.msra.mxu0 0
    %406 = vmatprep.subr.bf16.mxu0 0
    %407 = vmatpush1.bf16.msra.mxu0 0
    %408 = vmatprep.subr.bf16.mxu0 0
    %409 = vmatpush1.bf16.msra.mxu0 0
    %410 = vmatprep.subr.bf16.mxu0 0
    %411 = vmatpush1.bf16.msra.mxu0 0
    %412 = vmatprep.subr.bf16.mxu0 0
    %413 = vmatpush1.bf16.msra.mxu0 0
    %414 = vmatprep.subr.bf16.mxu0 0
    %415 = vmatpush1.bf16.msra.mxu0 0
    %416 = vmatprep.subr.bf16.mxu0 0
    %417 = vmatpush1.bf16.msra.mxu0 0
    %418 = vmatprep.subr.bf16.mxu0 0
    %419 = vmatpush1.bf16.msra.mxu0 0
    %420 = vmatprep.mubr.bf16.mxu0 0
    %421 = vmatmul.mubr.bf16.gmra.mrb[0].mxu0 %v386
    %v422 = vpop.f32.mrb[0].mxu0
    %v423 = vadd.f32 %v151, %v422
    %v424 = vpop.f32.mrb[0].mxu0
    %v425 = vpop.f32.mrb[0].mxu0
    %v426 = vpop.f32.mrb[0].mxu0
    %427 = vdwg.mxu0
    %v428 = vmax.f32 %v423, 0.0
    %v429 = vpack.c.bf16 %v428, %v428
    %v434 = vunpack.c.l.b16 %v100
    %v435 = vunpack.c.l.b16 %v101
    %v436 = vunpack.c.l.b16 %v102
    %v437 = vunpack.c.l.b16 %v103
    %v438 = vpack.c.b16 %v435, %v434
    %v439 = vpack.c.b16 %v437, %v436
    %v443 = vsel %vm259, %v429, 0
    %445 = vmatprep.subr.bf16.mxu0 0
    %446 = vmatpush1.bf16.msra.mxu0 %v438
    %447 = vmatprep.subr.bf16.mxu0 0
    %448 = vmatpush1.bf16.msra.mxu0 %v439
    %449 = vmatprep.subr.bf16.mxu0 0
    %450 = vmatpush1.bf16.msra.mxu0 0
    %451 = vmatprep.subr.bf16.mxu0 0
    %452 = vmatpush1.bf16.msra.mxu0 0
    %453 = vmatprep.subr.bf16.mxu0 0
    %454 = vmatpush1.bf16.msra.mxu0 0
    %455 = vmatprep.subr.bf16.mxu0 0
    %456 = vmatpush1.bf16.msra.mxu0 0
    %457 = vmatprep.subr.bf16.mxu0 0
    %458 = vmatpush1.bf16.msra.mxu0 0
    %459 = vmatprep.subr.bf16.mxu0 0
    %460 = vmatpush1.bf16.msra.mxu0 0
    %461 = vmatprep.subr.bf16.mxu0 0
    %462 = vmatpush1.bf16.msra.mxu0 0
    %463 = vmatprep.subr.bf16.mxu0 0
    %464 = vmatpush1.bf16.msra.mxu0 0
    %465 = vmatprep.subr.bf16.mxu0 0
    %466 = vmatpush1.bf16.msra.mxu0 0
    %467 = vmatprep.subr.bf16.mxu0 0
    %468 = vmatpush1.bf16.msra.mxu0 0
    %469 = vmatprep.subr.bf16.mxu0 0
    %470 = vmatpush1.bf16.msra.mxu0 0
    %471 = vmatprep.subr.bf16.mxu0 0
    %472 = vmatpush1.bf16.msra.mxu0 0
    %473 = vmatprep.subr.bf16.mxu0 0
    %474 = vmatpush1.bf16.msra.mxu0 0
    %475 = vmatprep.subr.bf16.mxu0 0
    %476 = vmatpush1.bf16.msra.mxu0 0
    %477 = vmatprep.mubr.bf16.mxu0 0
    %478 = vmatmul.mubr.bf16.gmra.mrb[0].mxu0 %v443
    %v479 = vpop.f32.mrb[0].mxu0
    %v480 = vadd.f32 %v158, %v479
    %v481 = vpop.f32.mrb[0].mxu0
    %v482 = vpop.f32.mrb[0].mxu0
    %v483 = vpop.f32.mrb[0].mxu0
    %484 = vdwg.mxu0
    %v485 = vmax.f32 %v480, 0.0
    %v486 = vpack.c.bf16 %v485, %v485
    %v491 = vunpack.c.l.b16 %v108
    %v492 = vunpack.c.l.b16 %v109
    %v493 = vunpack.c.l.b16 %v110
    %v494 = vunpack.c.l.b16 %v111
    %v495 = vpack.c.b16 %v492, %v491
    %v496 = vpack.c.b16 %v494, %v493
    %v500 = vsel %vm259, %v486, 0
    %502 = vmatprep.subr.bf16.mxu0 0
    %503 = vmatpush1.bf16.msra.mxu0 %v495
    %504 = vmatprep.subr.bf16.mxu0 0
    %505 = vmatpush1.bf16.msra.mxu0 %v496
    %506 = vmatprep.subr.bf16.mxu0 0
    %507 = vmatpush1.bf16.msra.mxu0 0
    %508 = vmatprep.subr.bf16.mxu0 0
    %509 = vmatpush1.bf16.msra.mxu0 0
    %510 = vmatprep.subr.bf16.mxu0 0
    %511 = vmatpush1.bf16.msra.mxu0 0
    %512 = vmatprep.subr.bf16.mxu0 0
    %513 = vmatpush1.bf16.msra.mxu0 0
    %514 = vmatprep.subr.bf16.mxu0 0
    %515 = vmatpush1.bf16.msra.mxu0 0
    %516 = vmatprep.subr.bf16.mxu0 0
    %517 = vmatpush1.bf16.msra.mxu0 0
    %518 = vmatprep.subr.bf16.mxu0 0
    %519 = vmatpush1.bf16.msra.mxu0 0
    %520 = vmatprep.subr.bf16.mxu0 0
    %521 = vmatpush1.bf16.msra.mxu0 0
    %522 = vmatprep.subr.bf16.mxu0 0
    %523 = vmatpush1.bf16.msra.mxu0 0
    %524 = vmatprep.subr.bf16.mxu0 0
    %525 = vmatpush1.bf16.msra.mxu0 0
    %526 = vmatprep.subr.bf16.mxu0 0
    %527 = vmatpush1.bf16.msra.mxu0 0
    %528 = vmatprep.subr.bf16.mxu0 0
    %529 = vmatpush1.bf16.msra.mxu0 0
    %530 = vmatprep.subr.bf16.mxu0 0
    %531 = vmatpush1.bf16.msra.mxu0 0
    %532 = vmatprep.subr.bf16.mxu0 0
    %533 = vmatpush1.bf16.msra.mxu0 0
    %534 = vmatprep.mubr.bf16.mxu0 0
    %535 = vmatmul.mubr.bf16.gmra.mrb[0].mxu0 %v500
    %v536 = vpop.f32.mrb[0].mxu0
    %v537 = vadd.f32 %v172, %v536
    %v538 = vpop.f32.mrb[0].mxu0
    %v539 = vpop.f32.mrb[0].mxu0
    %v540 = vpop.f32.mrb[0].mxu0
    %541 = vdwg.mxu0
    %v542 = vstv %s367
    %v543 = vmul.f32 %v542, %v537
    %v544 = vadd.f32 %v423, %v543
    %v545 = vmax.f32 %v544, 0.0
    %v546 = vpack.c.bf16 %v545, %v545
    %v548 = vsel %vm259, %v546, 0
    %550 = vmatprep.subr.bf16.mxu0 0
    %551 = vmatpush1.bf16.msra.mxu0 %v438
    %552 = vmatprep.subr.bf16.mxu0 0
    %553 = vmatpush1.bf16.msra.mxu0 %v439
    %554 = vmatprep.subr.bf16.mxu0 0
    %555 = vmatpush1.bf16.msra.mxu0 0
    %556 = vmatprep.subr.bf16.mxu0 0
    %557 = vmatpush1.bf16.msra.mxu0 0
    %558 = vmatprep.subr.bf16.mxu0 0
    %559 = vmatpush1.bf16.msra.mxu0 0
    %560 = vmatprep.subr.bf16.mxu0 0
    %561 = vmatpush1.bf16.msra.mxu0 0
    %562 = vmatprep.subr.bf16.mxu0 0
    %563 = vmatpush1.bf16.msra.mxu0 0
    %564 = vmatprep.subr.bf16.mxu0 0
    %565 = vmatpush1.bf16.msra.mxu0 0
    %566 = vmatprep.subr.bf16.mxu0 0
    %567 = vmatpush1.bf16.msra.mxu0 0
    %568 = vmatprep.subr.bf16.mxu0 0
    %569 = vmatpush1.bf16.msra.mxu0 0
    %570 = vmatprep.subr.bf16.mxu0 0
    %571 = vmatpush1.bf16.msra.mxu0 0
    %572 = vmatprep.subr.bf16.mxu0 0
    %573 = vmatpush1.bf16.msra.mxu0 0
    %574 = vmatprep.subr.bf16.mxu0 0
    %575 = vmatpush1.bf16.msra.mxu0 0
    %576 = vmatprep.subr.bf16.mxu0 0
    %577 = vmatpush1.bf16.msra.mxu0 0
    %578 = vmatprep.subr.bf16.mxu0 0
    %579 = vmatpush1.bf16.msra.mxu0 0
    %580 = vmatprep.subr.bf16.mxu0 0
    %581 = vmatpush1.bf16.msra.mxu0 0
    %582 = vmatprep.mubr.bf16.mxu0 0
    %583 = vmatmul.mubr.bf16.gmra.mrb[0].mxu0 %v548
    %v584 = vpop.f32.mrb[0].mxu0
    %v585 = vadd.f32 %v158, %v584
    %v586 = vpop.f32.mrb[0].mxu0
    %v587 = vpop.f32.mrb[0].mxu0
    %v588 = vpop.f32.mrb[0].mxu0
    %589 = vdwg.mxu0
    %v590 = vmax.f32 %v585, 0.0
    %v591 = vpack.c.bf16 %v590, %v590
    %v593 = vsel %vm259, %v591, 0
    %595 = vmatprep.subr.bf16.mxu0 0
    %596 = vmatpush1.bf16.msra.mxu0 %v495
    %597 = vmatprep.subr.bf16.mxu0 0
    %598 = vmatpush1.bf16.msra.mxu0 %v496
    %599 = vmatprep.subr.bf16.mxu0 0
    %600 = vmatpush1.bf16.msra.mxu0 0
    %601 = vmatprep.subr.bf16.mxu0 0
    %602 = vmatpush1.bf16.msra.mxu0 0
    %603 = vmatprep.subr.bf16.mxu0 0
    %604 = vmatpush1.bf16.msra.mxu0 0
    %605 = vmatprep.subr.bf16.mxu0 0
    %606 = vmatpush1.bf16.msra.mxu0 0
    %607 = vmatprep.subr.bf16.mxu0 0
    %608 = vmatpush1.bf16.msra.mxu0 0
    %609 = vmatprep.subr.bf16.mxu0 0
    %610 = vmatpush1.bf16.msra.mxu0 0
    %611 = vmatprep.subr.bf16.mxu0 0
    %612 = vmatpush1.bf16.msra.mxu0 0
    %613 = vmatprep.subr.bf16.mxu0 0
    %614 = vmatpush1.bf16.msra.mxu0 0
    %615 = vmatprep.subr.bf16.mxu0 0
    %616 = vmatpush1.bf16.msra.mxu0 0
    %617 = vmatprep.subr.bf16.mxu0 0
    %618 = vmatpush1.bf16.msra.mxu0 0
    %619 = vmatprep.subr.bf16.mxu0 0
    %620 = vmatpush1.bf16.msra.mxu0 0
    %621 = vmatprep.subr.bf16.mxu0 0
    %622 = vmatpush1.bf16.msra.mxu0 0
    %623 = vmatprep.subr.bf16.mxu0 0
    %624 = vmatpush1.bf16.msra.mxu0 0
    %625 = vmatprep.subr.bf16.mxu0 0
    %626 = vmatpush1.bf16.msra.mxu0 0
    %627 = vmatprep.mubr.bf16.mxu0 0
    %628 = vmatmul.mubr.bf16.gmra.mrb[0].mxu0 %v593
    %v629 = vpop.f32.mrb[0].mxu0
    %v630 = vadd.f32 %v172, %v629
    %v631 = vpop.f32.mrb[0].mxu0
    %v632 = vpop.f32.mrb[0].mxu0
    %v633 = vpop.f32.mrb[0].mxu0
    %634 = vdwg.mxu0
    %v635 = vmul.f32 %v542, %v630
    %v636 = vadd.f32 %v423, %v635
    %v637 = vmax.f32 %v636, 0.0
    %v638 = vpack.c.bf16 %v637, %v637
    %v640 = vsel %vm259, %v638, 0
    %642 = vmatprep.subr.bf16.mxu0 0
    %643 = vmatpush1.bf16.msra.mxu0 %v438
    %644 = vmatprep.subr.bf16.mxu0 0
    %645 = vmatpush1.bf16.msra.mxu0 %v439
    %646 = vmatprep.subr.bf16.mxu0 0
    %647 = vmatpush1.bf16.msra.mxu0 0
    %648 = vmatprep.subr.bf16.mxu0 0
    %649 = vmatpush1.bf16.msra.mxu0 0
    %650 = vmatprep.subr.bf16.mxu0 0
    %651 = vmatpush1.bf16.msra.mxu0 0
    %652 = vmatprep.subr.bf16.mxu0 0
    %653 = vmatpush1.bf16.msra.mxu0 0
    %654 = vmatprep.subr.bf16.mxu0 0
    %655 = vmatpush1.bf16.msra.mxu0 0
    %656 = vmatprep.subr.bf16.mxu0 0
    %657 = vmatpush1.bf16.msra.mxu0 0
    %658 = vmatprep.subr.bf16.mxu0 0
    %659 = vmatpush1.bf16.msra.mxu0 0
    %660 = vmatprep.subr.bf16.mxu0 0
    %661 = vmatpush1.bf16.msra.mxu0 0
    %662 = vmatprep.subr.bf16.mxu0 0
    %663 = vmatpush1.bf16.msra.mxu0 0
    %664 = vmatprep.subr.bf16.mxu0 0
    %665 = vmatpush1.bf16.msra.mxu0 0
    %666 = vmatprep.subr.bf16.mxu0 0
    %667 = vmatpush1.bf16.msra.mxu0 0
    %668 = vmatprep.subr.bf16.mxu0 0
    %669 = vmatpush1.bf16.msra.mxu0 0
    %670 = vmatprep.subr.bf16.mxu0 0
    %671 = vmatpush1.bf16.msra.mxu0 0
    %672 = vmatprep.subr.bf16.mxu0 0
    %673 = vmatpush1.bf16.msra.mxu0 0
    %674 = vmatprep.mubr.bf16.mxu0 0
    %675 = vmatmul.mubr.bf16.gmra.mrb[0].mxu0 %v640
    %v676 = vpop.f32.mrb[0].mxu0
    %v677 = vadd.f32 %v158, %v676
    %v678 = vpop.f32.mrb[0].mxu0
    %v679 = vpop.f32.mrb[0].mxu0
    %v680 = vpop.f32.mrb[0].mxu0
    %681 = vdwg.mxu0
    %v682 = vmax.f32 %v677, 0.0
    %v683 = vpack.c.bf16 %v682, %v682
    %v685 = vsel %vm259, %v683, 0
    %687 = vmatprep.subr.bf16.mxu0 0
    %688 = vmatpush1.bf16.msra.mxu0 %v495
    %689 = vmatprep.subr.bf16.mxu0 0
    %690 = vmatpush1.bf16.msra.mxu0 %v496
    %691 = vmatprep.subr.bf16.mxu0 0
    %692 = vmatpush1.bf16.msra.mxu0 0
    %693 = vmatprep.subr.bf16.mxu0 0
    %694 = vmatpush1.bf16.msra.mxu0 0
    %695 = vmatprep.subr.bf16.mxu0 0
    %696 = vmatpush1.bf16.msra.mxu0 0
    %697 = vmatprep.subr.bf16.mxu0 0
    %698 = vmatpush1.bf16.msra.mxu0 0
    %699 = vmatprep.subr.bf16.mxu0 0
    %700 = vmatpush1.bf16.msra.mxu0 0
    %701 = vmatprep.subr.bf16.mxu0 0
    %702 = vmatpush1.bf16.msra.mxu0 0
    %703 = vmatprep.subr.bf16.mxu0 0
    %704 = vmatpush1.bf16.msra.mxu0 0
    %705 = vmatprep.subr.bf16.mxu0 0
    %706 = vmatpush1.bf16.msra.mxu0 0
    %707 = vmatprep.subr.bf16.mxu0 0
    %708 = vmatpush1.bf16.msra.mxu0 0
    %709 = vmatprep.subr.bf16.mxu0 0
    %710 = vmatpush1.bf16.msra.mxu0 0
    %711 = vmatprep.subr.bf16.mxu0 0
    %712 = vmatpush1.bf16.msra.mxu0 0
    %713 = vmatprep.subr.bf16.mxu0 0
    %714 = vmatpush1.bf16.msra.mxu0 0
    %715 = vmatprep.subr.bf16.mxu0 0
    %716 = vmatpush1.bf16.msra.mxu0 0
    %717 = vmatprep.subr.bf16.mxu0 0
    %718 = vmatpush1.bf16.msra.mxu0 0
    %719 = vmatprep.mubr.bf16.mxu0 0
    %720 = vmatmul.mubr.bf16.gmra.mrb[0].mxu0 %v685
    %v721 = vpop.f32.mrb[0].mxu0
    %v722 = vadd.f32 %v172, %v721
    %v723 = vpop.f32.mrb[0].mxu0
    %v724 = vpop.f32.mrb[0].mxu0
    %v725 = vpop.f32.mrb[0].mxu0
    %726 = vdwg.mxu0
    %v727 = vstv %s366
    %v728 = vmul.f32 %v727, %v722
    %v729 = vadd.f32 %v423, %v728
    %v730 = vmax.f32 %v729, 0.0
    %v731 = vpack.c.bf16 %v730, %v730
    %v733 = vsel %vm259, %v731, 0
    %735 = vmatprep.subr.bf16.mxu0 0
    %736 = vmatpush1.bf16.msra.mxu0 %v438
    %737 = vmatprep.subr.bf16.mxu0 0
    %738 = vmatpush1.bf16.msra.mxu0 %v439
    %739 = vmatprep.subr.bf16.mxu0 0
    %740 = vmatpush1.bf16.msra.mxu0 0
    %741 = vmatprep.subr.bf16.mxu0 0
    %742 = vmatpush1.bf16.msra.mxu0 0
    %743 = vmatprep.subr.bf16.mxu0 0
    %744 = vmatpush1.bf16.msra.mxu0 0
    %745 = vmatprep.subr.bf16.mxu0 0
    %746 = vmatpush1.bf16.msra.mxu0 0
    %747 = vmatprep.subr.bf16.mxu0 0
    %748 = vmatpush1.bf16.msra.mxu0 0
    %749 = vmatprep.subr.bf16.mxu0 0
    %750 = vmatpush1.bf16.msra.mxu0 0
    %751 = vmatprep.subr.bf16.mxu0 0
    %752 = vmatpush1.bf16.msra.mxu0 0
    %753 = vmatprep.subr.bf16.mxu0 0
    %754 = vmatpush1.bf16.msra.mxu0 0
    %755 = vmatprep.subr.bf16.mxu0 0
    %756 = vmatpush1.bf16.msra.mxu0 0
    %757 = vmatprep.subr.bf16.mxu0 0
    %758 = vmatpush1.bf16.msra.mxu0 0
    %759 = vmatprep.subr.bf16.mxu0 0
    %760 = vmatpush1.bf16.msra.mxu0 0
    %761 = vmatprep.subr.bf16.mxu0 0
    %762 = vmatpush1.bf16.msra.mxu0 0
    %763 = vmatprep.subr.bf16.mxu0 0
    %764 = vmatpush1.bf16.msra.mxu0 0
    %765 = vmatprep.subr.bf16.mxu0 0
    %766 = vmatpush1.bf16.msra.mxu0 0
    %767 = vmatprep.mubr.bf16.mxu0 0
    %768 = vmatmul.mubr.bf16.gmra.mrb[0].mxu0 %v733
    %v769 = vpop.f32.mrb[0].mxu0
    %v770 = vadd.f32 %v158, %v769
    %v771 = vpop.f32.mrb[0].mxu0
    %v772 = vpop.f32.mrb[0].mxu0
    %v773 = vpop.f32.mrb[0].mxu0
    %774 = vdwg.mxu0
    %v775 = vmax.f32 %v770, 0.0
    %v776 = vadd.f32 %v590, %v682
    %v777 = vmul.f32 %v776, 2.0
    %v778 = vadd.f32 %v485, %v777
    %v779 = vadd.f32 %v778, %v775
    %v780 = vpack.c.bf16 %v779, %v779
    %v785 = vunpack.c.l.b16 %v104
    %v786 = vunpack.c.l.b16 %v105
    %v787 = vunpack.c.l.b16 %v106
    %v788 = vunpack.c.l.b16 %v107
    %v789 = vpack.c.b16 %v786, %v785
    %v790 = vpack.c.b16 %v788, %v787
    %v794 = vsel %vm259, %v780, 0
    %796 = vmatprep.subr.bf16.mxu0 0
    %797 = vmatpush1.bf16.msra.mxu0 %v789
    %798 = vmatprep.subr.bf16.mxu0 0
    %799 = vmatpush1.bf16.msra.mxu0 %v790
    %800 = vmatprep.subr.bf16.mxu0 0
    %801 = vmatpush1.bf16.msra.mxu0 0
    %802 = vmatprep.subr.bf16.mxu0 0
    %803 = vmatpush1.bf16.msra.mxu0 0
    %804 = vmatprep.subr.bf16.mxu0 0
    %805 = vmatpush1.bf16.msra.mxu0 0
    %806 = vmatprep.subr.bf16.mxu0 0
    %807 = vmatpush1.bf16.msra.mxu0 0
    %808 = vmatprep.subr.bf16.mxu0 0
    %809 = vmatpush1.bf16.msra.mxu0 0
    %810 = vmatprep.subr.bf16.mxu0 0
    %811 = vmatpush1.bf16.msra.mxu0 0
    %812 = vmatprep.subr.bf16.mxu0 0
    %813 = vmatpush1.bf16.msra.mxu0 0
    %814 = vmatprep.subr.bf16.mxu0 0
    %815 = vmatpush1.bf16.msra.mxu0 0
    %816 = vmatprep.subr.bf16.mxu0 0
    %817 = vmatpush1.bf16.msra.mxu0 0
    %818 = vmatprep.subr.bf16.mxu0 0
    %819 = vmatpush1.bf16.msra.mxu0 0
    %820 = vmatprep.subr.bf16.mxu0 0
    %821 = vmatpush1.bf16.msra.mxu0 0
    %822 = vmatprep.subr.bf16.mxu0 0
    %823 = vmatpush1.bf16.msra.mxu0 0
    %824 = vmatprep.subr.bf16.mxu0 0
    %825 = vmatpush1.bf16.msra.mxu0 0
    %826 = vmatprep.subr.bf16.mxu0 0
    %827 = vmatpush1.bf16.msra.mxu0 0
    %828 = vmatprep.mubr.bf16.mxu0 0
    %829 = vmatmul.mubr.bf16.gmra.mrb[0].mxu0 %v794
    %v830 = vpop.f32.mrb[0].mxu0
    %v831 = vadd.f32 0.0, %v830
    %v832 = vpop.f32.mrb[0].mxu0
    %v833 = vpop.f32.mrb[0].mxu0
    %v834 = vpop.f32.mrb[0].mxu0
    %835 = vdwg.mxu0
    %v836 = vstv %s368
    %v837 = vmul.f32 %v836, %v831
    %839 = vrot.lane.b32.xlu0 %v837, 32
    %v840 = vpop.permute.xlu0 %839
    %v842 = vadd.f32 %v358, %v840
    %v843 = vmul.f32 %v727, %v165
    %845 = vrot.lane.b32.xlu0 %v843, 32
    %v846 = vpop.permute.xlu0 %845
    %v848 = vadd.f32 %v842, %v846
    %v849 = vpack.c.bf16 %v848, %v848
    %851 = vrot.lane.b32.xlu0 %v849, 96
    %v852 = vpop.permute.xlu0 %851
    %v854 = vsel %vm259, %v852, 0
    %856 = vmatprep.subr.bf16.mxu0 0
    %857 = vmatpush1.bf16.msra.mxu0 %v381
    %858 = vmatprep.subr.bf16.mxu0 0
    %859 = vmatpush1.bf16.msra.mxu0 %v382
    %860 = vmatprep.subr.bf16.mxu0 0
    %861 = vmatpush1.bf16.msra.mxu0 0
    %862 = vmatprep.subr.bf16.mxu0 0
    %863 = vmatpush1.bf16.msra.mxu0 0
    %864 = vmatprep.subr.bf16.mxu0 0
    %865 = vmatpush1.bf16.msra.mxu0 0
    %866 = vmatprep.subr.bf16.mxu0 0
    %867 = vmatpush1.bf16.msra.mxu0 0
    %868 = vmatprep.subr.bf16.mxu0 0
    %869 = vmatpush1.bf16.msra.mxu0 0
    %870 = vmatprep.subr.bf16.mxu0 0
    %871 = vmatpush1.bf16.msra.mxu0 0
    %872 = vmatprep.subr.bf16.mxu0 0
    %873 = vmatpush1.bf16.msra.mxu0 0
    %874 = vmatprep.subr.bf16.mxu0 0
    %875 = vmatpush1.bf16.msra.mxu0 0
    %876 = vmatprep.subr.bf16.mxu0 0
    %877 = vmatpush1.bf16.msra.mxu0 0
    %878 = vmatprep.subr.bf16.mxu0 0
    %879 = vmatpush1.bf16.msra.mxu0 0
    %880 = vmatprep.subr.bf16.mxu0 0
    %881 = vmatpush1.bf16.msra.mxu0 0
    %882 = vmatprep.subr.bf16.mxu0 0
    %883 = vmatpush1.bf16.msra.mxu0 0
    %884 = vmatprep.subr.bf16.mxu0 0
    %885 = vmatpush1.bf16.msra.mxu0 0
    %886 = vmatprep.subr.bf16.mxu0 0
    %887 = vmatpush1.bf16.msra.mxu0 0
    %888 = vmatprep.mubr.bf16.mxu0 0
    %889 = vmatmul.mubr.bf16.gmra.mrb[0].mxu0 %v854
    %v890 = vpop.f32.mrb[0].mxu0
    %v891 = vadd.f32 %v151, %v890
    %v892 = vpop.f32.mrb[0].mxu0
    %v893 = vpop.f32.mrb[0].mxu0
    %v894 = vpop.f32.mrb[0].mxu0
    %895 = vdwg.mxu0
    %v896 = vmax.f32 %v891, 0.0
    %v897 = vpack.c.bf16 %v896, %v896
    %v899 = vsel %vm259, %v897, 0
    %901 = vmatprep.subr.bf16.mxu0 0
    %902 = vmatpush1.bf16.msra.mxu0 %v438
    %903 = vmatprep.subr.bf16.mxu0 0
    %904 = vmatpush1.bf16.msra.mxu0 %v439
    %905 = vmatprep.subr.bf16.mxu0 0
    %906 = vmatpush1.bf16.msra.mxu0 0
    %907 = vmatprep.subr.bf16.mxu0 0
    %908 = vmatpush1.bf16.msra.mxu0 0
    %909 = vmatprep.subr.bf16.mxu0 0
    %910 = vmatpush1.bf16.msra.mxu0 0
    %911 = vmatprep.subr.bf16.mxu0 0
    %912 = vmatpush1.bf16.msra.mxu0 0
    %913 = vmatprep.subr.bf16.mxu0 0
    %914 = vmatpush1.bf16.msra.mxu0 0
    %915 = vmatprep.subr.bf16.mxu0 0
    %916 = vmatpush1.bf16.msra.mxu0 0
    %917 = vmatprep.subr.bf16.mxu0 0
    %918 = vmatpush1.bf16.msra.mxu0 0
    %919 = vmatprep.subr.bf16.mxu0 0
    %920 = vmatpush1.bf16.msra.mxu0 0
    %921 = vmatprep.subr.bf16.mxu0 0
    %922 = vmatpush1.bf16.msra.mxu0 0
    %923 = vmatprep.subr.bf16.mxu0 0
    %924 = vmatpush1.bf16.msra.mxu0 0
    %925 = vmatprep.subr.bf16.mxu0 0
    %926 = vmatpush1.bf16.msra.mxu0 0
    %927 = vmatprep.subr.bf16.mxu0 0
    %928 = vmatpush1.bf16.msra.mxu0 0
    %929 = vmatprep.subr.bf16.mxu0 0
    %930 = vmatpush1.bf16.msra.mxu0 0
    %931 = vmatprep.subr.bf16.mxu0 0
    %932 = vmatpush1.bf16.msra.mxu0 0
    %933 = vmatprep.mubr.bf16.mxu0 0
    %934 = vmatmul.mubr.bf16.gmra.mrb[0].mxu0 %v899
    %v935 = vpop.f32.mrb[0].mxu0
    %v936 = vadd.f32 %v158, %v935
    %v937 = vpop.f32.mrb[0].mxu0
    %v938 = vpop.f32.mrb[0].mxu0
    %v939 = vpop.f32.mrb[0].mxu0
    %940 = vdwg.mxu0
    %v941 = vmax.f32 %v936, 0.0
    %v942 = vpack.c.bf16 %v941, %v941
    %v944 = vsel %vm259, %v942, 0
    %946 = vmatprep.subr.bf16.mxu0 0
    %947 = vmatpush1.bf16.msra.mxu0 %v495
    %948 = vmatprep.subr.bf16.mxu0 0
    %949 = vmatpush1.bf16.msra.mxu0 %v496
    %950 = vmatprep.subr.bf16.mxu0 0
    %951 = vmatpush1.bf16.msra.mxu0 0
    %952 = vmatprep.subr.bf16.mxu0 0
    %953 = vmatpush1.bf16.msra.mxu0 0
    %954 = vmatprep.subr.bf16.mxu0 0
    %955 = vmatpush1.bf16.msra.mxu0 0
    %956 = vmatprep.subr.bf16.mxu0 0
    %957 = vmatpush1.bf16.msra.mxu0 0
    %958 = vmatprep.subr.bf16.mxu0 0
    %959 = vmatpush1.bf16.msra.mxu0 0
    %960 = vmatprep.subr.bf16.mxu0 0
    %961 = vmatpush1.bf16.msra.mxu0 0
    %962 = vmatprep.subr.bf16.mxu0 0
    %963 = vmatpush1.bf16.msra.mxu0 0
    %964 = vmatprep.subr.bf16.mxu0 0
    %965 = vmatpush1.bf16.msra.mxu0 0
    %966 = vmatprep.subr.bf16.mxu0 0
    %967 = vmatpush1.bf16.msra.mxu0 0
    %968 = vmatprep.subr.bf16.mxu0 0
    %969 = vmatpush1.bf16.msra.mxu0 0
    %970 = vmatprep.subr.bf16.mxu0 0
    %971 = vmatpush1.bf16.msra.mxu0 0
    %972 = vmatprep.subr.bf16.mxu0 0
    %973 = vmatpush1.bf16.msra.mxu0 0
    %974 = vmatprep.subr.bf16.mxu0 0
    %975 = vmatpush1.bf16.msra.mxu0 0
    %976 = vmatprep.subr.bf16.mxu0 0
    %977 = vmatpush1.bf16.msra.mxu0 0
    %978 = vmatprep.mubr.bf16.mxu0 0
    %979 = vmatmul.mubr.bf16.gmra.mrb[0].mxu0 %v944
    %v980 = vpop.f32.mrb[0].mxu0
    %v981 = vadd.f32 %v172, %v980
    %v982 = vpop.f32.mrb[0].mxu0
    %v983 = vpop.f32.mrb[0].mxu0
    %v984 = vpop.f32.mrb[0].mxu0
    %985 = vdwg.mxu0
    %v986 = vmul.f32 %v542, %v981
    %v987 = vadd.f32 %v891, %v986
    %v988 = vmax.f32 %v987, 0.0
    %v989 = vpack.c.bf16 %v988, %v988
    %v991 = vsel %vm259, %v989, 0
    %993 = vmatprep.subr.bf16.mxu0 0
    %994 = vmatpush1.bf16.msra.mxu0 %v438
    %995 = vmatprep.subr.bf16.mxu0 0
    %996 = vmatpush1.bf16.msra.mxu0 %v439
    %997 = vmatprep.subr.bf16.mxu0 0
    %998 = vmatpush1.bf16.msra.mxu0 0
    %999 = vmatprep.subr.bf16.mxu0 0
    %1000 = vmatpush1.bf16.msra.mxu0 0
    %1001 = vmatprep.subr.bf16.mxu0 0
    %1002 = vmatpush1.bf16.msra.mxu0 0
    %1003 = vmatprep.subr.bf16.mxu0 0
    %1004 = vmatpush1.bf16.msra.mxu0 0
    %1005 = vmatprep.subr.bf16.mxu0 0
    %1006 = vmatpush1.bf16.msra.mxu0 0
    %1007 = vmatprep.subr.bf16.mxu0 0
    %1008 = vmatpush1.bf16.msra.mxu0 0
    %1009 = vmatprep.subr.bf16.mxu0 0
    %1010 = vmatpush1.bf16.msra.mxu0 0
    %1011 = vmatprep.subr.bf16.mxu0 0
    %1012 = vmatpush1.bf16.msra.mxu0 0
    %1013 = vmatprep.subr.bf16.mxu0 0
    %1014 = vmatpush1.bf16.msra.mxu0 0
    %1015 = vmatprep.subr.bf16.mxu0 0
    %1016 = vmatpush1.bf16.msra.mxu0 0
    %1017 = vmatprep.subr.bf16.mxu0 0
    %1018 = vmatpush1.bf16.msra.mxu0 0
    %1019 = vmatprep.subr.bf16.mxu0 0
    %1020 = vmatpush1.bf16.msra.mxu0 0
    %1021 = vmatprep.subr.bf16.mxu0 0
    %1022 = vmatpush1.bf16.msra.mxu0 0
    %1023 = vmatprep.subr.bf16.mxu0 0
    %1024 = vmatpush1.bf16.msra.mxu0 0
    %1025 = vmatprep.mubr.bf16.mxu0 0
    %1026 = vmatmul.mubr.bf16.gmra.mrb[0].mxu0 %v991
    %v1027 = vpop.f32.mrb[0].mxu0
    %v1028 = vadd.f32 %v158, %v1027
    %v1029 = vpop.f32.mrb[0].mxu0
    %v1030 = vpop.f32.mrb[0].mxu0
    %v1031 = vpop.f32.mrb[0].mxu0
    %1032 = vdwg.mxu0
    %v1033 = vmax.f32 %v1028, 0.0
    %v1034 = vpack.c.bf16 %v1033, %v1033
    %v1036 = vsel %vm259, %v1034, 0
    %1038 = vmatprep.subr.bf16.mxu0 0
    %1039 = vmatpush1.bf16.msra.mxu0 %v495
    %1040 = vmatprep.subr.bf16.mxu0 0
    %1041 = vmatpush1.bf16.msra.mxu0 %v496
    %1042 = vmatprep.subr.bf16.mxu0 0
    %1043 = vmatpush1.bf16.msra.mxu0 0
    %1044 = vmatprep.subr.bf16.mxu0 0
    %1045 = vmatpush1.bf16.msra.mxu0 0
    %1046 = vmatprep.subr.bf16.mxu0 0
    %1047 = vmatpush1.bf16.msra.mxu0 0
    %1048 = vmatprep.subr.bf16.mxu0 0
    %1049 = vmatpush1.bf16.msra.mxu0 0
    %1050 = vmatprep.subr.bf16.mxu0 0
    %1051 = vmatpush1.bf16.msra.mxu0 0
    %1052 = vmatprep.subr.bf16.mxu0 0
    %1053 = vmatpush1.bf16.msra.mxu0 0
    %1054 = vmatprep.subr.bf16.mxu0 0
    %1055 = vmatpush1.bf16.msra.mxu0 0
    %1056 = vmatprep.subr.bf16.mxu0 0
    %1057 = vmatpush1.bf16.msra.mxu0 0
    %1058 = vmatprep.subr.bf16.mxu0 0
    %1059 = vmatpush1.bf16.msra.mxu0 0
    %1060 = vmatprep.subr.bf16.mxu0 0
    %1061 = vmatpush1.bf16.msra.mxu0 0
    %1062 = vmatprep.subr.bf16.mxu0 0
    %1063 = vmatpush1.bf16.msra.mxu0 0
    %1064 = vmatprep.subr.bf16.mxu0 0
    %1065 = vmatpush1.bf16.msra.mxu0 0
    %1066 = vmatprep.subr.bf16.mxu0 0
    %1067 = vmatpush1.bf16.msra.mxu0 0
    %1068 = vmatprep.subr.bf16.mxu0 0
    %1069 = vmatpush1.bf16.msra.mxu0 0
    %1070 = vmatprep.mubr.bf16.mxu0 0
    %1071 = vmatmul.mubr.bf16.gmra.mrb[0].mxu0 %v1036
    %v1072 = vpop.f32.mrb[0].mxu0
    %v1073 = vadd.f32 %v172, %v1072
    %v1074 = vpop.f32.mrb[0].mxu0
    %v1075 = vpop.f32.mrb[0].mxu0
    %v1076 = vpop.f32.mrb[0].mxu0
    %1077 = vdwg.mxu0
    %v1078 = vmul.f32 %v542, %v1073
    %v1079 = vadd.f32 %v891, %v1078
    %v1080 = vmax.f32 %v1079, 0.0
    %v1081 = vpack.c.bf16 %v1080, %v1080
    %v1083 = vsel %vm259, %v1081, 0
    %1085 = vmatprep.subr.bf16.mxu0 0
    %1086 = vmatpush1.bf16.msra.mxu0 %v438
    %1087 = vmatprep.subr.bf16.mxu0 0
    %1088 = vmatpush1.bf16.msra.mxu0 %v439
    %1089 = vmatprep.subr.bf16.mxu0 0
    %1090 = vmatpush1.bf16.msra.mxu0 0
    %1091 = vmatprep.subr.bf16.mxu0 0
    %1092 = vmatpush1.bf16.msra.mxu0 0
    %1093 = vmatprep.subr.bf16.mxu0 0
    %1094 = vmatpush1.bf16.msra.mxu0 0
    %1095 = vmatprep.subr.bf16.mxu0 0
    %1096 = vmatpush1.bf16.msra.mxu0 0
    %1097 = vmatprep.subr.bf16.mxu0 0
    %1098 = vmatpush1.bf16.msra.mxu0 0
    %1099 = vmatprep.subr.bf16.mxu0 0
    %1100 = vmatpush1.bf16.msra.mxu0 0
    %1101 = vmatprep.subr.bf16.mxu0 0
    %1102 = vmatpush1.bf16.msra.mxu0 0
    %1103 = vmatprep.subr.bf16.mxu0 0
    %1104 = vmatpush1.bf16.msra.mxu0 0
    %1105 = vmatprep.subr.bf16.mxu0 0
    %1106 = vmatpush1.bf16.msra.mxu0 0
    %1107 = vmatprep.subr.bf16.mxu0 0
    %1108 = vmatpush1.bf16.msra.mxu0 0
    %1109 = vmatprep.subr.bf16.mxu0 0
    %1110 = vmatpush1.bf16.msra.mxu0 0
    %1111 = vmatprep.subr.bf16.mxu0 0
    %1112 = vmatpush1.bf16.msra.mxu0 0
    %1113 = vmatprep.subr.bf16.mxu0 0
    %1114 = vmatpush1.bf16.msra.mxu0 0
    %1115 = vmatprep.subr.bf16.mxu0 0
    %1116 = vmatpush1.bf16.msra.mxu0 0
    %1117 = vmatprep.mubr.bf16.mxu0 0
    %1118 = vmatmul.mubr.bf16.gmra.mrb[0].mxu0 %v1083
    %v1119 = vpop.f32.mrb[0].mxu0
    %v1120 = vadd.f32 %v158, %v1119
    %v1121 = vpop.f32.mrb[0].mxu0
    %v1122 = vpop.f32.mrb[0].mxu0
    %v1123 = vpop.f32.mrb[0].mxu0
    %1124 = vdwg.mxu0
    %v1125 = vmax.f32 %v1120, 0.0
    %v1126 = vpack.c.bf16 %v1125, %v1125
    %v1128 = vsel %vm259, %v1126, 0
    %1130 = vmatprep.subr.bf16.mxu0 0
    %1131 = vmatpush1.bf16.msra.mxu0 %v495
    %1132 = vmatprep.subr.bf16.mxu0 0
    %1133 = vmatpush1.bf16.msra.mxu0 %v496
    %1134 = vmatprep.subr.bf16.mxu0 0
    %1135 = vmatpush1.bf16.msra.mxu0 0
    %1136 = vmatprep.subr.bf16.mxu0 0
    %1137 = vmatpush1.bf16.msra.mxu0 0
    %1138 = vmatprep.subr.bf16.mxu0 0
    %1139 = vmatpush1.bf16.msra.mxu0 0
    %1140 = vmatprep.subr.bf16.mxu0 0
    %1141 = vmatpush1.bf16.msra.mxu0 0
    %1142 = vmatprep.subr.bf16.mxu0 0
    %1143 = vmatpush1.bf16.msra.mxu0 0
    %1144 = vmatprep.subr.bf16.mxu0 0
    %1145 = vmatpush1.bf16.msra.mxu0 0
    %1146 = vmatprep.subr.bf16.mxu0 0
    %1147 = vmatpush1.bf16.msra.mxu0 0
    %1148 = vmatprep.subr.bf16.mxu0 0
    %1149 = vmatpush1.bf16.msra.mxu0 0
    %1150 = vmatprep.subr.bf16.mxu0 0
    %1151 = vmatpush1.bf16.msra.mxu0 0
    %1152 = vmatprep.subr.bf16.mxu0 0
    %1153 = vmatpush1.bf16.msra.mxu0 0
    %1154 = vmatprep.subr.bf16.mxu0 0
    %1155 = vmatpush1.bf16.msra.mxu0 0
    %1156 = vmatprep.subr.bf16.mxu0 0
    %1157 = vmatpush1.bf16.msra.mxu0 0
    %1158 = vmatprep.subr.bf16.mxu0 0
    %1159 = vmatpush1.bf16.msra.mxu0 0
    %1160 = vmatprep.subr.bf16.mxu0 0
    %1161 = vmatpush1.bf16.msra.mxu0 0
    %1162 = vmatprep.mubr.bf16.mxu0 0
    %1163 = vmatmul.mubr.bf16.gmra.mrb[0].mxu0 %v1128
    %v1164 = vpop.f32.mrb[0].mxu0
    %v1165 = vadd.f32 %v172, %v1164
    %v1166 = vpop.f32.mrb[0].mxu0
    %v1167 = vpop.f32.mrb[0].mxu0
    %v1168 = vpop.f32.mrb[0].mxu0
    %1169 = vdwg.mxu0
    %v1170 = vmul.f32 %v727, %v1165
    %v1171 = vadd.f32 %v891, %v1170
    %v1172 = vmax.f32 %v1171, 0.0
    %v1173 = vpack.c.bf16 %v1172, %v1172
    %v1175 = vsel %vm259, %v1173, 0
    %1177 = vmatprep.subr.bf16.mxu0 0
    %1178 = vmatpush1.bf16.msra.mxu0 %v438
    %1179 = vmatprep.subr.bf16.mxu0 0
    %1180 = vmatpush1.bf16.msra.mxu0 %v439
    %1181 = vmatprep.subr.bf16.mxu0 0
    %1182 = vmatpush1.bf16.msra.mxu0 0
    %1183 = vmatprep.subr.bf16.mxu0 0
    %1184 = vmatpush1.bf16.msra.mxu0 0
    %1185 = vmatprep.subr.bf16.mxu0 0
    %1186 = vmatpush1.bf16.msra.mxu0 0
    %1187 = vmatprep.subr.bf16.mxu0 0
    %1188 = vmatpush1.bf16.msra.mxu0 0
    %1189 = vmatprep.subr.bf16.mxu0 0
    %1190 = vmatpush1.bf16.msra.mxu0 0
    %1191 = vmatprep.subr.bf16.mxu0 0
    %1192 = vmatpush1.bf16.msra.mxu0 0
    %1193 = vmatprep.subr.bf16.mxu0 0
    %1194 = vmatpush1.bf16.msra.mxu0 0
    %1195 = vmatprep.subr.bf16.mxu0 0
    %1196 = vmatpush1.bf16.msra.mxu0 0
    %1197 = vmatprep.subr.bf16.mxu0 0
    %1198 = vmatpush1.bf16.msra.mxu0 0
    %1199 = vmatprep.subr.bf16.mxu0 0
    %1200 = vmatpush1.bf16.msra.mxu0 0
    %1201 = vmatprep.subr.bf16.mxu0 0
    %1202 = vmatpush1.bf16.msra.mxu0 0
    %1203 = vmatprep.subr.bf16.mxu0 0
    %1204 = vmatpush1.bf16.msra.mxu0 0
    %1205 = vmatprep.subr.bf16.mxu0 0
    %1206 = vmatpush1.bf16.msra.mxu0 0
    %1207 = vmatprep.subr.bf16.mxu0 0
    %1208 = vmatpush1.bf16.msra.mxu0 0
    %1209 = vmatprep.mubr.bf16.mxu0 0
    %1210 = vmatmul.mubr.bf16.gmra.mrb[0].mxu0 %v1175
    %v1211 = vpop.f32.mrb[0].mxu0
    %v1212 = vadd.f32 %v158, %v1211
    %v1213 = vpop.f32.mrb[0].mxu0
    %v1214 = vpop.f32.mrb[0].mxu0
    %v1215 = vpop.f32.mrb[0].mxu0
    %1216 = vdwg.mxu0
    %v1217 = vmax.f32 %v1212, 0.0
    %v1218 = vadd.f32 %v1033, %v1125
    %v1219 = vmul.f32 %v1218, 2.0
    %v1220 = vadd.f32 %v941, %v1219
    %v1221 = vadd.f32 %v1220, %v1217
    %v1222 = vpack.c.bf16 %v1221, %v1221
    %v1224 = vsel %vm259, %v1222, 0
    %1226 = vmatprep.subr.bf16.mxu0 0
    %1227 = vmatpush1.bf16.msra.mxu0 %v789
    %1228 = vmatprep.subr.bf16.mxu0 0
    %1229 = vmatpush1.bf16.msra.mxu0 %v790
    %1230 = vmatprep.subr.bf16.mxu0 0
    %1231 = vmatpush1.bf16.msra.mxu0 0
    %1232 = vmatprep.subr.bf16.mxu0 0
    %1233 = vmatpush1.bf16.msra.mxu0 0
    %1234 = vmatprep.subr.bf16.mxu0 0
    %1235 = vmatpush1.bf16.msra.mxu0 0
    %1236 = vmatprep.subr.bf16.mxu0 0
    %1237 = vmatpush1.bf16.msra.mxu0 0
    %1238 = vmatprep.subr.bf16.mxu0 0
    %1239 = vmatpush1.bf16.msra.mxu0 0
    %1240 = vmatprep.subr.bf16.mxu0 0
    %1241 = vmatpush1.bf16.msra.mxu0 0
    %1242 = vmatprep.subr.bf16.mxu0 0
    %1243 = vmatpush1.bf16.msra.mxu0 0
    %1244 = vmatprep.subr.bf16.mxu0 0
    %1245 = vmatpush1.bf16.msra.mxu0 0
    %1246 = vmatprep.subr.bf16.mxu0 0
    %1247 = vmatpush1.bf16.msra.mxu0 0
    %1248 = vmatprep.subr.bf16.mxu0 0
    %1249 = vmatpush1.bf16.msra.mxu0 0
    %1250 = vmatprep.subr.bf16.mxu0 0
    %1251 = vmatpush1.bf16.msra.mxu0 0
    %1252 = vmatprep.subr.bf16.mxu0 0
    %1253 = vmatpush1.bf16.msra.mxu0 0
    %1254 = vmatprep.subr.bf16.mxu0 0
    %1255 = vmatpush1.bf16.msra.mxu0 0
    %1256 = vmatprep.subr.bf16.mxu0 0
    %1257 = vmatpush1.bf16.msra.mxu0 0
    %1258 = vmatprep.mubr.bf16.mxu0 0
    %1259 = vmatmul.mubr.bf16.gmra.mrb[0].mxu0 %v1224
    %v1260 = vpop.f32.mrb[0].mxu0
    %v1261 = vadd.f32 0.0, %v1260
    %v1262 = vpop.f32.mrb[0].mxu0
    %v1263 = vpop.f32.mrb[0].mxu0
    %v1264 = vpop.f32.mrb[0].mxu0
    %1265 = vdwg.mxu0
    %v1266 = vmul.f32 %v836, %v1261
    %1268 = vrot.lane.b32.xlu0 %v1266, 32
    %v1269 = vpop.permute.xlu0 %1268
    %v1271 = vadd.f32 %v848, %v1269
    %v1272 = vadd.f32 %v1271, %v846
    %v1273 = vld [vmem:[#allocation2 + $0x4] sm:$0xf]
    %v1274 = vsel %vm259, %v1273, %v1272
    %v1275 = vpack.c.bf16 %v1274, %v1274
    %v1277 = vsel %vm290, %v1275, 0
    %1279 = vmatprep.subr.bf16.mxu0 0
    %1280 = vmatpush1.bf16.msra.mxu0 %v282
    %1281 = vmatprep.subr.bf16.mxu0 0
    %1282 = vmatpush1.bf16.msra.mxu0 %v283
    %1283 = vmatprep.subr.bf16.mxu0 0
    %1284 = vmatpush1.bf16.msra.mxu0 %v284
    %1285 = vmatprep.subr.bf16.mxu0 0
    %1286 = vmatpush1.bf16.msra.mxu0 %v285
    %1287 = vmatprep.subr.bf16.mxu0 0
    %1288 = vmatpush1.bf16.msra.mxu0 0
    %1289 = vmatprep.subr.bf16.mxu0 0
    %1290 = vmatpush1.bf16.msra.mxu0 0
    %1291 = vmatprep.subr.bf16.mxu0 0
    %1292 = vmatpush1.bf16.msra.mxu0 0
    %1293 = vmatprep.subr.bf16.mxu0 0
    %1294 = vmatpush1.bf16.msra.mxu0 0
    %1295 = vmatprep.subr.bf16.mxu0 0
    %1296 = vmatpush1.bf16.msra.mxu0 0
    %1297 = vmatprep.subr.bf16.mxu0 0
    %1298 = vmatpush1.bf16.msra.mxu0 0
    %1299 = vmatprep.subr.bf16.mxu0 0
    %1300 = vmatpush1.bf16.msra.mxu0 0
    %1301 = vmatprep.subr.bf16.mxu0 0
    %1302 = vmatpush1.bf16.msra.mxu0 0
    %1303 = vmatprep.subr.bf16.mxu0 0
    %1304 = vmatpush1.bf16.msra.mxu0 0
    %1305 = vmatprep.subr.bf16.mxu0 0
    %1306 = vmatpush1.bf16.msra.mxu0 0
    %1307 = vmatprep.subr.bf16.mxu0 0
    %1308 = vmatpush1.bf16.msra.mxu0 0
    %1309 = vmatprep.subr.bf16.mxu0 0
    %1310 = vmatpush1.bf16.msra.mxu0 0
    %1311 = vmatprep.mubr.bf16.mxu0 0
    %1312 = vmatmul.mubr.bf16.gmra.mrb[0].mxu0 %v1277
    %v1313 = vpop.f32.mrb[0].mxu0
    %v1314 = vadd.f32 %v144, %v1313
    %v1315 = vpop.f32.mrb[0].mxu0
    %v1316 = vpop.f32.mrb[0].mxu0
    %v1317 = vpop.f32.mrb[0].mxu0
    %1318 = vdwg.mxu0
    %v1319 = vxor.u32 %v1314, 2147483648
    %v1320 = vmul.f32 %v1319, 1.442695
    %v1321 = vpow.pop %v1320
    %v1322 = vadd.f32 %v1321, 1.0
    %v1323 = vrcp.pop %v1322
    %v1324 = vmul.f32 1.0, %v1323
    %1326 = vrot.lane.b32.xlu0 %v1314, 32
    %v1327 = vpop.permute.xlu0 %1326
    %v1329 = vmul.f32 %v1324, %v1327
    %1331 = vrot.lane.b32.xlu0 %v1329, 64
    %v1332 = vpop.permute.xlu0 %1331
    %v1334 = vadd.f32 %v1314, %v1332
    %v1335 = vtanh.pop %v1334
    %v1336 = vsub.f32 1.0, %v1324
    %1338 = vrot.lane.b32.xlu0 %v1335, 96
    %v1339 = vpop.permute.xlu0 %1338
    %v1341 = vmul.f32 %v1336, %v1339
    %v1342 = vmul.f32 %v1324, %v1272
    %v1343 = vadd.f32 %v1341, %v1342
    %1345 = vrot.lane.b32.xlu0 %v1343, 96
    %v1346 = vpop.permute.xlu0 %1345
    %1348 = vst.msk [vmem:[#allocation3 + $0x4] sm:$0xf] %vm363, %v1346
    %s1349 = sld [smem:[#allocation4 + $0x2]]
    %s1350 = smul.f32 %s1349, 0.5
    %s1351 = smul.f32 %s1350, 0.5
    %s1352 = smul.f32 %s1350, 0.16666667
    %v1353 = vpack.c.bf16 %v1343, %v1343
    %1355 = vrot.lane.b32.xlu0 %v1353, 96
    %v1356 = vpop.permute.xlu0 %1355
    %v1358 = vsel %vm259, %v1356, 0
    %1360 = vmatprep.subr.bf16.mxu0 0
    %1361 = vmatpush1.bf16.msra.mxu0 %v381
    %1362 = vmatprep.subr.bf16.mxu0 0
    %1363 = vmatpush1.bf16.msra.mxu0 %v382
    %1364 = vmatprep.subr.bf16.mxu0 0
    %1365 = vmatpush1.bf16.msra.mxu0 0
    %1366 = vmatprep.subr.bf16.mxu0 0
    %1367 = vmatpush1.bf16.msra.mxu0 0
    %1368 = vmatprep.subr.bf16.mxu0 0
    %1369 = vmatpush1.bf16.msra.mxu0 0
    %1370 = vmatprep.subr.bf16.mxu0 0
    %1371 = vmatpush1.bf16.msra.mxu0 0
    %1372 = vmatprep.subr.bf16.mxu0 0
    %1373 = vmatpush1.bf16.msra.mxu0 0
    %1374 = vmatprep.subr.bf16.mxu0 0
    %1375 = vmatpush1.bf16.msra.mxu0 0
    %1376 = vmatprep.subr.bf16.mxu0 0
    %1377 = vmatpush1.bf16.msra.mxu0 0
    %1378 = vmatprep.subr.bf16.mxu0 0
    %1379 = vmatpush1.bf16.msra.mxu0 0
    %1380 = vmatprep.subr.bf16.mxu0 0
    %1381 = vmatpush1.bf16.msra.mxu0 0
    %1382 = vmatprep.subr.bf16.mxu0 0
    %1383 = vmatpush1.bf16.msra.mxu0 0
    %1384 = vmatprep.subr.bf16.mxu0 0
    %1385 = vmatpush1.bf16.msra.mxu0 0
    %1386 = vmatprep.subr.bf16.mxu0 0
    %1387 = vmatpush1.bf16.msra.mxu0 0
    %1388 = vmatprep.subr.bf16.mxu0 0
    %1389 = vmatpush1.bf16.msra.mxu0 0
    %1390 = vmatprep.subr.bf16.mxu0 0
    %1391 = vmatpush1.bf16.msra.mxu0 0
    %1392 = vmatprep.mubr.bf16.mxu0 0
    %1393 = vmatmul.mubr.bf16.gmra.mrb[0].mxu0 %v1358
    %v1394 = vpop.f32.mrb[0].mxu0
    %v1395 = vadd.f32 %v151, %v1394
    %v1396 = vpop.f32.mrb[0].mxu0
    %v1397 = vpop.f32.mrb[0].mxu0
    %v1398 = vpop.f32.mrb[0].mxu0
    %1399 = vdwg.mxu0
    %v1400 = vmax.f32 %v1395, 0.0
    %v1401 = vpack.c.bf16 %v1400, %v1400
    %v1403 = vsel %vm259, %v1401, 0
    %1405 = vmatprep.subr.bf16.mxu0 0
    %1406 = vmatpush1.bf16.msra.mxu0 %v438
    %1407 = vmatprep.subr.bf16.mxu0 0
    %1408 = vmatpush1.bf16.msra.mxu0 %v439
    %1409 = vmatprep.subr.bf16.mxu0 0
    %1410 = vmatpush1.bf16.msra.mxu0 0
    %1411 = vmatprep.subr.bf16.mxu0 0
    %1412 = vmatpush1.bf16.msra.mxu0 0
    %1413 = vmatprep.subr.bf16.mxu0 0
    %1414 = vmatpush1.bf16.msra.mxu0 0
    %1415 = vmatprep.subr.bf16.mxu0 0
    %1416 = vmatpush1.bf16.msra.mxu0 0
    %1417 = vmatprep.subr.bf16.mxu0 0
    %1418 = vmatpush1.bf16.msra.mxu0 0
    %1419 = vmatprep.subr.bf16.mxu0 0
    %1420 = vmatpush1.bf16.msra.mxu0 0
    %1421 = vmatprep.subr.bf16.mxu0 0
    %1422 = vmatpush1.bf16.msra.mxu0 0
    %1423 = vmatprep.subr.bf16.mxu0 0
    %1424 = vmatpush1.bf16.msra.mxu0 0
    %1425 = vmatprep.subr.bf16.mxu0 0
    %1426 = vmatpush1.bf16.msra.mxu0 0
    %1427 = vmatprep.subr.bf16.mxu0 0
    %1428 = vmatpush1.bf16.msra.mxu0 0
    %1429 = vmatprep.subr.bf16.mxu0 0
    %1430 = vmatpush1.bf16.msra.mxu0 0
    %1431 = vmatprep.subr.bf16.mxu0 0
    %1432 = vmatpush1.bf16.msra.mxu0 0
    %1433 = vmatprep.subr.bf16.mxu0 0
    %1434 = vmatpush1.bf16.msra.mxu0 0
    %1435 = vmatprep.subr.bf16.mxu0 0
    %1436 = vmatpush1.bf16.msra.mxu0 0
    %1437 = vmatprep.mubr.bf16.mxu0 0
    %1438 = vmatmul.mubr.bf16.gmra.mrb[0].mxu0 %v1403
    %v1439 = vpop.f32.mrb[0].mxu0
    %v1440 = vadd.f32 %v158, %v1439
    %v1441 = vpop.f32.mrb[0].mxu0
    %v1442 = vpop.f32.mrb[0].mxu0
    %v1443 = vpop.f32.mrb[0].mxu0
    %1444 = vdwg.mxu0
    %v1445 = vmax.f32 %v1440, 0.0
    %v1446 = vpack.c.bf16 %v1445, %v1445
    %v1448 = vsel %vm259, %v1446, 0
    %1450 = vmatprep.subr.bf16.mxu0 0
    %1451 = vmatpush1.bf16.msra.mxu0 %v495
    %1452 = vmatprep.subr.bf16.mxu0 0
    %1453 = vmatpush1.bf16.msra.mxu0 %v496
    %1454 = vmatprep.subr.bf16.mxu0 0
    %1455 = vmatpush1.bf16.msra.mxu0 0
    %1456 = vmatprep.subr.bf16.mxu0 0
    %1457 = vmatpush1.bf16.msra.mxu0 0
    %1458 = vmatprep.subr.bf16.mxu0 0
    %1459 = vmatpush1.bf16.msra.mxu0 0
    %1460 = vmatprep.subr.bf16.mxu0 0
    %1461 = vmatpush1.bf16.msra.mxu0 0
    %1462 = vmatprep.subr.bf16.mxu0 0
    %1463 = vmatpush1.bf16.msra.mxu0 0
    %1464 = vmatprep.subr.bf16.mxu0 0
    %1465 = vmatpush1.bf16.msra.mxu0 0
    %1466 = vmatprep.subr.bf16.mxu0 0
    %1467 = vmatpush1.bf16.msra.mxu0 0
    %1468 = vmatprep.subr.bf16.mxu0 0
    %1469 = vmatpush1.bf16.msra.mxu0 0
    %1470 = vmatprep.subr.bf16.mxu0 0
    %1471 = vmatpush1.bf16.msra.mxu0 0
    %1472 = vmatprep.subr.bf16.mxu0 0
    %1473 = vmatpush1.bf16.msra.mxu0 0
    %1474 = vmatprep.subr.bf16.mxu0 0
    %1475 = vmatpush1.bf16.msra.mxu0 0
    %1476 = vmatprep.subr.bf16.mxu0 0
    %1477 = vmatpush1.bf16.msra.mxu0 0
    %1478 = vmatprep.subr.bf16.mxu0 0
    %1479 = vmatpush1.bf16.msra.mxu0 0
    %1480 = vmatprep.subr.bf16.mxu0 0
    %1481 = vmatpush1.bf16.msra.mxu0 0
    %1482 = vmatprep.mubr.bf16.mxu0 0
    %1483 = vmatmul.mubr.bf16.gmra.mrb[0].mxu0 %v1448
    %v1484 = vpop.f32.mrb[0].mxu0
    %v1485 = vadd.f32 %v172, %v1484
    %v1486 = vpop.f32.mrb[0].mxu0
    %v1487 = vpop.f32.mrb[0].mxu0
    %v1488 = vpop.f32.mrb[0].mxu0
    %1489 = vdwg.mxu0
    %v1490 = vstv %s1351
    %v1491 = vmul.f32 %v1490, %v1485
    %v1492 = vadd.f32 %v1395, %v1491
    %v1493 = vmax.f32 %v1492, 0.0
    %v1494 = vpack.c.bf16 %v1493, %v1493
    %v1496 = vsel %vm259, %v1494, 0
    %1498 = vmatprep.subr.bf16.mxu0 0
    %1499 = vmatpush1.bf16.msra.mxu0 %v438
    %1500 = vmatprep.subr.bf16.mxu0 0
    %1501 = vmatpush1.bf16.msra.mxu0 %v439
    %1502 = vmatprep.subr.bf16.mxu0 0
    %1503 = vmatpush1.bf16.msra.mxu0 0
    %1504 = vmatprep.subr.bf16.mxu0 0
    %1505 = vmatpush1.bf16.msra.mxu0 0
    %1506 = vmatprep.subr.bf16.mxu0 0
    %1507 = vmatpush1.bf16.msra.mxu0 0
    %1508 = vmatprep.subr.bf16.mxu0 0
    %1509 = vmatpush1.bf16.msra.mxu0 0
    %1510 = vmatprep.subr.bf16.mxu0 0
    %1511 = vmatpush1.bf16.msra.mxu0 0
    %1512 = vmatprep.subr.bf16.mxu0 0
    %1513 = vmatpush1.bf16.msra.mxu0 0
    %1514 = vmatprep.subr.bf16.mxu0 0
    %1515 = vmatpush1.bf16.msra.mxu0 0
    %1516 = vmatprep.subr.bf16.mxu0 0
    %1517 = vmatpush1.bf16.msra.mxu0 0
    %1518 = vmatprep.subr.bf16.mxu0 0
    %1519 = vmatpush1.bf16.msra.mxu0 0
    %1520 = vmatprep.subr.bf16.mxu0 0
    %1521 = vmatpush1.bf16.msra.mxu0 0
    %1522 = vmatprep.subr.bf16.mxu0 0
    %1523 = vmatpush1.bf16.msra.mxu0 0
    %1524 = vmatprep.subr.bf16.mxu0 0
    %1525 = vmatpush1.bf16.msra.mxu0 0
    %1526 = vmatprep.subr.bf16.mxu0 0
    %1527 = vmatpush1.bf16.msra.mxu0 0
    %1528 = vmatprep.subr.bf16.mxu0 0
    %1529 = vmatpush1.bf16.msra.mxu0 0
    %1530 = vmatprep.mubr.bf16.mxu0 0
    %1531 = vmatmul.mubr.bf16.gmra.mrb[0].mxu0 %v1496
    %v1532 = vpop.f32.mrb[0].mxu0
    %v1533 = vadd.f32 %v158, %v1532
    %v1534 = vpop.f32.mrb[0].mxu0
    %v1535 = vpop.f32.mrb[0].mxu0
    %v1536 = vpop.f32.mrb[0].mxu0
    %1537 = vdwg.mxu0
    %v1538 = vmax.f32 %v1533, 0.0
    %v1539 = vpack.c.bf16 %v1538, %v1538
    %v1541 = vsel %vm259, %v1539, 0
    %1543 = vmatprep.subr.bf16.mxu0 0
    %1544 = vmatpush1.bf16.msra.mxu0 %v495
    %1545 = vmatprep.subr.bf16.mxu0 0
    %1546 = vmatpush1.bf16.msra.mxu0 %v496
    %1547 = vmatprep.subr.bf16.mxu0 0
    %1548 = vmatpush1.bf16.msra.mxu0 0
    %1549 = vmatprep.subr.bf16.mxu0 0
    %1550 = vmatpush1.bf16.msra.mxu0 0
    %1551 = vmatprep.subr.bf16.mxu0 0
    %1552 = vmatpush1.bf16.msra.mxu0 0
    %1553 = vmatprep.subr.bf16.mxu0 0
    %1554 = vmatpush1.bf16.msra.mxu0 0
    %1555 = vmatprep.subr.bf16.mxu0 0
    %1556 = vmatpush1.bf16.msra.mxu0 0
    %1557 = vmatprep.subr.bf16.mxu0 0
    %1558 = vmatpush1.bf16.msra.mxu0 0
    %1559 = vmatprep.subr.bf16.mxu0 0
    %1560 = vmatpush1.bf16.msra.mxu0 0
    %1561 = vmatprep.subr.bf16.mxu0 0
    %1562 = vmatpush1.bf16.msra.mxu0 0
    %1563 = vmatprep.subr.bf16.mxu0 0
    %1564 = vmatpush1.bf16.msra.mxu0 0
    %1565 = vmatprep.subr.bf16.mxu0 0
    %1566 = vmatpush1.bf16.msra.mxu0 0
    %1567 = vmatprep.subr.bf16.mxu0 0
    %1568 = vmatpush1.bf16.msra.mxu0 0
    %1569 = vmatprep.subr.bf16.mxu0 0
    %1570 = vmatpush1.bf16.msra.mxu0 0
    %1571 = vmatprep.subr.bf16.mxu0 0
    %1572 = vmatpush1.bf16.msra.mxu0 0
    %1573 = vmatprep.subr.bf16.mxu0 0
    %1574 = vmatpush1.bf16.msra.mxu0 0
    %1575 = vmatprep.mubr.bf16.mxu0 0
    %1576 = vmatmul.mubr.bf16.gmra.mrb[0].mxu0 %v1541
    %v1577 = vpop.f32.mrb[0].mxu0
    %v1578 = vadd.f32 %v172, %v1577
    %v1579 = vpop.f32.mrb[0].mxu0
    %v1580 = vpop.f32.mrb[0].mxu0
    %v1581 = vpop.f32.mrb[0].mxu0
    %1582 = vdwg.mxu0
    %v1583 = vmul.f32 %v1490, %v1578
    %v1584 = vadd.f32 %v1395, %v1583
    %v1585 = vmax.f32 %v1584, 0.0
    %v1586 = vpack.c.bf16 %v1585, %v1585
    %v1588 = vsel %vm259, %v1586, 0
    %1590 = vmatprep.subr.bf16.mxu0 0
    %1591 = vmatpush1.bf16.msra.mxu0 %v438
    %1592 = vmatprep.subr.bf16.mxu0 0
    %1593 = vmatpush1.bf16.msra.mxu0 %v439
    %1594 = vmatprep.subr.bf16.mxu0 0
    %1595 = vmatpush1.bf16.msra.mxu0 0
    %1596 = vmatprep.subr.bf16.mxu0 0
    %1597 = vmatpush1.bf16.msra.mxu0 0
    %1598 = vmatprep.subr.bf16.mxu0 0
    %1599 = vmatpush1.bf16.msra.mxu0 0
    %1600 = vmatprep.subr.bf16.mxu0 0
    %1601 = vmatpush1.bf16.msra.mxu0 0
    %1602 = vmatprep.subr.bf16.mxu0 0
    %1603 = vmatpush1.bf16.msra.mxu0 0
    %1604 = vmatprep.subr.bf16.mxu0 0
    %1605 = vmatpush1.bf16.msra.mxu0 0
    %1606 = vmatprep.subr.bf16.mxu0 0
    %1607 = vmatpush1.bf16.msra.mxu0 0
    %1608 = vmatprep.subr.bf16.mxu0 0
    %1609 = vmatpush1.bf16.msra.mxu0 0
    %1610 = vmatprep.subr.bf16.mxu0 0
    %1611 = vmatpush1.bf16.msra.mxu0 0
    %1612 = vmatprep.subr.bf16.mxu0 0
    %1613 = vmatpush1.bf16.msra.mxu0 0
    %1614 = vmatprep.subr.bf16.mxu0 0
    %1615 = vmatpush1.bf16.msra.mxu0 0
    %1616 = vmatprep.subr.bf16.mxu0 0
    %1617 = vmatpush1.bf16.msra.mxu0 0
    %1618 = vmatprep.subr.bf16.mxu0 0
    %1619 = vmatpush1.bf16.msra.mxu0 0
    %1620 = vmatprep.subr.bf16.mxu0 0
    %1621 = vmatpush1.bf16.msra.mxu0 0
    %1622 = vmatprep.mubr.bf16.mxu0 0
    %1623 = vmatmul.mubr.bf16.gmra.mrb[0].mxu0 %v1588
    %v1624 = vpop.f32.mrb[0].mxu0
    %v1625 = vadd.f32 %v158, %v1624
    %v1626 = vpop.f32.mrb[0].mxu0
    %v1627 = vpop.f32.mrb[0].mxu0
    %v1628 = vpop.f32.mrb[0].mxu0
    %1629 = vdwg.mxu0
    %v1630 = vmax.f32 %v1625, 0.0
    %v1631 = vpack.c.bf16 %v1630, %v1630
    %v1633 = vsel %vm259, %v1631, 0
    %1635 = vmatprep.subr.bf16.mxu0 0
    %1636 = vmatpush1.bf16.msra.mxu0 %v495
    %1637 = vmatprep.subr.bf16.mxu0 0
    %1638 = vmatpush1.bf16.msra.mxu0 %v496
    %1639 = vmatprep.subr.bf16.mxu0 0
    %1640 = vmatpush1.bf16.msra.mxu0 0
    %1641 = vmatprep.subr.bf16.mxu0 0
    %1642 = vmatpush1.bf16.msra.mxu0 0
    %1643 = vmatprep.subr.bf16.mxu0 0
    %1644 = vmatpush1.bf16.msra.mxu0 0
    %1645 = vmatprep.subr.bf16.mxu0 0
    %1646 = vmatpush1.bf16.msra.mxu0 0
    %1647 = vmatprep.subr.bf16.mxu0 0
    %1648 = vmatpush1.bf16.msra.mxu0 0
    %1649 = vmatprep.subr.bf16.mxu0 0
    %1650 = vmatpush1.bf16.msra.mxu0 0
    %1651 = vmatprep.subr.bf16.mxu0 0
    %1652 = vmatpush1.bf16.msra.mxu0 0
    %1653 = vmatprep.subr.bf16.mxu0 0
    %1654 = vmatpush1.bf16.msra.mxu0 0
    %1655 = vmatprep.subr.bf16.mxu0 0
    %1656 = vmatpush1.bf16.msra.mxu0 0
    %1657 = vmatprep.subr.bf16.mxu0 0
    %1658 = vmatpush1.bf16.msra.mxu0 0
    %1659 = vmatprep.subr.bf16.mxu0 0
    %1660 = vmatpush1.bf16.msra.mxu0 0
    %1661 = vmatprep.subr.bf16.mxu0 0
    %1662 = vmatpush1.bf16.msra.mxu0 0
    %1663 = vmatprep.subr.bf16.mxu0 0
    %1664 = vmatpush1.bf16.msra.mxu0 0
    %1665 = vmatprep.subr.bf16.mxu0 0
    %1666 = vmatpush1.bf16.msra.mxu0 0
    %1667 = vmatprep.mubr.bf16.mxu0 0
    %1668 = vmatmul.mubr.bf16.gmra.mrb[0].mxu0 %v1633
    %v1669 = vpop.f32.mrb[0].mxu0
    %v1670 = vadd.f32 %v172, %v1669
    %v1671 = vpop.f32.mrb[0].mxu0
    %v1672 = vpop.f32.mrb[0].mxu0
    %v1673 = vpop.f32.mrb[0].mxu0
    %1674 = vdwg.mxu0
    %v1675 = vstv %s1350
    %v1676 = vmul.f32 %v1675, %v1670
    %v1677 = vadd.f32 %v1395, %v1676
    %v1678 = vmax.f32 %v1677, 0.0
    %v1679 = vpack.c.bf16 %v1678, %v1678
    %v1681 = vsel %vm259, %v1679, 0
    %1683 = vmatprep.subr.bf16.mxu0 0
    %1684 = vmatpush1.bf16.msra.mxu0 %v438
    %1685 = vmatprep.subr.bf16.mxu0 0
    %1686 = vmatpush1.bf16.msra.mxu0 %v439
    %1687 = vmatprep.subr.bf16.mxu0 0
    %1688 = vmatpush1.bf16.msra.mxu0 0
    %1689 = vmatprep.subr.bf16.mxu0 0
    %1690 = vmatpush1.bf16.msra.mxu0 0
    %1691 = vmatprep.subr.bf16.mxu0 0
    %1692 = vmatpush1.bf16.msra.mxu0 0
    %1693 = vmatprep.subr.bf16.mxu0 0
    %1694 = vmatpush1.bf16.msra.mxu0 0
    %1695 = vmatprep.subr.bf16.mxu0 0
    %1696 = vmatpush1.bf16.msra.mxu0 0
    %1697 = vmatprep.subr.bf16.mxu0 0
    %1698 = vmatpush1.bf16.msra.mxu0 0
    %1699 = vmatprep.subr.bf16.mxu0 0
    %1700 = vmatpush1.bf16.msra.mxu0 0
    %1701 = vmatprep.subr.bf16.mxu0 0
    %1702 = vmatpush1.bf16.msra.mxu0 0
    %1703 = vmatprep.subr.bf16.mxu0 0
    %1704 = vmatpush1.bf16.msra.mxu0 0
    %1705 = vmatprep.subr.bf16.mxu0 0
    %1706 = vmatpush1.bf16.msra.mxu0 0
    %1707 = vmatprep.subr.bf16.mxu0 0
    %1708 = vmatpush1.bf16.msra.mxu0 0
    %1709 = vmatprep.subr.bf16.mxu0 0
    %1710 = vmatpush1.bf16.msra.mxu0 0
    %1711 = vmatprep.subr.bf16.mxu0 0
    %1712 = vmatpush1.bf16.msra.mxu0 0
    %1713 = vmatprep.subr.bf16.mxu0 0
    %1714 = vmatpush1.bf16.msra.mxu0 0
    %1715 = vmatprep.mubr.bf16.mxu0 0
    %1716 = vmatmul.mubr.bf16.gmra.mrb[0].mxu0 %v1681
    %v1717 = vpop.f32.mrb[0].mxu0
    %v1718 = vadd.f32 %v158, %v1717
    %v1719 = vpop.f32.mrb[0].mxu0
    %v1720 = vpop.f32.mrb[0].mxu0
    %v1721 = vpop.f32.mrb[0].mxu0
    %1722 = vdwg.mxu0
    %v1723 = vmax.f32 %v1718, 0.0
    %v1724 = vadd.f32 %v1538, %v1630
    %v1725 = vmul.f32 %v1724, 2.0
    %v1726 = vadd.f32 %v1445, %v1725
    %v1727 = vadd.f32 %v1726, %v1723
    %v1728 = vpack.c.bf16 %v1727, %v1727
    %v1730 = vsel %vm259, %v1728, 0
    %1732 = vmatprep.subr.bf16.mxu0 0
    %1733 = vmatpush1.bf16.msra.mxu0 %v789
    %1734 = vmatprep.subr.bf16.mxu0 0
    %1735 = vmatpush1.bf16.msra.mxu0 %v790
    %1736 = vmatprep.subr.bf16.mxu0 0
    %1737 = vmatpush1.bf16.msra.mxu0 0
    %1738 = vmatprep.subr.bf16.mxu0 0
    %1739 = vmatpush1.bf16.msra.mxu0 0
    %1740 = vmatprep.subr.bf16.mxu0 0
    %1741 = vmatpush1.bf16.msra.mxu0 0
    %1742 = vmatprep.subr.bf16.mxu0 0
    %1743 = vmatpush1.bf16.msra.mxu0 0
    %1744 = vmatprep.subr.bf16.mxu0 0
    %1745 = vmatpush1.bf16.msra.mxu0 0
    %1746 = vmatprep.subr.bf16.mxu0 0
    %1747 = vmatpush1.bf16.msra.mxu0 0
    %1748 = vmatprep.subr.bf16.mxu0 0
    %1749 = vmatpush1.bf16.msra.mxu0 0
    %1750 = vmatprep.subr.bf16.mxu0 0
    %1751 = vmatpush1.bf16.msra.mxu0 0
    %1752 = vmatprep.subr.bf16.mxu0 0
    %1753 = vmatpush1.bf16.msra.mxu0 0
    %1754 = vmatprep.subr.bf16.mxu0 0
    %1755 = vmatpush1.bf16.msra.mxu0 0
    %1756 = vmatprep.subr.bf16.mxu0 0
    %1757 = vmatpush1.bf16.msra.mxu0 0
    %1758 = vmatprep.subr.bf16.mxu0 0
    %1759 = vmatpush1.bf16.msra.mxu0 0
    %1760 = vmatprep.subr.bf16.mxu0 0
    %1761 = vmatpush1.bf16.msra.mxu0 0
    %1762 = vmatprep.subr.bf16.mxu0 0
    %1763 = vmatpush1.bf16.msra.mxu0 0
    %1764 = vmatprep.mubr.bf16.mxu0 0
    %1765 = vmatmul.mubr.bf16.gmra.mrb[0].mxu0 %v1730
    %v1766 = vpop.f32.mrb[0].mxu0
    %v1767 = vadd.f32 0.0, %v1766
    %v1768 = vpop.f32.mrb[0].mxu0
    %v1769 = vpop.f32.mrb[0].mxu0
    %v1770 = vpop.f32.mrb[0].mxu0
    %1771 = vdwg.mxu0
    %v1772 = vstv %s1352
    %v1773 = vmul.f32 %v1772, %v1767
    %1775 = vrot.lane.b32.xlu0 %v1773, 32
    %v1776 = vpop.permute.xlu0 %1775
    %v1778 = vadd.f32 %v1343, %v1776
    %v1779 = vmul.f32 %v1675, %v165
    %1781 = vrot.lane.b32.xlu0 %v1779, 32
    %v1782 = vpop.permute.xlu0 %1781
    %v1784 = vadd.f32 %v1778, %v1782
    %v1785 = vpack.c.bf16 %v1784, %v1784
    %1787 = vrot.lane.b32.xlu0 %v1785, 96
    %v1788 = vpop.permute.xlu0 %1787
    %v1790 = vsel %vm259, %v1788, 0
    %1792 = vmatprep.subr.bf16.mxu0 0
    %1793 = vmatpush1.bf16.msra.mxu0 %v381
    %1794 = vmatprep.subr.bf16.mxu0 0
    %1795 = vmatpush1.bf16.msra.mxu0 %v382
    %1796 = vmatprep.subr.bf16.mxu0 0
    %1797 = vmatpush1.bf16.msra.mxu0 0
    %1798 = vmatprep.subr.bf16.mxu0 0
    %1799 = vmatpush1.bf16.msra.mxu0 0
    %1800 = vmatprep.subr.bf16.mxu0 0
    %1801 = vmatpush1.bf16.msra.mxu0 0
    %1802 = vmatprep.subr.bf16.mxu0 0
    %1803 = vmatpush1.bf16.msra.mxu0 0
    %1804 = vmatprep.subr.bf16.mxu0 0
    %1805 = vmatpush1.bf16.msra.mxu0 0
    %1806 = vmatprep.subr.bf16.mxu0 0
    %1807 = vmatpush1.bf16.msra.mxu0 0
    %1808 = vmatprep.subr.bf16.mxu0 0
    %1809 = vmatpush1.bf16.msra.mxu0 0
    %1810 = vmatprep.subr.bf16.mxu0 0
    %1811 = vmatpush1.bf16.msra.mxu0 0
    %1812 = vmatprep.subr.bf16.mxu0 0
    %1813 = vmatpush1.bf16.msra.mxu0 0
    %1814 = vmatprep.subr.bf16.mxu0 0
    %1815 = vmatpush1.bf16.msra.mxu0 0
    %1816 = vmatprep.subr.bf16.mxu0 0
    %1817 = vmatpush1.bf16.msra.mxu0 0
    %1818 = vmatprep.subr.bf16.mxu0 0
    %1819 = vmatpush1.bf16.msra.mxu0 0
    %1820 = vmatprep.subr.bf16.mxu0 0
    %1821 = vmatpush1.bf16.msra.mxu0 0
    %1822 = vmatprep.subr.bf16.mxu0 0
    %1823 = vmatpush1.bf16.msra.mxu0 0
    %1824 = vmatprep.mubr.bf16.mxu0 0
    %1825 = vmatmul.mubr.bf16.gmra.mrb[0].mxu0 %v1790
    %v1826 = vpop.f32.mrb[0].mxu0
    %v1827 = vadd.f32 %v151, %v1826
    %v1828 = vpop.f32.mrb[0].mxu0
    %v1829 = vpop.f32.mrb[0].mxu0
    %v1830 = vpop.f32.mrb[0].mxu0
    %1831 = vdwg.mxu0
    %v1832 = vmax.f32 %v1827, 0.0
    %v1833 = vpack.c.bf16 %v1832, %v1832
    %v1835 = vsel %vm259, %v1833, 0
    %1837 = vmatprep.subr.bf16.mxu0 0
    %1838 = vmatpush1.bf16.msra.mxu0 %v438
    %1839 = vmatprep.subr.bf16.mxu0 0
    %1840 = vmatpush1.bf16.msra.mxu0 %v439
    %1841 = vmatprep.subr.bf16.mxu0 0
    %1842 = vmatpush1.bf16.msra.mxu0 0
    %1843 = vmatprep.subr.bf16.mxu0 0
    %1844 = vmatpush1.bf16.msra.mxu0 0
    %1845 = vmatprep.subr.bf16.mxu0 0
    %1846 = vmatpush1.bf16.msra.mxu0 0
    %1847 = vmatprep.subr.bf16.mxu0 0
    %1848 = vmatpush1.bf16.msra.mxu0 0
    %1849 = vmatprep.subr.bf16.mxu0 0
    %1850 = vmatpush1.bf16.msra.mxu0 0
    %1851 = vmatprep.subr.bf16.mxu0 0
    %1852 = vmatpush1.bf16.msra.mxu0 0
    %1853 = vmatprep.subr.bf16.mxu0 0
    %1854 = vmatpush1.bf16.msra.mxu0 0
    %1855 = vmatprep.subr.bf16.mxu0 0
    %1856 = vmatpush1.bf16.msra.mxu0 0
    %1857 = vmatprep.subr.bf16.mxu0 0
    %1858 = vmatpush1.bf16.msra.mxu0 0
    %1859 = vmatprep.subr.bf16.mxu0 0
    %1860 = vmatpush1.bf16.msra.mxu0 0
    %1861 = vmatprep.subr.bf16.mxu0 0
    %1862 = vmatpush1.bf16.msra.mxu0 0
    %1863 = vmatprep.subr.bf16.mxu0 0
    %1864 = vmatpush1.bf16.msra.mxu0 0
    %1865 = vmatprep.subr.bf16.mxu0 0
    %1866 = vmatpush1.bf16.msra.mxu0 0
    %1867 = vmatprep.subr.bf16.mxu0 0
    %1868 = vmatpush1.bf16.msra.mxu0 0
    %1869 = vmatprep.mubr.bf16.mxu0 0
    %1870 = vmatmul.mubr.bf16.gmra.mrb[0].mxu0 %v1835
    %v1871 = vpop.f32.mrb[0].mxu0
    %v1872 = vadd.f32 %v158, %v1871
    %v1873 = vpop.f32.mrb[0].mxu0
    %v1874 = vpop.f32.mrb[0].mxu0
    %v1875 = vpop.f32.mrb[0].mxu0
    %1876 = vdwg.mxu0
    %v1877 = vmax.f32 %v1872, 0.0
    %v1878 = vpack.c.bf16 %v1877, %v1877
    %v1880 = vsel %vm259, %v1878, 0
    %1882 = vmatprep.subr.bf16.mxu0 0
    %1883 = vmatpush1.bf16.msra.mxu0 %v495
    %1884 = vmatprep.subr.bf16.mxu0 0
    %1885 = vmatpush1.bf16.msra.mxu0 %v496
    %1886 = vmatprep.subr.bf16.mxu0 0
    %1887 = vmatpush1.bf16.msra.mxu0 0
    %1888 = vmatprep.subr.bf16.mxu0 0
    %1889 = vmatpush1.bf16.msra.mxu0 0
    %1890 = vmatprep.subr.bf16.mxu0 0
    %1891 = vmatpush1.bf16.msra.mxu0 0
    %1892 = vmatprep.subr.bf16.mxu0 0
    %1893 = vmatpush1.bf16.msra.mxu0 0
    %1894 = vmatprep.subr.bf16.mxu0 0
    %1895 = vmatpush1.bf16.msra.mxu0 0
    %1896 = vmatprep.subr.bf16.mxu0 0
    %1897 = vmatpush1.bf16.msra.mxu0 0
    %1898 = vmatprep.subr.bf16.mxu0 0
    %1899 = vmatpush1.bf16.msra.mxu0 0
    %1900 = vmatprep.subr.bf16.mxu0 0
    %1901 = vmatpush1.bf16.msra.mxu0 0
    %1902 = vmatprep.subr.bf16.mxu0 0
    %1903 = vmatpush1.bf16.msra.mxu0 0
    %1904 = vmatprep.subr.bf16.mxu0 0
    %1905 = vmatpush1.bf16.msra.mxu0 0
    %1906 = vmatprep.subr.bf16.mxu0 0
    %1907 = vmatpush1.bf16.msra.mxu0 0
    %1908 = vmatprep.subr.bf16.mxu0 0
    %1909 = vmatpush1.bf16.msra.mxu0 0
    %1910 = vmatprep.subr.bf16.mxu0 0
    %1911 = vmatpush1.bf16.msra.mxu0 0
    %1912 = vmatprep.subr.bf16.mxu0 0
    %1913 = vmatpush1.bf16.msra.mxu0 0
    %1914 = vmatprep.mubr.bf16.mxu0 0
    %1915 = vmatmul.mubr.bf16.gmra.mrb[0].mxu0 %v1880
    %v1916 = vpop.f32.mrb[0].mxu0
    %v1917 = vadd.f32 %v172, %v1916
    %v1918 = vpop.f32.mrb[0].mxu0
    %v1919 = vpop.f32.mrb[0].mxu0
    %v1920 = vpop.f32.mrb[0].mxu0
    %1921 = vdwg.mxu0
    %v1922 = vmul.f32 %v1490, %v1917
    %v1923 = vadd.f32 %v1827, %v1922
    %v1924 = vmax.f32 %v1923, 0.0
    %v1925 = vpack.c.bf16 %v1924, %v1924
    %v1927 = vsel %vm259, %v1925, 0
    %1929 = vmatprep.subr.bf16.mxu0 0
    %1930 = vmatpush1.bf16.msra.mxu0 %v438
    %1931 = vmatprep.subr.bf16.mxu0 0
    %1932 = vmatpush1.bf16.msra.mxu0 %v439
    %1933 = vmatprep.subr.bf16.mxu0 0
    %1934 = vmatpush1.bf16.msra.mxu0 0
    %1935 = vmatprep.subr.bf16.mxu0 0
    %1936 = vmatpush1.bf16.msra.mxu0 0
    %1937 = vmatprep.subr.bf16.mxu0 0
    %1938 = vmatpush1.bf16.msra.mxu0 0
    %1939 = vmatprep.subr.bf16.mxu0 0
    %1940 = vmatpush1.bf16.msra.mxu0 0
    %1941 = vmatprep.subr.bf16.mxu0 0
    %1942 = vmatpush1.bf16.msra.mxu0 0
    %1943 = vmatprep.subr.bf16.mxu0 0
    %1944 = vmatpush1.bf16.msra.mxu0 0
    %1945 = vmatprep.subr.bf16.mxu0 0
    %1946 = vmatpush1.bf16.msra.mxu0 0
    %1947 = vmatprep.subr.bf16.mxu0 0
    %1948 = vmatpush1.bf16.msra.mxu0 0
    %1949 = vmatprep.subr.bf16.mxu0 0
    %1950 = vmatpush1.bf16.msra.mxu0 0
    %1951 = vmatprep.subr.bf16.mxu0 0
    %1952 = vmatpush1.bf16.msra.mxu0 0
    %1953 = vmatprep.subr.bf16.mxu0 0
    %1954 = vmatpush1.bf16.msra.mxu0 0
    %1955 = vmatprep.subr.bf16.mxu0 0
    %1956 = vmatpush1.bf16.msra.mxu0 0
    %1957 = vmatprep.subr.bf16.mxu0 0
    %1958 = vmatpush1.bf16.msra.mxu0 0
    %1959 = vmatprep.subr.bf16.mxu0 0
    %1960 = vmatpush1.bf16.msra.mxu0 0
    %1961 = vmatprep.mubr.bf16.mxu0 0
    %1962 = vmatmul.mubr.bf16.gmra.mrb[0].mxu0 %v1927
    %v1963 = vpop.f32.mrb[0].mxu0
    %v1964 = vadd.f32 %v158, %v1963
    %v1965 = vpop.f32.mrb[0].mxu0
    %v1966 = vpop.f32.mrb[0].mxu0
    %v1967 = vpop.f32.mrb[0].mxu0
    %1968 = vdwg.mxu0
    %v1969 = vmax.f32 %v1964, 0.0
    %v1970 = vpack.c.bf16 %v1969, %v1969
    %v1972 = vsel %vm259, %v1970, 0
    %1974 = vmatprep.subr.bf16.mxu0 0
    %1975 = vmatpush1.bf16.msra.mxu0 %v495
    %1976 = vmatprep.subr.bf16.mxu0 0
    %1977 = vmatpush1.bf16.msra.mxu0 %v496
    %1978 = vmatprep.subr.bf16.mxu0 0
    %1979 = vmatpush1.bf16.msra.mxu0 0
    %1980 = vmatprep.subr.bf16.mxu0 0
    %1981 = vmatpush1.bf16.msra.mxu0 0
    %1982 = vmatprep.subr.bf16.mxu0 0
    %1983 = vmatpush1.bf16.msra.mxu0 0
    %1984 = vmatprep.subr.bf16.mxu0 0
    %1985 = vmatpush1.bf16.msra.mxu0 0
    %1986 = vmatprep.subr.bf16.mxu0 0
    %1987 = vmatpush1.bf16.msra.mxu0 0
    %1988 = vmatprep.subr.bf16.mxu0 0
    %1989 = vmatpush1.bf16.msra.mxu0 0
    %1990 = vmatprep.subr.bf16.mxu0 0
    %1991 = vmatpush1.bf16.msra.mxu0 0
    %1992 = vmatprep.subr.bf16.mxu0 0
    %1993 = vmatpush1.bf16.msra.mxu0 0
    %1994 = vmatprep.subr.bf16.mxu0 0
    %1995 = vmatpush1.bf16.msra.mxu0 0
    %1996 = vmatprep.subr.bf16.mxu0 0
    %1997 = vmatpush1.bf16.msra.mxu0 0
    %1998 = vmatprep.subr.bf16.mxu0 0
    %1999 = vmatpush1.bf16.msra.mxu0 0
    %2000 = vmatprep.subr.bf16.mxu0 0
    %2001 = vmatpush1.bf16.msra.mxu0 0
    %2002 = vmatprep.subr.bf16.mxu0 0
    %2003 = vmatpush1.bf16.msra.mxu0 0
    %2004 = vmatprep.subr.bf16.mxu0 0
    %2005 = vmatpush1.bf16.msra.mxu0 0
    %2006 = vmatprep.mubr.bf16.mxu0 0
    %2007 = vmatmul.mubr.bf16.gmra.mrb[0].mxu0 %v1972
    %v2008 = vpop.f32.mrb[0].mxu0
    %v2009 = vadd.f32 %v172, %v2008
    %v2010 = vpop.f32.mrb[0].mxu0
    %v2011 = vpop.f32.mrb[0].mxu0
    %v2012 = vpop.f32.mrb[0].mxu0
    %2013 = vdwg.mxu0
    %v2014 = vmul.f32 %v1490, %v2009
    %v2015 = vadd.f32 %v1827, %v2014
    %v2016 = vmax.f32 %v2015, 0.0
    %v2017 = vpack.c.bf16 %v2016, %v2016
    %v2019 = vsel %vm259, %v2017, 0
    %2021 = vmatprep.subr.bf16.mxu0 0
    %2022 = vmatpush1.bf16.msra.mxu0 %v438
    %2023 = vmatprep.subr.bf16.mxu0 0
    %2024 = vmatpush1.bf16.msra.mxu0 %v439
    %2025 = vmatprep.subr.bf16.mxu0 0
    %2026 = vmatpush1.bf16.msra.mxu0 0
    %2027 = vmatprep.subr.bf16.mxu0 0
    %2028 = vmatpush1.bf16.msra.mxu0 0
    %2029 = vmatprep.subr.bf16.mxu0 0
    %2030 = vmatpush1.bf16.msra.mxu0 0
    %2031 = vmatprep.subr.bf16.mxu0 0
    %2032 = vmatpush1.bf16.msra.mxu0 0
    %2033 = vmatprep.subr.bf16.mxu0 0
    %2034 = vmatpush1.bf16.msra.mxu0 0
    %2035 = vmatprep.subr.bf16.mxu0 0
    %2036 = vmatpush1.bf16.msra.mxu0 0
    %2037 = vmatprep.subr.bf16.mxu0 0
    %2038 = vmatpush1.bf16.msra.mxu0 0
    %2039 = vmatprep.subr.bf16.mxu0 0
    %2040 = vmatpush1.bf16.msra.mxu0 0
    %2041 = vmatprep.subr.bf16.mxu0 0
    %2042 = vmatpush1.bf16.msra.mxu0 0
    %2043 = vmatprep.subr.bf16.mxu0 0
    %2044 = vmatpush1.bf16.msra.mxu0 0
    %2045 = vmatprep.subr.bf16.mxu0 0
    %2046 = vmatpush1.bf16.msra.mxu0 0
    %2047 = vmatprep.subr.bf16.mxu0 0
    %2048 = vmatpush1.bf16.msra.mxu0 0
    %2049 = vmatprep.subr.bf16.mxu0 0
    %2050 = vmatpush1.bf16.msra.mxu0 0
    %2051 = vmatprep.subr.bf16.mxu0 0
    %2052 = vmatpush1.bf16.msra.mxu0 0
    %2053 = vmatprep.mubr.bf16.mxu0 0
    %2054 = vmatmul.mubr.bf16.gmra.mrb[0].mxu0 %v2019
    %v2055 = vpop.f32.mrb[0].mxu0
    %v2056 = vadd.f32 %v158, %v2055
    %v2057 = vpop.f32.mrb[0].mxu0
    %v2058 = vpop.f32.mrb[0].mxu0
    %v2059 = vpop.f32.mrb[0].mxu0
    %2060 = vdwg.mxu0
    %v2061 = vmax.f32 %v2056, 0.0
    %v2062 = vpack.c.bf16 %v2061, %v2061
    %v2064 = vsel %vm259, %v2062, 0
    %2066 = vmatprep.subr.bf16.mxu0 0
    %2067 = vmatpush1.bf16.msra.mxu0 %v495
    %2068 = vmatprep.subr.bf16.mxu0 0
    %2069 = vmatpush1.bf16.msra.mxu0 %v496
    %2070 = vmatprep.subr.bf16.mxu0 0
    %2071 = vmatpush1.bf16.msra.mxu0 0
    %2072 = vmatprep.subr.bf16.mxu0 0
    %2073 = vmatpush1.bf16.msra.mxu0 0
    %2074 = vmatprep.subr.bf16.mxu0 0
    %2075 = vmatpush1.bf16.msra.mxu0 0
    %2076 = vmatprep.subr.bf16.mxu0 0
    %2077 = vmatpush1.bf16.msra.mxu0 0
    %2078 = vmatprep.subr.bf16.mxu0 0
    %2079 = vmatpush1.bf16.msra.mxu0 0
    %2080 = vmatprep.subr.bf16.mxu0 0
    %2081 = vmatpush1.bf16.msra.mxu0 0
    %2082 = vmatprep.subr.bf16.mxu0 0
    %2083 = vmatpush1.bf16.msra.mxu0 0
    %2084 = vmatprep.subr.bf16.mxu0 0
    %2085 = vmatpush1.bf16.msra.mxu0 0
    %2086 = vmatprep.subr.bf16.mxu0 0
    %2087 = vmatpush1.bf16.msra.mxu0 0
    %2088 = vmatprep.subr.bf16.mxu0 0
    %2089 = vmatpush1.bf16.msra.mxu0 0
    %2090 = vmatprep.subr.bf16.mxu0 0
    %2091 = vmatpush1.bf16.msra.mxu0 0
    %2092 = vmatprep.subr.bf16.mxu0 0
    %2093 = vmatpush1.bf16.msra.mxu0 0
    %2094 = vmatprep.subr.bf16.mxu0 0
    %2095 = vmatpush1.bf16.msra.mxu0 0
    %2096 = vmatprep.subr.bf16.mxu0 0
    %2097 = vmatpush1.bf16.msra.mxu0 0
    %2098 = vmatprep.mubr.bf16.mxu0 0
    %2099 = vmatmul.mubr.bf16.gmra.mrb[0].mxu0 %v2064
    %v2100 = vpop.f32.mrb[0].mxu0
    %v2101 = vadd.f32 %v172, %v2100
    %v2102 = vpop.f32.mrb[0].mxu0
    %v2103 = vpop.f32.mrb[0].mxu0
    %v2104 = vpop.f32.mrb[0].mxu0
    %2105 = vdwg.mxu0
    %v2106 = vmul.f32 %v1675, %v2101
    %v2107 = vadd.f32 %v1827, %v2106
    %v2108 = vmax.f32 %v2107, 0.0
    %v2109 = vpack.c.bf16 %v2108, %v2108
    %v2111 = vsel %vm259, %v2109, 0
    %2113 = vmatprep.subr.bf16.mxu0 0
    %2114 = vmatpush1.bf16.msra.mxu0 %v438
    %2115 = vmatprep.subr.bf16.mxu0 0
    %2116 = vmatpush1.bf16.msra.mxu0 %v439
    %2117 = vmatprep.subr.bf16.mxu0 0
    %2118 = vmatpush1.bf16.msra.mxu0 0
    %2119 = vmatprep.subr.bf16.mxu0 0
    %2120 = vmatpush1.bf16.msra.mxu0 0
    %2121 = vmatprep.subr.bf16.mxu0 0
    %2122 = vmatpush1.bf16.msra.mxu0 0
    %2123 = vmatprep.subr.bf16.mxu0 0
    %2124 = vmatpush1.bf16.msra.mxu0 0
    %2125 = vmatprep.subr.bf16.mxu0 0
    %2126 = vmatpush1.bf16.msra.mxu0 0
    %2127 = vmatprep.subr.bf16.mxu0 0
    %2128 = vmatpush1.bf16.msra.mxu0 0
    %2129 = vmatprep.subr.bf16.mxu0 0
    %2130 = vmatpush1.bf16.msra.mxu0 0
    %2131 = vmatprep.subr.bf16.mxu0 0
    %2132 = vmatpush1.bf16.msra.mxu0 0
    %2133 = vmatprep.subr.bf16.mxu0 0
    %2134 = vmatpush1.bf16.msra.mxu0 0
    %2135 = vmatprep.subr.bf16.mxu0 0
    %2136 = vmatpush1.bf16.msra.mxu0 0
    %2137 = vmatprep.subr.bf16.mxu0 0
    %2138 = vmatpush1.bf16.msra.mxu0 0
    %2139 = vmatprep.subr.bf16.mxu0 0
    %2140 = vmatpush1.bf16.msra.mxu0 0
    %2141 = vmatprep.subr.bf16.mxu0 0
    %2142 = vmatpush1.bf16.msra.mxu0 0
    %2143 = vmatprep.subr.bf16.mxu0 0
    %2144 = vmatpush1.bf16.msra.mxu0 0
    %2145 = vmatprep.mubr.bf16.mxu0 0
    %2146 = vmatmul.mubr.bf16.gmra.mrb[0].mxu0 %v2111
    %v2147 = vpop.f32.mrb[0].mxu0
    %v2148 = vadd.f32 %v158, %v2147
    %v2149 = vpop.f32.mrb[0].mxu0
    %v2150 = vpop.f32.mrb[0].mxu0
    %v2151 = vpop.f32.mrb[0].mxu0
    %2152 = vdwg.mxu0
    %v2153 = vmax.f32 %v2148, 0.0
    %v2154 = vadd.f32 %v1969, %v2061
    %v2155 = vmul.f32 %v2154, 2.0
    %v2156 = vadd.f32 %v1877, %v2155
    %v2157 = vadd.f32 %v2156, %v2153
    %v2158 = vpack.c.bf16 %v2157, %v2157
    %v2160 = vsel %vm259, %v2158, 0
    %2162 = vmatprep.subr.bf16.mxu0 0
    %2163 = vmatpush1.bf16.msra.mxu0 %v789
    %2164 = vmatprep.subr.bf16.mxu0 0
    %2165 = vmatpush1.bf16.msra.mxu0 %v790
    %2166 = vmatprep.subr.bf16.mxu0 0
    %2167 = vmatpush1.bf16.msra.mxu0 0
    %2168 = vmatprep.subr.bf16.mxu0 0
    %2169 = vmatpush1.bf16.msra.mxu0 0
    %2170 = vmatprep.subr.bf16.mxu0 0
    %2171 = vmatpush1.bf16.msra.mxu0 0
    %2172 = vmatprep.subr.bf16.mxu0 0
    %2173 = vmatpush1.bf16.msra.mxu0 0
    %2174 = vmatprep.subr.bf16.mxu0 0
    %2175 = vmatpush1.bf16.msra.mxu0 0
    %2176 = vmatprep.subr.bf16.mxu0 0
    %2177 = vmatpush1.bf16.msra.mxu0 0
    %2178 = vmatprep.subr.bf16.mxu0 0
    %2179 = vmatpush1.bf16.msra.mxu0 0
    %2180 = vmatprep.subr.bf16.mxu0 0
    %2181 = vmatpush1.bf16.msra.mxu0 0
    %2182 = vmatprep.subr.bf16.mxu0 0
    %2183 = vmatpush1.bf16.msra.mxu0 0
    %2184 = vmatprep.subr.bf16.mxu0 0
    %2185 = vmatpush1.bf16.msra.mxu0 0
    %2186 = vmatprep.subr.bf16.mxu0 0
    %2187 = vmatpush1.bf16.msra.mxu0 0
    %2188 = vmatprep.subr.bf16.mxu0 0
    %2189 = vmatpush1.bf16.msra.mxu0 0
    %2190 = vmatprep.subr.bf16.mxu0 0
    %2191 = vmatpush1.bf16.msra.mxu0 0
    %2192 = vmatprep.subr.bf16.mxu0 0
    %2193 = vmatpush1.bf16.msra.mxu0 0
    %2194 = vmatprep.mubr.bf16.mxu0 0
    %2195 = vmatmul.mubr.bf16.gmra.mrb[0].mxu0 %v2160
    %v2196 = vpop.f32.mrb[0].mxu0
    %v2197 = vadd.f32 0.0, %v2196
    %v2198 = vpop.f32.mrb[0].mxu0
    %v2199 = vpop.f32.mrb[0].mxu0
    %v2200 = vpop.f32.mrb[0].mxu0
    %2201 = vdwg.mxu0
    %v2202 = vmul.f32 %v1772, %v2197
    %2204 = vrot.lane.b32.xlu0 %v2202, 32
    %v2205 = vpop.permute.xlu0 %2204
    %v2207 = vadd.f32 %v1784, %v2205
    %v2208 = vadd.f32 %v2207, %v1782
    %v2209 = vld [vmem:[#allocation2 + $0x8] sm:$0xf]
    %v2210 = vsel %vm259, %v2209, %v2208
    %v2211 = vpack.c.bf16 %v2210, %v2210
    %v2213 = vsel %vm290, %v2211, 0
    %2215 = vmatprep.subr.bf16.mxu0 0
    %2216 = vmatpush1.bf16.msra.mxu0 %v282
    %2217 = vmatprep.subr.bf16.mxu0 0
    %2218 = vmatpush1.bf16.msra.mxu0 %v283
    %2219 = vmatprep.subr.bf16.mxu0 0
    %2220 = vmatpush1.bf16.msra.mxu0 %v284
    %2221 = vmatprep.subr.bf16.mxu0 0
    %2222 = vmatpush1.bf16.msra.mxu0 %v285
    %2223 = vmatprep.subr.bf16.mxu0 0
    %2224 = vmatpush1.bf16.msra.mxu0 0
    %2225 = vmatprep.subr.bf16.mxu0 0
    %2226 = vmatpush1.bf16.msra.mxu0 0
    %2227 = vmatprep.subr.bf16.mxu0 0
    %2228 = vmatpush1.bf16.msra.mxu0 0
    %2229 = vmatprep.subr.bf16.mxu0 0
    %2230 = vmatpush1.bf16.msra.mxu0 0
    %2231 = vmatprep.subr.bf16.mxu0 0
    %2232 = vmatpush1.bf16.msra.mxu0 0
    %2233 = vmatprep.subr.bf16.mxu0 0
    %2234 = vmatpush1.bf16.msra.mxu0 0
    %2235 = vmatprep.subr.bf16.mxu0 0
    %2236 = vmatpush1.bf16.msra.mxu0 0
    %2237 = vmatprep.subr.bf16.mxu0 0
    %2238 = vmatpush1.bf16.msra.mxu0 0
    %2239 = vmatprep.subr.bf16.mxu0 0
    %2240 = vmatpush1.bf16.msra.mxu0 0
    %2241 = vmatprep.subr.bf16.mxu0 0
    %2242 = vmatpush1.bf16.msra.mxu0 0
    %2243 = vmatprep.subr.bf16.mxu0 0
    %2244 = vmatpush1.bf16.msra.mxu0 0
    %2245 = vmatprep.subr.bf16.mxu0 0
    %2246 = vmatpush1.bf16.msra.mxu0 0
    %2247 = vmatprep.mubr.bf16.mxu0 0
    %2248 = vmatmul.mubr.bf16.gmra.mrb[0].mxu0 %v2213
    %v2249 = vpop.f32.mrb[0].mxu0
    %v2250 = vadd.f32 %v144, %v2249
    %v2251 = vpop.f32.mrb[0].mxu0
    %v2252 = vpop.f32.mrb[0].mxu0
    %v2253 = vpop.f32.mrb[0].mxu0
    %2254 = vdwg.mxu0
    %v2255 = vxor.u32 %v2250, 2147483648
    %v2256 = vmul.f32 %v2255, 1.442695
    %v2257 = vpow.pop %v2256
    %v2258 = vadd.f32 %v2257, 1.0
    %v2259 = vrcp.pop %v2258
    %v2260 = vmul.f32 1.0, %v2259
    %2262 = vrot.lane.b32.xlu0 %v2250, 32
    %v2263 = vpop.permute.xlu0 %2262
    %v2265 = vmul.f32 %v2260, %v2263
    %2267 = vrot.lane.b32.xlu0 %v2265, 64
    %v2268 = vpop.permute.xlu0 %2267
    %v2270 = vadd.f32 %v2250, %v2268
    %v2271 = vtanh.pop %v2270
    %v2272 = vsub.f32 1.0, %v2260
    %2274 = vrot.lane.b32.xlu0 %v2271, 96
    %v2275 = vpop.permute.xlu0 %2274
    %v2277 = vmul.f32 %v2272, %v2275
    %v2278 = vmul.f32 %v2260, %v2208
    %v2279 = vadd.f32 %v2277, %v2278
    %2281 = vrot.lane.b32.xlu0 %v2279, 96
    %v2282 = vpop.permute.xlu0 %2281
    %2284 = vst.msk [vmem:[#allocation3 + $0x8] sm:$0xf] %vm363, %v2282
    %s2285 = sld [smem:[#allocation4 + $0x3]]
    %s2286 = smul.f32 %s2285, 0.5
    %s2287 = smul.f32 %s2286, 0.5
    %s2288 = smul.f32 %s2286, 0.16666667
    %v2289 = vpack.c.bf16 %v2279, %v2279
    %2291 = vrot.lane.b32.xlu0 %v2289, 96
    %v2292 = vpop.permute.xlu0 %2291
    %v2294 = vsel %vm259, %v2292, 0
    %2296 = vmatprep.subr.bf16.mxu0 0
    %2297 = vmatpush1.bf16.msra.mxu0 %v381
    %2298 = vmatprep.subr.bf16.mxu0 0
    %2299 = vmatpush1.bf16.msra.mxu0 %v382
    %2300 = vmatprep.subr.bf16.mxu0 0
    %2301 = vmatpush1.bf16.msra.mxu0 0
    %2302 = vmatprep.subr.bf16.mxu0 0
    %2303 = vmatpush1.bf16.msra.mxu0 0
    %2304 = vmatprep.subr.bf16.mxu0 0
    %2305 = vmatpush1.bf16.msra.mxu0 0
    %2306 = vmatprep.subr.bf16.mxu0 0
    %2307 = vmatpush1.bf16.msra.mxu0 0
    %2308 = vmatprep.subr.bf16.mxu0 0
    %2309 = vmatpush1.bf16.msra.mxu0 0
    %2310 = vmatprep.subr.bf16.mxu0 0
    %2311 = vmatpush1.bf16.msra.mxu0 0
    %2312 = vmatprep.subr.bf16.mxu0 0
    %2313 = vmatpush1.bf16.msra.mxu0 0
    %2314 = vmatprep.subr.bf16.mxu0 0
    %2315 = vmatpush1.bf16.msra.mxu0 0
    %2316 = vmatprep.subr.bf16.mxu0 0
    %2317 = vmatpush1.bf16.msra.mxu0 0
    %2318 = vmatprep.subr.bf16.mxu0 0
    %2319 = vmatpush1.bf16.msra.mxu0 0
    %2320 = vmatprep.subr.bf16.mxu0 0
    %2321 = vmatpush1.bf16.msra.mxu0 0
    %2322 = vmatprep.subr.bf16.mxu0 0
    %2323 = vmatpush1.bf16.msra.mxu0 0
    %2324 = vmatprep.subr.bf16.mxu0 0
    %2325 = vmatpush1.bf16.msra.mxu0 0
    %2326 = vmatprep.subr.bf16.mxu0 0
    %2327 = vmatpush1.bf16.msra.mxu0 0
    %2328 = vmatprep.mubr.bf16.mxu0 0
    %2329 = vmatmul.mubr.bf16.gmra.mrb[0].mxu0 %v2294
    %v2330 = vpop.f32.mrb[0].mxu0
    %v2331 = vadd.f32 %v151, %v2330
    %v2332 = vpop.f32.mrb[0].mxu0
    %v2333 = vpop.f32.mrb[0].mxu0
    %v2334 = vpop.f32.mrb[0].mxu0
    %2335 = vdwg.mxu0
    %v2336 = vmax.f32 %v2331, 0.0
    %v2337 = vpack.c.bf16 %v2336, %v2336
    %v2339 = vsel %vm259, %v2337, 0
    %2341 = vmatprep.subr.bf16.mxu0 0
    %2342 = vmatpush1.bf16.msra.mxu0 %v438
    %2343 = vmatprep.subr.bf16.mxu0 0
    %2344 = vmatpush1.bf16.msra.mxu0 %v439
    %2345 = vmatprep.subr.bf16.mxu0 0
    %2346 = vmatpush1.bf16.msra.mxu0 0
    %2347 = vmatprep.subr.bf16.mxu0 0
    %2348 = vmatpush1.bf16.msra.mxu0 0
    %2349 = vmatprep.subr.bf16.mxu0 0
    %2350 = vmatpush1.bf16.msra.mxu0 0
    %2351 = vmatprep.subr.bf16.mxu0 0
    %2352 = vmatpush1.bf16.msra.mxu0 0
    %2353 = vmatprep.subr.bf16.mxu0 0
    %2354 = vmatpush1.bf16.msra.mxu0 0
    %2355 = vmatprep.subr.bf16.mxu0 0
    %2356 = vmatpush1.bf16.msra.mxu0 0
    %2357 = vmatprep.subr.bf16.mxu0 0
    %2358 = vmatpush1.bf16.msra.mxu0 0
    %2359 = vmatprep.subr.bf16.mxu0 0
    %2360 = vmatpush1.bf16.msra.mxu0 0
    %2361 = vmatprep.subr.bf16.mxu0 0
    %2362 = vmatpush1.bf16.msra.mxu0 0
    %2363 = vmatprep.subr.bf16.mxu0 0
    %2364 = vmatpush1.bf16.msra.mxu0 0
    %2365 = vmatprep.subr.bf16.mxu0 0
    %2366 = vmatpush1.bf16.msra.mxu0 0
    %2367 = vmatprep.subr.bf16.mxu0 0
    %2368 = vmatpush1.bf16.msra.mxu0 0
    %2369 = vmatprep.subr.bf16.mxu0 0
    %2370 = vmatpush1.bf16.msra.mxu0 0
    %2371 = vmatprep.subr.bf16.mxu0 0
    %2372 = vmatpush1.bf16.msra.mxu0 0
    %2373 = vmatprep.mubr.bf16.mxu0 0
    %2374 = vmatmul.mubr.bf16.gmra.mrb[0].mxu0 %v2339
    %v2375 = vpop.f32.mrb[0].mxu0
    %v2376 = vadd.f32 %v158, %v2375
    %v2377 = vpop.f32.mrb[0].mxu0
    %v2378 = vpop.f32.mrb[0].mxu0
    %v2379 = vpop.f32.mrb[0].mxu0
    %2380 = vdwg.mxu0
    %v2381 = vmax.f32 %v2376, 0.0
    %v2382 = vpack.c.bf16 %v2381, %v2381
    %v2384 = vsel %vm259, %v2382, 0
    %2386 = vmatprep.subr.bf16.mxu0 0
    %2387 = vmatpush1.bf16.msra.mxu0 %v495
    %2388 = vmatprep.subr.bf16.mxu0 0
    %2389 = vmatpush1.bf16.msra.mxu0 %v496
    %2390 = vmatprep.subr.bf16.mxu0 0
    %2391 = vmatpush1.bf16.msra.mxu0 0
    %2392 = vmatprep.subr.bf16.mxu0 0
    %2393 = vmatpush1.bf16.msra.mxu0 0
    %2394 = vmatprep.subr.bf16.mxu0 0
    %2395 = vmatpush1.bf16.msra.mxu0 0
    %2396 = vmatprep.subr.bf16.mxu0 0
    %2397 = vmatpush1.bf16.msra.mxu0 0
    %2398 = vmatprep.subr.bf16.mxu0 0
    %2399 = vmatpush1.bf16.msra.mxu0 0
    %2400 = vmatprep.subr.bf16.mxu0 0
    %2401 = vmatpush1.bf16.msra.mxu0 0
    %2402 = vmatprep.subr.bf16.mxu0 0
    %2403 = vmatpush1.bf16.msra.mxu0 0
    %2404 = vmatprep.subr.bf16.mxu0 0
    %2405 = vmatpush1.bf16.msra.mxu0 0
    %2406 = vmatprep.subr.bf16.mxu0 0
    %2407 = vmatpush1.bf16.msra.mxu0 0
    %2408 = vmatprep.subr.bf16.mxu0 0
    %2409 = vmatpush1.bf16.msra.mxu0 0
    %2410 = vmatprep.subr.bf16.mxu0 0
    %2411 = vmatpush1.bf16.msra.mxu0 0
    %2412 = vmatprep.subr.bf16.mxu0 0
    %2413 = vmatpush1.bf16.msra.mxu0 0
    %2414 = vmatprep.subr.bf16.mxu0 0
    %2415 = vmatpush1.bf16.msra.mxu0 0
    %2416 = vmatprep.subr.bf16.mxu0 0
    %2417 = vmatpush1.bf16.msra.mxu0 0
    %2418 = vmatprep.mubr.bf16.mxu0 0
    %2419 = vmatmul.mubr.bf16.gmra.mrb[0].mxu0 %v2384
    %v2420 = vpop.f32.mrb[0].mxu0
    %v2421 = vadd.f32 %v172, %v2420
    %v2422 = vpop.f32.mrb[0].mxu0
    %v2423 = vpop.f32.mrb[0].mxu0
    %v2424 = vpop.f32.mrb[0].mxu0
    %2425 = vdwg.mxu0
    %v2426 = vstv %s2287
    %v2427 = vmul.f32 %v2426, %v2421
    %v2428 = vadd.f32 %v2331, %v2427
    %v2429 = vmax.f32 %v2428, 0.0
    %v2430 = vpack.c.bf16 %v2429, %v2429
    %v2432 = vsel %vm259, %v2430, 0
    %2434 = vmatprep.subr.bf16.mxu0 0
    %2435 = vmatpush1.bf16.msra.mxu0 %v438
    %2436 = vmatprep.subr.bf16.mxu0 0
    %2437 = vmatpush1.bf16.msra.mxu0 %v439
    %2438 = vmatprep.subr.bf16.mxu0 0
    %2439 = vmatpush1.bf16.msra.mxu0 0
    %2440 = vmatprep.subr.bf16.mxu0 0
    %2441 = vmatpush1.bf16.msra.mxu0 0
    %2442 = vmatprep.subr.bf16.mxu0 0
    %2443 = vmatpush1.bf16.msra.mxu0 0
    %2444 = vmatprep.subr.bf16.mxu0 0
    %2445 = vmatpush1.bf16.msra.mxu0 0
    %2446 = vmatprep.subr.bf16.mxu0 0
    %2447 = vmatpush1.bf16.msra.mxu0 0
    %2448 = vmatprep.subr.bf16.mxu0 0
    %2449 = vmatpush1.bf16.msra.mxu0 0
    %2450 = vmatprep.subr.bf16.mxu0 0
    %2451 = vmatpush1.bf16.msra.mxu0 0
    %2452 = vmatprep.subr.bf16.mxu0 0
    %2453 = vmatpush1.bf16.msra.mxu0 0
    %2454 = vmatprep.subr.bf16.mxu0 0
    %2455 = vmatpush1.bf16.msra.mxu0 0
    %2456 = vmatprep.subr.bf16.mxu0 0
    %2457 = vmatpush1.bf16.msra.mxu0 0
    %2458 = vmatprep.subr.bf16.mxu0 0
    %2459 = vmatpush1.bf16.msra.mxu0 0
    %2460 = vmatprep.subr.bf16.mxu0 0
    %2461 = vmatpush1.bf16.msra.mxu0 0
    %2462 = vmatprep.subr.bf16.mxu0 0
    %2463 = vmatpush1.bf16.msra.mxu0 0
    %2464 = vmatprep.subr.bf16.mxu0 0
    %2465 = vmatpush1.bf16.msra.mxu0 0
    %2466 = vmatprep.mubr.bf16.mxu0 0
    %2467 = vmatmul.mubr.bf16.gmra.mrb[0].mxu0 %v2432
    %v2468 = vpop.f32.mrb[0].mxu0
    %v2469 = vadd.f32 %v158, %v2468
    %v2470 = vpop.f32.mrb[0].mxu0
    %v2471 = vpop.f32.mrb[0].mxu0
    %v2472 = vpop.f32.mrb[0].mxu0
    %2473 = vdwg.mxu0
    %v2474 = vmax.f32 %v2469, 0.0
    %v2475 = vpack.c.bf16 %v2474, %v2474
    %v2477 = vsel %vm259, %v2475, 0
    %2479 = vmatprep.subr.bf16.mxu0 0
    %2480 = vmatpush1.bf16.msra.mxu0 %v495
    %2481 = vmatprep.subr.bf16.mxu0 0
    %2482 = vmatpush1.bf16.msra.mxu0 %v496
    %2483 = vmatprep.subr.bf16.mxu0 0
    %2484 = vmatpush1.bf16.msra.mxu0 0
    %2485 = vmatprep.subr.bf16.mxu0 0
    %2486 = vmatpush1.bf16.msra.mxu0 0
    %2487 = vmatprep.subr.bf16.mxu0 0
    %2488 = vmatpush1.bf16.msra.mxu0 0
    %2489 = vmatprep.subr.bf16.mxu0 0
    %2490 = vmatpush1.bf16.msra.mxu0 0
    %2491 = vmatprep.subr.bf16.mxu0 0
    %2492 = vmatpush1.bf16.msra.mxu0 0
    %2493 = vmatprep.subr.bf16.mxu0 0
    %2494 = vmatpush1.bf16.msra.mxu0 0
    %2495 = vmatprep.subr.bf16.mxu0 0
    %2496 = vmatpush1.bf16.msra.mxu0 0
    %2497 = vmatprep.subr.bf16.mxu0 0
    %2498 = vmatpush1.bf16.msra.mxu0 0
    %2499 = vmatprep.subr.bf16.mxu0 0
    %2500 = vmatpush1.bf16.msra.mxu0 0
    %2501 = vmatprep.subr.bf16.mxu0 0
    %2502 = vmatpush1.bf16.msra.mxu0 0
    %2503 = vmatprep.subr.bf16.mxu0 0
    %2504 = vmatpush1.bf16.msra.mxu0 0
    %2505 = vmatprep.subr.bf16.mxu0 0
    %2506 = vmatpush1.bf16.msra.mxu0 0
    %2507 = vmatprep.subr.bf16.mxu0 0
    %2508 = vmatpush1.bf16.msra.mxu0 0
    %2509 = vmatprep.subr.bf16.mxu0 0
    %2510 = vmatpush1.bf16.msra.mxu0 0
    %2511 = vmatprep.mubr.bf16.mxu0 0
    %2512 = vmatmul.mubr.bf16.gmra.mrb[0].mxu0 %v2477
    %v2513 = vpop.f32.mrb[0].mxu0
    %v2514 = vadd.f32 %v172, %v2513
    %v2515 = vpop.f32.mrb[0].mxu0
    %v2516 = vpop.f32.mrb[0].mxu0
    %v2517 = vpop.f32.mrb[0].mxu0
    %2518 = vdwg.mxu0
    %v2519 = vmul.f32 %v2426, %v2514
    %v2520 = vadd.f32 %v2331, %v2519
    %v2521 = vmax.f32 %v2520, 0.0
    %v2522 = vpack.c.bf16 %v2521, %v2521
    %v2524 = vsel %vm259, %v2522, 0
    %2526 = vmatprep.subr.bf16.mxu0 0
    %2527 = vmatpush1.bf16.msra.mxu0 %v438
    %2528 = vmatprep.subr.bf16.mxu0 0
    %2529 = vmatpush1.bf16.msra.mxu0 %v439
    %2530 = vmatprep.subr.bf16.mxu0 0
    %2531 = vmatpush1.bf16.msra.mxu0 0
    %2532 = vmatprep.subr.bf16.mxu0 0
    %2533 = vmatpush1.bf16.msra.mxu0 0
    %2534 = vmatprep.subr.bf16.mxu0 0
    %2535 = vmatpush1.bf16.msra.mxu0 0
    %2536 = vmatprep.subr.bf16.mxu0 0
    %2537 = vmatpush1.bf16.msra.mxu0 0
    %2538 = vmatprep.subr.bf16.mxu0 0
    %2539 = vmatpush1.bf16.msra.mxu0 0
    %2540 = vmatprep.subr.bf16.mxu0 0
    %2541 = vmatpush1.bf16.msra.mxu0 0
    %2542 = vmatprep.subr.bf16.mxu0 0
    %2543 = vmatpush1.bf16.msra.mxu0 0
    %2544 = vmatprep.subr.bf16.mxu0 0
    %2545 = vmatpush1.bf16.msra.mxu0 0
    %2546 = vmatprep.subr.bf16.mxu0 0
    %2547 = vmatpush1.bf16.msra.mxu0 0
    %2548 = vmatprep.subr.bf16.mxu0 0
    %2549 = vmatpush1.bf16.msra.mxu0 0
    %2550 = vmatprep.subr.bf16.mxu0 0
    %2551 = vmatpush1.bf16.msra.mxu0 0
    %2552 = vmatprep.subr.bf16.mxu0 0
    %2553 = vmatpush1.bf16.msra.mxu0 0
    %2554 = vmatprep.subr.bf16.mxu0 0
    %2555 = vmatpush1.bf16.msra.mxu0 0
    %2556 = vmatprep.subr.bf16.mxu0 0
    %2557 = vmatpush1.bf16.msra.mxu0 0
    %2558 = vmatprep.mubr.bf16.mxu0 0
    %2559 = vmatmul.mubr.bf16.gmra.mrb[0].mxu0 %v2524
    %v2560 = vpop.f32.mrb[0].mxu0
    %v2561 = vadd.f32 %v158, %v2560
    %v2562 = vpop.f32.mrb[0].mxu0
    %v2563 = vpop.f32.mrb[0].mxu0
    %v2564 = vpop.f32.mrb[0].mxu0
    %2565 = vdwg.mxu0
    %v2566 = vmax.f32 %v2561, 0.0
    %v2567 = vpack.c.bf16 %v2566, %v2566
    %v2569 = vsel %vm259, %v2567, 0
    %2571 = vmatprep.subr.bf16.mxu0 0
    %2572 = vmatpush1.bf16.msra.mxu0 %v495
    %2573 = vmatprep.subr.bf16.mxu0 0
    %2574 = vmatpush1.bf16.msra.mxu0 %v496
    %2575 = vmatprep.subr.bf16.mxu0 0
    %2576 = vmatpush1.bf16.msra.mxu0 0
    %2577 = vmatprep.subr.bf16.mxu0 0
    %2578 = vmatpush1.bf16.msra.mxu0 0
    %2579 = vmatprep.subr.bf16.mxu0 0
    %2580 = vmatpush1.bf16.msra.mxu0 0
    %2581 = vmatprep.subr.bf16.mxu0 0
    %2582 = vmatpush1.bf16.msra.mxu0 0
    %2583 = vmatprep.subr.bf16.mxu0 0
    %2584 = vmatpush1.bf16.msra.mxu0 0
    %2585 = vmatprep.subr.bf16.mxu0 0
    %2586 = vmatpush1.bf16.msra.mxu0 0
    %2587 = vmatprep.subr.bf16.mxu0 0
    %2588 = vmatpush1.bf16.msra.mxu0 0
    %2589 = vmatprep.subr.bf16.mxu0 0
    %2590 = vmatpush1.bf16.msra.mxu0 0
    %2591 = vmatprep.subr.bf16.mxu0 0
    %2592 = vmatpush1.bf16.msra.mxu0 0
    %2593 = vmatprep.subr.bf16.mxu0 0
    %2594 = vmatpush1.bf16.msra.mxu0 0
    %2595 = vmatprep.subr.bf16.mxu0 0
    %2596 = vmatpush1.bf16.msra.mxu0 0
    %2597 = vmatprep.subr.bf16.mxu0 0
    %2598 = vmatpush1.bf16.msra.mxu0 0
    %2599 = vmatprep.subr.bf16.mxu0 0
    %2600 = vmatpush1.bf16.msra.mxu0 0
    %2601 = vmatprep.subr.bf16.mxu0 0
    %2602 = vmatpush1.bf16.msra.mxu0 0
    %2603 = vmatprep.mubr.bf16.mxu0 0
    %2604 = vmatmul.mubr.bf16.gmra.mrb[0].mxu0 %v2569
    %v2605 = vpop.f32.mrb[0].mxu0
    %v2606 = vadd.f32 %v172, %v2605
    %v2607 = vpop.f32.mrb[0].mxu0
    %v2608 = vpop.f32.mrb[0].mxu0
    %v2609 = vpop.f32.mrb[0].mxu0
    %2610 = vdwg.mxu0
    %v2611 = vstv %s2286
    %v2612 = vmul.f32 %v2611, %v2606
    %v2613 = vadd.f32 %v2331, %v2612
    %v2614 = vmax.f32 %v2613, 0.0
    %v2615 = vpack.c.bf16 %v2614, %v2614
    %v2617 = vsel %vm259, %v2615, 0
    %2619 = vmatprep.subr.bf16.mxu0 0
    %2620 = vmatpush1.bf16.msra.mxu0 %v438
    %2621 = vmatprep.subr.bf16.mxu0 0
    %2622 = vmatpush1.bf16.msra.mxu0 %v439
    %2623 = vmatprep.subr.bf16.mxu0 0
    %2624 = vmatpush1.bf16.msra.mxu0 0
    %2625 = vmatprep.subr.bf16.mxu0 0
    %2626 = vmatpush1.bf16.msra.mxu0 0
    %2627 = vmatprep.subr.bf16.mxu0 0
    %2628 = vmatpush1.bf16.msra.mxu0 0
    %2629 = vmatprep.subr.bf16.mxu0 0
    %2630 = vmatpush1.bf16.msra.mxu0 0
    %2631 = vmatprep.subr.bf16.mxu0 0
    %2632 = vmatpush1.bf16.msra.mxu0 0
    %2633 = vmatprep.subr.bf16.mxu0 0
    %2634 = vmatpush1.bf16.msra.mxu0 0
    %2635 = vmatprep.subr.bf16.mxu0 0
    %2636 = vmatpush1.bf16.msra.mxu0 0
    %2637 = vmatprep.subr.bf16.mxu0 0
    %2638 = vmatpush1.bf16.msra.mxu0 0
    %2639 = vmatprep.subr.bf16.mxu0 0
    %2640 = vmatpush1.bf16.msra.mxu0 0
    %2641 = vmatprep.subr.bf16.mxu0 0
    %2642 = vmatpush1.bf16.msra.mxu0 0
    %2643 = vmatprep.subr.bf16.mxu0 0
    %2644 = vmatpush1.bf16.msra.mxu0 0
    %2645 = vmatprep.subr.bf16.mxu0 0
    %2646 = vmatpush1.bf16.msra.mxu0 0
    %2647 = vmatprep.subr.bf16.mxu0 0
    %2648 = vmatpush1.bf16.msra.mxu0 0
    %2649 = vmatprep.subr.bf16.mxu0 0
    %2650 = vmatpush1.bf16.msra.mxu0 0
    %2651 = vmatprep.mubr.bf16.mxu0 0
    %2652 = vmatmul.mubr.bf16.gmra.mrb[0].mxu0 %v2617
    %v2653 = vpop.f32.mrb[0].mxu0
    %v2654 = vadd.f32 %v158, %v2653
    %v2655 = vpop.f32.mrb[0].mxu0
    %v2656 = vpop.f32.mrb[0].mxu0
    %v2657 = vpop.f32.mrb[0].mxu0
    %2658 = vdwg.mxu0
    %v2659 = vmax.f32 %v2654, 0.0
    %v2660 = vadd.f32 %v2474, %v2566
    %v2661 = vmul.f32 %v2660, 2.0
    %v2662 = vadd.f32 %v2381, %v2661
    %v2663 = vadd.f32 %v2662, %v2659
    %v2664 = vpack.c.bf16 %v2663, %v2663
    %v2666 = vsel %vm259, %v2664, 0
    %2668 = vmatprep.subr.bf16.mxu0 0
    %2669 = vmatpush1.bf16.msra.mxu0 %v789
    %2670 = vmatprep.subr.bf16.mxu0 0
    %2671 = vmatpush1.bf16.msra.mxu0 %v790
    %2672 = vmatprep.subr.bf16.mxu0 0
    %2673 = vmatpush1.bf16.msra.mxu0 0
    %2674 = vmatprep.subr.bf16.mxu0 0
    %2675 = vmatpush1.bf16.msra.mxu0 0
    %2676 = vmatprep.subr.bf16.mxu0 0
    %2677 = vmatpush1.bf16.msra.mxu0 0
    %2678 = vmatprep.subr.bf16.mxu0 0
    %2679 = vmatpush1.bf16.msra.mxu0 0
    %2680 = vmatprep.subr.bf16.mxu0 0
    %2681 = vmatpush1.bf16.msra.mxu0 0
    %2682 = vmatprep.subr.bf16.mxu0 0
    %2683 = vmatpush1.bf16.msra.mxu0 0
    %2684 = vmatprep.subr.bf16.mxu0 0
    %2685 = vmatpush1.bf16.msra.mxu0 0
    %2686 = vmatprep.subr.bf16.mxu0 0
    %2687 = vmatpush1.bf16.msra.mxu0 0
    %2688 = vmatprep.subr.bf16.mxu0 0
    %2689 = vmatpush1.bf16.msra.mxu0 0
    %2690 = vmatprep.subr.bf16.mxu0 0
    %2691 = vmatpush1.bf16.msra.mxu0 0
    %2692 = vmatprep.subr.bf16.mxu0 0
    %2693 = vmatpush1.bf16.msra.mxu0 0
    %2694 = vmatprep.subr.bf16.mxu0 0
    %2695 = vmatpush1.bf16.msra.mxu0 0
    %2696 = vmatprep.subr.bf16.mxu0 0
    %2697 = vmatpush1.bf16.msra.mxu0 0
    %2698 = vmatprep.subr.bf16.mxu0 0
    %2699 = vmatpush1.bf16.msra.mxu0 0
    %2700 = vmatprep.mubr.bf16.mxu0 0
    %2701 = vmatmul.mubr.bf16.gmra.mrb[0].mxu0 %v2666
    %v2702 = vpop.f32.mrb[0].mxu0
    %v2703 = vadd.f32 0.0, %v2702
    %v2704 = vpop.f32.mrb[0].mxu0
    %v2705 = vpop.f32.mrb[0].mxu0
    %v2706 = vpop.f32.mrb[0].mxu0
    %2707 = vdwg.mxu0
    %v2708 = vstv %s2288
    %v2709 = vmul.f32 %v2708, %v2703
    %2711 = vrot.lane.b32.xlu0 %v2709, 32
    %v2712 = vpop.permute.xlu0 %2711
    %v2714 = vadd.f32 %v2279, %v2712
    %v2715 = vmul.f32 %v2611, %v165
    %2717 = vrot.lane.b32.xlu0 %v2715, 32
    %v2718 = vpop.permute.xlu0 %2717
    %v2720 = vadd.f32 %v2714, %v2718
    %v2721 = vpack.c.bf16 %v2720, %v2720
    %2723 = vrot.lane.b32.xlu0 %v2721, 96
    %v2724 = vpop.permute.xlu0 %2723
    %v2726 = vsel %vm259, %v2724, 0
    %2728 = vmatprep.subr.bf16.mxu0 0
    %2729 = vmatpush1.bf16.msra.mxu0 %v381
    %2730 = vmatprep.subr.bf16.mxu0 0
    %2731 = vmatpush1.bf16.msra.mxu0 %v382
    %2732 = vmatprep.subr.bf16.mxu0 0
    %2733 = vmatpush1.bf16.msra.mxu0 0
    %2734 = vmatprep.subr.bf16.mxu0 0
    %2735 = vmatpush1.bf16.msra.mxu0 0
    %2736 = vmatprep.subr.bf16.mxu0 0
    %2737 = vmatpush1.bf16.msra.mxu0 0
    %2738 = vmatprep.subr.bf16.mxu0 0
    %2739 = vmatpush1.bf16.msra.mxu0 0
    %2740 = vmatprep.subr.bf16.mxu0 0
    %2741 = vmatpush1.bf16.msra.mxu0 0
    %2742 = vmatprep.subr.bf16.mxu0 0
    %2743 = vmatpush1.bf16.msra.mxu0 0
    %2744 = vmatprep.subr.bf16.mxu0 0
    %2745 = vmatpush1.bf16.msra.mxu0 0
    %2746 = vmatprep.subr.bf16.mxu0 0
    %2747 = vmatpush1.bf16.msra.mxu0 0
    %2748 = vmatprep.subr.bf16.mxu0 0
    %2749 = vmatpush1.bf16.msra.mxu0 0
    %2750 = vmatprep.subr.bf16.mxu0 0
    %2751 = vmatpush1.bf16.msra.mxu0 0
    %2752 = vmatprep.subr.bf16.mxu0 0
    %2753 = vmatpush1.bf16.msra.mxu0 0
    %2754 = vmatprep.subr.bf16.mxu0 0
    %2755 = vmatpush1.bf16.msra.mxu0 0
    %2756 = vmatprep.subr.bf16.mxu0 0
    %2757 = vmatpush1.bf16.msra.mxu0 0
    %2758 = vmatprep.subr.bf16.mxu0 0
    %2759 = vmatpush1.bf16.msra.mxu0 0
    %2760 = vmatprep.mubr.bf16.mxu0 0
    %2761 = vmatmul.mubr.bf16.gmra.mrb[0].mxu0 %v2726
    %v2762 = vpop.f32.mrb[0].mxu0
    %v2763 = vadd.f32 %v151, %v2762
    %v2764 = vpop.f32.mrb[0].mxu0
    %v2765 = vpop.f32.mrb[0].mxu0
    %v2766 = vpop.f32.mrb[0].mxu0
    %2767 = vdwg.mxu0
    %v2768 = vmax.f32 %v2763, 0.0
    %v2769 = vpack.c.bf16 %v2768, %v2768
    %v2771 = vsel %vm259, %v2769, 0
    %2773 = vmatprep.subr.bf16.mxu0 0
    %2774 = vmatpush1.bf16.msra.mxu0 %v438
    %2775 = vmatprep.subr.bf16.mxu0 0
    %2776 = vmatpush1.bf16.msra.mxu0 %v439
    %2777 = vmatprep.subr.bf16.mxu0 0
    %2778 = vmatpush1.bf16.msra.mxu0 0
    %2779 = vmatprep.subr.bf16.mxu0 0
    %2780 = vmatpush1.bf16.msra.mxu0 0
    %2781 = vmatprep.subr.bf16.mxu0 0
    %2782 = vmatpush1.bf16.msra.mxu0 0
    %2783 = vmatprep.subr.bf16.mxu0 0
    %2784 = vmatpush1.bf16.msra.mxu0 0
    %2785 = vmatprep.subr.bf16.mxu0 0
    %2786 = vmatpush1.bf16.msra.mxu0 0
    %2787 = vmatprep.subr.bf16.mxu0 0
    %2788 = vmatpush1.bf16.msra.mxu0 0
    %2789 = vmatprep.subr.bf16.mxu0 0
    %2790 = vmatpush1.bf16.msra.mxu0 0
    %2791 = vmatprep.subr.bf16.mxu0 0
    %2792 = vmatpush1.bf16.msra.mxu0 0
    %2793 = vmatprep.subr.bf16.mxu0 0
    %2794 = vmatpush1.bf16.msra.mxu0 0
    %2795 = vmatprep.subr.bf16.mxu0 0
    %2796 = vmatpush1.bf16.msra.mxu0 0
    %2797 = vmatprep.subr.bf16.mxu0 0
    %2798 = vmatpush1.bf16.msra.mxu0 0
    %2799 = vmatprep.subr.bf16.mxu0 0
    %2800 = vmatpush1.bf16.msra.mxu0 0
    %2801 = vmatprep.subr.bf16.mxu0 0
    %2802 = vmatpush1.bf16.msra.mxu0 0
    %2803 = vmatprep.subr.bf16.mxu0 0
    %2804 = vmatpush1.bf16.msra.mxu0 0
    %2805 = vmatprep.mubr.bf16.mxu0 0
    %2806 = vmatmul.mubr.bf16.gmra.mrb[0].mxu0 %v2771
    %v2807 = vpop.f32.mrb[0].mxu0
    %v2808 = vadd.f32 %v158, %v2807
    %v2809 = vpop.f32.mrb[0].mxu0
    %v2810 = vpop.f32.mrb[0].mxu0
    %v2811 = vpop.f32.mrb[0].mxu0
    %2812 = vdwg.mxu0
    %v2813 = vmax.f32 %v2808, 0.0
    %v2814 = vpack.c.bf16 %v2813, %v2813
    %v2816 = vsel %vm259, %v2814, 0
    %2818 = vmatprep.subr.bf16.mxu0 0
    %2819 = vmatpush1.bf16.msra.mxu0 %v495
    %2820 = vmatprep.subr.bf16.mxu0 0
    %2821 = vmatpush1.bf16.msra.mxu0 %v496
    %2822 = vmatprep.subr.bf16.mxu0 0
    %2823 = vmatpush1.bf16.msra.mxu0 0
    %2824 = vmatprep.subr.bf16.mxu0 0
    %2825 = vmatpush1.bf16.msra.mxu0 0
    %2826 = vmatprep.subr.bf16.mxu0 0
    %2827 = vmatpush1.bf16.msra.mxu0 0
    %2828 = vmatprep.subr.bf16.mxu0 0
    %2829 = vmatpush1.bf16.msra.mxu0 0
    %2830 = vmatprep.subr.bf16.mxu0 0
    %2831 = vmatpush1.bf16.msra.mxu0 0
    %2832 = vmatprep.subr.bf16.mxu0 0
    %2833 = vmatpush1.bf16.msra.mxu0 0
    %2834 = vmatprep.subr.bf16.mxu0 0
    %2835 = vmatpush1.bf16.msra.mxu0 0
    %2836 = vmatprep.subr.bf16.mxu0 0
    %2837 = vmatpush1.bf16.msra.mxu0 0
    %2838 = vmatprep.subr.bf16.mxu0 0
    %2839 = vmatpush1.bf16.msra.mxu0 0
    %2840 = vmatprep.subr.bf16.mxu0 0
    %2841 = vmatpush1.bf16.msra.mxu0 0
    %2842 = vmatprep.subr.bf16.mxu0 0
    %2843 = vmatpush1.bf16.msra.mxu0 0
    %2844 = vmatprep.subr.bf16.mxu0 0
    %2845 = vmatpush1.bf16.msra.mxu0 0
    %2846 = vmatprep.subr.bf16.mxu0 0
    %2847 = vmatpush1.bf16.msra.mxu0 0
    %2848 = vmatprep.subr.bf16.mxu0 0
    %2849 = vmatpush1.bf16.msra.mxu0 0
    %2850 = vmatprep.mubr.bf16.mxu0 0
    %2851 = vmatmul.mubr.bf16.gmra.mrb[0].mxu0 %v2816
    %v2852 = vpop.f32.mrb[0].mxu0
    %v2853 = vadd.f32 %v172, %v2852
    %v2854 = vpop.f32.mrb[0].mxu0
    %v2855 = vpop.f32.mrb[0].mxu0
    %v2856 = vpop.f32.mrb[0].mxu0
    %2857 = vdwg.mxu0
    %v2858 = vmul.f32 %v2426, %v2853
    %v2859 = vadd.f32 %v2763, %v2858
    %v2860 = vmax.f32 %v2859, 0.0
    %v2861 = vpack.c.bf16 %v2860, %v2860
    %v2863 = vsel %vm259, %v2861, 0
    %2865 = vmatprep.subr.bf16.mxu0 0
    %2866 = vmatpush1.bf16.msra.mxu0 %v438
    %2867 = vmatprep.subr.bf16.mxu0 0
    %2868 = vmatpush1.bf16.msra.mxu0 %v439
    %2869 = vmatprep.subr.bf16.mxu0 0
    %2870 = vmatpush1.bf16.msra.mxu0 0
    %2871 = vmatprep.subr.bf16.mxu0 0
    %2872 = vmatpush1.bf16.msra.mxu0 0
    %2873 = vmatprep.subr.bf16.mxu0 0
    %2874 = vmatpush1.bf16.msra.mxu0 0
    %2875 = vmatprep.subr.bf16.mxu0 0
    %2876 = vmatpush1.bf16.msra.mxu0 0
    %2877 = vmatprep.subr.bf16.mxu0 0
    %2878 = vmatpush1.bf16.msra.mxu0 0
    %2879 = vmatprep.subr.bf16.mxu0 0
    %2880 = vmatpush1.bf16.msra.mxu0 0
    %2881 = vmatprep.subr.bf16.mxu0 0
    %2882 = vmatpush1.bf16.msra.mxu0 0
    %2883 = vmatprep.subr.bf16.mxu0 0
    %2884 = vmatpush1.bf16.msra.mxu0 0
    %2885 = vmatprep.subr.bf16.mxu0 0
    %2886 = vmatpush1.bf16.msra.mxu0 0
    %2887 = vmatprep.subr.bf16.mxu0 0
    %2888 = vmatpush1.bf16.msra.mxu0 0
    %2889 = vmatprep.subr.bf16.mxu0 0
    %2890 = vmatpush1.bf16.msra.mxu0 0
    %2891 = vmatprep.subr.bf16.mxu0 0
    %2892 = vmatpush1.bf16.msra.mxu0 0
    %2893 = vmatprep.subr.bf16.mxu0 0
    %2894 = vmatpush1.bf16.msra.mxu0 0
    %2895 = vmatprep.subr.bf16.mxu0 0
    %2896 = vmatpush1.bf16.msra.mxu0 0
    %2897 = vmatprep.mubr.bf16.mxu0 0
    %2898 = vmatmul.mubr.bf16.gmra.mrb[0].mxu0 %v2863
    %v2899 = vpop.f32.mrb[0].mxu0
    %v2900 = vadd.f32 %v158, %v2899
    %v2901 = vpop.f32.mrb[0].mxu0
    %v2902 = vpop.f32.mrb[0].mxu0
    %v2903 = vpop.f32.mrb[0].mxu0
    %2904 = vdwg.mxu0
    %v2905 = vmax.f32 %v2900, 0.0
    %v2906 = vpack.c.bf16 %v2905, %v2905
    %v2908 = vsel %vm259, %v2906, 0
    %2910 = vmatprep.subr.bf16.mxu0 0
    %2911 = vmatpush1.bf16.msra.mxu0 %v495
    %2912 = vmatprep.subr.bf16.mxu0 0
    %2913 = vmatpush1.bf16.msra.mxu0 %v496
    %2914 = vmatprep.subr.bf16.mxu0 0
    %2915 = vmatpush1.bf16.msra.mxu0 0
    %2916 = vmatprep.subr.bf16.mxu0 0
    %2917 = vmatpush1.bf16.msra.mxu0 0
    %2918 = vmatprep.subr.bf16.mxu0 0
    %2919 = vmatpush1.bf16.msra.mxu0 0
    %2920 = vmatprep.subr.bf16.mxu0 0
    %2921 = vmatpush1.bf16.msra.mxu0 0
    %2922 = vmatprep.subr.bf16.mxu0 0
    %2923 = vmatpush1.bf16.msra.mxu0 0
    %2924 = vmatprep.subr.bf16.mxu0 0
    %2925 = vmatpush1.bf16.msra.mxu0 0
    %2926 = vmatprep.subr.bf16.mxu0 0
    %2927 = vmatpush1.bf16.msra.mxu0 0
    %2928 = vmatprep.subr.bf16.mxu0 0
    %2929 = vmatpush1.bf16.msra.mxu0 0
    %2930 = vmatprep.subr.bf16.mxu0 0
    %2931 = vmatpush1.bf16.msra.mxu0 0
    %2932 = vmatprep.subr.bf16.mxu0 0
    %2933 = vmatpush1.bf16.msra.mxu0 0
    %2934 = vmatprep.subr.bf16.mxu0 0
    %2935 = vmatpush1.bf16.msra.mxu0 0
    %2936 = vmatprep.subr.bf16.mxu0 0
    %2937 = vmatpush1.bf16.msra.mxu0 0
    %2938 = vmatprep.subr.bf16.mxu0 0
    %2939 = vmatpush1.bf16.msra.mxu0 0
    %2940 = vmatprep.subr.bf16.mxu0 0
    %2941 = vmatpush1.bf16.msra.mxu0 0
    %2942 = vmatprep.mubr.bf16.mxu0 0
    %2943 = vmatmul.mubr.bf16.gmra.mrb[0].mxu0 %v2908
    %v2944 = vpop.f32.mrb[0].mxu0
    %v2945 = vadd.f32 %v172, %v2944
    %v2946 = vpop.f32.mrb[0].mxu0
    %v2947 = vpop.f32.mrb[0].mxu0
    %v2948 = vpop.f32.mrb[0].mxu0
    %2949 = vdwg.mxu0
    %v2950 = vmul.f32 %v2426, %v2945
    %v2951 = vadd.f32 %v2763, %v2950
    %v2952 = vmax.f32 %v2951, 0.0
    %v2953 = vpack.c.bf16 %v2952, %v2952
    %v2955 = vsel %vm259, %v2953, 0
    %2957 = vmatprep.subr.bf16.mxu0 0
    %2958 = vmatpush1.bf16.msra.mxu0 %v438
    %2959 = vmatprep.subr.bf16.mxu0 0
    %2960 = vmatpush1.bf16.msra.mxu0 %v439
    %2961 = vmatprep.subr.bf16.mxu0 0
    %2962 = vmatpush1.bf16.msra.mxu0 0
    %2963 = vmatprep.subr.bf16.mxu0 0
    %2964 = vmatpush1.bf16.msra.mxu0 0
    %2965 = vmatprep.subr.bf16.mxu0 0
    %2966 = vmatpush1.bf16.msra.mxu0 0
    %2967 = vmatprep.subr.bf16.mxu0 0
    %2968 = vmatpush1.bf16.msra.mxu0 0
    %2969 = vmatprep.subr.bf16.mxu0 0
    %2970 = vmatpush1.bf16.msra.mxu0 0
    %2971 = vmatprep.subr.bf16.mxu0 0
    %2972 = vmatpush1.bf16.msra.mxu0 0
    %2973 = vmatprep.subr.bf16.mxu0 0
    %2974 = vmatpush1.bf16.msra.mxu0 0
    %2975 = vmatprep.subr.bf16.mxu0 0
    %2976 = vmatpush1.bf16.msra.mxu0 0
    %2977 = vmatprep.subr.bf16.mxu0 0
    %2978 = vmatpush1.bf16.msra.mxu0 0
    %2979 = vmatprep.subr.bf16.mxu0 0
    %2980 = vmatpush1.bf16.msra.mxu0 0
    %2981 = vmatprep.subr.bf16.mxu0 0
    %2982 = vmatpush1.bf16.msra.mxu0 0
    %2983 = vmatprep.subr.bf16.mxu0 0
    %2984 = vmatpush1.bf16.msra.mxu0 0
    %2985 = vmatprep.subr.bf16.mxu0 0
    %2986 = vmatpush1.bf16.msra.mxu0 0
    %2987 = vmatprep.subr.bf16.mxu0 0
    %2988 = vmatpush1.bf16.msra.mxu0 0
    %2989 = vmatprep.mubr.bf16.mxu0 0
    %2990 = vmatmul.mubr.bf16.gmra.mrb[0].mxu0 %v2955
    %v2991 = vpop.f32.mrb[0].mxu0
    %v2992 = vadd.f32 %v158, %v2991
    %v2993 = vpop.f32.mrb[0].mxu0
    %v2994 = vpop.f32.mrb[0].mxu0
    %v2995 = vpop.f32.mrb[0].mxu0
    %2996 = vdwg.mxu0
    %v2997 = vmax.f32 %v2992, 0.0
    %v2998 = vpack.c.bf16 %v2997, %v2997
    %v3000 = vsel %vm259, %v2998, 0
    %3002 = vmatprep.subr.bf16.mxu0 0
    %3003 = vmatpush1.bf16.msra.mxu0 %v495
    %3004 = vmatprep.subr.bf16.mxu0 0
    %3005 = vmatpush1.bf16.msra.mxu0 %v496
    %3006 = vmatprep.subr.bf16.mxu0 0
    %3007 = vmatpush1.bf16.msra.mxu0 0
    %3008 = vmatprep.subr.bf16.mxu0 0
    %3009 = vmatpush1.bf16.msra.mxu0 0
    %3010 = vmatprep.subr.bf16.mxu0 0
    %3011 = vmatpush1.bf16.msra.mxu0 0
    %3012 = vmatprep.subr.bf16.mxu0 0
    %3013 = vmatpush1.bf16.msra.mxu0 0
    %3014 = vmatprep.subr.bf16.mxu0 0
    %3015 = vmatpush1.bf16.msra.mxu0 0
    %3016 = vmatprep.subr.bf16.mxu0 0
    %3017 = vmatpush1.bf16.msra.mxu0 0
    %3018 = vmatprep.subr.bf16.mxu0 0
    %3019 = vmatpush1.bf16.msra.mxu0 0
    %3020 = vmatprep.subr.bf16.mxu0 0
    %3021 = vmatpush1.bf16.msra.mxu0 0
    %3022 = vmatprep.subr.bf16.mxu0 0
    %3023 = vmatpush1.bf16.msra.mxu0 0
    %3024 = vmatprep.subr.bf16.mxu0 0
    %3025 = vmatpush1.bf16.msra.mxu0 0
    %3026 = vmatprep.subr.bf16.mxu0 0
    %3027 = vmatpush1.bf16.msra.mxu0 0
    %3028 = vmatprep.subr.bf16.mxu0 0
    %3029 = vmatpush1.bf16.msra.mxu0 0
    %3030 = vmatprep.subr.bf16.mxu0 0
    %3031 = vmatpush1.bf16.msra.mxu0 0
    %3032 = vmatprep.subr.bf16.mxu0 0
    %3033 = vmatpush1.bf16.msra.mxu0 0
    %3034 = vmatprep.mubr.bf16.mxu0 0
    %3035 = vmatmul.mubr.bf16.gmra.mrb[0].mxu0 %v3000
    %v3036 = vpop.f32.mrb[0].mxu0
    %v3037 = vadd.f32 %v172, %v3036
    %v3038 = vpop.f32.mrb[0].mxu0
    %v3039 = vpop.f32.mrb[0].mxu0
    %v3040 = vpop.f32.mrb[0].mxu0
    %3041 = vdwg.mxu0
    %v3042 = vmul.f32 %v2611, %v3037
    %v3043 = vadd.f32 %v2763, %v3042
    %v3044 = vmax.f32 %v3043, 0.0
    %v3045 = vpack.c.bf16 %v3044, %v3044
    %v3047 = vsel %vm259, %v3045, 0
    %3049 = vmatprep.subr.bf16.mxu0 0
    %3050 = vmatpush1.bf16.msra.mxu0 %v438
    %3051 = vmatprep.subr.bf16.mxu0 0
    %3052 = vmatpush1.bf16.msra.mxu0 %v439
    %3053 = vmatprep.subr.bf16.mxu0 0
    %3054 = vmatpush1.bf16.msra.mxu0 0
    %3055 = vmatprep.subr.bf16.mxu0 0
    %3056 = vmatpush1.bf16.msra.mxu0 0
    %3057 = vmatprep.subr.bf16.mxu0 0
    %3058 = vmatpush1.bf16.msra.mxu0 0
    %3059 = vmatprep.subr.bf16.mxu0 0
    %3060 = vmatpush1.bf16.msra.mxu0 0
    %3061 = vmatprep.subr.bf16.mxu0 0
    %3062 = vmatpush1.bf16.msra.mxu0 0
    %3063 = vmatprep.subr.bf16.mxu0 0
    %3064 = vmatpush1.bf16.msra.mxu0 0
    %3065 = vmatprep.subr.bf16.mxu0 0
    %3066 = vmatpush1.bf16.msra.mxu0 0
    %3067 = vmatprep.subr.bf16.mxu0 0
    %3068 = vmatpush1.bf16.msra.mxu0 0
    %3069 = vmatprep.subr.bf16.mxu0 0
    %3070 = vmatpush1.bf16.msra.mxu0 0
    %3071 = vmatprep.subr.bf16.mxu0 0
    %3072 = vmatpush1.bf16.msra.mxu0 0
    %3073 = vmatprep.subr.bf16.mxu0 0
    %3074 = vmatpush1.bf16.msra.mxu0 0
    %3075 = vmatprep.subr.bf16.mxu0 0
    %3076 = vmatpush1.bf16.msra.mxu0 0
    %3077 = vmatprep.subr.bf16.mxu0 0
    %3078 = vmatpush1.bf16.msra.mxu0 0
    %3079 = vmatprep.subr.bf16.mxu0 0
    %3080 = vmatpush1.bf16.msra.mxu0 0
    %3081 = vmatprep.mubr.bf16.mxu0 0
    %3082 = vmatmul.mubr.bf16.gmra.mrb[0].mxu0 %v3047
    %v3083 = vpop.f32.mrb[0].mxu0
    %v3084 = vadd.f32 %v158, %v3083
    %v3085 = vpop.f32.mrb[0].mxu0
    %v3086 = vpop.f32.mrb[0].mxu0
    %v3087 = vpop.f32.mrb[0].mxu0
    %3088 = vdwg.mxu0
    %v3089 = vmax.f32 %v3084, 0.0
    %v3090 = vadd.f32 %v2905, %v2997
    %v3091 = vmul.f32 %v3090, 2.0
    %v3092 = vadd.f32 %v2813, %v3091
    %v3093 = vadd.f32 %v3092, %v3089
    %v3094 = vpack.c.bf16 %v3093, %v3093
    %v3096 = vsel %vm259, %v3094, 0
    %3098 = vmatprep.subr.bf16.mxu0 0
    %3099 = vmatpush1.bf16.msra.mxu0 %v789
    %3100 = vmatprep.subr.bf16.mxu0 0
    %3101 = vmatpush1.bf16.msra.mxu0 %v790
    %3102 = vmatprep.subr.bf16.mxu0 0
    %3103 = vmatpush1.bf16.msra.mxu0 0
    %3104 = vmatprep.subr.bf16.mxu0 0
    %3105 = vmatpush1.bf16.msra.mxu0 0
    %3106 = vmatprep.subr.bf16.mxu0 0
    %3107 = vmatpush1.bf16.msra.mxu0 0
    %3108 = vmatprep.subr.bf16.mxu0 0
    %3109 = vmatpush1.bf16.msra.mxu0 0
    %3110 = vmatprep.subr.bf16.mxu0 0
    %3111 = vmatpush1.bf16.msra.mxu0 0
    %3112 = vmatprep.subr.bf16.mxu0 0
    %3113 = vmatpush1.bf16.msra.mxu0 0
    %3114 = vmatprep.subr.bf16.mxu0 0
    %3115 = vmatpush1.bf16.msra.mxu0 0
    %3116 = vmatprep.subr.bf16.mxu0 0
    %3117 = vmatpush1.bf16.msra.mxu0 0
    %3118 = vmatprep.subr.bf16.mxu0 0
    %3119 = vmatpush1.bf16.msra.mxu0 0
    %3120 = vmatprep.subr.bf16.mxu0 0
    %3121 = vmatpush1.bf16.msra.mxu0 0
    %3122 = vmatprep.subr.bf16.mxu0 0
    %3123 = vmatpush1.bf16.msra.mxu0 0
    %3124 = vmatprep.subr.bf16.mxu0 0
    %3125 = vmatpush1.bf16.msra.mxu0 0
    %3126 = vmatprep.subr.bf16.mxu0 0
    %3127 = vmatpush1.bf16.msra.mxu0 0
    %3128 = vmatprep.subr.bf16.mxu0 0
    %3129 = vmatpush1.bf16.msra.mxu0 0
    %3130 = vmatprep.mubr.bf16.mxu0 0
    %3131 = vmatmul.mubr.bf16.gmra.mrb[0].mxu0 %v3096
    %v3132 = vpop.f32.mrb[0].mxu0
    %v3133 = vadd.f32 0.0, %v3132
    %v3134 = vpop.f32.mrb[0].mxu0
    %v3135 = vpop.f32.mrb[0].mxu0
    %v3136 = vpop.f32.mrb[0].mxu0
    %3137 = vdwg.mxu0
    %v3138 = vmul.f32 %v2708, %v3133
    %3140 = vrot.lane.b32.xlu0 %v3138, 32
    %v3141 = vpop.permute.xlu0 %3140
    %v3143 = vadd.f32 %v2720, %v3141
    %v3144 = vadd.f32 %v3143, %v2718
    %v3145 = vld [vmem:[#allocation2 + $0xc] sm:$0xf]
    %v3146 = vsel %vm259, %v3145, %v3144
    %v3147 = vpack.c.bf16 %v3146, %v3146
    %v3149 = vsel %vm290, %v3147, 0
    %3151 = vmatprep.subr.bf16.mxu0 0
    %3152 = vmatpush1.bf16.msra.mxu0 %v282
    %3153 = vmatprep.subr.bf16.mxu0 0
    %3154 = vmatpush1.bf16.msra.mxu0 %v283
    %3155 = vmatprep.subr.bf16.mxu0 0
    %3156 = vmatpush1.bf16.msra.mxu0 %v284
    %3157 = vmatprep.subr.bf16.mxu0 0
    %3158 = vmatpush1.bf16.msra.mxu0 %v285
    %3159 = vmatprep.subr.bf16.mxu0 0
    %3160 = vmatpush1.bf16.msra.mxu0 0
    %3161 = vmatprep.subr.bf16.mxu0 0
    %3162 = vmatpush1.bf16.msra.mxu0 0
    %3163 = vmatprep.subr.bf16.mxu0 0
    %3164 = vmatpush1.bf16.msra.mxu0 0
    %3165 = vmatprep.subr.bf16.mxu0 0
    %3166 = vmatpush1.bf16.msra.mxu0 0
    %3167 = vmatprep.subr.bf16.mxu0 0
    %3168 = vmatpush1.bf16.msra.mxu0 0
    %3169 = vmatprep.subr.bf16.mxu0 0
    %3170 = vmatpush1.bf16.msra.mxu0 0
    %3171 = vmatprep.subr.bf16.mxu0 0
    %3172 = vmatpush1.bf16.msra.mxu0 0
    %3173 = vmatprep.subr.bf16.mxu0 0
    %3174 = vmatpush1.bf16.msra.mxu0 0
    %3175 = vmatprep.subr.bf16.mxu0 0
    %3176 = vmatpush1.bf16.msra.mxu0 0
    %3177 = vmatprep.subr.bf16.mxu0 0
    %3178 = vmatpush1.bf16.msra.mxu0 0
    %3179 = vmatprep.subr.bf16.mxu0 0
    %3180 = vmatpush1.bf16.msra.mxu0 0
    %3181 = vmatprep.subr.bf16.mxu0 0
    %3182 = vmatpush1.bf16.msra.mxu0 0
    %3183 = vmatprep.mubr.bf16.mxu0 0
    %3184 = vmatmul.mubr.bf16.gmra.mrb[0].mxu0 %v3149
    %v3185 = vpop.f32.mrb[0].mxu0
    %v3186 = vadd.f32 %v144, %v3185
    %v3187 = vpop.f32.mrb[0].mxu0
    %v3188 = vpop.f32.mrb[0].mxu0
    %v3189 = vpop.f32.mrb[0].mxu0
    %3190 = vdwg.mxu0
    %v3191 = vxor.u32 %v3186, 2147483648
    %v3192 = vmul.f32 %v3191, 1.442695
    %v3193 = vpow.pop %v3192
    %v3194 = vadd.f32 %v3193, 1.0
    %v3195 = vrcp.pop %v3194
    %v3196 = vmul.f32 1.0, %v3195
    %3198 = vrot.lane.b32.xlu0 %v3186, 32
    %v3199 = vpop.permute.xlu0 %3198
    %v3201 = vmul.f32 %v3196, %v3199
    %3203 = vrot.lane.b32.xlu0 %v3201, 64
    %v3204 = vpop.permute.xlu0 %3203
    %v3206 = vadd.f32 %v3186, %v3204
    %v3207 = vtanh.pop %v3206
    %v3208 = vsub.f32 1.0, %v3196
    %3210 = vrot.lane.b32.xlu0 %v3207, 96
    %v3211 = vpop.permute.xlu0 %3210
    %v3213 = vmul.f32 %v3208, %v3211
    %v3214 = vmul.f32 %v3196, %v3144
    %v3215 = vadd.f32 %v3213, %v3214
    %3217 = vrot.lane.b32.xlu0 %v3215, 96
    %v3218 = vpop.permute.xlu0 %3217
    %3220 = vst.msk [vmem:[#allocation3 + $0xc] sm:$0xf] %vm363, %v3218
    %s3221 = sld [smem:[#allocation4 + $0x4]]
    %s3222 = smul.f32 %s3221, 0.5
    %s3223 = smul.f32 %s3222, 0.5
    %s3224 = smul.f32 %s3222, 0.16666667
    %v3225 = vpack.c.bf16 %v3215, %v3215
    %3227 = vrot.lane.b32.xlu0 %v3225, 96
    %v3228 = vpop.permute.xlu0 %3227
    %v3230 = vsel %vm259, %v3228, 0
    %3232 = vmatprep.subr.bf16.mxu0 0
    %3233 = vmatpush1.bf16.msra.mxu0 %v381
    %3234 = vmatprep.subr.bf16.mxu0 0
    %3235 = vmatpush1.bf16.msra.mxu0 %v382
    %3236 = vmatprep.subr.bf16.mxu0 0
    %3237 = vmatpush1.bf16.msra.mxu0 0
    %3238 = vmatprep.subr.bf16.mxu0 0
    %3239 = vmatpush1.bf16.msra.mxu0 0
    %3240 = vmatprep.subr.bf16.mxu0 0
    %3241 = vmatpush1.bf16.msra.mxu0 0
    %3242 = vmatprep.subr.bf16.mxu0 0
    %3243 = vmatpush1.bf16.msra.mxu0 0
    %3244 = vmatprep.subr.bf16.mxu0 0
    %3245 = vmatpush1.bf16.msra.mxu0 0
    %3246 = vmatprep.subr.bf16.mxu0 0
    %3247 = vmatpush1.bf16.msra.mxu0 0
    %3248 = vmatprep.subr.bf16.mxu0 0
    %3249 = vmatpush1.bf16.msra.mxu0 0
    %3250 = vmatprep.subr.bf16.mxu0 0
    %3251 = vmatpush1.bf16.msra.mxu0 0
    %3252 = vmatprep.subr.bf16.mxu0 0
    %3253 = vmatpush1.bf16.msra.mxu0 0
    %3254 = vmatprep.subr.bf16.mxu0 0
    %3255 = vmatpush1.bf16.msra.mxu0 0
    %3256 = vmatprep.subr.bf16.mxu0 0
    %3257 = vmatpush1.bf16.msra.mxu0 0
    %3258 = vmatprep.subr.bf16.mxu0 0
    %3259 = vmatpush1.bf16.msra.mxu0 0
    %3260 = vmatprep.subr.bf16.mxu0 0
    %3261 = vmatpush1.bf16.msra.mxu0 0
    %3262 = vmatprep.subr.bf16.mxu0 0
    %3263 = vmatpush1.bf16.msra.mxu0 0
    %3264 = vmatprep.mubr.bf16.mxu0 0
    %3265 = vmatmul.mubr.bf16.gmra.mrb[0].mxu0 %v3230
    %v3266 = vpop.f32.mrb[0].mxu0
    %v3267 = vadd.f32 %v151, %v3266
    %v3268 = vpop.f32.mrb[0].mxu0
    %v3269 = vpop.f32.mrb[0].mxu0
    %v3270 = vpop.f32.mrb[0].mxu0
    %3271 = vdwg.mxu0
    %v3272 = vmax.f32 %v3267, 0.0
    %v3273 = vpack.c.bf16 %v3272, %v3272
    %v3275 = vsel %vm259, %v3273, 0
    %3277 = vmatprep.subr.bf16.mxu0 0
    %3278 = vmatpush1.bf16.msra.mxu0 %v438
    %3279 = vmatprep.subr.bf16.mxu0 0
    %3280 = vmatpush1.bf16.msra.mxu0 %v439
    %3281 = vmatprep.subr.bf16.mxu0 0
    %3282 = vmatpush1.bf16.msra.mxu0 0
    %3283 = vmatprep.subr.bf16.mxu0 0
    %3284 = vmatpush1.bf16.msra.mxu0 0
    %3285 = vmatprep.subr.bf16.mxu0 0
    %3286 = vmatpush1.bf16.msra.mxu0 0
    %3287 = vmatprep.subr.bf16.mxu0 0
    %3288 = vmatpush1.bf16.msra.mxu0 0
    %3289 = vmatprep.subr.bf16.mxu0 0
    %3290 = vmatpush1.bf16.msra.mxu0 0
    %3291 = vmatprep.subr.bf16.mxu0 0
    %3292 = vmatpush1.bf16.msra.mxu0 0
    %3293 = vmatprep.subr.bf16.mxu0 0
    %3294 = vmatpush1.bf16.msra.mxu0 0
    %3295 = vmatprep.subr.bf16.mxu0 0
    %3296 = vmatpush1.bf16.msra.mxu0 0
    %3297 = vmatprep.subr.bf16.mxu0 0
    %3298 = vmatpush1.bf16.msra.mxu0 0
    %3299 = vmatprep.subr.bf16.mxu0 0
    %3300 = vmatpush1.bf16.msra.mxu0 0
    %3301 = vmatprep.subr.bf16.mxu0 0
    %3302 = vmatpush1.bf16.msra.mxu0 0
    %3303 = vmatprep.subr.bf16.mxu0 0
    %3304 = vmatpush1.bf16.msra.mxu0 0
    %3305 = vmatprep.subr.bf16.mxu0 0
    %3306 = vmatpush1.bf16.msra.mxu0 0
    %3307 = vmatprep.subr.bf16.mxu0 0
    %3308 = vmatpush1.bf16.msra.mxu0 0
    %3309 = vmatprep.mubr.bf16.mxu0 0
    %3310 = vmatmul.mubr.bf16.gmra.mrb[0].mxu0 %v3275
    %v3311 = vpop.f32.mrb[0].mxu0
    %v3312 = vadd.f32 %v158, %v3311
    %v3313 = vpop.f32.mrb[0].mxu0
    %v3314 = vpop.f32.mrb[0].mxu0
    %v3315 = vpop.f32.mrb[0].mxu0
    %3316 = vdwg.mxu0
    %v3317 = vmax.f32 %v3312, 0.0
    %v3318 = vpack.c.bf16 %v3317, %v3317
    %v3320 = vsel %vm259, %v3318, 0
    %3322 = vmatprep.subr.bf16.mxu0 0
    %3323 = vmatpush1.bf16.msra.mxu0 %v495
    %3324 = vmatprep.subr.bf16.mxu0 0
    %3325 = vmatpush1.bf16.msra.mxu0 %v496
    %3326 = vmatprep.subr.bf16.mxu0 0
    %3327 = vmatpush1.bf16.msra.mxu0 0
    %3328 = vmatprep.subr.bf16.mxu0 0
    %3329 = vmatpush1.bf16.msra.mxu0 0
    %3330 = vmatprep.subr.bf16.mxu0 0
    %3331 = vmatpush1.bf16.msra.mxu0 0
    %3332 = vmatprep.subr.bf16.mxu0 0
    %3333 = vmatpush1.bf16.msra.mxu0 0
    %3334 = vmatprep.subr.bf16.mxu0 0
    %3335 = vmatpush1.bf16.msra.mxu0 0
    %3336 = vmatprep.subr.bf16.mxu0 0
    %3337 = vmatpush1.bf16.msra.mxu0 0
    %3338 = vmatprep.subr.bf16.mxu0 0
    %3339 = vmatpush1.bf16.msra.mxu0 0
    %3340 = vmatprep.subr.bf16.mxu0 0
    %3341 = vmatpush1.bf16.msra.mxu0 0
    %3342 = vmatprep.subr.bf16.mxu0 0
    %3343 = vmatpush1.bf16.msra.mxu0 0
    %3344 = vmatprep.subr.bf16.mxu0 0
    %3345 = vmatpush1.bf16.msra.mxu0 0
    %3346 = vmatprep.subr.bf16.mxu0 0
    %3347 = vmatpush1.bf16.msra.mxu0 0
    %3348 = vmatprep.subr.bf16.mxu0 0
    %3349 = vmatpush1.bf16.msra.mxu0 0
    %3350 = vmatprep.subr.bf16.mxu0 0
    %3351 = vmatpush1.bf16.msra.mxu0 0
    %3352 = vmatprep.subr.bf16.mxu0 0
    %3353 = vmatpush1.bf16.msra.mxu0 0
    %3354 = vmatprep.mubr.bf16.mxu0 0
    %3355 = vmatmul.mubr.bf16.gmra.mrb[0].mxu0 %v3320
    %v3356 = vpop.f32.mrb[0].mxu0
    %v3357 = vadd.f32 %v172, %v3356
    %v3358 = vpop.f32.mrb[0].mxu0
    %v3359 = vpop.f32.mrb[0].mxu0
    %v3360 = vpop.f32.mrb[0].mxu0
    %3361 = vdwg.mxu0
    %v3362 = vstv %s3223
    %v3363 = vmul.f32 %v3362, %v3357
    %v3364 = vadd.f32 %v3267, %v3363
    %v3365 = vmax.f32 %v3364, 0.0
    %v3366 = vpack.c.bf16 %v3365, %v3365
    %v3368 = vsel %vm259, %v3366, 0
    %3370 = vmatprep.subr.bf16.mxu0 0
    %3371 = vmatpush1.bf16.msra.mxu0 %v438
    %3372 = vmatprep.subr.bf16.mxu0 0
    %3373 = vmatpush1.bf16.msra.mxu0 %v439
    %3374 = vmatprep.subr.bf16.mxu0 0
    %3375 = vmatpush1.bf16.msra.mxu0 0
    %3376 = vmatprep.subr.bf16.mxu0 0
    %3377 = vmatpush1.bf16.msra.mxu0 0
    %3378 = vmatprep.subr.bf16.mxu0 0
    %3379 = vmatpush1.bf16.msra.mxu0 0
    %3380 = vmatprep.subr.bf16.mxu0 0
    %3381 = vmatpush1.bf16.msra.mxu0 0
    %3382 = vmatprep.subr.bf16.mxu0 0
    %3383 = vmatpush1.bf16.msra.mxu0 0
    %3384 = vmatprep.subr.bf16.mxu0 0
    %3385 = vmatpush1.bf16.msra.mxu0 0
    %3386 = vmatprep.subr.bf16.mxu0 0
    %3387 = vmatpush1.bf16.msra.mxu0 0
    %3388 = vmatprep.subr.bf16.mxu0 0
    %3389 = vmatpush1.bf16.msra.mxu0 0
    %3390 = vmatprep.subr.bf16.mxu0 0
    %3391 = vmatpush1.bf16.msra.mxu0 0
    %3392 = vmatprep.subr.bf16.mxu0 0
    %3393 = vmatpush1.bf16.msra.mxu0 0
    %3394 = vmatprep.subr.bf16.mxu0 0
    %3395 = vmatpush1.bf16.msra.mxu0 0
    %3396 = vmatprep.subr.bf16.mxu0 0
    %3397 = vmatpush1.bf16.msra.mxu0 0
    %3398 = vmatprep.subr.bf16.mxu0 0
    %3399 = vmatpush1.bf16.msra.mxu0 0
    %3400 = vmatprep.subr.bf16.mxu0 0
    %3401 = vmatpush1.bf16.msra.mxu0 0
    %3402 = vmatprep.mubr.bf16.mxu0 0
    %3403 = vmatmul.mubr.bf16.gmra.mrb[0].mxu0 %v3368
    %v3404 = vpop.f32.mrb[0].mxu0
    %v3405 = vadd.f32 %v158, %v3404
    %v3406 = vpop.f32.mrb[0].mxu0
    %v3407 = vpop.f32.mrb[0].mxu0
    %v3408 = vpop.f32.mrb[0].mxu0
    %3409 = vdwg.mxu0
    %v3410 = vmax.f32 %v3405, 0.0
    %v3411 = vpack.c.bf16 %v3410, %v3410
    %v3413 = vsel %vm259, %v3411, 0
    %3415 = vmatprep.subr.bf16.mxu0 0
    %3416 = vmatpush1.bf16.msra.mxu0 %v495
    %3417 = vmatprep.subr.bf16.mxu0 0
    %3418 = vmatpush1.bf16.msra.mxu0 %v496
    %3419 = vmatprep.subr.bf16.mxu0 0
    %3420 = vmatpush1.bf16.msra.mxu0 0
    %3421 = vmatprep.subr.bf16.mxu0 0
    %3422 = vmatpush1.bf16.msra.mxu0 0
    %3423 = vmatprep.subr.bf16.mxu0 0
    %3424 = vmatpush1.bf16.msra.mxu0 0
    %3425 = vmatprep.subr.bf16.mxu0 0
    %3426 = vmatpush1.bf16.msra.mxu0 0
    %3427 = vmatprep.subr.bf16.mxu0 0
    %3428 = vmatpush1.bf16.msra.mxu0 0
    %3429 = vmatprep.subr.bf16.mxu0 0
    %3430 = vmatpush1.bf16.msra.mxu0 0
    %3431 = vmatprep.subr.bf16.mxu0 0
    %3432 = vmatpush1.bf16.msra.mxu0 0
    %3433 = vmatprep.subr.bf16.mxu0 0
    %3434 = vmatpush1.bf16.msra.mxu0 0
    %3435 = vmatprep.subr.bf16.mxu0 0
    %3436 = vmatpush1.bf16.msra.mxu0 0
    %3437 = vmatprep.subr.bf16.mxu0 0
    %3438 = vmatpush1.bf16.msra.mxu0 0
    %3439 = vmatprep.subr.bf16.mxu0 0
    %3440 = vmatpush1.bf16.msra.mxu0 0
    %3441 = vmatprep.subr.bf16.mxu0 0
    %3442 = vmatpush1.bf16.msra.mxu0 0
    %3443 = vmatprep.subr.bf16.mxu0 0
    %3444 = vmatpush1.bf16.msra.mxu0 0
    %3445 = vmatprep.subr.bf16.mxu0 0
    %3446 = vmatpush1.bf16.msra.mxu0 0
    %3447 = vmatprep.mubr.bf16.mxu0 0
    %3448 = vmatmul.mubr.bf16.gmra.mrb[0].mxu0 %v3413
    %v3449 = vpop.f32.mrb[0].mxu0
    %v3450 = vadd.f32 %v172, %v3449
    %v3451 = vpop.f32.mrb[0].mxu0
    %v3452 = vpop.f32.mrb[0].mxu0
    %v3453 = vpop.f32.mrb[0].mxu0
    %3454 = vdwg.mxu0
    %v3455 = vmul.f32 %v3362, %v3450
    %v3456 = vadd.f32 %v3267, %v3455
    %v3457 = vmax.f32 %v3456, 0.0
    %v3458 = vpack.c.bf16 %v3457, %v3457
    %v3460 = vsel %vm259, %v3458, 0
    %3462 = vmatprep.subr.bf16.mxu0 0
    %3463 = vmatpush1.bf16.msra.mxu0 %v438
    %3464 = vmatprep.subr.bf16.mxu0 0
    %3465 = vmatpush1.bf16.msra.mxu0 %v439
    %3466 = vmatprep.subr.bf16.mxu0 0
    %3467 = vmatpush1.bf16.msra.mxu0 0
    %3468 = vmatprep.subr.bf16.mxu0 0
    %3469 = vmatpush1.bf16.msra.mxu0 0
    %3470 = vmatprep.subr.bf16.mxu0 0
    %3471 = vmatpush1.bf16.msra.mxu0 0
    %3472 = vmatprep.subr.bf16.mxu0 0
    %3473 = vmatpush1.bf16.msra.mxu0 0
    %3474 = vmatprep.subr.bf16.mxu0 0
    %3475 = vmatpush1.bf16.msra.mxu0 0
    %3476 = vmatprep.subr.bf16.mxu0 0
    %3477 = vmatpush1.bf16.msra.mxu0 0
    %3478 = vmatprep.subr.bf16.mxu0 0
    %3479 = vmatpush1.bf16.msra.mxu0 0
    %3480 = vmatprep.subr.bf16.mxu0 0
    %3481 = vmatpush1.bf16.msra.mxu0 0
    %3482 = vmatprep.subr.bf16.mxu0 0
    %3483 = vmatpush1.bf16.msra.mxu0 0
    %3484 = vmatprep.subr.bf16.mxu0 0
    %3485 = vmatpush1.bf16.msra.mxu0 0
    %3486 = vmatprep.subr.bf16.mxu0 0
    %3487 = vmatpush1.bf16.msra.mxu0 0
    %3488 = vmatprep.subr.bf16.mxu0 0
    %3489 = vmatpush1.bf16.msra.mxu0 0
    %3490 = vmatprep.subr.bf16.mxu0 0
    %3491 = vmatpush1.bf16.msra.mxu0 0
    %3492 = vmatprep.subr.bf16.mxu0 0
    %3493 = vmatpush1.bf16.msra.mxu0 0
    %3494 = vmatprep.mubr.bf16.mxu0 0
    %3495 = vmatmul.mubr.bf16.gmra.mrb[0].mxu0 %v3460
    %v3496 = vpop.f32.mrb[0].mxu0
    %v3497 = vadd.f32 %v158, %v3496
    %v3498 = vpop.f32.mrb[0].mxu0
    %v3499 = vpop.f32.mrb[0].mxu0
    %v3500 = vpop.f32.mrb[0].mxu0
    %3501 = vdwg.mxu0
    %v3502 = vmax.f32 %v3497, 0.0
    %v3503 = vpack.c.bf16 %v3502, %v3502
    %v3505 = vsel %vm259, %v3503, 0
    %3507 = vmatprep.subr.bf16.mxu0 0
    %3508 = vmatpush1.bf16.msra.mxu0 %v495
    %3509 = vmatprep.subr.bf16.mxu0 0
    %3510 = vmatpush1.bf16.msra.mxu0 %v496
    %3511 = vmatprep.subr.bf16.mxu0 0
    %3512 = vmatpush1.bf16.msra.mxu0 0
    %3513 = vmatprep.subr.bf16.mxu0 0
    %3514 = vmatpush1.bf16.msra.mxu0 0
    %3515 = vmatprep.subr.bf16.mxu0 0
    %3516 = vmatpush1.bf16.msra.mxu0 0
    %3517 = vmatprep.subr.bf16.mxu0 0
    %3518 = vmatpush1.bf16.msra.mxu0 0
    %3519 = vmatprep.subr.bf16.mxu0 0
    %3520 = vmatpush1.bf16.msra.mxu0 0
    %3521 = vmatprep.subr.bf16.mxu0 0
    %3522 = vmatpush1.bf16.msra.mxu0 0
    %3523 = vmatprep.subr.bf16.mxu0 0
    %3524 = vmatpush1.bf16.msra.mxu0 0
    %3525 = vmatprep.subr.bf16.mxu0 0
    %3526 = vmatpush1.bf16.msra.mxu0 0
    %3527 = vmatprep.subr.bf16.mxu0 0
    %3528 = vmatpush1.bf16.msra.mxu0 0
    %3529 = vmatprep.subr.bf16.mxu0 0
    %3530 = vmatpush1.bf16.msra.mxu0 0
    %3531 = vmatprep.subr.bf16.mxu0 0
    %3532 = vmatpush1.bf16.msra.mxu0 0
    %3533 = vmatprep.subr.bf16.mxu0 0
    %3534 = vmatpush1.bf16.msra.mxu0 0
    %3535 = vmatprep.subr.bf16.mxu0 0
    %3536 = vmatpush1.bf16.msra.mxu0 0
    %3537 = vmatprep.subr.bf16.mxu0 0
    %3538 = vmatpush1.bf16.msra.mxu0 0
    %3539 = vmatprep.mubr.bf16.mxu0 0
    %3540 = vmatmul.mubr.bf16.gmra.mrb[0].mxu0 %v3505
    %v3541 = vpop.f32.mrb[0].mxu0
    %v3542 = vadd.f32 %v172, %v3541
    %v3543 = vpop.f32.mrb[0].mxu0
    %v3544 = vpop.f32.mrb[0].mxu0
    %v3545 = vpop.f32.mrb[0].mxu0
    %3546 = vdwg.mxu0
    %v3547 = vstv %s3222
    %v3548 = vmul.f32 %v3547, %v3542
    %v3549 = vadd.f32 %v3267, %v3548
    %v3550 = vmax.f32 %v3549, 0.0
    %v3551 = vpack.c.bf16 %v3550, %v3550
    %v3553 = vsel %vm259, %v3551, 0
    %3555 = vmatprep.subr.bf16.mxu0 0
    %3556 = vmatpush1.bf16.msra.mxu0 %v438
    %3557 = vmatprep.subr.bf16.mxu0 0
    %3558 = vmatpush1.bf16.msra.mxu0 %v439
    %3559 = vmatprep.subr.bf16.mxu0 0
    %3560 = vmatpush1.bf16.msra.mxu0 0
    %3561 = vmatprep.subr.bf16.mxu0 0
    %3562 = vmatpush1.bf16.msra.mxu0 0
    %3563 = vmatprep.subr.bf16.mxu0 0
    %3564 = vmatpush1.bf16.msra.mxu0 0
    %3565 = vmatprep.subr.bf16.mxu0 0
    %3566 = vmatpush1.bf16.msra.mxu0 0
    %3567 = vmatprep.subr.bf16.mxu0 0
    %3568 = vmatpush1.bf16.msra.mxu0 0
    %3569 = vmatprep.subr.bf16.mxu0 0
    %3570 = vmatpush1.bf16.msra.mxu0 0
    %3571 = vmatprep.subr.bf16.mxu0 0
    %3572 = vmatpush1.bf16.msra.mxu0 0
    %3573 = vmatprep.subr.bf16.mxu0 0
    %3574 = vmatpush1.bf16.msra.mxu0 0
    %3575 = vmatprep.subr.bf16.mxu0 0
    %3576 = vmatpush1.bf16.msra.mxu0 0
    %3577 = vmatprep.subr.bf16.mxu0 0
    %3578 = vmatpush1.bf16.msra.mxu0 0
    %3579 = vmatprep.subr.bf16.mxu0 0
    %3580 = vmatpush1.bf16.msra.mxu0 0
    %3581 = vmatprep.subr.bf16.mxu0 0
    %3582 = vmatpush1.bf16.msra.mxu0 0
    %3583 = vmatprep.subr.bf16.mxu0 0
    %3584 = vmatpush1.bf16.msra.mxu0 0
    %3585 = vmatprep.subr.bf16.mxu0 0
    %3586 = vmatpush1.bf16.msra.mxu0 0
    %3587 = vmatprep.mubr.bf16.mxu0 0
    %3588 = vmatmul.mubr.bf16.gmra.mrb[0].mxu0 %v3553
    %v3589 = vpop.f32.mrb[0].mxu0
    %v3590 = vadd.f32 %v158, %v3589
    %v3591 = vpop.f32.mrb[0].mxu0
    %v3592 = vpop.f32.mrb[0].mxu0
    %v3593 = vpop.f32.mrb[0].mxu0
    %3594 = vdwg.mxu0
    %v3595 = vmax.f32 %v3590, 0.0
    %v3596 = vadd.f32 %v3410, %v3502
    %v3597 = vmul.f32 %v3596, 2.0
    %v3598 = vadd.f32 %v3317, %v3597
    %v3599 = vadd.f32 %v3598, %v3595
    %v3600 = vpack.c.bf16 %v3599, %v3599
    %v3602 = vsel %vm259, %v3600, 0
    %3604 = vmatprep.subr.bf16.mxu0 0
    %3605 = vmatpush1.bf16.msra.mxu0 %v789
    %3606 = vmatprep.subr.bf16.mxu0 0
    %3607 = vmatpush1.bf16.msra.mxu0 %v790
    %3608 = vmatprep.subr.bf16.mxu0 0
    %3609 = vmatpush1.bf16.msra.mxu0 0
    %3610 = vmatprep.subr.bf16.mxu0 0
    %3611 = vmatpush1.bf16.msra.mxu0 0
    %3612 = vmatprep.subr.bf16.mxu0 0
    %3613 = vmatpush1.bf16.msra.mxu0 0
    %3614 = vmatprep.subr.bf16.mxu0 0
    %3615 = vmatpush1.bf16.msra.mxu0 0
    %3616 = vmatprep.subr.bf16.mxu0 0
    %3617 = vmatpush1.bf16.msra.mxu0 0
    %3618 = vmatprep.subr.bf16.mxu0 0
    %3619 = vmatpush1.bf16.msra.mxu0 0
    %3620 = vmatprep.subr.bf16.mxu0 0
    %3621 = vmatpush1.bf16.msra.mxu0 0
    %3622 = vmatprep.subr.bf16.mxu0 0
    %3623 = vmatpush1.bf16.msra.mxu0 0
    %3624 = vmatprep.subr.bf16.mxu0 0
    %3625 = vmatpush1.bf16.msra.mxu0 0
    %3626 = vmatprep.subr.bf16.mxu0 0
    %3627 = vmatpush1.bf16.msra.mxu0 0
    %3628 = vmatprep.subr.bf16.mxu0 0
    %3629 = vmatpush1.bf16.msra.mxu0 0
    %3630 = vmatprep.subr.bf16.mxu0 0
    %3631 = vmatpush1.bf16.msra.mxu0 0
    %3632 = vmatprep.subr.bf16.mxu0 0
    %3633 = vmatpush1.bf16.msra.mxu0 0
    %3634 = vmatprep.subr.bf16.mxu0 0
    %3635 = vmatpush1.bf16.msra.mxu0 0
    %3636 = vmatprep.mubr.bf16.mxu0 0
    %3637 = vmatmul.mubr.bf16.gmra.mrb[0].mxu0 %v3602
    %v3638 = vpop.f32.mrb[0].mxu0
    %v3639 = vadd.f32 0.0, %v3638
    %v3640 = vpop.f32.mrb[0].mxu0
    %v3641 = vpop.f32.mrb[0].mxu0
    %v3642 = vpop.f32.mrb[0].mxu0
    %3643 = vdwg.mxu0
    %v3644 = vstv %s3224
    %v3645 = vmul.f32 %v3644, %v3639
    %3647 = vrot.lane.b32.xlu0 %v3645, 32
    %v3648 = vpop.permute.xlu0 %3647
    %v3650 = vadd.f32 %v3215, %v3648
    %v3651 = vmul.f32 %v3547, %v165
    %3653 = vrot.lane.b32.xlu0 %v3651, 32
    %v3654 = vpop.permute.xlu0 %3653
    %v3656 = vadd.f32 %v3650, %v3654
    %v3657 = vpack.c.bf16 %v3656, %v3656
    %3659 = vrot.lane.b32.xlu0 %v3657, 96
    %v3660 = vpop.permute.xlu0 %3659
    %v3662 = vsel %vm259, %v3660, 0
    %3664 = vmatprep.subr.bf16.mxu0 0
    %3665 = vmatpush1.bf16.msra.mxu0 %v381
    %3666 = vmatprep.subr.bf16.mxu0 0
    %3667 = vmatpush1.bf16.msra.mxu0 %v382
    %3668 = vmatprep.subr.bf16.mxu0 0
    %3669 = vmatpush1.bf16.msra.mxu0 0
    %3670 = vmatprep.subr.bf16.mxu0 0
    %3671 = vmatpush1.bf16.msra.mxu0 0
    %3672 = vmatprep.subr.bf16.mxu0 0
    %3673 = vmatpush1.bf16.msra.mxu0 0
    %3674 = vmatprep.subr.bf16.mxu0 0
    %3675 = vmatpush1.bf16.msra.mxu0 0
    %3676 = vmatprep.subr.bf16.mxu0 0
    %3677 = vmatpush1.bf16.msra.mxu0 0
    %3678 = vmatprep.subr.bf16.mxu0 0
    %3679 = vmatpush1.bf16.msra.mxu0 0
    %3680 = vmatprep.subr.bf16.mxu0 0
    %3681 = vmatpush1.bf16.msra.mxu0 0
    %3682 = vmatprep.subr.bf16.mxu0 0
    %3683 = vmatpush1.bf16.msra.mxu0 0
    %3684 = vmatprep.subr.bf16.mxu0 0
    %3685 = vmatpush1.bf16.msra.mxu0 0
    %3686 = vmatprep.subr.bf16.mxu0 0
    %3687 = vmatpush1.bf16.msra.mxu0 0
    %3688 = vmatprep.subr.bf16.mxu0 0
    %3689 = vmatpush1.bf16.msra.mxu0 0
    %3690 = vmatprep.subr.bf16.mxu0 0
    %3691 = vmatpush1.bf16.msra.mxu0 0
    %3692 = vmatprep.subr.bf16.mxu0 0
    %3693 = vmatpush1.bf16.msra.mxu0 0
    %3694 = vmatprep.subr.bf16.mxu0 0
    %3695 = vmatpush1.bf16.msra.mxu0 0
    %3696 = vmatprep.mubr.bf16.mxu0 0
    %3697 = vmatmul.mubr.bf16.gmra.mrb[0].mxu0 %v3662
    %v3698 = vpop.f32.mrb[0].mxu0
    %v3699 = vadd.f32 %v151, %v3698
    %v3700 = vpop.f32.mrb[0].mxu0
    %v3701 = vpop.f32.mrb[0].mxu0
    %v3702 = vpop.f32.mrb[0].mxu0
    %3703 = vdwg.mxu0
    %v3704 = vmax.f32 %v3699, 0.0
    %v3705 = vpack.c.bf16 %v3704, %v3704
    %v3707 = vsel %vm259, %v3705, 0
    %3709 = vmatprep.subr.bf16.mxu0 0
    %3710 = vmatpush1.bf16.msra.mxu0 %v438
    %3711 = vmatprep.subr.bf16.mxu0 0
    %3712 = vmatpush1.bf16.msra.mxu0 %v439
    %3713 = vmatprep.subr.bf16.mxu0 0
    %3714 = vmatpush1.bf16.msra.mxu0 0
    %3715 = vmatprep.subr.bf16.mxu0 0
    %3716 = vmatpush1.bf16.msra.mxu0 0
    %3717 = vmatprep.subr.bf16.mxu0 0
    %3718 = vmatpush1.bf16.msra.mxu0 0
    %3719 = vmatprep.subr.bf16.mxu0 0
    %3720 = vmatpush1.bf16.msra.mxu0 0
    %3721 = vmatprep.subr.bf16.mxu0 0
    %3722 = vmatpush1.bf16.msra.mxu0 0
    %3723 = vmatprep.subr.bf16.mxu0 0
    %3724 = vmatpush1.bf16.msra.mxu0 0
    %3725 = vmatprep.subr.bf16.mxu0 0
    %3726 = vmatpush1.bf16.msra.mxu0 0
    %3727 = vmatprep.subr.bf16.mxu0 0
    %3728 = vmatpush1.bf16.msra.mxu0 0
    %3729 = vmatprep.subr.bf16.mxu0 0
    %3730 = vmatpush1.bf16.msra.mxu0 0
    %3731 = vmatprep.subr.bf16.mxu0 0
    %3732 = vmatpush1.bf16.msra.mxu0 0
    %3733 = vmatprep.subr.bf16.mxu0 0
    %3734 = vmatpush1.bf16.msra.mxu0 0
    %3735 = vmatprep.subr.bf16.mxu0 0
    %3736 = vmatpush1.bf16.msra.mxu0 0
    %3737 = vmatprep.subr.bf16.mxu0 0
    %3738 = vmatpush1.bf16.msra.mxu0 0
    %3739 = vmatprep.subr.bf16.mxu0 0
    %3740 = vmatpush1.bf16.msra.mxu0 0
    %3741 = vmatprep.mubr.bf16.mxu0 0
    %3742 = vmatmul.mubr.bf16.gmra.mrb[0].mxu0 %v3707
    %v3743 = vpop.f32.mrb[0].mxu0
    %v3744 = vadd.f32 %v158, %v3743
    %v3745 = vpop.f32.mrb[0].mxu0
    %v3746 = vpop.f32.mrb[0].mxu0
    %v3747 = vpop.f32.mrb[0].mxu0
    %3748 = vdwg.mxu0
    %v3749 = vmax.f32 %v3744, 0.0
    %v3750 = vpack.c.bf16 %v3749, %v3749
    %v3752 = vsel %vm259, %v3750, 0
    %3754 = vmatprep.subr.bf16.mxu0 0
    %3755 = vmatpush1.bf16.msra.mxu0 %v495
    %3756 = vmatprep.subr.bf16.mxu0 0
    %3757 = vmatpush1.bf16.msra.mxu0 %v496
    %3758 = vmatprep.subr.bf16.mxu0 0
    %3759 = vmatpush1.bf16.msra.mxu0 0
    %3760 = vmatprep.subr.bf16.mxu0 0
    %3761 = vmatpush1.bf16.msra.mxu0 0
    %3762 = vmatprep.subr.bf16.mxu0 0
    %3763 = vmatpush1.bf16.msra.mxu0 0
    %3764 = vmatprep.subr.bf16.mxu0 0
    %3765 = vmatpush1.bf16.msra.mxu0 0
    %3766 = vmatprep.subr.bf16.mxu0 0
    %3767 = vmatpush1.bf16.msra.mxu0 0
    %3768 = vmatprep.subr.bf16.mxu0 0
    %3769 = vmatpush1.bf16.msra.mxu0 0
    %3770 = vmatprep.subr.bf16.mxu0 0
    %3771 = vmatpush1.bf16.msra.mxu0 0
    %3772 = vmatprep.subr.bf16.mxu0 0
    %3773 = vmatpush1.bf16.msra.mxu0 0
    %3774 = vmatprep.subr.bf16.mxu0 0
    %3775 = vmatpush1.bf16.msra.mxu0 0
    %3776 = vmatprep.subr.bf16.mxu0 0
    %3777 = vmatpush1.bf16.msra.mxu0 0
    %3778 = vmatprep.subr.bf16.mxu0 0
    %3779 = vmatpush1.bf16.msra.mxu0 0
    %3780 = vmatprep.subr.bf16.mxu0 0
    %3781 = vmatpush1.bf16.msra.mxu0 0
    %3782 = vmatprep.subr.bf16.mxu0 0
    %3783 = vmatpush1.bf16.msra.mxu0 0
    %3784 = vmatprep.subr.bf16.mxu0 0
    %3785 = vmatpush1.bf16.msra.mxu0 0
    %3786 = vmatprep.mubr.bf16.mxu0 0
    %3787 = vmatmul.mubr.bf16.gmra.mrb[0].mxu0 %v3752
    %v3788 = vpop.f32.mrb[0].mxu0
    %v3789 = vadd.f32 %v172, %v3788
    %v3790 = vpop.f32.mrb[0].mxu0
    %v3791 = vpop.f32.mrb[0].mxu0
    %v3792 = vpop.f32.mrb[0].mxu0
    %3793 = vdwg.mxu0
    %v3794 = vmul.f32 %v3362, %v3789
    %v3795 = vadd.f32 %v3699, %v3794
    %v3796 = vmax.f32 %v3795, 0.0
    %v3797 = vpack.c.bf16 %v3796, %v3796
    %v3799 = vsel %vm259, %v3797, 0
    %3801 = vmatprep.subr.bf16.mxu0 0
    %3802 = vmatpush1.bf16.msra.mxu0 %v438
    %3803 = vmatprep.subr.bf16.mxu0 0
    %3804 = vmatpush1.bf16.msra.mxu0 %v439
    %3805 = vmatprep.subr.bf16.mxu0 0
    %3806 = vmatpush1.bf16.msra.mxu0 0
    %3807 = vmatprep.subr.bf16.mxu0 0
    %3808 = vmatpush1.bf16.msra.mxu0 0
    %3809 = vmatprep.subr.bf16.mxu0 0
    %3810 = vmatpush1.bf16.msra.mxu0 0
    %3811 = vmatprep.subr.bf16.mxu0 0
    %3812 = vmatpush1.bf16.msra.mxu0 0
    %3813 = vmatprep.subr.bf16.mxu0 0
    %3814 = vmatpush1.bf16.msra.mxu0 0
    %3815 = vmatprep.subr.bf16.mxu0 0
    %3816 = vmatpush1.bf16.msra.mxu0 0
    %3817 = vmatprep.subr.bf16.mxu0 0
    %3818 = vmatpush1.bf16.msra.mxu0 0
    %3819 = vmatprep.subr.bf16.mxu0 0
    %3820 = vmatpush1.bf16.msra.mxu0 0
    %3821 = vmatprep.subr.bf16.mxu0 0
    %3822 = vmatpush1.bf16.msra.mxu0 0
    %3823 = vmatprep.subr.bf16.mxu0 0
    %3824 = vmatpush1.bf16.msra.mxu0 0
    %3825 = vmatprep.subr.bf16.mxu0 0
    %3826 = vmatpush1.bf16.msra.mxu0 0
    %3827 = vmatprep.subr.bf16.mxu0 0
    %3828 = vmatpush1.bf16.msra.mxu0 0
    %3829 = vmatprep.subr.bf16.mxu0 0
    %3830 = vmatpush1.bf16.msra.mxu0 0
    %3831 = vmatprep.subr.bf16.mxu0 0
    %3832 = vmatpush1.bf16.msra.mxu0 0
    %3833 = vmatprep.mubr.bf16.mxu0 0
    %3834 = vmatmul.mubr.bf16.gmra.mrb[0].mxu0 %v3799
    %v3835 = vpop.f32.mrb[0].mxu0
    %v3836 = vadd.f32 %v158, %v3835
    %v3837 = vpop.f32.mrb[0].mxu0
    %v3838 = vpop.f32.mrb[0].mxu0
    %v3839 = vpop.f32.mrb[0].mxu0
    %3840 = vdwg.mxu0
    %v3841 = vmax.f32 %v3836, 0.0
    %v3842 = vpack.c.bf16 %v3841, %v3841
    %v3844 = vsel %vm259, %v3842, 0
    %3846 = vmatprep.subr.bf16.mxu0 0
    %3847 = vmatpush1.bf16.msra.mxu0 %v495
    %3848 = vmatprep.subr.bf16.mxu0 0
    %3849 = vmatpush1.bf16.msra.mxu0 %v496
    %3850 = vmatprep.subr.bf16.mxu0 0
    %3851 = vmatpush1.bf16.msra.mxu0 0
    %3852 = vmatprep.subr.bf16.mxu0 0
    %3853 = vmatpush1.bf16.msra.mxu0 0
    %3854 = vmatprep.subr.bf16.mxu0 0
    %3855 = vmatpush1.bf16.msra.mxu0 0
    %3856 = vmatprep.subr.bf16.mxu0 0
    %3857 = vmatpush1.bf16.msra.mxu0 0
    %3858 = vmatprep.subr.bf16.mxu0 0
    %3859 = vmatpush1.bf16.msra.mxu0 0
    %3860 = vmatprep.subr.bf16.mxu0 0
    %3861 = vmatpush1.bf16.msra.mxu0 0
    %3862 = vmatprep.subr.bf16.mxu0 0
    %3863 = vmatpush1.bf16.msra.mxu0 0
    %3864 = vmatprep.subr.bf16.mxu0 0
    %3865 = vmatpush1.bf16.msra.mxu0 0
    %3866 = vmatprep.subr.bf16.mxu0 0
    %3867 = vmatpush1.bf16.msra.mxu0 0
    %3868 = vmatprep.subr.bf16.mxu0 0
    %3869 = vmatpush1.bf16.msra.mxu0 0
    %3870 = vmatprep.subr.bf16.mxu0 0
    %3871 = vmatpush1.bf16.msra.mxu0 0
    %3872 = vmatprep.subr.bf16.mxu0 0
    %3873 = vmatpush1.bf16.msra.mxu0 0
    %3874 = vmatprep.subr.bf16.mxu0 0
    %3875 = vmatpush1.bf16.msra.mxu0 0
    %3876 = vmatprep.subr.bf16.mxu0 0
    %3877 = vmatpush1.bf16.msra.mxu0 0
    %3878 = vmatprep.mubr.bf16.mxu0 0
    %3879 = vmatmul.mubr.bf16.gmra.mrb[0].mxu0 %v3844
    %v3880 = vpop.f32.mrb[0].mxu0
    %v3881 = vadd.f32 %v172, %v3880
    %v3882 = vpop.f32.mrb[0].mxu0
    %v3883 = vpop.f32.mrb[0].mxu0
    %v3884 = vpop.f32.mrb[0].mxu0
    %3885 = vdwg.mxu0
    %v3886 = vmul.f32 %v3362, %v3881
    %v3887 = vadd.f32 %v3699, %v3886
    %v3888 = vmax.f32 %v3887, 0.0
    %v3889 = vpack.c.bf16 %v3888, %v3888
    %v3891 = vsel %vm259, %v3889, 0
    %3893 = vmatprep.subr.bf16.mxu0 0
    %3894 = vmatpush1.bf16.msra.mxu0 %v438
    %3895 = vmatprep.subr.bf16.mxu0 0
    %3896 = vmatpush1.bf16.msra.mxu0 %v439
    %3897 = vmatprep.subr.bf16.mxu0 0
    %3898 = vmatpush1.bf16.msra.mxu0 0
    %3899 = vmatprep.subr.bf16.mxu0 0
    %3900 = vmatpush1.bf16.msra.mxu0 0
    %3901 = vmatprep.subr.bf16.mxu0 0
    %3902 = vmatpush1.bf16.msra.mxu0 0
    %3903 = vmatprep.subr.bf16.mxu0 0
    %3904 = vmatpush1.bf16.msra.mxu0 0
    %3905 = vmatprep.subr.bf16.mxu0 0
    %3906 = vmatpush1.bf16.msra.mxu0 0
    %3907 = vmatprep.subr.bf16.mxu0 0
    %3908 = vmatpush1.bf16.msra.mxu0 0
    %3909 = vmatprep.subr.bf16.mxu0 0
    %3910 = vmatpush1.bf16.msra.mxu0 0
    %3911 = vmatprep.subr.bf16.mxu0 0
    %3912 = vmatpush1.bf16.msra.mxu0 0
    %3913 = vmatprep.subr.bf16.mxu0 0
    %3914 = vmatpush1.bf16.msra.mxu0 0
    %3915 = vmatprep.subr.bf16.mxu0 0
    %3916 = vmatpush1.bf16.msra.mxu0 0
    %3917 = vmatprep.subr.bf16.mxu0 0
    %3918 = vmatpush1.bf16.msra.mxu0 0
    %3919 = vmatprep.subr.bf16.mxu0 0
    %3920 = vmatpush1.bf16.msra.mxu0 0
    %3921 = vmatprep.subr.bf16.mxu0 0
    %3922 = vmatpush1.bf16.msra.mxu0 0
    %3923 = vmatprep.subr.bf16.mxu0 0
    %3924 = vmatpush1.bf16.msra.mxu0 0
    %3925 = vmatprep.mubr.bf16.mxu0 0
    %3926 = vmatmul.mubr.bf16.gmra.mrb[0].mxu0 %v3891
    %v3927 = vpop.f32.mrb[0].mxu0
    %v3928 = vadd.f32 %v158, %v3927
    %v3929 = vpop.f32.mrb[0].mxu0
    %v3930 = vpop.f32.mrb[0].mxu0
    %v3931 = vpop.f32.mrb[0].mxu0
    %3932 = vdwg.mxu0
    %v3933 = vmax.f32 %v3928, 0.0
    %v3934 = vpack.c.bf16 %v3933, %v3933
    %v3936 = vsel %vm259, %v3934, 0
    %3938 = vmatprep.subr.bf16.mxu0 0
    %3939 = vmatpush1.bf16.msra.mxu0 %v495
    %3940 = vmatprep.subr.bf16.mxu0 0
    %3941 = vmatpush1.bf16.msra.mxu0 %v496
    %3942 = vmatprep.subr.bf16.mxu0 0
    %3943 = vmatpush1.bf16.msra.mxu0 0
    %3944 = vmatprep.subr.bf16.mxu0 0
    %3945 = vmatpush1.bf16.msra.mxu0 0
    %3946 = vmatprep.subr.bf16.mxu0 0
    %3947 = vmatpush1.bf16.msra.mxu0 0
    %3948 = vmatprep.subr.bf16.mxu0 0
    %3949 = vmatpush1.bf16.msra.mxu0 0
    %3950 = vmatprep.subr.bf16.mxu0 0
    %3951 = vmatpush1.bf16.msra.mxu0 0
    %3952 = vmatprep.subr.bf16.mxu0 0
    %3953 = vmatpush1.bf16.msra.mxu0 0
    %3954 = vmatprep.subr.bf16.mxu0 0
    %3955 = vmatpush1.bf16.msra.mxu0 0
    %3956 = vmatprep.subr.bf16.mxu0 0
    %3957 = vmatpush1.bf16.msra.mxu0 0
    %3958 = vmatprep.subr.bf16.mxu0 0
    %3959 = vmatpush1.bf16.msra.mxu0 0
    %3960 = vmatprep.subr.bf16.mxu0 0
    %3961 = vmatpush1.bf16.msra.mxu0 0
    %3962 = vmatprep.subr.bf16.mxu0 0
    %3963 = vmatpush1.bf16.msra.mxu0 0
    %3964 = vmatprep.subr.bf16.mxu0 0
    %3965 = vmatpush1.bf16.msra.mxu0 0
    %3966 = vmatprep.subr.bf16.mxu0 0
    %3967 = vmatpush1.bf16.msra.mxu0 0
    %3968 = vmatprep.subr.bf16.mxu0 0
    %3969 = vmatpush1.bf16.msra.mxu0 0
    %3970 = vmatprep.mubr.bf16.mxu0 0
    %3971 = vmatmul.mubr.bf16.gmra.mrb[0].mxu0 %v3936
    %v3972 = vpop.f32.mrb[0].mxu0
    %v3973 = vadd.f32 %v172, %v3972
    %v3974 = vpop.f32.mrb[0].mxu0
    %v3975 = vpop.f32.mrb[0].mxu0
    %v3976 = vpop.f32.mrb[0].mxu0
    %3977 = vdwg.mxu0
    %v3978 = vmul.f32 %v3547, %v3973
    %v3979 = vadd.f32 %v3699, %v3978
    %v3980 = vmax.f32 %v3979, 0.0
    %v3981 = vpack.c.bf16 %v3980, %v3980
    %v3983 = vsel %vm259, %v3981, 0
    %3985 = vmatprep.subr.bf16.mxu0 0
    %3986 = vmatpush1.bf16.msra.mxu0 %v438
    %3987 = vmatprep.subr.bf16.mxu0 0
    %3988 = vmatpush1.bf16.msra.mxu0 %v439
    %3989 = vmatprep.subr.bf16.mxu0 0
    %3990 = vmatpush1.bf16.msra.mxu0 0
    %3991 = vmatprep.subr.bf16.mxu0 0
    %3992 = vmatpush1.bf16.msra.mxu0 0
    %3993 = vmatprep.subr.bf16.mxu0 0
    %3994 = vmatpush1.bf16.msra.mxu0 0
    %3995 = vmatprep.subr.bf16.mxu0 0
    %3996 = vmatpush1.bf16.msra.mxu0 0
    %3997 = vmatprep.subr.bf16.mxu0 0
    %3998 = vmatpush1.bf16.msra.mxu0 0
    %3999 = vmatprep.subr.bf16.mxu0 0
    %4000 = vmatpush1.bf16.msra.mxu0 0
    %4001 = vmatprep.subr.bf16.mxu0 0
    %4002 = vmatpush1.bf16.msra.mxu0 0
    %4003 = vmatprep.subr.bf16.mxu0 0
    %4004 = vmatpush1.bf16.msra.mxu0 0
    %4005 = vmatprep.subr.bf16.mxu0 0
    %4006 = vmatpush1.bf16.msra.mxu0 0
    %4007 = vmatprep.subr.bf16.mxu0 0
    %4008 = vmatpush1.bf16.msra.mxu0 0
    %4009 = vmatprep.subr.bf16.mxu0 0
    %4010 = vmatpush1.bf16.msra.mxu0 0
    %4011 = vmatprep.subr.bf16.mxu0 0
    %4012 = vmatpush1.bf16.msra.mxu0 0
    %4013 = vmatprep.subr.bf16.mxu0 0
    %4014 = vmatpush1.bf16.msra.mxu0 0
    %4015 = vmatprep.subr.bf16.mxu0 0
    %4016 = vmatpush1.bf16.msra.mxu0 0
    %4017 = vmatprep.mubr.bf16.mxu0 0
    %4018 = vmatmul.mubr.bf16.gmra.mrb[0].mxu0 %v3983
    %v4019 = vpop.f32.mrb[0].mxu0
    %v4020 = vadd.f32 %v158, %v4019
    %v4021 = vpop.f32.mrb[0].mxu0
    %v4022 = vpop.f32.mrb[0].mxu0
    %v4023 = vpop.f32.mrb[0].mxu0
    %4024 = vdwg.mxu0
    %v4025 = vmax.f32 %v4020, 0.0
    %v4026 = vadd.f32 %v3841, %v3933
    %v4027 = vmul.f32 %v4026, 2.0
    %v4028 = vadd.f32 %v3749, %v4027
    %v4029 = vadd.f32 %v4028, %v4025
    %v4030 = vpack.c.bf16 %v4029, %v4029
    %v4032 = vsel %vm259, %v4030, 0
    %4034 = vmatprep.subr.bf16.mxu0 0
    %4035 = vmatpush1.bf16.msra.mxu0 %v789
    %4036 = vmatprep.subr.bf16.mxu0 0
    %4037 = vmatpush1.bf16.msra.mxu0 %v790
    %4038 = vmatprep.subr.bf16.mxu0 0
    %4039 = vmatpush1.bf16.msra.mxu0 0
    %4040 = vmatprep.subr.bf16.mxu0 0
    %4041 = vmatpush1.bf16.msra.mxu0 0
    %4042 = vmatprep.subr.bf16.mxu0 0
    %4043 = vmatpush1.bf16.msra.mxu0 0
    %4044 = vmatprep.subr.bf16.mxu0 0
    %4045 = vmatpush1.bf16.msra.mxu0 0
    %4046 = vmatprep.subr.bf16.mxu0 0
    %4047 = vmatpush1.bf16.msra.mxu0 0
    %4048 = vmatprep.subr.bf16.mxu0 0
    %4049 = vmatpush1.bf16.msra.mxu0 0
    %4050 = vmatprep.subr.bf16.mxu0 0
    %4051 = vmatpush1.bf16.msra.mxu0 0
    %4052 = vmatprep.subr.bf16.mxu0 0
    %4053 = vmatpush1.bf16.msra.mxu0 0
    %4054 = vmatprep.subr.bf16.mxu0 0
    %4055 = vmatpush1.bf16.msra.mxu0 0
    %4056 = vmatprep.subr.bf16.mxu0 0
    %4057 = vmatpush1.bf16.msra.mxu0 0
    %4058 = vmatprep.subr.bf16.mxu0 0
    %4059 = vmatpush1.bf16.msra.mxu0 0
    %4060 = vmatprep.subr.bf16.mxu0 0
    %4061 = vmatpush1.bf16.msra.mxu0 0
    %4062 = vmatprep.subr.bf16.mxu0 0
    %4063 = vmatpush1.bf16.msra.mxu0 0
    %4064 = vmatprep.subr.bf16.mxu0 0
    %4065 = vmatpush1.bf16.msra.mxu0 0
    %4066 = vmatprep.mubr.bf16.mxu0 0
    %4067 = vmatmul.mubr.bf16.gmra.mrb[0].mxu0 %v4032
    %v4068 = vpop.f32.mrb[0].mxu0
    %v4069 = vadd.f32 0.0, %v4068
    %v4070 = vpop.f32.mrb[0].mxu0
    %v4071 = vpop.f32.mrb[0].mxu0
    %v4072 = vpop.f32.mrb[0].mxu0
    %4073 = vdwg.mxu0
    %v4074 = vmul.f32 %v3644, %v4069
    %4076 = vrot.lane.b32.xlu0 %v4074, 32
    %v4077 = vpop.permute.xlu0 %4076
    %v4079 = vadd.f32 %v3656, %v4077
    %v4080 = vadd.f32 %v4079, %v3654
    %v4081 = vld [vmem:[#allocation2 + $0x10] sm:$0xf]
    %v4082 = vsel %vm259, %v4081, %v4080
    %v4083 = vpack.c.bf16 %v4082, %v4082
    %v4085 = vsel %vm290, %v4083, 0
    %4087 = vmatprep.subr.bf16.mxu0 0
    %4088 = vmatpush1.bf16.msra.mxu0 %v282
    %4089 = vmatprep.subr.bf16.mxu0 0
    %4090 = vmatpush1.bf16.msra.mxu0 %v283
    %4091 = vmatprep.subr.bf16.mxu0 0
    %4092 = vmatpush1.bf16.msra.mxu0 %v284
    %4093 = vmatprep.subr.bf16.mxu0 0
    %4094 = vmatpush1.bf16.msra.mxu0 %v285
    %4095 = vmatprep.subr.bf16.mxu0 0
    %4096 = vmatpush1.bf16.msra.mxu0 0
    %4097 = vmatprep.subr.bf16.mxu0 0
    %4098 = vmatpush1.bf16.msra.mxu0 0
    %4099 = vmatprep.subr.bf16.mxu0 0
    %4100 = vmatpush1.bf16.msra.mxu0 0
    %4101 = vmatprep.subr.bf16.mxu0 0
    %4102 = vmatpush1.bf16.msra.mxu0 0
    %4103 = vmatprep.subr.bf16.mxu0 0
    %4104 = vmatpush1.bf16.msra.mxu0 0
    %4105 = vmatprep.subr.bf16.mxu0 0
    %4106 = vmatpush1.bf16.msra.mxu0 0
    %4107 = vmatprep.subr.bf16.mxu0 0
    %4108 = vmatpush1.bf16.msra.mxu0 0
    %4109 = vmatprep.subr.bf16.mxu0 0
    %4110 = vmatpush1.bf16.msra.mxu0 0
    %4111 = vmatprep.subr.bf16.mxu0 0
    %4112 = vmatpush1.bf16.msra.mxu0 0
    %4113 = vmatprep.subr.bf16.mxu0 0
    %4114 = vmatpush1.bf16.msra.mxu0 0
    %4115 = vmatprep.subr.bf16.mxu0 0
    %4116 = vmatpush1.bf16.msra.mxu0 0
    %4117 = vmatprep.subr.bf16.mxu0 0
    %4118 = vmatpush1.bf16.msra.mxu0 0
    %4119 = vmatprep.mubr.bf16.mxu0 0
    %4120 = vmatmul.mubr.bf16.gmra.mrb[0].mxu0 %v4085
    %v4121 = vpop.f32.mrb[0].mxu0
    %v4122 = vadd.f32 %v144, %v4121
    %v4123 = vpop.f32.mrb[0].mxu0
    %v4124 = vpop.f32.mrb[0].mxu0
    %v4125 = vpop.f32.mrb[0].mxu0
    %4126 = vdwg.mxu0
    %v4127 = vxor.u32 %v4122, 2147483648
    %v4128 = vmul.f32 %v4127, 1.442695
    %v4129 = vpow.pop %v4128
    %v4130 = vadd.f32 %v4129, 1.0
    %v4131 = vrcp.pop %v4130
    %v4132 = vmul.f32 1.0, %v4131
    %4134 = vrot.lane.b32.xlu0 %v4122, 32
    %v4135 = vpop.permute.xlu0 %4134
    %v4137 = vmul.f32 %v4132, %v4135
    %4139 = vrot.lane.b32.xlu0 %v4137, 64
    %v4140 = vpop.permute.xlu0 %4139
    %v4142 = vadd.f32 %v4122, %v4140
    %v4143 = vtanh.pop %v4142
    %v4144 = vsub.f32 1.0, %v4132
    %4146 = vrot.lane.b32.xlu0 %v4143, 96
    %v4147 = vpop.permute.xlu0 %4146
    %v4149 = vmul.f32 %v4144, %v4147
    %v4150 = vmul.f32 %v4132, %v4080
    %v4151 = vadd.f32 %v4149, %v4150
    %4153 = vrot.lane.b32.xlu0 %v4151, 96
    %v4154 = vpop.permute.xlu0 %4153
    %4156 = vst.msk [vmem:[#allocation3 + $0x10] sm:$0xf] %vm363, %v4154
    %s4157 = sld [smem:[#allocation4 + $0x5]]
    %s4158 = smul.f32 %s4157, 0.5
    %s4159 = smul.f32 %s4158, 0.5
    %s4160 = smul.f32 %s4158, 0.16666667
    %v4161 = vpack.c.bf16 %v4151, %v4151
    %4163 = vrot.lane.b32.xlu0 %v4161, 96
    %v4164 = vpop.permute.xlu0 %4163
    %v4166 = vsel %vm259, %v4164, 0
    %4168 = vmatprep.subr.bf16.mxu0 0
    %4169 = vmatpush1.bf16.msra.mxu0 %v381
    %4170 = vmatprep.subr.bf16.mxu0 0
    %4171 = vmatpush1.bf16.msra.mxu0 %v382
    %4172 = vmatprep.subr.bf16.mxu0 0
    %4173 = vmatpush1.bf16.msra.mxu0 0
    %4174 = vmatprep.subr.bf16.mxu0 0
    %4175 = vmatpush1.bf16.msra.mxu0 0
    %4176 = vmatprep.subr.bf16.mxu0 0
    %4177 = vmatpush1.bf16.msra.mxu0 0
    %4178 = vmatprep.subr.bf16.mxu0 0
    %4179 = vmatpush1.bf16.msra.mxu0 0
    %4180 = vmatprep.subr.bf16.mxu0 0
    %4181 = vmatpush1.bf16.msra.mxu0 0
    %4182 = vmatprep.subr.bf16.mxu0 0
    %4183 = vmatpush1.bf16.msra.mxu0 0
    %4184 = vmatprep.subr.bf16.mxu0 0
    %4185 = vmatpush1.bf16.msra.mxu0 0
    %4186 = vmatprep.subr.bf16.mxu0 0
    %4187 = vmatpush1.bf16.msra.mxu0 0
    %4188 = vmatprep.subr.bf16.mxu0 0
    %4189 = vmatpush1.bf16.msra.mxu0 0
    %4190 = vmatprep.subr.bf16.mxu0 0
    %4191 = vmatpush1.bf16.msra.mxu0 0
    %4192 = vmatprep.subr.bf16.mxu0 0
    %4193 = vmatpush1.bf16.msra.mxu0 0
    %4194 = vmatprep.subr.bf16.mxu0 0
    %4195 = vmatpush1.bf16.msra.mxu0 0
    %4196 = vmatprep.subr.bf16.mxu0 0
    %4197 = vmatpush1.bf16.msra.mxu0 0
    %4198 = vmatprep.subr.bf16.mxu0 0
    %4199 = vmatpush1.bf16.msra.mxu0 0
    %4200 = vmatprep.mubr.bf16.mxu0 0
    %4201 = vmatmul.mubr.bf16.gmra.mrb[0].mxu0 %v4166
    %v4202 = vpop.f32.mrb[0].mxu0
    %v4203 = vadd.f32 %v151, %v4202
    %v4204 = vpop.f32.mrb[0].mxu0
    %v4205 = vpop.f32.mrb[0].mxu0
    %v4206 = vpop.f32.mrb[0].mxu0
    %4207 = vdwg.mxu0
    %v4208 = vmax.f32 %v4203, 0.0
    %v4209 = vpack.c.bf16 %v4208, %v4208
    %v4211 = vsel %vm259, %v4209, 0
    %4213 = vmatprep.subr.bf16.mxu0 0
    %4214 = vmatpush1.bf16.msra.mxu0 %v438
    %4215 = vmatprep.subr.bf16.mxu0 0
    %4216 = vmatpush1.bf16.msra.mxu0 %v439
    %4217 = vmatprep.subr.bf16.mxu0 0
    %4218 = vmatpush1.bf16.msra.mxu0 0
    %4219 = vmatprep.subr.bf16.mxu0 0
    %4220 = vmatpush1.bf16.msra.mxu0 0
    %4221 = vmatprep.subr.bf16.mxu0 0
    %4222 = vmatpush1.bf16.msra.mxu0 0
    %4223 = vmatprep.subr.bf16.mxu0 0
    %4224 = vmatpush1.bf16.msra.mxu0 0
    %4225 = vmatprep.subr.bf16.mxu0 0
    %4226 = vmatpush1.bf16.msra.mxu0 0
    %4227 = vmatprep.subr.bf16.mxu0 0
    %4228 = vmatpush1.bf16.msra.mxu0 0
    %4229 = vmatprep.subr.bf16.mxu0 0
    %4230 = vmatpush1.bf16.msra.mxu0 0
    %4231 = vmatprep.subr.bf16.mxu0 0
    %4232 = vmatpush1.bf16.msra.mxu0 0
    %4233 = vmatprep.subr.bf16.mxu0 0
    %4234 = vmatpush1.bf16.msra.mxu0 0
    %4235 = vmatprep.subr.bf16.mxu0 0
    %4236 = vmatpush1.bf16.msra.mxu0 0
    %4237 = vmatprep.subr.bf16.mxu0 0
    %4238 = vmatpush1.bf16.msra.mxu0 0
    %4239 = vmatprep.subr.bf16.mxu0 0
    %4240 = vmatpush1.bf16.msra.mxu0 0
    %4241 = vmatprep.subr.bf16.mxu0 0
    %4242 = vmatpush1.bf16.msra.mxu0 0
    %4243 = vmatprep.subr.bf16.mxu0 0
    %4244 = vmatpush1.bf16.msra.mxu0 0
    %4245 = vmatprep.mubr.bf16.mxu0 0
    %4246 = vmatmul.mubr.bf16.gmra.mrb[0].mxu0 %v4211
    %v4247 = vpop.f32.mrb[0].mxu0
    %v4248 = vadd.f32 %v158, %v4247
    %v4249 = vpop.f32.mrb[0].mxu0
    %v4250 = vpop.f32.mrb[0].mxu0
    %v4251 = vpop.f32.mrb[0].mxu0
    %4252 = vdwg.mxu0
    %v4253 = vmax.f32 %v4248, 0.0
    %v4254 = vpack.c.bf16 %v4253, %v4253
    %v4256 = vsel %vm259, %v4254, 0
    %4258 = vmatprep.subr.bf16.mxu0 0
    %4259 = vmatpush1.bf16.msra.mxu0 %v495
    %4260 = vmatprep.subr.bf16.mxu0 0
    %4261 = vmatpush1.bf16.msra.mxu0 %v496
    %4262 = vmatprep.subr.bf16.mxu0 0
    %4263 = vmatpush1.bf16.msra.mxu0 0
    %4264 = vmatprep.subr.bf16.mxu0 0
    %4265 = vmatpush1.bf16.msra.mxu0 0
    %4266 = vmatprep.subr.bf16.mxu0 0
    %4267 = vmatpush1.bf16.msra.mxu0 0
    %4268 = vmatprep.subr.bf16.mxu0 0
    %4269 = vmatpush1.bf16.msra.mxu0 0
    %4270 = vmatprep.subr.bf16.mxu0 0
    %4271 = vmatpush1.bf16.msra.mxu0 0
    %4272 = vmatprep.subr.bf16.mxu0 0
    %4273 = vmatpush1.bf16.msra.mxu0 0
    %4274 = vmatprep.subr.bf16.mxu0 0
    %4275 = vmatpush1.bf16.msra.mxu0 0
    %4276 = vmatprep.subr.bf16.mxu0 0
    %4277 = vmatpush1.bf16.msra.mxu0 0
    %4278 = vmatprep.subr.bf16.mxu0 0
    %4279 = vmatpush1.bf16.msra.mxu0 0
    %4280 = vmatprep.subr.bf16.mxu0 0
    %4281 = vmatpush1.bf16.msra.mxu0 0
    %4282 = vmatprep.subr.bf16.mxu0 0
    %4283 = vmatpush1.bf16.msra.mxu0 0
    %4284 = vmatprep.subr.bf16.mxu0 0
    %4285 = vmatpush1.bf16.msra.mxu0 0
    %4286 = vmatprep.subr.bf16.mxu0 0
    %4287 = vmatpush1.bf16.msra.mxu0 0
    %4288 = vmatprep.subr.bf16.mxu0 0
    %4289 = vmatpush1.bf16.msra.mxu0 0
    %4290 = vmatprep.mubr.bf16.mxu0 0
    %4291 = vmatmul.mubr.bf16.gmra.mrb[0].mxu0 %v4256
    %v4292 = vpop.f32.mrb[0].mxu0
    %v4293 = vadd.f32 %v172, %v4292
    %v4294 = vpop.f32.mrb[0].mxu0
    %v4295 = vpop.f32.mrb[0].mxu0
    %v4296 = vpop.f32.mrb[0].mxu0
    %4297 = vdwg.mxu0
    %v4298 = vstv %s4159
    %v4299 = vmul.f32 %v4298, %v4293
    %v4300 = vadd.f32 %v4203, %v4299
    %v4301 = vmax.f32 %v4300, 0.0
    %v4302 = vpack.c.bf16 %v4301, %v4301
    %v4304 = vsel %vm259, %v4302, 0
    %4306 = vmatprep.subr.bf16.mxu0 0
    %4307 = vmatpush1.bf16.msra.mxu0 %v438
    %4308 = vmatprep.subr.bf16.mxu0 0
    %4309 = vmatpush1.bf16.msra.mxu0 %v439
    %4310 = vmatprep.subr.bf16.mxu0 0
    %4311 = vmatpush1.bf16.msra.mxu0 0
    %4312 = vmatprep.subr.bf16.mxu0 0
    %4313 = vmatpush1.bf16.msra.mxu0 0
    %4314 = vmatprep.subr.bf16.mxu0 0
    %4315 = vmatpush1.bf16.msra.mxu0 0
    %4316 = vmatprep.subr.bf16.mxu0 0
    %4317 = vmatpush1.bf16.msra.mxu0 0
    %4318 = vmatprep.subr.bf16.mxu0 0
    %4319 = vmatpush1.bf16.msra.mxu0 0
    %4320 = vmatprep.subr.bf16.mxu0 0
    %4321 = vmatpush1.bf16.msra.mxu0 0
    %4322 = vmatprep.subr.bf16.mxu0 0
    %4323 = vmatpush1.bf16.msra.mxu0 0
    %4324 = vmatprep.subr.bf16.mxu0 0
    %4325 = vmatpush1.bf16.msra.mxu0 0
    %4326 = vmatprep.subr.bf16.mxu0 0
    %4327 = vmatpush1.bf16.msra.mxu0 0
    %4328 = vmatprep.subr.bf16.mxu0 0
    %4329 = vmatpush1.bf16.msra.mxu0 0
    %4330 = vmatprep.subr.bf16.mxu0 0
    %4331 = vmatpush1.bf16.msra.mxu0 0
    %4332 = vmatprep.subr.bf16.mxu0 0
    %4333 = vmatpush1.bf16.msra.mxu0 0
    %4334 = vmatprep.subr.bf16.mxu0 0
    %4335 = vmatpush1.bf16.msra.mxu0 0
    %4336 = vmatprep.subr.bf16.mxu0 0
    %4337 = vmatpush1.bf16.msra.mxu0 0
    %4338 = vmatprep.mubr.bf16.mxu0 0
    %4339 = vmatmul.mubr.bf16.gmra.mrb[0].mxu0 %v4304
    %v4340 = vpop.f32.mrb[0].mxu0
    %v4341 = vadd.f32 %v158, %v4340
    %v4342 = vpop.f32.mrb[0].mxu0
    %v4343 = vpop.f32.mrb[0].mxu0
    %v4344 = vpop.f32.mrb[0].mxu0
    %4345 = vdwg.mxu0
    %v4346 = vmax.f32 %v4341, 0.0
    %v4347 = vpack.c.bf16 %v4346, %v4346
    %v4349 = vsel %vm259, %v4347, 0
    %4351 = vmatprep.subr.bf16.mxu0 0
    %4352 = vmatpush1.bf16.msra.mxu0 %v495
    %4353 = vmatprep.subr.bf16.mxu0 0
    %4354 = vmatpush1.bf16.msra.mxu0 %v496
    %4355 = vmatprep.subr.bf16.mxu0 0
    %4356 = vmatpush1.bf16.msra.mxu0 0
    %4357 = vmatprep.subr.bf16.mxu0 0
    %4358 = vmatpush1.bf16.msra.mxu0 0
    %4359 = vmatprep.subr.bf16.mxu0 0
    %4360 = vmatpush1.bf16.msra.mxu0 0
    %4361 = vmatprep.subr.bf16.mxu0 0
    %4362 = vmatpush1.bf16.msra.mxu0 0
    %4363 = vmatprep.subr.bf16.mxu0 0
    %4364 = vmatpush1.bf16.msra.mxu0 0
    %4365 = vmatprep.subr.bf16.mxu0 0
    %4366 = vmatpush1.bf16.msra.mxu0 0
    %4367 = vmatprep.subr.bf16.mxu0 0
    %4368 = vmatpush1.bf16.msra.mxu0 0
    %4369 = vmatprep.subr.bf16.mxu0 0
    %4370 = vmatpush1.bf16.msra.mxu0 0
    %4371 = vmatprep.subr.bf16.mxu0 0
    %4372 = vmatpush1.bf16.msra.mxu0 0
    %4373 = vmatprep.subr.bf16.mxu0 0
    %4374 = vmatpush1.bf16.msra.mxu0 0
    %4375 = vmatprep.subr.bf16.mxu0 0
    %4376 = vmatpush1.bf16.msra.mxu0 0
    %4377 = vmatprep.subr.bf16.mxu0 0
    %4378 = vmatpush1.bf16.msra.mxu0 0
    %4379 = vmatprep.subr.bf16.mxu0 0
    %4380 = vmatpush1.bf16.msra.mxu0 0
    %4381 = vmatprep.subr.bf16.mxu0 0
    %4382 = vmatpush1.bf16.msra.mxu0 0
    %4383 = vmatprep.mubr.bf16.mxu0 0
    %4384 = vmatmul.mubr.bf16.gmra.mrb[0].mxu0 %v4349
    %v4385 = vpop.f32.mrb[0].mxu0
    %v4386 = vadd.f32 %v172, %v4385
    %v4387 = vpop.f32.mrb[0].mxu0
    %v4388 = vpop.f32.mrb[0].mxu0
    %v4389 = vpop.f32.mrb[0].mxu0
    %4390 = vdwg.mxu0
    %v4391 = vmul.f32 %v4298, %v4386
    %v4392 = vadd.f32 %v4203, %v4391
    %v4393 = vmax.f32 %v4392, 0.0
    %v4394 = vpack.c.bf16 %v4393, %v4393
    %v4396 = vsel %vm259, %v4394, 0
    %4398 = vmatprep.subr.bf16.mxu0 0
    %4399 = vmatpush1.bf16.msra.mxu0 %v438
    %4400 = vmatprep.subr.bf16.mxu0 0
    %4401 = vmatpush1.bf16.msra.mxu0 %v439
    %4402 = vmatprep.subr.bf16.mxu0 0
    %4403 = vmatpush1.bf16.msra.mxu0 0
    %4404 = vmatprep.subr.bf16.mxu0 0
    %4405 = vmatpush1.bf16.msra.mxu0 0
    %4406 = vmatprep.subr.bf16.mxu0 0
    %4407 = vmatpush1.bf16.msra.mxu0 0
    %4408 = vmatprep.subr.bf16.mxu0 0
    %4409 = vmatpush1.bf16.msra.mxu0 0
    %4410 = vmatprep.subr.bf16.mxu0 0
    %4411 = vmatpush1.bf16.msra.mxu0 0
    %4412 = vmatprep.subr.bf16.mxu0 0
    %4413 = vmatpush1.bf16.msra.mxu0 0
    %4414 = vmatprep.subr.bf16.mxu0 0
    %4415 = vmatpush1.bf16.msra.mxu0 0
    %4416 = vmatprep.subr.bf16.mxu0 0
    %4417 = vmatpush1.bf16.msra.mxu0 0
    %4418 = vmatprep.subr.bf16.mxu0 0
    %4419 = vmatpush1.bf16.msra.mxu0 0
    %4420 = vmatprep.subr.bf16.mxu0 0
    %4421 = vmatpush1.bf16.msra.mxu0 0
    %4422 = vmatprep.subr.bf16.mxu0 0
    %4423 = vmatpush1.bf16.msra.mxu0 0
    %4424 = vmatprep.subr.bf16.mxu0 0
    %4425 = vmatpush1.bf16.msra.mxu0 0
    %4426 = vmatprep.subr.bf16.mxu0 0
    %4427 = vmatpush1.bf16.msra.mxu0 0
    %4428 = vmatprep.subr.bf16.mxu0 0
    %4429 = vmatpush1.bf16.msra.mxu0 0
    %4430 = vmatprep.mubr.bf16.mxu0 0
    %4431 = vmatmul.mubr.bf16.gmra.mrb[0].mxu0 %v4396
    %v4432 = vpop.f32.mrb[0].mxu0
    %v4433 = vadd.f32 %v158, %v4432
    %v4434 = vpop.f32.mrb[0].mxu0
    %v4435 = vpop.f32.mrb[0].mxu0
    %v4436 = vpop.f32.mrb[0].mxu0
    %4437 = vdwg.mxu0
    %v4438 = vmax.f32 %v4433, 0.0
    %v4439 = vpack.c.bf16 %v4438, %v4438
    %v4441 = vsel %vm259, %v4439, 0
    %4443 = vmatprep.subr.bf16.mxu0 0
    %4444 = vmatpush1.bf16.msra.mxu0 %v495
    %4445 = vmatprep.subr.bf16.mxu0 0
    %4446 = vmatpush1.bf16.msra.mxu0 %v496
    %4447 = vmatprep.subr.bf16.mxu0 0
    %4448 = vmatpush1.bf16.msra.mxu0 0
    %4449 = vmatprep.subr.bf16.mxu0 0
    %4450 = vmatpush1.bf16.msra.mxu0 0
    %4451 = vmatprep.subr.bf16.mxu0 0
    %4452 = vmatpush1.bf16.msra.mxu0 0
    %4453 = vmatprep.subr.bf16.mxu0 0
    %4454 = vmatpush1.bf16.msra.mxu0 0
    %4455 = vmatprep.subr.bf16.mxu0 0
    %4456 = vmatpush1.bf16.msra.mxu0 0
    %4457 = vmatprep.subr.bf16.mxu0 0
    %4458 = vmatpush1.bf16.msra.mxu0 0
    %4459 = vmatprep.subr.bf16.mxu0 0
    %4460 = vmatpush1.bf16.msra.mxu0 0
    %4461 = vmatprep.subr.bf16.mxu0 0
    %4462 = vmatpush1.bf16.msra.mxu0 0
    %4463 = vmatprep.subr.bf16.mxu0 0
    %4464 = vmatpush1.bf16.msra.mxu0 0
    %4465 = vmatprep.subr.bf16.mxu0 0
    %4466 = vmatpush1.bf16.msra.mxu0 0
    %4467 = vmatprep.subr.bf16.mxu0 0
    %4468 = vmatpush1.bf16.msra.mxu0 0
    %4469 = vmatprep.subr.bf16.mxu0 0
    %4470 = vmatpush1.bf16.msra.mxu0 0
    %4471 = vmatprep.subr.bf16.mxu0 0
    %4472 = vmatpush1.bf16.msra.mxu0 0
    %4473 = vmatprep.subr.bf16.mxu0 0
    %4474 = vmatpush1.bf16.msra.mxu0 0
    %4475 = vmatprep.mubr.bf16.mxu0 0
    %4476 = vmatmul.mubr.bf16.gmra.mrb[0].mxu0 %v4441
    %v4477 = vpop.f32.mrb[0].mxu0
    %v4478 = vadd.f32 %v172, %v4477
    %v4479 = vpop.f32.mrb[0].mxu0
    %v4480 = vpop.f32.mrb[0].mxu0
    %v4481 = vpop.f32.mrb[0].mxu0
    %4482 = vdwg.mxu0
    %v4483 = vstv %s4158
    %v4484 = vmul.f32 %v4483, %v4478
    %v4485 = vadd.f32 %v4203, %v4484
    %v4486 = vmax.f32 %v4485, 0.0
    %v4487 = vpack.c.bf16 %v4486, %v4486
    %v4489 = vsel %vm259, %v4487, 0
    %4491 = vmatprep.subr.bf16.mxu0 0
    %4492 = vmatpush1.bf16.msra.mxu0 %v438
    %4493 = vmatprep.subr.bf16.mxu0 0
    %4494 = vmatpush1.bf16.msra.mxu0 %v439
    %4495 = vmatprep.subr.bf16.mxu0 0
    %4496 = vmatpush1.bf16.msra.mxu0 0
    %4497 = vmatprep.subr.bf16.mxu0 0
    %4498 = vmatpush1.bf16.msra.mxu0 0
    %4499 = vmatprep.subr.bf16.mxu0 0
    %4500 = vmatpush1.bf16.msra.mxu0 0
    %4501 = vmatprep.subr.bf16.mxu0 0
    %4502 = vmatpush1.bf16.msra.mxu0 0
    %4503 = vmatprep.subr.bf16.mxu0 0
    %4504 = vmatpush1.bf16.msra.mxu0 0
    %4505 = vmatprep.subr.bf16.mxu0 0
    %4506 = vmatpush1.bf16.msra.mxu0 0
    %4507 = vmatprep.subr.bf16.mxu0 0
    %4508 = vmatpush1.bf16.msra.mxu0 0
    %4509 = vmatprep.subr.bf16.mxu0 0
    %4510 = vmatpush1.bf16.msra.mxu0 0
    %4511 = vmatprep.subr.bf16.mxu0 0
    %4512 = vmatpush1.bf16.msra.mxu0 0
    %4513 = vmatprep.subr.bf16.mxu0 0
    %4514 = vmatpush1.bf16.msra.mxu0 0
    %4515 = vmatprep.subr.bf16.mxu0 0
    %4516 = vmatpush1.bf16.msra.mxu0 0
    %4517 = vmatprep.subr.bf16.mxu0 0
    %4518 = vmatpush1.bf16.msra.mxu0 0
    %4519 = vmatprep.subr.bf16.mxu0 0
    %4520 = vmatpush1.bf16.msra.mxu0 0
    %4521 = vmatprep.subr.bf16.mxu0 0
    %4522 = vmatpush1.bf16.msra.mxu0 0
    %4523 = vmatprep.mubr.bf16.mxu0 0
    %4524 = vmatmul.mubr.bf16.gmra.mrb[0].mxu0 %v4489
    %v4525 = vpop.f32.mrb[0].mxu0
    %v4526 = vadd.f32 %v158, %v4525
    %v4527 = vpop.f32.mrb[0].mxu0
    %v4528 = vpop.f32.mrb[0].mxu0
    %v4529 = vpop.f32.mrb[0].mxu0
    %4530 = vdwg.mxu0
    %v4531 = vmax.f32 %v4526, 0.0
    %v4532 = vadd.f32 %v4346, %v4438
    %v4533 = vmul.f32 %v4532, 2.0
    %v4534 = vadd.f32 %v4253, %v4533
    %v4535 = vadd.f32 %v4534, %v4531
    %v4536 = vpack.c.bf16 %v4535, %v4535
    %v4538 = vsel %vm259, %v4536, 0
    %4540 = vmatprep.subr.bf16.mxu0 0
    %4541 = vmatpush1.bf16.msra.mxu0 %v789
    %4542 = vmatprep.subr.bf16.mxu0 0
    %4543 = vmatpush1.bf16.msra.mxu0 %v790
    %4544 = vmatprep.subr.bf16.mxu0 0
    %4545 = vmatpush1.bf16.msra.mxu0 0
    %4546 = vmatprep.subr.bf16.mxu0 0
    %4547 = vmatpush1.bf16.msra.mxu0 0
    %4548 = vmatprep.subr.bf16.mxu0 0
    %4549 = vmatpush1.bf16.msra.mxu0 0
    %4550 = vmatprep.subr.bf16.mxu0 0
    %4551 = vmatpush1.bf16.msra.mxu0 0
    %4552 = vmatprep.subr.bf16.mxu0 0
    %4553 = vmatpush1.bf16.msra.mxu0 0
    %4554 = vmatprep.subr.bf16.mxu0 0
    %4555 = vmatpush1.bf16.msra.mxu0 0
    %4556 = vmatprep.subr.bf16.mxu0 0
    %4557 = vmatpush1.bf16.msra.mxu0 0
    %4558 = vmatprep.subr.bf16.mxu0 0
    %4559 = vmatpush1.bf16.msra.mxu0 0
    %4560 = vmatprep.subr.bf16.mxu0 0
    %4561 = vmatpush1.bf16.msra.mxu0 0
    %4562 = vmatprep.subr.bf16.mxu0 0
    %4563 = vmatpush1.bf16.msra.mxu0 0
    %4564 = vmatprep.subr.bf16.mxu0 0
    %4565 = vmatpush1.bf16.msra.mxu0 0
    %4566 = vmatprep.subr.bf16.mxu0 0
    %4567 = vmatpush1.bf16.msra.mxu0 0
    %4568 = vmatprep.subr.bf16.mxu0 0
    %4569 = vmatpush1.bf16.msra.mxu0 0
    %4570 = vmatprep.subr.bf16.mxu0 0
    %4571 = vmatpush1.bf16.msra.mxu0 0
    %4572 = vmatprep.mubr.bf16.mxu0 0
    %4573 = vmatmul.mubr.bf16.gmra.mrb[0].mxu0 %v4538
    %v4574 = vpop.f32.mrb[0].mxu0
    %v4575 = vadd.f32 0.0, %v4574
    %v4576 = vpop.f32.mrb[0].mxu0
    %v4577 = vpop.f32.mrb[0].mxu0
    %v4578 = vpop.f32.mrb[0].mxu0
    %4579 = vdwg.mxu0
    %v4580 = vstv %s4160
    %v4581 = vmul.f32 %v4580, %v4575
    %4583 = vrot.lane.b32.xlu0 %v4581, 32
    %v4584 = vpop.permute.xlu0 %4583
    %v4586 = vadd.f32 %v4151, %v4584
    %v4587 = vmul.f32 %v4483, %v165
    %4589 = vrot.lane.b32.xlu0 %v4587, 32
    %v4590 = vpop.permute.xlu0 %4589
    %v4592 = vadd.f32 %v4586, %v4590
    %v4593 = vpack.c.bf16 %v4592, %v4592
    %4595 = vrot.lane.b32.xlu0 %v4593, 96
    %v4596 = vpop.permute.xlu0 %4595
    %v4598 = vsel %vm259, %v4596, 0
    %4600 = vmatprep.subr.bf16.mxu0 0
    %4601 = vmatpush1.bf16.msra.mxu0 %v381
    %4602 = vmatprep.subr.bf16.mxu0 0
    %4603 = vmatpush1.bf16.msra.mxu0 %v382
    %4604 = vmatprep.subr.bf16.mxu0 0
    %4605 = vmatpush1.bf16.msra.mxu0 0
    %4606 = vmatprep.subr.bf16.mxu0 0
    %4607 = vmatpush1.bf16.msra.mxu0 0
    %4608 = vmatprep.subr.bf16.mxu0 0
    %4609 = vmatpush1.bf16.msra.mxu0 0
    %4610 = vmatprep.subr.bf16.mxu0 0
    %4611 = vmatpush1.bf16.msra.mxu0 0
    %4612 = vmatprep.subr.bf16.mxu0 0
    %4613 = vmatpush1.bf16.msra.mxu0 0
    %4614 = vmatprep.subr.bf16.mxu0 0
    %4615 = vmatpush1.bf16.msra.mxu0 0
    %4616 = vmatprep.subr.bf16.mxu0 0
    %4617 = vmatpush1.bf16.msra.mxu0 0
    %4618 = vmatprep.subr.bf16.mxu0 0
    %4619 = vmatpush1.bf16.msra.mxu0 0
    %4620 = vmatprep.subr.bf16.mxu0 0
    %4621 = vmatpush1.bf16.msra.mxu0 0
    %4622 = vmatprep.subr.bf16.mxu0 0
    %4623 = vmatpush1.bf16.msra.mxu0 0
    %4624 = vmatprep.subr.bf16.mxu0 0
    %4625 = vmatpush1.bf16.msra.mxu0 0
    %4626 = vmatprep.subr.bf16.mxu0 0
    %4627 = vmatpush1.bf16.msra.mxu0 0
    %4628 = vmatprep.subr.bf16.mxu0 0
    %4629 = vmatpush1.bf16.msra.mxu0 0
    %4630 = vmatprep.subr.bf16.mxu0 0
    %4631 = vmatpush1.bf16.msra.mxu0 0
    %4632 = vmatprep.mubr.bf16.mxu0 0
    %4633 = vmatmul.mubr.bf16.gmra.mrb[0].mxu0 %v4598
    %v4634 = vpop.f32.mrb[0].mxu0
    %v4635 = vadd.f32 %v151, %v4634
    %v4636 = vpop.f32.mrb[0].mxu0
    %v4637 = vpop.f32.mrb[0].mxu0
    %v4638 = vpop.f32.mrb[0].mxu0
    %4639 = vdwg.mxu0
    %v4640 = vmax.f32 %v4635, 0.0
    %v4641 = vpack.c.bf16 %v4640, %v4640
    %v4643 = vsel %vm259, %v4641, 0
    %4645 = vmatprep.subr.bf16.mxu0 0
    %4646 = vmatpush1.bf16.msra.mxu0 %v438
    %4647 = vmatprep.subr.bf16.mxu0 0
    %4648 = vmatpush1.bf16.msra.mxu0 %v439
    %4649 = vmatprep.subr.bf16.mxu0 0
    %4650 = vmatpush1.bf16.msra.mxu0 0
    %4651 = vmatprep.subr.bf16.mxu0 0
    %4652 = vmatpush1.bf16.msra.mxu0 0
    %4653 = vmatprep.subr.bf16.mxu0 0
    %4654 = vmatpush1.bf16.msra.mxu0 0
    %4655 = vmatprep.subr.bf16.mxu0 0
    %4656 = vmatpush1.bf16.msra.mxu0 0
    %4657 = vmatprep.subr.bf16.mxu0 0
    %4658 = vmatpush1.bf16.msra.mxu0 0
    %4659 = vmatprep.subr.bf16.mxu0 0
    %4660 = vmatpush1.bf16.msra.mxu0 0
    %4661 = vmatprep.subr.bf16.mxu0 0
    %4662 = vmatpush1.bf16.msra.mxu0 0
    %4663 = vmatprep.subr.bf16.mxu0 0
    %4664 = vmatpush1.bf16.msra.mxu0 0
    %4665 = vmatprep.subr.bf16.mxu0 0
    %4666 = vmatpush1.bf16.msra.mxu0 0
    %4667 = vmatprep.subr.bf16.mxu0 0
    %4668 = vmatpush1.bf16.msra.mxu0 0
    %4669 = vmatprep.subr.bf16.mxu0 0
    %4670 = vmatpush1.bf16.msra.mxu0 0
    %4671 = vmatprep.subr.bf16.mxu0 0
    %4672 = vmatpush1.bf16.msra.mxu0 0
    %4673 = vmatprep.subr.bf16.mxu0 0
    %4674 = vmatpush1.bf16.msra.mxu0 0
    %4675 = vmatprep.subr.bf16.mxu0 0
    %4676 = vmatpush1.bf16.msra.mxu0 0
    %4677 = vmatprep.mubr.bf16.mxu0 0
    %4678 = vmatmul.mubr.bf16.gmra.mrb[0].mxu0 %v4643
    %v4679 = vpop.f32.mrb[0].mxu0
    %v4680 = vadd.f32 %v158, %v4679
    %v4681 = vpop.f32.mrb[0].mxu0
    %v4682 = vpop.f32.mrb[0].mxu0
    %v4683 = vpop.f32.mrb[0].mxu0
    %4684 = vdwg.mxu0
    %v4685 = vmax.f32 %v4680, 0.0
    %v4686 = vpack.c.bf16 %v4685, %v4685
    %v4688 = vsel %vm259, %v4686, 0
    %4690 = vmatprep.subr.bf16.mxu0 0
    %4691 = vmatpush1.bf16.msra.mxu0 %v495
    %4692 = vmatprep.subr.bf16.mxu0 0
    %4693 = vmatpush1.bf16.msra.mxu0 %v496
    %4694 = vmatprep.subr.bf16.mxu0 0
    %4695 = vmatpush1.bf16.msra.mxu0 0
    %4696 = vmatprep.subr.bf16.mxu0 0
    %4697 = vmatpush1.bf16.msra.mxu0 0
    %4698 = vmatprep.subr.bf16.mxu0 0
    %4699 = vmatpush1.bf16.msra.mxu0 0
    %4700 = vmatprep.subr.bf16.mxu0 0
    %4701 = vmatpush1.bf16.msra.mxu0 0
    %4702 = vmatprep.subr.bf16.mxu0 0
    %4703 = vmatpush1.bf16.msra.mxu0 0
    %4704 = vmatprep.subr.bf16.mxu0 0
    %4705 = vmatpush1.bf16.msra.mxu0 0
    %4706 = vmatprep.subr.bf16.mxu0 0
    %4707 = vmatpush1.bf16.msra.mxu0 0
    %4708 = vmatprep.subr.bf16.mxu0 0
    %4709 = vmatpush1.bf16.msra.mxu0 0
    %4710 = vmatprep.subr.bf16.mxu0 0
    %4711 = vmatpush1.bf16.msra.mxu0 0
    %4712 = vmatprep.subr.bf16.mxu0 0
    %4713 = vmatpush1.bf16.msra.mxu0 0
    %4714 = vmatprep.subr.bf16.mxu0 0
    %4715 = vmatpush1.bf16.msra.mxu0 0
    %4716 = vmatprep.subr.bf16.mxu0 0
    %4717 = vmatpush1.bf16.msra.mxu0 0
    %4718 = vmatprep.subr.bf16.mxu0 0
    %4719 = vmatpush1.bf16.msra.mxu0 0
    %4720 = vmatprep.subr.bf16.mxu0 0
    %4721 = vmatpush1.bf16.msra.mxu0 0
    %4722 = vmatprep.mubr.bf16.mxu0 0
    %4723 = vmatmul.mubr.bf16.gmra.mrb[0].mxu0 %v4688
    %v4724 = vpop.f32.mrb[0].mxu0
    %v4725 = vadd.f32 %v172, %v4724
    %v4726 = vpop.f32.mrb[0].mxu0
    %v4727 = vpop.f32.mrb[0].mxu0
    %v4728 = vpop.f32.mrb[0].mxu0
    %4729 = vdwg.mxu0
    %v4730 = vmul.f32 %v4298, %v4725
    %v4731 = vadd.f32 %v4635, %v4730
    %v4732 = vmax.f32 %v4731, 0.0
    %v4733 = vpack.c.bf16 %v4732, %v4732
    %v4735 = vsel %vm259, %v4733, 0
    %4737 = vmatprep.subr.bf16.mxu0 0
    %4738 = vmatpush1.bf16.msra.mxu0 %v438
    %4739 = vmatprep.subr.bf16.mxu0 0
    %4740 = vmatpush1.bf16.msra.mxu0 %v439
    %4741 = vmatprep.subr.bf16.mxu0 0
    %4742 = vmatpush1.bf16.msra.mxu0 0
    %4743 = vmatprep.subr.bf16.mxu0 0
    %4744 = vmatpush1.bf16.msra.mxu0 0
    %4745 = vmatprep.subr.bf16.mxu0 0
    %4746 = vmatpush1.bf16.msra.mxu0 0
    %4747 = vmatprep.subr.bf16.mxu0 0
    %4748 = vmatpush1.bf16.msra.mxu0 0
    %4749 = vmatprep.subr.bf16.mxu0 0
    %4750 = vmatpush1.bf16.msra.mxu0 0
    %4751 = vmatprep.subr.bf16.mxu0 0
    %4752 = vmatpush1.bf16.msra.mxu0 0
    %4753 = vmatprep.subr.bf16.mxu0 0
    %4754 = vmatpush1.bf16.msra.mxu0 0
    %4755 = vmatprep.subr.bf16.mxu0 0
    %4756 = vmatpush1.bf16.msra.mxu0 0
    %4757 = vmatprep.subr.bf16.mxu0 0
    %4758 = vmatpush1.bf16.msra.mxu0 0
    %4759 = vmatprep.subr.bf16.mxu0 0
    %4760 = vmatpush1.bf16.msra.mxu0 0
    %4761 = vmatprep.subr.bf16.mxu0 0
    %4762 = vmatpush1.bf16.msra.mxu0 0
    %4763 = vmatprep.subr.bf16.mxu0 0
    %4764 = vmatpush1.bf16.msra.mxu0 0
    %4765 = vmatprep.subr.bf16.mxu0 0
    %4766 = vmatpush1.bf16.msra.mxu0 0
    %4767 = vmatprep.subr.bf16.mxu0 0
    %4768 = vmatpush1.bf16.msra.mxu0 0
    %4769 = vmatprep.mubr.bf16.mxu0 0
    %4770 = vmatmul.mubr.bf16.gmra.mrb[0].mxu0 %v4735
    %v4771 = vpop.f32.mrb[0].mxu0
    %v4772 = vadd.f32 %v158, %v4771
    %v4773 = vpop.f32.mrb[0].mxu0
    %v4774 = vpop.f32.mrb[0].mxu0
    %v4775 = vpop.f32.mrb[0].mxu0
    %4776 = vdwg.mxu0
    %v4777 = vmax.f32 %v4772, 0.0
    %v4778 = vpack.c.bf16 %v4777, %v4777
    %v4780 = vsel %vm259, %v4778, 0
    %4782 = vmatprep.subr.bf16.mxu0 0
    %4783 = vmatpush1.bf16.msra.mxu0 %v495
    %4784 = vmatprep.subr.bf16.mxu0 0
    %4785 = vmatpush1.bf16.msra.mxu0 %v496
    %4786 = vmatprep.subr.bf16.mxu0 0
    %4787 = vmatpush1.bf16.msra.mxu0 0
    %4788 = vmatprep.subr.bf16.mxu0 0
    %4789 = vmatpush1.bf16.msra.mxu0 0
    %4790 = vmatprep.subr.bf16.mxu0 0
    %4791 = vmatpush1.bf16.msra.mxu0 0
    %4792 = vmatprep.subr.bf16.mxu0 0
    %4793 = vmatpush1.bf16.msra.mxu0 0
    %4794 = vmatprep.subr.bf16.mxu0 0
    %4795 = vmatpush1.bf16.msra.mxu0 0
    %4796 = vmatprep.subr.bf16.mxu0 0
    %4797 = vmatpush1.bf16.msra.mxu0 0
    %4798 = vmatprep.subr.bf16.mxu0 0
    %4799 = vmatpush1.bf16.msra.mxu0 0
    %4800 = vmatprep.subr.bf16.mxu0 0
    %4801 = vmatpush1.bf16.msra.mxu0 0
    %4802 = vmatprep.subr.bf16.mxu0 0
    %4803 = vmatpush1.bf16.msra.mxu0 0
    %4804 = vmatprep.subr.bf16.mxu0 0
    %4805 = vmatpush1.bf16.msra.mxu0 0
    %4806 = vmatprep.subr.bf16.mxu0 0
    %4807 = vmatpush1.bf16.msra.mxu0 0
    %4808 = vmatprep.subr.bf16.mxu0 0
    %4809 = vmatpush1.bf16.msra.mxu0 0
    %4810 = vmatprep.subr.bf16.mxu0 0
    %4811 = vmatpush1.bf16.msra.mxu0 0
    %4812 = vmatprep.subr.bf16.mxu0 0
    %4813 = vmatpush1.bf16.msra.mxu0 0
    %4814 = vmatprep.mubr.bf16.mxu0 0
    %4815 = vmatmul.mubr.bf16.gmra.mrb[0].mxu0 %v4780
    %v4816 = vpop.f32.mrb[0].mxu0
    %v4817 = vadd.f32 %v172, %v4816
    %v4818 = vpop.f32.mrb[0].mxu0
    %v4819 = vpop.f32.mrb[0].mxu0
    %v4820 = vpop.f32.mrb[0].mxu0
    %4821 = vdwg.mxu0
    %v4822 = vmul.f32 %v4298, %v4817
    %v4823 = vadd.f32 %v4635, %v4822
    %v4824 = vmax.f32 %v4823, 0.0
    %v4825 = vpack.c.bf16 %v4824, %v4824
    %v4827 = vsel %vm259, %v4825, 0
    %4829 = vmatprep.subr.bf16.mxu0 0
    %4830 = vmatpush1.bf16.msra.mxu0 %v438
    %4831 = vmatprep.subr.bf16.mxu0 0
    %4832 = vmatpush1.bf16.msra.mxu0 %v439
    %4833 = vmatprep.subr.bf16.mxu0 0
    %4834 = vmatpush1.bf16.msra.mxu0 0
    %4835 = vmatprep.subr.bf16.mxu0 0
    %4836 = vmatpush1.bf16.msra.mxu0 0
    %4837 = vmatprep.subr.bf16.mxu0 0
    %4838 = vmatpush1.bf16.msra.mxu0 0
    %4839 = vmatprep.subr.bf16.mxu0 0
    %4840 = vmatpush1.bf16.msra.mxu0 0
    %4841 = vmatprep.subr.bf16.mxu0 0
    %4842 = vmatpush1.bf16.msra.mxu0 0
    %4843 = vmatprep.subr.bf16.mxu0 0
    %4844 = vmatpush1.bf16.msra.mxu0 0
    %4845 = vmatprep.subr.bf16.mxu0 0
    %4846 = vmatpush1.bf16.msra.mxu0 0
    %4847 = vmatprep.subr.bf16.mxu0 0
    %4848 = vmatpush1.bf16.msra.mxu0 0
    %4849 = vmatprep.subr.bf16.mxu0 0
    %4850 = vmatpush1.bf16.msra.mxu0 0
    %4851 = vmatprep.subr.bf16.mxu0 0
    %4852 = vmatpush1.bf16.msra.mxu0 0
    %4853 = vmatprep.subr.bf16.mxu0 0
    %4854 = vmatpush1.bf16.msra.mxu0 0
    %4855 = vmatprep.subr.bf16.mxu0 0
    %4856 = vmatpush1.bf16.msra.mxu0 0
    %4857 = vmatprep.subr.bf16.mxu0 0
    %4858 = vmatpush1.bf16.msra.mxu0 0
    %4859 = vmatprep.subr.bf16.mxu0 0
    %4860 = vmatpush1.bf16.msra.mxu0 0
    %4861 = vmatprep.mubr.bf16.mxu0 0
    %4862 = vmatmul.mubr.bf16.gmra.mrb[0].mxu0 %v4827
    %v4863 = vpop.f32.mrb[0].mxu0
    %v4864 = vadd.f32 %v158, %v4863
    %v4865 = vpop.f32.mrb[0].mxu0
    %v4866 = vpop.f32.mrb[0].mxu0
    %v4867 = vpop.f32.mrb[0].mxu0
    %4868 = vdwg.mxu0
    %v4869 = vmax.f32 %v4864, 0.0
    %v4870 = vpack.c.bf16 %v4869, %v4869
    %v4872 = vsel %vm259, %v4870, 0
    %4874 = vmatprep.subr.bf16.mxu0 0
    %4875 = vmatpush1.bf16.msra.mxu0 %v495
    %4876 = vmatprep.subr.bf16.mxu0 0
    %4877 = vmatpush1.bf16.msra.mxu0 %v496
    %4878 = vmatprep.subr.bf16.mxu0 0
    %4879 = vmatpush1.bf16.msra.mxu0 0
    %4880 = vmatprep.subr.bf16.mxu0 0
    %4881 = vmatpush1.bf16.msra.mxu0 0
    %4882 = vmatprep.subr.bf16.mxu0 0
    %4883 = vmatpush1.bf16.msra.mxu0 0
    %4884 = vmatprep.subr.bf16.mxu0 0
    %4885 = vmatpush1.bf16.msra.mxu0 0
    %4886 = vmatprep.subr.bf16.mxu0 0
    %4887 = vmatpush1.bf16.msra.mxu0 0
    %4888 = vmatprep.subr.bf16.mxu0 0
    %4889 = vmatpush1.bf16.msra.mxu0 0
    %4890 = vmatprep.subr.bf16.mxu0 0
    %4891 = vmatpush1.bf16.msra.mxu0 0
    %4892 = vmatprep.subr.bf16.mxu0 0
    %4893 = vmatpush1.bf16.msra.mxu0 0
    %4894 = vmatprep.subr.bf16.mxu0 0
    %4895 = vmatpush1.bf16.msra.mxu0 0
    %4896 = vmatprep.subr.bf16.mxu0 0
    %4897 = vmatpush1.bf16.msra.mxu0 0
    %4898 = vmatprep.subr.bf16.mxu0 0
    %4899 = vmatpush1.bf16.msra.mxu0 0
    %4900 = vmatprep.subr.bf16.mxu0 0
    %4901 = vmatpush1.bf16.msra.mxu0 0
    %4902 = vmatprep.subr.bf16.mxu0 0
    %4903 = vmatpush1.bf16.msra.mxu0 0
    %4904 = vmatprep.subr.bf16.mxu0 0
    %4905 = vmatpush1.bf16.msra.mxu0 0
    %4906 = vmatprep.mubr.bf16.mxu0 0
    %4907 = vmatmul.mubr.bf16.gmra.mrb[0].mxu0 %v4872
    %v4908 = vpop.f32.mrb[0].mxu0
    %v4909 = vadd.f32 %v172, %v4908
    %v4910 = vpop.f32.mrb[0].mxu0
    %v4911 = vpop.f32.mrb[0].mxu0
    %v4912 = vpop.f32.mrb[0].mxu0
    %4913 = vdwg.mxu0
    %v4914 = vmul.f32 %v4483, %v4909
    %v4915 = vadd.f32 %v4635, %v4914
    %v4916 = vmax.f32 %v4915, 0.0
    %v4917 = vpack.c.bf16 %v4916, %v4916
    %v4919 = vsel %vm259, %v4917, 0
    %4921 = vmatprep.subr.bf16.mxu0 0
    %4922 = vmatpush1.bf16.msra.mxu0 %v438
    %4923 = vmatprep.subr.bf16.mxu0 0
    %4924 = vmatpush1.bf16.msra.mxu0 %v439
    %4925 = vmatprep.subr.bf16.mxu0 0
    %4926 = vmatpush1.bf16.msra.mxu0 0
    %4927 = vmatprep.subr.bf16.mxu0 0
    %4928 = vmatpush1.bf16.msra.mxu0 0
    %4929 = vmatprep.subr.bf16.mxu0 0
    %4930 = vmatpush1.bf16.msra.mxu0 0
    %4931 = vmatprep.subr.bf16.mxu0 0
    %4932 = vmatpush1.bf16.msra.mxu0 0
    %4933 = vmatprep.subr.bf16.mxu0 0
    %4934 = vmatpush1.bf16.msra.mxu0 0
    %4935 = vmatprep.subr.bf16.mxu0 0
    %4936 = vmatpush1.bf16.msra.mxu0 0
    %4937 = vmatprep.subr.bf16.mxu0 0
    %4938 = vmatpush1.bf16.msra.mxu0 0
    %4939 = vmatprep.subr.bf16.mxu0 0
    %4940 = vmatpush1.bf16.msra.mxu0 0
    %4941 = vmatprep.subr.bf16.mxu0 0
    %4942 = vmatpush1.bf16.msra.mxu0 0
    %4943 = vmatprep.subr.bf16.mxu0 0
    %4944 = vmatpush1.bf16.msra.mxu0 0
    %4945 = vmatprep.subr.bf16.mxu0 0
    %4946 = vmatpush1.bf16.msra.mxu0 0
    %4947 = vmatprep.subr.bf16.mxu0 0
    %4948 = vmatpush1.bf16.msra.mxu0 0
    %4949 = vmatprep.subr.bf16.mxu0 0
    %4950 = vmatpush1.bf16.msra.mxu0 0
    %4951 = vmatprep.subr.bf16.mxu0 0
    %4952 = vmatpush1.bf16.msra.mxu0 0
    %4953 = vmatprep.mubr.bf16.mxu0 0
    %4954 = vmatmul.mubr.bf16.gmra.mrb[0].mxu0 %v4919
    %v4955 = vpop.f32.mrb[0].mxu0
    %v4956 = vadd.f32 %v158, %v4955
    %v4957 = vpop.f32.mrb[0].mxu0
    %v4958 = vpop.f32.mrb[0].mxu0
    %v4959 = vpop.f32.mrb[0].mxu0
    %4960 = vdwg.mxu0
    %v4961 = vmax.f32 %v4956, 0.0
    %v4962 = vadd.f32 %v4777, %v4869
    %v4963 = vmul.f32 %v4962, 2.0
    %v4964 = vadd.f32 %v4685, %v4963
    %v4965 = vadd.f32 %v4964, %v4961
    %v4966 = vpack.c.bf16 %v4965, %v4965
    %v4968 = vsel %vm259, %v4966, 0
    %4970 = vmatprep.subr.bf16.mxu0 0
    %4971 = vmatpush1.bf16.msra.mxu0 %v789
    %4972 = vmatprep.subr.bf16.mxu0 0
    %4973 = vmatpush1.bf16.msra.mxu0 %v790
    %4974 = vmatprep.subr.bf16.mxu0 0
    %4975 = vmatpush1.bf16.msra.mxu0 0
    %4976 = vmatprep.subr.bf16.mxu0 0
    %4977 = vmatpush1.bf16.msra.mxu0 0
    %4978 = vmatprep.subr.bf16.mxu0 0
    %4979 = vmatpush1.bf16.msra.mxu0 0
    %4980 = vmatprep.subr.bf16.mxu0 0
    %4981 = vmatpush1.bf16.msra.mxu0 0
    %4982 = vmatprep.subr.bf16.mxu0 0
    %4983 = vmatpush1.bf16.msra.mxu0 0
    %4984 = vmatprep.subr.bf16.mxu0 0
    %4985 = vmatpush1.bf16.msra.mxu0 0
    %4986 = vmatprep.subr.bf16.mxu0 0
    %4987 = vmatpush1.bf16.msra.mxu0 0
    %4988 = vmatprep.subr.bf16.mxu0 0
    %4989 = vmatpush1.bf16.msra.mxu0 0
    %4990 = vmatprep.subr.bf16.mxu0 0
    %4991 = vmatpush1.bf16.msra.mxu0 0
    %4992 = vmatprep.subr.bf16.mxu0 0
    %4993 = vmatpush1.bf16.msra.mxu0 0
    %4994 = vmatprep.subr.bf16.mxu0 0
    %4995 = vmatpush1.bf16.msra.mxu0 0
    %4996 = vmatprep.subr.bf16.mxu0 0
    %4997 = vmatpush1.bf16.msra.mxu0 0
    %4998 = vmatprep.subr.bf16.mxu0 0
    %4999 = vmatpush1.bf16.msra.mxu0 0
    %5000 = vmatprep.subr.bf16.mxu0 0
    %5001 = vmatpush1.bf16.msra.mxu0 0
    %5002 = vmatprep.mubr.bf16.mxu0 0
    %5003 = vmatmul.mubr.bf16.gmra.mrb[0].mxu0 %v4968
    %v5004 = vpop.f32.mrb[0].mxu0
    %v5005 = vadd.f32 0.0, %v5004
    %v5006 = vpop.f32.mrb[0].mxu0
    %v5007 = vpop.f32.mrb[0].mxu0
    %v5008 = vpop.f32.mrb[0].mxu0
    %5009 = vdwg.mxu0
    %v5010 = vmul.f32 %v4580, %v5005
    %5012 = vrot.lane.b32.xlu0 %v5010, 32
    %v5013 = vpop.permute.xlu0 %5012
    %v5015 = vadd.f32 %v4592, %v5013
    %v5016 = vadd.f32 %v5015, %v4590
    %v5017 = vld [vmem:[#allocation2 + $0x14] sm:$0xf]
    %v5018 = vsel %vm259, %v5017, %v5016
    %v5019 = vpack.c.bf16 %v5018, %v5018
    %v5021 = vsel %vm290, %v5019, 0
    %5023 = vmatprep.subr.bf16.mxu0 0
    %5024 = vmatpush1.bf16.msra.mxu0 %v282
    %5025 = vmatprep.subr.bf16.mxu0 0
    %5026 = vmatpush1.bf16.msra.mxu0 %v283
    %5027 = vmatprep.subr.bf16.mxu0 0
    %5028 = vmatpush1.bf16.msra.mxu0 %v284
    %5029 = vmatprep.subr.bf16.mxu0 0
    %5030 = vmatpush1.bf16.msra.mxu0 %v285
    %5031 = vmatprep.subr.bf16.mxu0 0
    %5032 = vmatpush1.bf16.msra.mxu0 0
    %5033 = vmatprep.subr.bf16.mxu0 0
    %5034 = vmatpush1.bf16.msra.mxu0 0
    %5035 = vmatprep.subr.bf16.mxu0 0
    %5036 = vmatpush1.bf16.msra.mxu0 0
    %5037 = vmatprep.subr.bf16.mxu0 0
    %5038 = vmatpush1.bf16.msra.mxu0 0
    %5039 = vmatprep.subr.bf16.mxu0 0
    %5040 = vmatpush1.bf16.msra.mxu0 0
    %5041 = vmatprep.subr.bf16.mxu0 0
    %5042 = vmatpush1.bf16.msra.mxu0 0
    %5043 = vmatprep.subr.bf16.mxu0 0
    %5044 = vmatpush1.bf16.msra.mxu0 0
    %5045 = vmatprep.subr.bf16.mxu0 0
    %5046 = vmatpush1.bf16.msra.mxu0 0
    %5047 = vmatprep.subr.bf16.mxu0 0
    %5048 = vmatpush1.bf16.msra.mxu0 0
    %5049 = vmatprep.subr.bf16.mxu0 0
    %5050 = vmatpush1.bf16.msra.mxu0 0
    %5051 = vmatprep.subr.bf16.mxu0 0
    %5052 = vmatpush1.bf16.msra.mxu0 0
    %5053 = vmatprep.subr.bf16.mxu0 0
    %5054 = vmatpush1.bf16.msra.mxu0 0
    %5055 = vmatprep.mubr.bf16.mxu0 0
    %5056 = vmatmul.mubr.bf16.gmra.mrb[0].mxu0 %v5021
    %v5057 = vpop.f32.mrb[0].mxu0
    %v5058 = vadd.f32 %v144, %v5057
    %v5059 = vpop.f32.mrb[0].mxu0
    %v5060 = vpop.f32.mrb[0].mxu0
    %v5061 = vpop.f32.mrb[0].mxu0
    %5062 = vdwg.mxu0
    %v5063 = vxor.u32 %v5058, 2147483648
    %v5064 = vmul.f32 %v5063, 1.442695
    %v5065 = vpow.pop %v5064
    %v5066 = vadd.f32 %v5065, 1.0
    %v5067 = vrcp.pop %v5066
    %v5068 = vmul.f32 1.0, %v5067
    %5070 = vrot.lane.b32.xlu0 %v5058, 32
    %v5071 = vpop.permute.xlu0 %5070
    %v5073 = vmul.f32 %v5068, %v5071
    %5075 = vrot.lane.b32.xlu0 %v5073, 64
    %v5076 = vpop.permute.xlu0 %5075
    %v5078 = vadd.f32 %v5058, %v5076
    %v5079 = vtanh.pop %v5078
    %v5080 = vsub.f32 1.0, %v5068
    %5082 = vrot.lane.b32.xlu0 %v5079, 96
    %v5083 = vpop.permute.xlu0 %5082
    %v5085 = vmul.f32 %v5080, %v5083
    %v5086 = vmul.f32 %v5068, %v5016
    %v5087 = vadd.f32 %v5085, %v5086
    %5089 = vrot.lane.b32.xlu0 %v5087, 96
    %v5090 = vpop.permute.xlu0 %5089
    %5092 = vst.msk [vmem:[#allocation3 + $0x14] sm:$0xf] %vm363, %v5090
    %5093 = vst.msk [vmem:[#allocation3 + $0x18] sm:$0xf] %vm363, %v5090
    %s5094 = sld [smem:[#allocation4 + $0x7]]
    %s5095 = smul.f32 %s5094, 0.5
    %s5096 = smul.f32 %s5095, 0.5
    %s5097 = smul.f32 %s5095, 0.16666667
    %v5098 = vpack.c.bf16 %v5087, %v5087
    %5100 = vrot.lane.b32.xlu0 %v5098, 96
    %v5101 = vpop.permute.xlu0 %5100
    %v5103 = vsel %vm259, %v5101, 0
    %5105 = vmatprep.subr.bf16.mxu0 0
    %5106 = vmatpush1.bf16.msra.mxu0 %v381
    %5107 = vmatprep.subr.bf16.mxu0 0
    %5108 = vmatpush1.bf16.msra.mxu0 %v382
    %5109 = vmatprep.subr.bf16.mxu0 0
    %5110 = vmatpush1.bf16.msra.mxu0 0
    %5111 = vmatprep.subr.bf16.mxu0 0
    %5112 = vmatpush1.bf16.msra.mxu0 0
    %5113 = vmatprep.subr.bf16.mxu0 0
    %5114 = vmatpush1.bf16.msra.mxu0 0
    %5115 = vmatprep.subr.bf16.mxu0 0
    %5116 = vmatpush1.bf16.msra.mxu0 0
    %5117 = vmatprep.subr.bf16.mxu0 0
    %5118 = vmatpush1.bf16.msra.mxu0 0
    %5119 = vmatprep.subr.bf16.mxu0 0
    %5120 = vmatpush1.bf16.msra.mxu0 0
    %5121 = vmatprep.subr.bf16.mxu0 0
    %5122 = vmatpush1.bf16.msra.mxu0 0
    %5123 = vmatprep.subr.bf16.mxu0 0
    %5124 = vmatpush1.bf16.msra.mxu0 0
    %5125 = vmatprep.subr.bf16.mxu0 0
    %5126 = vmatpush1.bf16.msra.mxu0 0
    %5127 = vmatprep.subr.bf16.mxu0 0
    %5128 = vmatpush1.bf16.msra.mxu0 0
    %5129 = vmatprep.subr.bf16.mxu0 0
    %5130 = vmatpush1.bf16.msra.mxu0 0
    %5131 = vmatprep.subr.bf16.mxu0 0
    %5132 = vmatpush1.bf16.msra.mxu0 0
    %5133 = vmatprep.subr.bf16.mxu0 0
    %5134 = vmatpush1.bf16.msra.mxu0 0
    %5135 = vmatprep.subr.bf16.mxu0 0
    %5136 = vmatpush1.bf16.msra.mxu0 0
    %5137 = vmatprep.mubr.bf16.mxu0 0
    %5138 = vmatmul.mubr.bf16.gmra.mrb[0].mxu0 %v5103
    %v5139 = vpop.f32.mrb[0].mxu0
    %v5140 = vadd.f32 %v151, %v5139
    %v5141 = vpop.f32.mrb[0].mxu0
    %v5142 = vpop.f32.mrb[0].mxu0
    %v5143 = vpop.f32.mrb[0].mxu0
    %5144 = vdwg.mxu0
    %v5145 = vmax.f32 %v5140, 0.0
    %v5146 = vpack.c.bf16 %v5145, %v5145
    %v5148 = vsel %vm259, %v5146, 0
    %5150 = vmatprep.subr.bf16.mxu0 0
    %5151 = vmatpush1.bf16.msra.mxu0 %v438
    %5152 = vmatprep.subr.bf16.mxu0 0
    %5153 = vmatpush1.bf16.msra.mxu0 %v439
    %5154 = vmatprep.subr.bf16.mxu0 0
    %5155 = vmatpush1.bf16.msra.mxu0 0
    %5156 = vmatprep.subr.bf16.mxu0 0
    %5157 = vmatpush1.bf16.msra.mxu0 0
    %5158 = vmatprep.subr.bf16.mxu0 0
    %5159 = vmatpush1.bf16.msra.mxu0 0
    %5160 = vmatprep.subr.bf16.mxu0 0
    %5161 = vmatpush1.bf16.msra.mxu0 0
    %5162 = vmatprep.subr.bf16.mxu0 0
    %5163 = vmatpush1.bf16.msra.mxu0 0
    %5164 = vmatprep.subr.bf16.mxu0 0
    %5165 = vmatpush1.bf16.msra.mxu0 0
    %5166 = vmatprep.subr.bf16.mxu0 0
    %5167 = vmatpush1.bf16.msra.mxu0 0
    %5168 = vmatprep.subr.bf16.mxu0 0
    %5169 = vmatpush1.bf16.msra.mxu0 0
    %5170 = vmatprep.subr.bf16.mxu0 0
    %5171 = vmatpush1.bf16.msra.mxu0 0
    %5172 = vmatprep.subr.bf16.mxu0 0
    %5173 = vmatpush1.bf16.msra.mxu0 0
    %5174 = vmatprep.subr.bf16.mxu0 0
    %5175 = vmatpush1.bf16.msra.mxu0 0
    %5176 = vmatprep.subr.bf16.mxu0 0
    %5177 = vmatpush1.bf16.msra.mxu0 0
    %5178 = vmatprep.subr.bf16.mxu0 0
    %5179 = vmatpush1.bf16.msra.mxu0 0
    %5180 = vmatprep.subr.bf16.mxu0 0
    %5181 = vmatpush1.bf16.msra.mxu0 0
    %5182 = vmatprep.mubr.bf16.mxu0 0
    %5183 = vmatmul.mubr.bf16.gmra.mrb[0].mxu0 %v5148
    %v5184 = vpop.f32.mrb[0].mxu0
    %v5185 = vadd.f32 %v158, %v5184
    %v5186 = vpop.f32.mrb[0].mxu0
    %v5187 = vpop.f32.mrb[0].mxu0
    %v5188 = vpop.f32.mrb[0].mxu0
    %5189 = vdwg.mxu0
    %v5190 = vmax.f32 %v5185, 0.0
    %v5191 = vpack.c.bf16 %v5190, %v5190
    %v5193 = vsel %vm259, %v5191, 0
    %5195 = vmatprep.subr.bf16.mxu0 0
    %5196 = vmatpush1.bf16.msra.mxu0 %v495
    %5197 = vmatprep.subr.bf16.mxu0 0
    %5198 = vmatpush1.bf16.msra.mxu0 %v496
    %5199 = vmatprep.subr.bf16.mxu0 0
    %5200 = vmatpush1.bf16.msra.mxu0 0
    %5201 = vmatprep.subr.bf16.mxu0 0
    %5202 = vmatpush1.bf16.msra.mxu0 0
    %5203 = vmatprep.subr.bf16.mxu0 0
    %5204 = vmatpush1.bf16.msra.mxu0 0
    %5205 = vmatprep.subr.bf16.mxu0 0
    %5206 = vmatpush1.bf16.msra.mxu0 0
    %5207 = vmatprep.subr.bf16.mxu0 0
    %5208 = vmatpush1.bf16.msra.mxu0 0
    %5209 = vmatprep.subr.bf16.mxu0 0
    %5210 = vmatpush1.bf16.msra.mxu0 0
    %5211 = vmatprep.subr.bf16.mxu0 0
    %5212 = vmatpush1.bf16.msra.mxu0 0
    %5213 = vmatprep.subr.bf16.mxu0 0
    %5214 = vmatpush1.bf16.msra.mxu0 0
    %5215 = vmatprep.subr.bf16.mxu0 0
    %5216 = vmatpush1.bf16.msra.mxu0 0
    %5217 = vmatprep.subr.bf16.mxu0 0
    %5218 = vmatpush1.bf16.msra.mxu0 0
    %5219 = vmatprep.subr.bf16.mxu0 0
    %5220 = vmatpush1.bf16.msra.mxu0 0
    %5221 = vmatprep.subr.bf16.mxu0 0
    %5222 = vmatpush1.bf16.msra.mxu0 0
    %5223 = vmatprep.subr.bf16.mxu0 0
    %5224 = vmatpush1.bf16.msra.mxu0 0
    %5225 = vmatprep.subr.bf16.mxu0 0
    %5226 = vmatpush1.bf16.msra.mxu0 0
    %5227 = vmatprep.mubr.bf16.mxu0 0
    %5228 = vmatmul.mubr.bf16.gmra.mrb[0].mxu0 %v5193
    %v5229 = vpop.f32.mrb[0].mxu0
    %v5230 = vadd.f32 %v172, %v5229
    %v5231 = vpop.f32.mrb[0].mxu0
    %v5232 = vpop.f32.mrb[0].mxu0
    %v5233 = vpop.f32.mrb[0].mxu0
    %5234 = vdwg.mxu0
    %v5235 = vstv %s5096
    %v5236 = vmul.f32 %v5235, %v5230
    %v5237 = vadd.f32 %v5140, %v5236
    %v5238 = vmax.f32 %v5237, 0.0
    %v5239 = vpack.c.bf16 %v5238, %v5238
    %v5241 = vsel %vm259, %v5239, 0
    %5243 = vmatprep.subr.bf16.mxu0 0
    %5244 = vmatpush1.bf16.msra.mxu0 %v438
    %5245 = vmatprep.subr.bf16.mxu0 0
    %5246 = vmatpush1.bf16.msra.mxu0 %v439
    %5247 = vmatprep.subr.bf16.mxu0 0
    %5248 = vmatpush1.bf16.msra.mxu0 0
    %5249 = vmatprep.subr.bf16.mxu0 0
    %5250 = vmatpush1.bf16.msra.mxu0 0
    %5251 = vmatprep.subr.bf16.mxu0 0
    %5252 = vmatpush1.bf16.msra.mxu0 0
    %5253 = vmatprep.subr.bf16.mxu0 0
    %5254 = vmatpush1.bf16.msra.mxu0 0
    %5255 = vmatprep.subr.bf16.mxu0 0
    %5256 = vmatpush1.bf16.msra.mxu0 0
    %5257 = vmatprep.subr.bf16.mxu0 0
    %5258 = vmatpush1.bf16.msra.mxu0 0
    %5259 = vmatprep.subr.bf16.mxu0 0
    %5260 = vmatpush1.bf16.msra.mxu0 0
    %5261 = vmatprep.subr.bf16.mxu0 0
    %5262 = vmatpush1.bf16.msra.mxu0 0
    %5263 = vmatprep.subr.bf16.mxu0 0
    %5264 = vmatpush1.bf16.msra.mxu0 0
    %5265 = vmatprep.subr.bf16.mxu0 0
    %5266 = vmatpush1.bf16.msra.mxu0 0
    %5267 = vmatprep.subr.bf16.mxu0 0
    %5268 = vmatpush1.bf16.msra.mxu0 0
    %5269 = vmatprep.subr.bf16.mxu0 0
    %5270 = vmatpush1.bf16.msra.mxu0 0
    %5271 = vmatprep.subr.bf16.mxu0 0
    %5272 = vmatpush1.bf16.msra.mxu0 0
    %5273 = vmatprep.subr.bf16.mxu0 0
    %5274 = vmatpush1.bf16.msra.mxu0 0
    %5275 = vmatprep.mubr.bf16.mxu0 0
    %5276 = vmatmul.mubr.bf16.gmra.mrb[0].mxu0 %v5241
    %v5277 = vpop.f32.mrb[0].mxu0
    %v5278 = vadd.f32 %v158, %v5277
    %v5279 = vpop.f32.mrb[0].mxu0
    %v5280 = vpop.f32.mrb[0].mxu0
    %v5281 = vpop.f32.mrb[0].mxu0
    %5282 = vdwg.mxu0
    %v5283 = vmax.f32 %v5278, 0.0
    %v5284 = vpack.c.bf16 %v5283, %v5283
    %v5286 = vsel %vm259, %v5284, 0
    %5288 = vmatprep.subr.bf16.mxu0 0
    %5289 = vmatpush1.bf16.msra.mxu0 %v495
    %5290 = vmatprep.subr.bf16.mxu0 0
    %5291 = vmatpush1.bf16.msra.mxu0 %v496
    %5292 = vmatprep.subr.bf16.mxu0 0
    %5293 = vmatpush1.bf16.msra.mxu0 0
    %5294 = vmatprep.subr.bf16.mxu0 0
    %5295 = vmatpush1.bf16.msra.mxu0 0
    %5296 = vmatprep.subr.bf16.mxu0 0
    %5297 = vmatpush1.bf16.msra.mxu0 0
    %5298 = vmatprep.subr.bf16.mxu0 0
    %5299 = vmatpush1.bf16.msra.mxu0 0
    %5300 = vmatprep.subr.bf16.mxu0 0
    %5301 = vmatpush1.bf16.msra.mxu0 0
    %5302 = vmatprep.subr.bf16.mxu0 0
    %5303 = vmatpush1.bf16.msra.mxu0 0
    %5304 = vmatprep.subr.bf16.mxu0 0
    %5305 = vmatpush1.bf16.msra.mxu0 0
    %5306 = vmatprep.subr.bf16.mxu0 0
    %5307 = vmatpush1.bf16.msra.mxu0 0
    %5308 = vmatprep.subr.bf16.mxu0 0
    %5309 = vmatpush1.bf16.msra.mxu0 0
    %5310 = vmatprep.subr.bf16.mxu0 0
    %5311 = vmatpush1.bf16.msra.mxu0 0
    %5312 = vmatprep.subr.bf16.mxu0 0
    %5313 = vmatpush1.bf16.msra.mxu0 0
    %5314 = vmatprep.subr.bf16.mxu0 0
    %5315 = vmatpush1.bf16.msra.mxu0 0
    %5316 = vmatprep.subr.bf16.mxu0 0
    %5317 = vmatpush1.bf16.msra.mxu0 0
    %5318 = vmatprep.subr.bf16.mxu0 0
    %5319 = vmatpush1.bf16.msra.mxu0 0
    %5320 = vmatprep.mubr.bf16.mxu0 0
    %5321 = vmatmul.mubr.bf16.gmra.mrb[0].mxu0 %v5286
    %v5322 = vpop.f32.mrb[0].mxu0
    %v5323 = vadd.f32 %v172, %v5322
    %v5324 = vpop.f32.mrb[0].mxu0
    %v5325 = vpop.f32.mrb[0].mxu0
    %v5326 = vpop.f32.mrb[0].mxu0
    %5327 = vdwg.mxu0
    %v5328 = vmul.f32 %v5235, %v5323
    %v5329 = vadd.f32 %v5140, %v5328
    %v5330 = vmax.f32 %v5329, 0.0
    %v5331 = vpack.c.bf16 %v5330, %v5330
    %v5333 = vsel %vm259, %v5331, 0
    %5335 = vmatprep.subr.bf16.mxu0 0
    %5336 = vmatpush1.bf16.msra.mxu0 %v438
    %5337 = vmatprep.subr.bf16.mxu0 0
    %5338 = vmatpush1.bf16.msra.mxu0 %v439
    %5339 = vmatprep.subr.bf16.mxu0 0
    %5340 = vmatpush1.bf16.msra.mxu0 0
    %5341 = vmatprep.subr.bf16.mxu0 0
    %5342 = vmatpush1.bf16.msra.mxu0 0
    %5343 = vmatprep.subr.bf16.mxu0 0
    %5344 = vmatpush1.bf16.msra.mxu0 0
    %5345 = vmatprep.subr.bf16.mxu0 0
    %5346 = vmatpush1.bf16.msra.mxu0 0
    %5347 = vmatprep.subr.bf16.mxu0 0
    %5348 = vmatpush1.bf16.msra.mxu0 0
    %5349 = vmatprep.subr.bf16.mxu0 0
    %5350 = vmatpush1.bf16.msra.mxu0 0
    %5351 = vmatprep.subr.bf16.mxu0 0
    %5352 = vmatpush1.bf16.msra.mxu0 0
    %5353 = vmatprep.subr.bf16.mxu0 0
    %5354 = vmatpush1.bf16.msra.mxu0 0
    %5355 = vmatprep.subr.bf16.mxu0 0
    %5356 = vmatpush1.bf16.msra.mxu0 0
    %5357 = vmatprep.subr.bf16.mxu0 0
    %5358 = vmatpush1.bf16.msra.mxu0 0
    %5359 = vmatprep.subr.bf16.mxu0 0
    %5360 = vmatpush1.bf16.msra.mxu0 0
    %5361 = vmatprep.subr.bf16.mxu0 0
    %5362 = vmatpush1.bf16.msra.mxu0 0
    %5363 = vmatprep.subr.bf16.mxu0 0
    %5364 = vmatpush1.bf16.msra.mxu0 0
    %5365 = vmatprep.subr.bf16.mxu0 0
    %5366 = vmatpush1.bf16.msra.mxu0 0
    %5367 = vmatprep.mubr.bf16.mxu0 0
    %5368 = vmatmul.mubr.bf16.gmra.mrb[0].mxu0 %v5333
    %v5369 = vpop.f32.mrb[0].mxu0
    %v5370 = vadd.f32 %v158, %v5369
    %v5371 = vpop.f32.mrb[0].mxu0
    %v5372 = vpop.f32.mrb[0].mxu0
    %v5373 = vpop.f32.mrb[0].mxu0
    %5374 = vdwg.mxu0
    %v5375 = vmax.f32 %v5370, 0.0
    %v5376 = vpack.c.bf16 %v5375, %v5375
    %v5378 = vsel %vm259, %v5376, 0
    %5380 = vmatprep.subr.bf16.mxu0 0
    %5381 = vmatpush1.bf16.msra.mxu0 %v495
    %5382 = vmatprep.subr.bf16.mxu0 0
    %5383 = vmatpush1.bf16.msra.mxu0 %v496
    %5384 = vmatprep.subr.bf16.mxu0 0
    %5385 = vmatpush1.bf16.msra.mxu0 0
    %5386 = vmatprep.subr.bf16.mxu0 0
    %5387 = vmatpush1.bf16.msra.mxu0 0
    %5388 = vmatprep.subr.bf16.mxu0 0
    %5389 = vmatpush1.bf16.msra.mxu0 0
    %5390 = vmatprep.subr.bf16.mxu0 0
    %5391 = vmatpush1.bf16.msra.mxu0 0
    %5392 = vmatprep.subr.bf16.mxu0 0
    %5393 = vmatpush1.bf16.msra.mxu0 0
    %5394 = vmatprep.subr.bf16.mxu0 0
    %5395 = vmatpush1.bf16.msra.mxu0 0
    %5396 = vmatprep.subr.bf16.mxu0 0
    %5397 = vmatpush1.bf16.msra.mxu0 0
    %5398 = vmatprep.subr.bf16.mxu0 0
    %5399 = vmatpush1.bf16.msra.mxu0 0
    %5400 = vmatprep.subr.bf16.mxu0 0
    %5401 = vmatpush1.bf16.msra.mxu0 0
    %5402 = vmatprep.subr.bf16.mxu0 0
    %5403 = vmatpush1.bf16.msra.mxu0 0
    %5404 = vmatprep.subr.bf16.mxu0 0
    %5405 = vmatpush1.bf16.msra.mxu0 0
    %5406 = vmatprep.subr.bf16.mxu0 0
    %5407 = vmatpush1.bf16.msra.mxu0 0
    %5408 = vmatprep.subr.bf16.mxu0 0
    %5409 = vmatpush1.bf16.msra.mxu0 0
    %5410 = vmatprep.subr.bf16.mxu0 0
    %5411 = vmatpush1.bf16.msra.mxu0 0
    %5412 = vmatprep.mubr.bf16.mxu0 0
    %5413 = vmatmul.mubr.bf16.gmra.mrb[0].mxu0 %v5378
    %v5414 = vpop.f32.mrb[0].mxu0
    %v5415 = vadd.f32 %v172, %v5414
    %v5416 = vpop.f32.mrb[0].mxu0
    %v5417 = vpop.f32.mrb[0].mxu0
    %v5418 = vpop.f32.mrb[0].mxu0
    %5419 = vdwg.mxu0
    %v5420 = vstv %s5095
    %v5421 = vmul.f32 %v5420, %v5415
    %v5422 = vadd.f32 %v5140, %v5421
    %v5423 = vmax.f32 %v5422, 0.0
    %v5424 = vpack.c.bf16 %v5423, %v5423
    %v5426 = vsel %vm259, %v5424, 0
    %5428 = vmatprep.subr.bf16.mxu0 0
    %5429 = vmatpush1.bf16.msra.mxu0 %v438
    %5430 = vmatprep.subr.bf16.mxu0 0
    %5431 = vmatpush1.bf16.msra.mxu0 %v439
    %5432 = vmatprep.subr.bf16.mxu0 0
    %5433 = vmatpush1.bf16.msra.mxu0 0
    %5434 = vmatprep.subr.bf16.mxu0 0
    %5435 = vmatpush1.bf16.msra.mxu0 0
    %5436 = vmatprep.subr.bf16.mxu0 0
    %5437 = vmatpush1.bf16.msra.mxu0 0
    %5438 = vmatprep.subr.bf16.mxu0 0
    %5439 = vmatpush1.bf16.msra.mxu0 0
    %5440 = vmatprep.subr.bf16.mxu0 0
    %5441 = vmatpush1.bf16.msra.mxu0 0
    %5442 = vmatprep.subr.bf16.mxu0 0
    %5443 = vmatpush1.bf16.msra.mxu0 0
    %5444 = vmatprep.subr.bf16.mxu0 0
    %5445 = vmatpush1.bf16.msra.mxu0 0
    %5446 = vmatprep.subr.bf16.mxu0 0
    %5447 = vmatpush1.bf16.msra.mxu0 0
    %5448 = vmatprep.subr.bf16.mxu0 0
    %5449 = vmatpush1.bf16.msra.mxu0 0
    %5450 = vmatprep.subr.bf16.mxu0 0
    %5451 = vmatpush1.bf16.msra.mxu0 0
    %5452 = vmatprep.subr.bf16.mxu0 0
    %5453 = vmatpush1.bf16.msra.mxu0 0
    %5454 = vmatprep.subr.bf16.mxu0 0
    %5455 = vmatpush1.bf16.msra.mxu0 0
    %5456 = vmatprep.subr.bf16.mxu0 0
    %5457 = vmatpush1.bf16.msra.mxu0 0
    %5458 = vmatprep.subr.bf16.mxu0 0
    %5459 = vmatpush1.bf16.msra.mxu0 0
    %5460 = vmatprep.mubr.bf16.mxu0 0
    %5461 = vmatmul.mubr.bf16.gmra.mrb[0].mxu0 %v5426
    %v5462 = vpop.f32.mrb[0].mxu0
    %v5463 = vadd.f32 %v158, %v5462
    %v5464 = vpop.f32.mrb[0].mxu0
    %v5465 = vpop.f32.mrb[0].mxu0
    %v5466 = vpop.f32.mrb[0].mxu0
    %5467 = vdwg.mxu0
    %v5468 = vmax.f32 %v5463, 0.0
    %v5469 = vadd.f32 %v5283, %v5375
    %v5470 = vmul.f32 %v5469, 2.0
    %v5471 = vadd.f32 %v5190, %v5470
    %v5472 = vadd.f32 %v5471, %v5468
    %v5473 = vpack.c.bf16 %v5472, %v5472
    %v5475 = vsel %vm259, %v5473, 0
    %5477 = vmatprep.subr.bf16.mxu0 0
    %5478 = vmatpush1.bf16.msra.mxu0 %v789
    %5479 = vmatprep.subr.bf16.mxu0 0
    %5480 = vmatpush1.bf16.msra.mxu0 %v790
    %5481 = vmatprep.subr.bf16.mxu0 0
    %5482 = vmatpush1.bf16.msra.mxu0 0
    %5483 = vmatprep.subr.bf16.mxu0 0
    %5484 = vmatpush1.bf16.msra.mxu0 0
    %5485 = vmatprep.subr.bf16.mxu0 0
    %5486 = vmatpush1.bf16.msra.mxu0 0
    %5487 = vmatprep.subr.bf16.mxu0 0
    %5488 = vmatpush1.bf16.msra.mxu0 0
    %5489 = vmatprep.subr.bf16.mxu0 0
    %5490 = vmatpush1.bf16.msra.mxu0 0
    %5491 = vmatprep.subr.bf16.mxu0 0
    %5492 = vmatpush1.bf16.msra.mxu0 0
    %5493 = vmatprep.subr.bf16.mxu0 0
    %5494 = vmatpush1.bf16.msra.mxu0 0
    %5495 = vmatprep.subr.bf16.mxu0 0
    %5496 = vmatpush1.bf16.msra.mxu0 0
    %5497 = vmatprep.subr.bf16.mxu0 0
    %5498 = vmatpush1.bf16.msra.mxu0 0
    %5499 = vmatprep.subr.bf16.mxu0 0
    %5500 = vmatpush1.bf16.msra.mxu0 0
    %5501 = vmatprep.subr.bf16.mxu0 0
    %5502 = vmatpush1.bf16.msra.mxu0 0
    %5503 = vmatprep.subr.bf16.mxu0 0
    %5504 = vmatpush1.bf16.msra.mxu0 0
    %5505 = vmatprep.subr.bf16.mxu0 0
    %5506 = vmatpush1.bf16.msra.mxu0 0
    %5507 = vmatprep.subr.bf16.mxu0 0
    %5508 = vmatpush1.bf16.msra.mxu0 0
    %5509 = vmatprep.mubr.bf16.mxu0 0
    %5510 = vmatmul.mubr.bf16.gmra.mrb[0].mxu0 %v5475
    %v5511 = vpop.f32.mrb[0].mxu0
    %v5512 = vadd.f32 0.0, %v5511
    %v5513 = vpop.f32.mrb[0].mxu0
    %v5514 = vpop.f32.mrb[0].mxu0
    %v5515 = vpop.f32.mrb[0].mxu0
    %5516 = vdwg.mxu0
    %v5517 = vstv %s5097
    %v5518 = vmul.f32 %v5517, %v5512
    %5520 = vrot.lane.b32.xlu0 %v5518, 32
    %v5521 = vpop.permute.xlu0 %5520
    %v5523 = vadd.f32 %v5087, %v5521
    %v5524 = vmul.f32 %v5420, %v165
    %5526 = vrot.lane.b32.xlu0 %v5524, 32
    %v5527 = vpop.permute.xlu0 %5526
    %v5529 = vadd.f32 %v5523, %v5527
    %v5530 = vpack.c.bf16 %v5529, %v5529
    %5532 = vrot.lane.b32.xlu0 %v5530, 96
    %v5533 = vpop.permute.xlu0 %5532
    %v5535 = vsel %vm259, %v5533, 0
    %5537 = vmatprep.subr.bf16.mxu0 0
    %5538 = vmatpush1.bf16.msra.mxu0 %v381
    %5539 = vmatprep.subr.bf16.mxu0 0
    %5540 = vmatpush1.bf16.msra.mxu0 %v382
    %5541 = vmatprep.subr.bf16.mxu0 0
    %5542 = vmatpush1.bf16.msra.mxu0 0
    %5543 = vmatprep.subr.bf16.mxu0 0
    %5544 = vmatpush1.bf16.msra.mxu0 0
    %5545 = vmatprep.subr.bf16.mxu0 0
    %5546 = vmatpush1.bf16.msra.mxu0 0
    %5547 = vmatprep.subr.bf16.mxu0 0
    %5548 = vmatpush1.bf16.msra.mxu0 0
    %5549 = vmatprep.subr.bf16.mxu0 0
    %5550 = vmatpush1.bf16.msra.mxu0 0
    %5551 = vmatprep.subr.bf16.mxu0 0
    %5552 = vmatpush1.bf16.msra.mxu0 0
    %5553 = vmatprep.subr.bf16.mxu0 0
    %5554 = vmatpush1.bf16.msra.mxu0 0
    %5555 = vmatprep.subr.bf16.mxu0 0
    %5556 = vmatpush1.bf16.msra.mxu0 0
    %5557 = vmatprep.subr.bf16.mxu0 0
    %5558 = vmatpush1.bf16.msra.mxu0 0
    %5559 = vmatprep.subr.bf16.mxu0 0
    %5560 = vmatpush1.bf16.msra.mxu0 0
    %5561 = vmatprep.subr.bf16.mxu0 0
    %5562 = vmatpush1.bf16.msra.mxu0 0
    %5563 = vmatprep.subr.bf16.mxu0 0
    %5564 = vmatpush1.bf16.msra.mxu0 0
    %5565 = vmatprep.subr.bf16.mxu0 0
    %5566 = vmatpush1.bf16.msra.mxu0 0
    %5567 = vmatprep.subr.bf16.mxu0 0
    %5568 = vmatpush1.bf16.msra.mxu0 0
    %5569 = vmatprep.mubr.bf16.mxu0 0
    %5570 = vmatmul.mubr.bf16.gmra.mrb[0].mxu0 %v5535
    %v5571 = vpop.f32.mrb[0].mxu0
    %v5572 = vadd.f32 %v151, %v5571
    %v5573 = vpop.f32.mrb[0].mxu0
    %v5574 = vpop.f32.mrb[0].mxu0
    %v5575 = vpop.f32.mrb[0].mxu0
    %5576 = vdwg.mxu0
    %v5577 = vmax.f32 %v5572, 0.0
    %v5578 = vpack.c.bf16 %v5577, %v5577
    %v5580 = vsel %vm259, %v5578, 0
    %5582 = vmatprep.subr.bf16.mxu0 0
    %5583 = vmatpush1.bf16.msra.mxu0 %v438
    %5584 = vmatprep.subr.bf16.mxu0 0
    %5585 = vmatpush1.bf16.msra.mxu0 %v439
    %5586 = vmatprep.subr.bf16.mxu0 0
    %5587 = vmatpush1.bf16.msra.mxu0 0
    %5588 = vmatprep.subr.bf16.mxu0 0
    %5589 = vmatpush1.bf16.msra.mxu0 0
    %5590 = vmatprep.subr.bf16.mxu0 0
    %5591 = vmatpush1.bf16.msra.mxu0 0
    %5592 = vmatprep.subr.bf16.mxu0 0
    %5593 = vmatpush1.bf16.msra.mxu0 0
    %5594 = vmatprep.subr.bf16.mxu0 0
    %5595 = vmatpush1.bf16.msra.mxu0 0
    %5596 = vmatprep.subr.bf16.mxu0 0
    %5597 = vmatpush1.bf16.msra.mxu0 0
    %5598 = vmatprep.subr.bf16.mxu0 0
    %5599 = vmatpush1.bf16.msra.mxu0 0
    %5600 = vmatprep.subr.bf16.mxu0 0
    %5601 = vmatpush1.bf16.msra.mxu0 0
    %5602 = vmatprep.subr.bf16.mxu0 0
    %5603 = vmatpush1.bf16.msra.mxu0 0
    %5604 = vmatprep.subr.bf16.mxu0 0
    %5605 = vmatpush1.bf16.msra.mxu0 0
    %5606 = vmatprep.subr.bf16.mxu0 0
    %5607 = vmatpush1.bf16.msra.mxu0 0
    %5608 = vmatprep.subr.bf16.mxu0 0
    %5609 = vmatpush1.bf16.msra.mxu0 0
    %5610 = vmatprep.subr.bf16.mxu0 0
    %5611 = vmatpush1.bf16.msra.mxu0 0
    %5612 = vmatprep.subr.bf16.mxu0 0
    %5613 = vmatpush1.bf16.msra.mxu0 0
    %5614 = vmatprep.mubr.bf16.mxu0 0
    %5615 = vmatmul.mubr.bf16.gmra.mrb[0].mxu0 %v5580
    %v5616 = vpop.f32.mrb[0].mxu0
    %v5617 = vadd.f32 %v158, %v5616
    %v5618 = vpop.f32.mrb[0].mxu0
    %v5619 = vpop.f32.mrb[0].mxu0
    %v5620 = vpop.f32.mrb[0].mxu0
    %5621 = vdwg.mxu0
    %v5622 = vmax.f32 %v5617, 0.0
    %v5623 = vpack.c.bf16 %v5622, %v5622
    %v5625 = vsel %vm259, %v5623, 0
    %5627 = vmatprep.subr.bf16.mxu0 0
    %5628 = vmatpush1.bf16.msra.mxu0 %v495
    %5629 = vmatprep.subr.bf16.mxu0 0
    %5630 = vmatpush1.bf16.msra.mxu0 %v496
    %5631 = vmatprep.subr.bf16.mxu0 0
    %5632 = vmatpush1.bf16.msra.mxu0 0
    %5633 = vmatprep.subr.bf16.mxu0 0
    %5634 = vmatpush1.bf16.msra.mxu0 0
    %5635 = vmatprep.subr.bf16.mxu0 0
    %5636 = vmatpush1.bf16.msra.mxu0 0
    %5637 = vmatprep.subr.bf16.mxu0 0
    %5638 = vmatpush1.bf16.msra.mxu0 0
    %5639 = vmatprep.subr.bf16.mxu0 0
    %5640 = vmatpush1.bf16.msra.mxu0 0
    %5641 = vmatprep.subr.bf16.mxu0 0
    %5642 = vmatpush1.bf16.msra.mxu0 0
    %5643 = vmatprep.subr.bf16.mxu0 0
    %5644 = vmatpush1.bf16.msra.mxu0 0
    %5645 = vmatprep.subr.bf16.mxu0 0
    %5646 = vmatpush1.bf16.msra.mxu0 0
    %5647 = vmatprep.subr.bf16.mxu0 0
    %5648 = vmatpush1.bf16.msra.mxu0 0
    %5649 = vmatprep.subr.bf16.mxu0 0
    %5650 = vmatpush1.bf16.msra.mxu0 0
    %5651 = vmatprep.subr.bf16.mxu0 0
    %5652 = vmatpush1.bf16.msra.mxu0 0
    %5653 = vmatprep.subr.bf16.mxu0 0
    %5654 = vmatpush1.bf16.msra.mxu0 0
    %5655 = vmatprep.subr.bf16.mxu0 0
    %5656 = vmatpush1.bf16.msra.mxu0 0
    %5657 = vmatprep.subr.bf16.mxu0 0
    %5658 = vmatpush1.bf16.msra.mxu0 0
    %5659 = vmatprep.mubr.bf16.mxu0 0
    %5660 = vmatmul.mubr.bf16.gmra.mrb[0].mxu0 %v5625
    %v5661 = vpop.f32.mrb[0].mxu0
    %v5662 = vadd.f32 %v172, %v5661
    %v5663 = vpop.f32.mrb[0].mxu0
    %v5664 = vpop.f32.mrb[0].mxu0
    %v5665 = vpop.f32.mrb[0].mxu0
    %5666 = vdwg.mxu0
    %v5667 = vmul.f32 %v5235, %v5662
    %v5668 = vadd.f32 %v5572, %v5667
    %v5669 = vmax.f32 %v5668, 0.0
    %v5670 = vpack.c.bf16 %v5669, %v5669
    %v5672 = vsel %vm259, %v5670, 0
    %5674 = vmatprep.subr.bf16.mxu0 0
    %5675 = vmatpush1.bf16.msra.mxu0 %v438
    %5676 = vmatprep.subr.bf16.mxu0 0
    %5677 = vmatpush1.bf16.msra.mxu0 %v439
    %5678 = vmatprep.subr.bf16.mxu0 0
    %5679 = vmatpush1.bf16.msra.mxu0 0
    %5680 = vmatprep.subr.bf16.mxu0 0
    %5681 = vmatpush1.bf16.msra.mxu0 0
    %5682 = vmatprep.subr.bf16.mxu0 0
    %5683 = vmatpush1.bf16.msra.mxu0 0
    %5684 = vmatprep.subr.bf16.mxu0 0
    %5685 = vmatpush1.bf16.msra.mxu0 0
    %5686 = vmatprep.subr.bf16.mxu0 0
    %5687 = vmatpush1.bf16.msra.mxu0 0
    %5688 = vmatprep.subr.bf16.mxu0 0
    %5689 = vmatpush1.bf16.msra.mxu0 0
    %5690 = vmatprep.subr.bf16.mxu0 0
    %5691 = vmatpush1.bf16.msra.mxu0 0
    %5692 = vmatprep.subr.bf16.mxu0 0
    %5693 = vmatpush1.bf16.msra.mxu0 0
    %5694 = vmatprep.subr.bf16.mxu0 0
    %5695 = vmatpush1.bf16.msra.mxu0 0
    %5696 = vmatprep.subr.bf16.mxu0 0
    %5697 = vmatpush1.bf16.msra.mxu0 0
    %5698 = vmatprep.subr.bf16.mxu0 0
    %5699 = vmatpush1.bf16.msra.mxu0 0
    %5700 = vmatprep.subr.bf16.mxu0 0
    %5701 = vmatpush1.bf16.msra.mxu0 0
    %5702 = vmatprep.subr.bf16.mxu0 0
    %5703 = vmatpush1.bf16.msra.mxu0 0
    %5704 = vmatprep.subr.bf16.mxu0 0
    %5705 = vmatpush1.bf16.msra.mxu0 0
    %5706 = vmatprep.mubr.bf16.mxu0 0
    %5707 = vmatmul.mubr.bf16.gmra.mrb[0].mxu0 %v5672
    %v5708 = vpop.f32.mrb[0].mxu0
    %v5709 = vadd.f32 %v158, %v5708
    %v5710 = vpop.f32.mrb[0].mxu0
    %v5711 = vpop.f32.mrb[0].mxu0
    %v5712 = vpop.f32.mrb[0].mxu0
    %5713 = vdwg.mxu0
    %v5714 = vmax.f32 %v5709, 0.0
    %v5715 = vpack.c.bf16 %v5714, %v5714
    %v5717 = vsel %vm259, %v5715, 0
    %5719 = vmatprep.subr.bf16.mxu0 0
    %5720 = vmatpush1.bf16.msra.mxu0 %v495
    %5721 = vmatprep.subr.bf16.mxu0 0
    %5722 = vmatpush1.bf16.msra.mxu0 %v496
    %5723 = vmatprep.subr.bf16.mxu0 0
    %5724 = vmatpush1.bf16.msra.mxu0 0
    %5725 = vmatprep.subr.bf16.mxu0 0
    %5726 = vmatpush1.bf16.msra.mxu0 0
    %5727 = vmatprep.subr.bf16.mxu0 0
    %5728 = vmatpush1.bf16.msra.mxu0 0
    %5729 = vmatprep.subr.bf16.mxu0 0
    %5730 = vmatpush1.bf16.msra.mxu0 0
    %5731 = vmatprep.subr.bf16.mxu0 0
    %5732 = vmatpush1.bf16.msra.mxu0 0
    %5733 = vmatprep.subr.bf16.mxu0 0
    %5734 = vmatpush1.bf16.msra.mxu0 0
    %5735 = vmatprep.subr.bf16.mxu0 0
    %5736 = vmatpush1.bf16.msra.mxu0 0
    %5737 = vmatprep.subr.bf16.mxu0 0
    %5738 = vmatpush1.bf16.msra.mxu0 0
    %5739 = vmatprep.subr.bf16.mxu0 0
    %5740 = vmatpush1.bf16.msra.mxu0 0
    %5741 = vmatprep.subr.bf16.mxu0 0
    %5742 = vmatpush1.bf16.msra.mxu0 0
    %5743 = vmatprep.subr.bf16.mxu0 0
    %5744 = vmatpush1.bf16.msra.mxu0 0
    %5745 = vmatprep.subr.bf16.mxu0 0
    %5746 = vmatpush1.bf16.msra.mxu0 0
    %5747 = vmatprep.subr.bf16.mxu0 0
    %5748 = vmatpush1.bf16.msra.mxu0 0
    %5749 = vmatprep.subr.bf16.mxu0 0
    %5750 = vmatpush1.bf16.msra.mxu0 0
    %5751 = vmatprep.mubr.bf16.mxu0 0
    %5752 = vmatmul.mubr.bf16.gmra.mrb[0].mxu0 %v5717
    %v5753 = vpop.f32.mrb[0].mxu0
    %v5754 = vadd.f32 %v172, %v5753
    %v5755 = vpop.f32.mrb[0].mxu0
    %v5756 = vpop.f32.mrb[0].mxu0
    %v5757 = vpop.f32.mrb[0].mxu0
    %5758 = vdwg.mxu0
    %v5759 = vmul.f32 %v5235, %v5754
    %v5760 = vadd.f32 %v5572, %v5759
    %v5761 = vmax.f32 %v5760, 0.0
    %v5762 = vpack.c.bf16 %v5761, %v5761
    %v5764 = vsel %vm259, %v5762, 0
    %5766 = vmatprep.subr.bf16.mxu0 0
    %5767 = vmatpush1.bf16.msra.mxu0 %v438
    %5768 = vmatprep.subr.bf16.mxu0 0
    %5769 = vmatpush1.bf16.msra.mxu0 %v439
    %5770 = vmatprep.subr.bf16.mxu0 0
    %5771 = vmatpush1.bf16.msra.mxu0 0
    %5772 = vmatprep.subr.bf16.mxu0 0
    %5773 = vmatpush1.bf16.msra.mxu0 0
    %5774 = vmatprep.subr.bf16.mxu0 0
    %5775 = vmatpush1.bf16.msra.mxu0 0
    %5776 = vmatprep.subr.bf16.mxu0 0
    %5777 = vmatpush1.bf16.msra.mxu0 0
    %5778 = vmatprep.subr.bf16.mxu0 0
    %5779 = vmatpush1.bf16.msra.mxu0 0
    %5780 = vmatprep.subr.bf16.mxu0 0
    %5781 = vmatpush1.bf16.msra.mxu0 0
    %5782 = vmatprep.subr.bf16.mxu0 0
    %5783 = vmatpush1.bf16.msra.mxu0 0
    %5784 = vmatprep.subr.bf16.mxu0 0
    %5785 = vmatpush1.bf16.msra.mxu0 0
    %5786 = vmatprep.subr.bf16.mxu0 0
    %5787 = vmatpush1.bf16.msra.mxu0 0
    %5788 = vmatprep.subr.bf16.mxu0 0
    %5789 = vmatpush1.bf16.msra.mxu0 0
    %5790 = vmatprep.subr.bf16.mxu0 0
    %5791 = vmatpush1.bf16.msra.mxu0 0
    %5792 = vmatprep.subr.bf16.mxu0 0
    %5793 = vmatpush1.bf16.msra.mxu0 0
    %5794 = vmatprep.subr.bf16.mxu0 0
    %5795 = vmatpush1.bf16.msra.mxu0 0
    %5796 = vmatprep.subr.bf16.mxu0 0
    %5797 = vmatpush1.bf16.msra.mxu0 0
    %5798 = vmatprep.mubr.bf16.mxu0 0
    %5799 = vmatmul.mubr.bf16.gmra.mrb[0].mxu0 %v5764
    %v5800 = vpop.f32.mrb[0].mxu0
    %v5801 = vadd.f32 %v158, %v5800
    %v5802 = vpop.f32.mrb[0].mxu0
    %v5803 = vpop.f32.mrb[0].mxu0
    %v5804 = vpop.f32.mrb[0].mxu0
    %5805 = vdwg.mxu0
    %v5806 = vmax.f32 %v5801, 0.0
    %v5807 = vpack.c.bf16 %v5806, %v5806
    %v5809 = vsel %vm259, %v5807, 0
    %5811 = vmatprep.subr.bf16.mxu0 0
    %5812 = vmatpush1.bf16.msra.mxu0 %v495
    %5813 = vmatprep.subr.bf16.mxu0 0
    %5814 = vmatpush1.bf16.msra.mxu0 %v496
    %5815 = vmatprep.subr.bf16.mxu0 0
    %5816 = vmatpush1.bf16.msra.mxu0 0
    %5817 = vmatprep.subr.bf16.mxu0 0
    %5818 = vmatpush1.bf16.msra.mxu0 0
    %5819 = vmatprep.subr.bf16.mxu0 0
    %5820 = vmatpush1.bf16.msra.mxu0 0
    %5821 = vmatprep.subr.bf16.mxu0 0
    %5822 = vmatpush1.bf16.msra.mxu0 0
    %5823 = vmatprep.subr.bf16.mxu0 0
    %5824 = vmatpush1.bf16.msra.mxu0 0
    %5825 = vmatprep.subr.bf16.mxu0 0
    %5826 = vmatpush1.bf16.msra.mxu0 0
    %5827 = vmatprep.subr.bf16.mxu0 0
    %5828 = vmatpush1.bf16.msra.mxu0 0
    %5829 = vmatprep.subr.bf16.mxu0 0
    %5830 = vmatpush1.bf16.msra.mxu0 0
    %5831 = vmatprep.subr.bf16.mxu0 0
    %5832 = vmatpush1.bf16.msra.mxu0 0
    %5833 = vmatprep.subr.bf16.mxu0 0
    %5834 = vmatpush1.bf16.msra.mxu0 0
    %5835 = vmatprep.subr.bf16.mxu0 0
    %5836 = vmatpush1.bf16.msra.mxu0 0
    %5837 = vmatprep.subr.bf16.mxu0 0
    %5838 = vmatpush1.bf16.msra.mxu0 0
    %5839 = vmatprep.subr.bf16.mxu0 0
    %5840 = vmatpush1.bf16.msra.mxu0 0
    %5841 = vmatprep.subr.bf16.mxu0 0
    %5842 = vmatpush1.bf16.msra.mxu0 0
    %5843 = vmatprep.mubr.bf16.mxu0 0
    %5844 = vmatmul.mubr.bf16.gmra.mrb[0].mxu0 %v5809
    %v5845 = vpop.f32.mrb[0].mxu0
    %v5846 = vadd.f32 %v172, %v5845
    %v5847 = vpop.f32.mrb[0].mxu0
    %v5848 = vpop.f32.mrb[0].mxu0
    %v5849 = vpop.f32.mrb[0].mxu0
    %5850 = vdwg.mxu0
    %v5851 = vmul.f32 %v5420, %v5846
    %v5852 = vadd.f32 %v5572, %v5851
    %v5853 = vmax.f32 %v5852, 0.0
    %v5854 = vpack.c.bf16 %v5853, %v5853
    %v5856 = vsel %vm259, %v5854, 0
    %5858 = vmatprep.subr.bf16.mxu0 0
    %5859 = vmatpush1.bf16.msra.mxu0 %v438
    %5860 = vmatprep.subr.bf16.mxu0 0
    %5861 = vmatpush1.bf16.msra.mxu0 %v439
    %5862 = vmatprep.subr.bf16.mxu0 0
    %5863 = vmatpush1.bf16.msra.mxu0 0
    %5864 = vmatprep.subr.bf16.mxu0 0
    %5865 = vmatpush1.bf16.msra.mxu0 0
    %5866 = vmatprep.subr.bf16.mxu0 0
    %5867 = vmatpush1.bf16.msra.mxu0 0
    %5868 = vmatprep.subr.bf16.mxu0 0
    %5869 = vmatpush1.bf16.msra.mxu0 0
    %5870 = vmatprep.subr.bf16.mxu0 0
    %5871 = vmatpush1.bf16.msra.mxu0 0
    %5872 = vmatprep.subr.bf16.mxu0 0
    %5873 = vmatpush1.bf16.msra.mxu0 0
    %5874 = vmatprep.subr.bf16.mxu0 0
    %5875 = vmatpush1.bf16.msra.mxu0 0
    %5876 = vmatprep.subr.bf16.mxu0 0
    %5877 = vmatpush1.bf16.msra.mxu0 0
    %5878 = vmatprep.subr.bf16.mxu0 0
    %5879 = vmatpush1.bf16.msra.mxu0 0
    %5880 = vmatprep.subr.bf16.mxu0 0
    %5881 = vmatpush1.bf16.msra.mxu0 0
    %5882 = vmatprep.subr.bf16.mxu0 0
    %5883 = vmatpush1.bf16.msra.mxu0 0
    %5884 = vmatprep.subr.bf16.mxu0 0
    %5885 = vmatpush1.bf16.msra.mxu0 0
    %5886 = vmatprep.subr.bf16.mxu0 0
    %5887 = vmatpush1.bf16.msra.mxu0 0
    %5888 = vmatprep.subr.bf16.mxu0 0
    %5889 = vmatpush1.bf16.msra.mxu0 0
    %5890 = vmatprep.mubr.bf16.mxu0 0
    %5891 = vmatmul.mubr.bf16.gmra.mrb[0].mxu0 %v5856
    %v5892 = vpop.f32.mrb[0].mxu0
    %v5893 = vadd.f32 %v158, %v5892
    %v5894 = vpop.f32.mrb[0].mxu0
    %v5895 = vpop.f32.mrb[0].mxu0
    %v5896 = vpop.f32.mrb[0].mxu0
    %5897 = vdwg.mxu0
    %v5898 = vmax.f32 %v5893, 0.0
    %v5899 = vadd.f32 %v5714, %v5806
    %v5900 = vmul.f32 %v5899, 2.0
    %v5901 = vadd.f32 %v5622, %v5900
    %v5902 = vadd.f32 %v5901, %v5898
    %v5903 = vpack.c.bf16 %v5902, %v5902
    %v5905 = vsel %vm259, %v5903, 0
    %5907 = vmatprep.subr.bf16.mxu0 0
    %5908 = vmatpush1.bf16.msra.mxu0 %v789
    %5909 = vmatprep.subr.bf16.mxu0 0
    %5910 = vmatpush1.bf16.msra.mxu0 %v790
    %5911 = vmatprep.subr.bf16.mxu0 0
    %5912 = vmatpush1.bf16.msra.mxu0 0
    %5913 = vmatprep.subr.bf16.mxu0 0
    %5914 = vmatpush1.bf16.msra.mxu0 0
    %5915 = vmatprep.subr.bf16.mxu0 0
    %5916 = vmatpush1.bf16.msra.mxu0 0
    %5917 = vmatprep.subr.bf16.mxu0 0
    %5918 = vmatpush1.bf16.msra.mxu0 0
    %5919 = vmatprep.subr.bf16.mxu0 0
    %5920 = vmatpush1.bf16.msra.mxu0 0
    %5921 = vmatprep.subr.bf16.mxu0 0
    %5922 = vmatpush1.bf16.msra.mxu0 0
    %5923 = vmatprep.subr.bf16.mxu0 0
    %5924 = vmatpush1.bf16.msra.mxu0 0
    %5925 = vmatprep.subr.bf16.mxu0 0
    %5926 = vmatpush1.bf16.msra.mxu0 0
    %5927 = vmatprep.subr.bf16.mxu0 0
    %5928 = vmatpush1.bf16.msra.mxu0 0
    %5929 = vmatprep.subr.bf16.mxu0 0
    %5930 = vmatpush1.bf16.msra.mxu0 0
    %5931 = vmatprep.subr.bf16.mxu0 0
    %5932 = vmatpush1.bf16.msra.mxu0 0
    %5933 = vmatprep.subr.bf16.mxu0 0
    %5934 = vmatpush1.bf16.msra.mxu0 0
    %5935 = vmatprep.subr.bf16.mxu0 0
    %5936 = vmatpush1.bf16.msra.mxu0 0
    %5937 = vmatprep.subr.bf16.mxu0 0
    %5938 = vmatpush1.bf16.msra.mxu0 0
    %5939 = vmatprep.mubr.bf16.mxu0 0
    %5940 = vmatmul.mubr.bf16.gmra.mrb[0].mxu0 %v5905
    %v5941 = vpop.f32.mrb[0].mxu0
    %v5942 = vadd.f32 0.0, %v5941
    %v5943 = vpop.f32.mrb[0].mxu0
    %v5944 = vpop.f32.mrb[0].mxu0
    %v5945 = vpop.f32.mrb[0].mxu0
    %5946 = vdwg.mxu0
    %v5947 = vmul.f32 %v5517, %v5942
    %5949 = vrot.lane.b32.xlu0 %v5947, 32
    %v5950 = vpop.permute.xlu0 %5949
    %v5952 = vadd.f32 %v5529, %v5950
    %v5953 = vadd.f32 %v5952, %v5527
    %5955 = vrot.lane.b32.xlu0 %v5953, 96
    %v5956 = vpop.permute.xlu0 %5955
    %5958 = vst.msk [vmem:[#allocation3 + $0x1c] sm:$0xf] %vm363, %v5956
    %s5959 = sld [smem:[#allocation4 + $0x8]]
    %s5960 = smul.f32 %s5959, 0.5
    %s5961 = smul.f32 %s5960, 0.5
    %s5962 = smul.f32 %s5960, 0.16666667
    %v5963 = vpack.c.bf16 %v5953, %v5953
    %5965 = vrot.lane.b32.xlu0 %v5963, 96
    %v5966 = vpop.permute.xlu0 %5965
    %v5968 = vsel %vm259, %v5966, 0
    %5970 = vmatprep.subr.bf16.mxu0 0
    %5971 = vmatpush1.bf16.msra.mxu0 %v381
    %5972 = vmatprep.subr.bf16.mxu0 0
    %5973 = vmatpush1.bf16.msra.mxu0 %v382
    %5974 = vmatprep.subr.bf16.mxu0 0
    %5975 = vmatpush1.bf16.msra.mxu0 0
    %5976 = vmatprep.subr.bf16.mxu0 0
    %5977 = vmatpush1.bf16.msra.mxu0 0
    %5978 = vmatprep.subr.bf16.mxu0 0
    %5979 = vmatpush1.bf16.msra.mxu0 0
    %5980 = vmatprep.subr.bf16.mxu0 0
    %5981 = vmatpush1.bf16.msra.mxu0 0
    %5982 = vmatprep.subr.bf16.mxu0 0
    %5983 = vmatpush1.bf16.msra.mxu0 0
    %5984 = vmatprep.subr.bf16.mxu0 0
    %5985 = vmatpush1.bf16.msra.mxu0 0
    %5986 = vmatprep.subr.bf16.mxu0 0
    %5987 = vmatpush1.bf16.msra.mxu0 0
    %5988 = vmatprep.subr.bf16.mxu0 0
    %5989 = vmatpush1.bf16.msra.mxu0 0
    %5990 = vmatprep.subr.bf16.mxu0 0
    %5991 = vmatpush1.bf16.msra.mxu0 0
    %5992 = vmatprep.subr.bf16.mxu0 0
    %5993 = vmatpush1.bf16.msra.mxu0 0
    %5994 = vmatprep.subr.bf16.mxu0 0
    %5995 = vmatpush1.bf16.msra.mxu0 0
    %5996 = vmatprep.subr.bf16.mxu0 0
    %5997 = vmatpush1.bf16.msra.mxu0 0
    %5998 = vmatprep.subr.bf16.mxu0 0
    %5999 = vmatpush1.bf16.msra.mxu0 0
    %6000 = vmatprep.subr.bf16.mxu0 0
    %6001 = vmatpush1.bf16.msra.mxu0 0
    %6002 = vmatprep.mubr.bf16.mxu0 0
    %6003 = vmatmul.mubr.bf16.gmra.mrb[0].mxu0 %v5968
    %v6004 = vpop.f32.mrb[0].mxu0
    %v6005 = vadd.f32 %v151, %v6004
    %v6006 = vpop.f32.mrb[0].mxu0
    %v6007 = vpop.f32.mrb[0].mxu0
    %v6008 = vpop.f32.mrb[0].mxu0
    %6009 = vdwg.mxu0
    %v6010 = vmax.f32 %v6005, 0.0
    %v6011 = vpack.c.bf16 %v6010, %v6010
    %v6013 = vsel %vm259, %v6011, 0
    %6015 = vmatprep.subr.bf16.mxu0 0
    %6016 = vmatpush1.bf16.msra.mxu0 %v438
    %6017 = vmatprep.subr.bf16.mxu0 0
    %6018 = vmatpush1.bf16.msra.mxu0 %v439
    %6019 = vmatprep.subr.bf16.mxu0 0
    %6020 = vmatpush1.bf16.msra.mxu0 0
    %6021 = vmatprep.subr.bf16.mxu0 0
    %6022 = vmatpush1.bf16.msra.mxu0 0
    %6023 = vmatprep.subr.bf16.mxu0 0
    %6024 = vmatpush1.bf16.msra.mxu0 0
    %6025 = vmatprep.subr.bf16.mxu0 0
    %6026 = vmatpush1.bf16.msra.mxu0 0
    %6027 = vmatprep.subr.bf16.mxu0 0
    %6028 = vmatpush1.bf16.msra.mxu0 0
    %6029 = vmatprep.subr.bf16.mxu0 0
    %6030 = vmatpush1.bf16.msra.mxu0 0
    %6031 = vmatprep.subr.bf16.mxu0 0
    %6032 = vmatpush1.bf16.msra.mxu0 0
    %6033 = vmatprep.subr.bf16.mxu0 0
    %6034 = vmatpush1.bf16.msra.mxu0 0
    %6035 = vmatprep.subr.bf16.mxu0 0
    %6036 = vmatpush1.bf16.msra.mxu0 0
    %6037 = vmatprep.subr.bf16.mxu0 0
    %6038 = vmatpush1.bf16.msra.mxu0 0
    %6039 = vmatprep.subr.bf16.mxu0 0
    %6040 = vmatpush1.bf16.msra.mxu0 0
    %6041 = vmatprep.subr.bf16.mxu0 0
    %6042 = vmatpush1.bf16.msra.mxu0 0
    %6043 = vmatprep.subr.bf16.mxu0 0
    %6044 = vmatpush1.bf16.msra.mxu0 0
    %6045 = vmatprep.subr.bf16.mxu0 0
    %6046 = vmatpush1.bf16.msra.mxu0 0
    %6047 = vmatprep.mubr.bf16.mxu0 0
    %6048 = vmatmul.mubr.bf16.gmra.mrb[0].mxu0 %v6013
    %v6049 = vpop.f32.mrb[0].mxu0
    %v6050 = vadd.f32 %v158, %v6049
    %v6051 = vpop.f32.mrb[0].mxu0
    %v6052 = vpop.f32.mrb[0].mxu0
    %v6053 = vpop.f32.mrb[0].mxu0
    %6054 = vdwg.mxu0
    %v6055 = vmax.f32 %v6050, 0.0
    %v6056 = vpack.c.bf16 %v6055, %v6055
    %v6058 = vsel %vm259, %v6056, 0
    %6060 = vmatprep.subr.bf16.mxu0 0
    %6061 = vmatpush1.bf16.msra.mxu0 %v495
    %6062 = vmatprep.subr.bf16.mxu0 0
    %6063 = vmatpush1.bf16.msra.mxu0 %v496
    %6064 = vmatprep.subr.bf16.mxu0 0
    %6065 = vmatpush1.bf16.msra.mxu0 0
    %6066 = vmatprep.subr.bf16.mxu0 0
    %6067 = vmatpush1.bf16.msra.mxu0 0
    %6068 = vmatprep.subr.bf16.mxu0 0
    %6069 = vmatpush1.bf16.msra.mxu0 0
    %6070 = vmatprep.subr.bf16.mxu0 0
    %6071 = vmatpush1.bf16.msra.mxu0 0
    %6072 = vmatprep.subr.bf16.mxu0 0
    %6073 = vmatpush1.bf16.msra.mxu0 0
    %6074 = vmatprep.subr.bf16.mxu0 0
    %6075 = vmatpush1.bf16.msra.mxu0 0
    %6076 = vmatprep.subr.bf16.mxu0 0
    %6077 = vmatpush1.bf16.msra.mxu0 0
    %6078 = vmatprep.subr.bf16.mxu0 0
    %6079 = vmatpush1.bf16.msra.mxu0 0
    %6080 = vmatprep.subr.bf16.mxu0 0
    %6081 = vmatpush1.bf16.msra.mxu0 0
    %6082 = vmatprep.subr.bf16.mxu0 0
    %6083 = vmatpush1.bf16.msra.mxu0 0
    %6084 = vmatprep.subr.bf16.mxu0 0
    %6085 = vmatpush1.bf16.msra.mxu0 0
    %6086 = vmatprep.subr.bf16.mxu0 0
    %6087 = vmatpush1.bf16.msra.mxu0 0
    %6088 = vmatprep.subr.bf16.mxu0 0
    %6089 = vmatpush1.bf16.msra.mxu0 0
    %6090 = vmatprep.subr.bf16.mxu0 0
    %6091 = vmatpush1.bf16.msra.mxu0 0
    %6092 = vmatprep.mubr.bf16.mxu0 0
    %6093 = vmatmul.mubr.bf16.gmra.mrb[0].mxu0 %v6058
    %v6094 = vpop.f32.mrb[0].mxu0
    %v6095 = vadd.f32 %v172, %v6094
    %v6096 = vpop.f32.mrb[0].mxu0
    %v6097 = vpop.f32.mrb[0].mxu0
    %v6098 = vpop.f32.mrb[0].mxu0
    %6099 = vdwg.mxu0
    %v6100 = vstv %s5961
    %v6101 = vmul.f32 %v6100, %v6095
    %v6102 = vadd.f32 %v6005, %v6101
    %v6103 = vmax.f32 %v6102, 0.0
    %v6104 = vpack.c.bf16 %v6103, %v6103
    %v6106 = vsel %vm259, %v6104, 0
    %6108 = vmatprep.subr.bf16.mxu0 0
    %6109 = vmatpush1.bf16.msra.mxu0 %v438
    %6110 = vmatprep.subr.bf16.mxu0 0
    %6111 = vmatpush1.bf16.msra.mxu0 %v439
    %6112 = vmatprep.subr.bf16.mxu0 0
    %6113 = vmatpush1.bf16.msra.mxu0 0
    %6114 = vmatprep.subr.bf16.mxu0 0
    %6115 = vmatpush1.bf16.msra.mxu0 0
    %6116 = vmatprep.subr.bf16.mxu0 0
    %6117 = vmatpush1.bf16.msra.mxu0 0
    %6118 = vmatprep.subr.bf16.mxu0 0
    %6119 = vmatpush1.bf16.msra.mxu0 0
    %6120 = vmatprep.subr.bf16.mxu0 0
    %6121 = vmatpush1.bf16.msra.mxu0 0
    %6122 = vmatprep.subr.bf16.mxu0 0
    %6123 = vmatpush1.bf16.msra.mxu0 0
    %6124 = vmatprep.subr.bf16.mxu0 0
    %6125 = vmatpush1.bf16.msra.mxu0 0
    %6126 = vmatprep.subr.bf16.mxu0 0
    %6127 = vmatpush1.bf16.msra.mxu0 0
    %6128 = vmatprep.subr.bf16.mxu0 0
    %6129 = vmatpush1.bf16.msra.mxu0 0
    %6130 = vmatprep.subr.bf16.mxu0 0
    %6131 = vmatpush1.bf16.msra.mxu0 0
    %6132 = vmatprep.subr.bf16.mxu0 0
    %6133 = vmatpush1.bf16.msra.mxu0 0
    %6134 = vmatprep.subr.bf16.mxu0 0
    %6135 = vmatpush1.bf16.msra.mxu0 0
    %6136 = vmatprep.subr.bf16.mxu0 0
    %6137 = vmatpush1.bf16.msra.mxu0 0
    %6138 = vmatprep.subr.bf16.mxu0 0
    %6139 = vmatpush1.bf16.msra.mxu0 0
    %6140 = vmatprep.mubr.bf16.mxu0 0
    %6141 = vmatmul.mubr.bf16.gmra.mrb[0].mxu0 %v6106
    %v6142 = vpop.f32.mrb[0].mxu0
    %v6143 = vadd.f32 %v158, %v6142
    %v6144 = vpop.f32.mrb[0].mxu0
    %v6145 = vpop.f32.mrb[0].mxu0
    %v6146 = vpop.f32.mrb[0].mxu0
    %6147 = vdwg.mxu0
    %v6148 = vmax.f32 %v6143, 0.0
    %v6149 = vpack.c.bf16 %v6148, %v6148
    %v6151 = vsel %vm259, %v6149, 0
    %6153 = vmatprep.subr.bf16.mxu0 0
    %6154 = vmatpush1.bf16.msra.mxu0 %v495
    %6155 = vmatprep.subr.bf16.mxu0 0
    %6156 = vmatpush1.bf16.msra.mxu0 %v496
    %6157 = vmatprep.subr.bf16.mxu0 0
    %6158 = vmatpush1.bf16.msra.mxu0 0
    %6159 = vmatprep.subr.bf16.mxu0 0
    %6160 = vmatpush1.bf16.msra.mxu0 0
    %6161 = vmatprep.subr.bf16.mxu0 0
    %6162 = vmatpush1.bf16.msra.mxu0 0
    %6163 = vmatprep.subr.bf16.mxu0 0
    %6164 = vmatpush1.bf16.msra.mxu0 0
    %6165 = vmatprep.subr.bf16.mxu0 0
    %6166 = vmatpush1.bf16.msra.mxu0 0
    %6167 = vmatprep.subr.bf16.mxu0 0
    %6168 = vmatpush1.bf16.msra.mxu0 0
    %6169 = vmatprep.subr.bf16.mxu0 0
    %6170 = vmatpush1.bf16.msra.mxu0 0
    %6171 = vmatprep.subr.bf16.mxu0 0
    %6172 = vmatpush1.bf16.msra.mxu0 0
    %6173 = vmatprep.subr.bf16.mxu0 0
    %6174 = vmatpush1.bf16.msra.mxu0 0
    %6175 = vmatprep.subr.bf16.mxu0 0
    %6176 = vmatpush1.bf16.msra.mxu0 0
    %6177 = vmatprep.subr.bf16.mxu0 0
    %6178 = vmatpush1.bf16.msra.mxu0 0
    %6179 = vmatprep.subr.bf16.mxu0 0
    %6180 = vmatpush1.bf16.msra.mxu0 0
    %6181 = vmatprep.subr.bf16.mxu0 0
    %6182 = vmatpush1.bf16.msra.mxu0 0
    %6183 = vmatprep.subr.bf16.mxu0 0
    %6184 = vmatpush1.bf16.msra.mxu0 0
    %6185 = vmatprep.mubr.bf16.mxu0 0
    %6186 = vmatmul.mubr.bf16.gmra.mrb[0].mxu0 %v6151
    %v6187 = vpop.f32.mrb[0].mxu0
    %v6188 = vadd.f32 %v172, %v6187
    %v6189 = vpop.f32.mrb[0].mxu0
    %v6190 = vpop.f32.mrb[0].mxu0
    %v6191 = vpop.f32.mrb[0].mxu0
    %6192 = vdwg.mxu0
    %v6193 = vmul.f32 %v6100, %v6188
    %v6194 = vadd.f32 %v6005, %v6193
    %v6195 = vmax.f32 %v6194, 0.0
    %v6196 = vpack.c.bf16 %v6195, %v6195
    %v6198 = vsel %vm259, %v6196, 0
    %6200 = vmatprep.subr.bf16.mxu0 0
    %6201 = vmatpush1.bf16.msra.mxu0 %v438
    %6202 = vmatprep.subr.bf16.mxu0 0
    %6203 = vmatpush1.bf16.msra.mxu0 %v439
    %6204 = vmatprep.subr.bf16.mxu0 0
    %6205 = vmatpush1.bf16.msra.mxu0 0
    %6206 = vmatprep.subr.bf16.mxu0 0
    %6207 = vmatpush1.bf16.msra.mxu0 0
    %6208 = vmatprep.subr.bf16.mxu0 0
    %6209 = vmatpush1.bf16.msra.mxu0 0
    %6210 = vmatprep.subr.bf16.mxu0 0
    %6211 = vmatpush1.bf16.msra.mxu0 0
    %6212 = vmatprep.subr.bf16.mxu0 0
    %6213 = vmatpush1.bf16.msra.mxu0 0
    %6214 = vmatprep.subr.bf16.mxu0 0
    %6215 = vmatpush1.bf16.msra.mxu0 0
    %6216 = vmatprep.subr.bf16.mxu0 0
    %6217 = vmatpush1.bf16.msra.mxu0 0
    %6218 = vmatprep.subr.bf16.mxu0 0
    %6219 = vmatpush1.bf16.msra.mxu0 0
    %6220 = vmatprep.subr.bf16.mxu0 0
    %6221 = vmatpush1.bf16.msra.mxu0 0
    %6222 = vmatprep.subr.bf16.mxu0 0
    %6223 = vmatpush1.bf16.msra.mxu0 0
    %6224 = vmatprep.subr.bf16.mxu0 0
    %6225 = vmatpush1.bf16.msra.mxu0 0
    %6226 = vmatprep.subr.bf16.mxu0 0
    %6227 = vmatpush1.bf16.msra.mxu0 0
    %6228 = vmatprep.subr.bf16.mxu0 0
    %6229 = vmatpush1.bf16.msra.mxu0 0
    %6230 = vmatprep.subr.bf16.mxu0 0
    %6231 = vmatpush1.bf16.msra.mxu0 0
    %6232 = vmatprep.mubr.bf16.mxu0 0
    %6233 = vmatmul.mubr.bf16.gmra.mrb[0].mxu0 %v6198
    %v6234 = vpop.f32.mrb[0].mxu0
    %v6235 = vadd.f32 %v158, %v6234
    %v6236 = vpop.f32.mrb[0].mxu0
    %v6237 = vpop.f32.mrb[0].mxu0
    %v6238 = vpop.f32.mrb[0].mxu0
    %6239 = vdwg.mxu0
    %v6240 = vmax.f32 %v6235, 0.0
    %v6241 = vpack.c.bf16 %v6240, %v6240
    %v6243 = vsel %vm259, %v6241, 0
    %6245 = vmatprep.subr.bf16.mxu0 0
    %6246 = vmatpush1.bf16.msra.mxu0 %v495
    %6247 = vmatprep.subr.bf16.mxu0 0
    %6248 = vmatpush1.bf16.msra.mxu0 %v496
    %6249 = vmatprep.subr.bf16.mxu0 0
    %6250 = vmatpush1.bf16.msra.mxu0 0
    %6251 = vmatprep.subr.bf16.mxu0 0
    %6252 = vmatpush1.bf16.msra.mxu0 0
    %6253 = vmatprep.subr.bf16.mxu0 0
    %6254 = vmatpush1.bf16.msra.mxu0 0
    %6255 = vmatprep.subr.bf16.mxu0 0
    %6256 = vmatpush1.bf16.msra.mxu0 0
    %6257 = vmatprep.subr.bf16.mxu0 0
    %6258 = vmatpush1.bf16.msra.mxu0 0
    %6259 = vmatprep.subr.bf16.mxu0 0
    %6260 = vmatpush1.bf16.msra.mxu0 0
    %6261 = vmatprep.subr.bf16.mxu0 0
    %6262 = vmatpush1.bf16.msra.mxu0 0
    %6263 = vmatprep.subr.bf16.mxu0 0
    %6264 = vmatpush1.bf16.msra.mxu0 0
    %6265 = vmatprep.subr.bf16.mxu0 0
    %6266 = vmatpush1.bf16.msra.mxu0 0
    %6267 = vmatprep.subr.bf16.mxu0 0
    %6268 = vmatpush1.bf16.msra.mxu0 0
    %6269 = vmatprep.subr.bf16.mxu0 0
    %6270 = vmatpush1.bf16.msra.mxu0 0
    %6271 = vmatprep.subr.bf16.mxu0 0
    %6272 = vmatpush1.bf16.msra.mxu0 0
    %6273 = vmatprep.subr.bf16.mxu0 0
    %6274 = vmatpush1.bf16.msra.mxu0 0
    %6275 = vmatprep.subr.bf16.mxu0 0
    %6276 = vmatpush1.bf16.msra.mxu0 0
    %6277 = vmatprep.mubr.bf16.mxu0 0
    %6278 = vmatmul.mubr.bf16.gmra.mrb[0].mxu0 %v6243
    %v6279 = vpop.f32.mrb[0].mxu0
    %v6280 = vadd.f32 %v172, %v6279
    %v6281 = vpop.f32.mrb[0].mxu0
    %v6282 = vpop.f32.mrb[0].mxu0
    %v6283 = vpop.f32.mrb[0].mxu0
    %6284 = vdwg.mxu0
    %v6285 = vstv %s5960
    %v6286 = vmul.f32 %v6285, %v6280
    %v6287 = vadd.f32 %v6005, %v6286
    %v6288 = vmax.f32 %v6287, 0.0
    %v6289 = vpack.c.bf16 %v6288, %v6288
    %v6291 = vsel %vm259, %v6289, 0
    %6293 = vmatprep.subr.bf16.mxu0 0
    %6294 = vmatpush1.bf16.msra.mxu0 %v438
    %6295 = vmatprep.subr.bf16.mxu0 0
    %6296 = vmatpush1.bf16.msra.mxu0 %v439
    %6297 = vmatprep.subr.bf16.mxu0 0
    %6298 = vmatpush1.bf16.msra.mxu0 0
    %6299 = vmatprep.subr.bf16.mxu0 0
    %6300 = vmatpush1.bf16.msra.mxu0 0
    %6301 = vmatprep.subr.bf16.mxu0 0
    %6302 = vmatpush1.bf16.msra.mxu0 0
    %6303 = vmatprep.subr.bf16.mxu0 0
    %6304 = vmatpush1.bf16.msra.mxu0 0
    %6305 = vmatprep.subr.bf16.mxu0 0
    %6306 = vmatpush1.bf16.msra.mxu0 0
    %6307 = vmatprep.subr.bf16.mxu0 0
    %6308 = vmatpush1.bf16.msra.mxu0 0
    %6309 = vmatprep.subr.bf16.mxu0 0
    %6310 = vmatpush1.bf16.msra.mxu0 0
    %6311 = vmatprep.subr.bf16.mxu0 0
    %6312 = vmatpush1.bf16.msra.mxu0 0
    %6313 = vmatprep.subr.bf16.mxu0 0
    %6314 = vmatpush1.bf16.msra.mxu0 0
    %6315 = vmatprep.subr.bf16.mxu0 0
    %6316 = vmatpush1.bf16.msra.mxu0 0
    %6317 = vmatprep.subr.bf16.mxu0 0
    %6318 = vmatpush1.bf16.msra.mxu0 0
    %6319 = vmatprep.subr.bf16.mxu0 0
    %6320 = vmatpush1.bf16.msra.mxu0 0
    %6321 = vmatprep.subr.bf16.mxu0 0
    %6322 = vmatpush1.bf16.msra.mxu0 0
    %6323 = vmatprep.subr.bf16.mxu0 0
    %6324 = vmatpush1.bf16.msra.mxu0 0
    %6325 = vmatprep.mubr.bf16.mxu0 0
    %6326 = vmatmul.mubr.bf16.gmra.mrb[0].mxu0 %v6291
    %v6327 = vpop.f32.mrb[0].mxu0
    %v6328 = vadd.f32 %v158, %v6327
    %v6329 = vpop.f32.mrb[0].mxu0
    %v6330 = vpop.f32.mrb[0].mxu0
    %v6331 = vpop.f32.mrb[0].mxu0
    %6332 = vdwg.mxu0
    %v6333 = vmax.f32 %v6328, 0.0
    %v6334 = vadd.f32 %v6148, %v6240
    %v6335 = vmul.f32 %v6334, 2.0
    %v6336 = vadd.f32 %v6055, %v6335
    %v6337 = vadd.f32 %v6336, %v6333
    %v6338 = vpack.c.bf16 %v6337, %v6337
    %v6340 = vsel %vm259, %v6338, 0
    %6342 = vmatprep.subr.bf16.mxu0 0
    %6343 = vmatpush1.bf16.msra.mxu0 %v789
    %6344 = vmatprep.subr.bf16.mxu0 0
    %6345 = vmatpush1.bf16.msra.mxu0 %v790
    %6346 = vmatprep.subr.bf16.mxu0 0
    %6347 = vmatpush1.bf16.msra.mxu0 0
    %6348 = vmatprep.subr.bf16.mxu0 0
    %6349 = vmatpush1.bf16.msra.mxu0 0
    %6350 = vmatprep.subr.bf16.mxu0 0
    %6351 = vmatpush1.bf16.msra.mxu0 0
    %6352 = vmatprep.subr.bf16.mxu0 0
    %6353 = vmatpush1.bf16.msra.mxu0 0
    %6354 = vmatprep.subr.bf16.mxu0 0
    %6355 = vmatpush1.bf16.msra.mxu0 0
    %6356 = vmatprep.subr.bf16.mxu0 0
    %6357 = vmatpush1.bf16.msra.mxu0 0
    %6358 = vmatprep.subr.bf16.mxu0 0
    %6359 = vmatpush1.bf16.msra.mxu0 0
    %6360 = vmatprep.subr.bf16.mxu0 0
    %6361 = vmatpush1.bf16.msra.mxu0 0
    %6362 = vmatprep.subr.bf16.mxu0 0
    %6363 = vmatpush1.bf16.msra.mxu0 0
    %6364 = vmatprep.subr.bf16.mxu0 0
    %6365 = vmatpush1.bf16.msra.mxu0 0
    %6366 = vmatprep.subr.bf16.mxu0 0
    %6367 = vmatpush1.bf16.msra.mxu0 0
    %6368 = vmatprep.subr.bf16.mxu0 0
    %6369 = vmatpush1.bf16.msra.mxu0 0
    %6370 = vmatprep.subr.bf16.mxu0 0
    %6371 = vmatpush1.bf16.msra.mxu0 0
    %6372 = vmatprep.subr.bf16.mxu0 0
    %6373 = vmatpush1.bf16.msra.mxu0 0
    %6374 = vmatprep.mubr.bf16.mxu0 0
    %6375 = vmatmul.mubr.bf16.gmra.mrb[0].mxu0 %v6340
    %v6376 = vpop.f32.mrb[0].mxu0
    %v6377 = vadd.f32 0.0, %v6376
    %v6378 = vpop.f32.mrb[0].mxu0
    %v6379 = vpop.f32.mrb[0].mxu0
    %v6380 = vpop.f32.mrb[0].mxu0
    %6381 = vdwg.mxu0
    %v6382 = vstv %s5962
    %v6383 = vmul.f32 %v6382, %v6377
    %6385 = vrot.lane.b32.xlu0 %v6383, 32
    %v6386 = vpop.permute.xlu0 %6385
    %v6388 = vadd.f32 %v5953, %v6386
    %v6389 = vmul.f32 %v6285, %v165
    %6391 = vrot.lane.b32.xlu0 %v6389, 32
    %v6392 = vpop.permute.xlu0 %6391
    %v6394 = vadd.f32 %v6388, %v6392
    %v6395 = vpack.c.bf16 %v6394, %v6394
    %6397 = vrot.lane.b32.xlu0 %v6395, 96
    %v6398 = vpop.permute.xlu0 %6397
    %v6400 = vsel %vm259, %v6398, 0
    %6402 = vmatprep.subr.bf16.mxu0 0
    %6403 = vmatpush1.bf16.msra.mxu0 %v381
    %6404 = vmatprep.subr.bf16.mxu0 0
    %6405 = vmatpush1.bf16.msra.mxu0 %v382
    %6406 = vmatprep.subr.bf16.mxu0 0
    %6407 = vmatpush1.bf16.msra.mxu0 0
    %6408 = vmatprep.subr.bf16.mxu0 0
    %6409 = vmatpush1.bf16.msra.mxu0 0
    %6410 = vmatprep.subr.bf16.mxu0 0
    %6411 = vmatpush1.bf16.msra.mxu0 0
    %6412 = vmatprep.subr.bf16.mxu0 0
    %6413 = vmatpush1.bf16.msra.mxu0 0
    %6414 = vmatprep.subr.bf16.mxu0 0
    %6415 = vmatpush1.bf16.msra.mxu0 0
    %6416 = vmatprep.subr.bf16.mxu0 0
    %6417 = vmatpush1.bf16.msra.mxu0 0
    %6418 = vmatprep.subr.bf16.mxu0 0
    %6419 = vmatpush1.bf16.msra.mxu0 0
    %6420 = vmatprep.subr.bf16.mxu0 0
    %6421 = vmatpush1.bf16.msra.mxu0 0
    %6422 = vmatprep.subr.bf16.mxu0 0
    %6423 = vmatpush1.bf16.msra.mxu0 0
    %6424 = vmatprep.subr.bf16.mxu0 0
    %6425 = vmatpush1.bf16.msra.mxu0 0
    %6426 = vmatprep.subr.bf16.mxu0 0
    %6427 = vmatpush1.bf16.msra.mxu0 0
    %6428 = vmatprep.subr.bf16.mxu0 0
    %6429 = vmatpush1.bf16.msra.mxu0 0
    %6430 = vmatprep.subr.bf16.mxu0 0
    %6431 = vmatpush1.bf16.msra.mxu0 0
    %6432 = vmatprep.subr.bf16.mxu0 0
    %6433 = vmatpush1.bf16.msra.mxu0 0
    %6434 = vmatprep.mubr.bf16.mxu0 0
    %6435 = vmatmul.mubr.bf16.gmra.mrb[0].mxu0 %v6400
    %v6436 = vpop.f32.mrb[0].mxu0
    %v6437 = vadd.f32 %v151, %v6436
    %v6438 = vpop.f32.mrb[0].mxu0
    %v6439 = vpop.f32.mrb[0].mxu0
    %v6440 = vpop.f32.mrb[0].mxu0
    %6441 = vdwg.mxu0
    %v6442 = vmax.f32 %v6437, 0.0
    %v6443 = vpack.c.bf16 %v6442, %v6442
    %v6445 = vsel %vm259, %v6443, 0
    %6447 = vmatprep.subr.bf16.mxu0 0
    %6448 = vmatpush1.bf16.msra.mxu0 %v438
    %6449 = vmatprep.subr.bf16.mxu0 0
    %6450 = vmatpush1.bf16.msra.mxu0 %v439
    %6451 = vmatprep.subr.bf16.mxu0 0
    %6452 = vmatpush1.bf16.msra.mxu0 0
    %6453 = vmatprep.subr.bf16.mxu0 0
    %6454 = vmatpush1.bf16.msra.mxu0 0
    %6455 = vmatprep.subr.bf16.mxu0 0
    %6456 = vmatpush1.bf16.msra.mxu0 0
    %6457 = vmatprep.subr.bf16.mxu0 0
    %6458 = vmatpush1.bf16.msra.mxu0 0
    %6459 = vmatprep.subr.bf16.mxu0 0
    %6460 = vmatpush1.bf16.msra.mxu0 0
    %6461 = vmatprep.subr.bf16.mxu0 0
    %6462 = vmatpush1.bf16.msra.mxu0 0
    %6463 = vmatprep.subr.bf16.mxu0 0
    %6464 = vmatpush1.bf16.msra.mxu0 0
    %6465 = vmatprep.subr.bf16.mxu0 0
    %6466 = vmatpush1.bf16.msra.mxu0 0
    %6467 = vmatprep.subr.bf16.mxu0 0
    %6468 = vmatpush1.bf16.msra.mxu0 0
    %6469 = vmatprep.subr.bf16.mxu0 0
    %6470 = vmatpush1.bf16.msra.mxu0 0
    %6471 = vmatprep.subr.bf16.mxu0 0
    %6472 = vmatpush1.bf16.msra.mxu0 0
    %6473 = vmatprep.subr.bf16.mxu0 0
    %6474 = vmatpush1.bf16.msra.mxu0 0
    %6475 = vmatprep.subr.bf16.mxu0 0
    %6476 = vmatpush1.bf16.msra.mxu0 0
    %6477 = vmatprep.subr.bf16.mxu0 0
    %6478 = vmatpush1.bf16.msra.mxu0 0
    %6479 = vmatprep.mubr.bf16.mxu0 0
    %6480 = vmatmul.mubr.bf16.gmra.mrb[0].mxu0 %v6445
    %v6481 = vpop.f32.mrb[0].mxu0
    %v6482 = vadd.f32 %v158, %v6481
    %v6483 = vpop.f32.mrb[0].mxu0
    %v6484 = vpop.f32.mrb[0].mxu0
    %v6485 = vpop.f32.mrb[0].mxu0
    %6486 = vdwg.mxu0
    %v6487 = vmax.f32 %v6482, 0.0
    %v6488 = vpack.c.bf16 %v6487, %v6487
    %v6490 = vsel %vm259, %v6488, 0
    %6492 = vmatprep.subr.bf16.mxu0 0
    %6493 = vmatpush1.bf16.msra.mxu0 %v495
    %6494 = vmatprep.subr.bf16.mxu0 0
    %6495 = vmatpush1.bf16.msra.mxu0 %v496
    %6496 = vmatprep.subr.bf16.mxu0 0
    %6497 = vmatpush1.bf16.msra.mxu0 0
    %6498 = vmatprep.subr.bf16.mxu0 0
    %6499 = vmatpush1.bf16.msra.mxu0 0
    %6500 = vmatprep.subr.bf16.mxu0 0
    %6501 = vmatpush1.bf16.msra.mxu0 0
    %6502 = vmatprep.subr.bf16.mxu0 0
    %6503 = vmatpush1.bf16.msra.mxu0 0
    %6504 = vmatprep.subr.bf16.mxu0 0
    %6505 = vmatpush1.bf16.msra.mxu0 0
    %6506 = vmatprep.subr.bf16.mxu0 0
    %6507 = vmatpush1.bf16.msra.mxu0 0
    %6508 = vmatprep.subr.bf16.mxu0 0
    %6509 = vmatpush1.bf16.msra.mxu0 0
    %6510 = vmatprep.subr.bf16.mxu0 0
    %6511 = vmatpush1.bf16.msra.mxu0 0
    %6512 = vmatprep.subr.bf16.mxu0 0
    %6513 = vmatpush1.bf16.msra.mxu0 0
    %6514 = vmatprep.subr.bf16.mxu0 0
    %6515 = vmatpush1.bf16.msra.mxu0 0
    %6516 = vmatprep.subr.bf16.mxu0 0
    %6517 = vmatpush1.bf16.msra.mxu0 0
    %6518 = vmatprep.subr.bf16.mxu0 0
    %6519 = vmatpush1.bf16.msra.mxu0 0
    %6520 = vmatprep.subr.bf16.mxu0 0
    %6521 = vmatpush1.bf16.msra.mxu0 0
    %6522 = vmatprep.subr.bf16.mxu0 0
    %6523 = vmatpush1.bf16.msra.mxu0 0
    %6524 = vmatprep.mubr.bf16.mxu0 0
    %6525 = vmatmul.mubr.bf16.gmra.mrb[0].mxu0 %v6490
    %v6526 = vpop.f32.mrb[0].mxu0
    %v6527 = vadd.f32 %v172, %v6526
    %v6528 = vpop.f32.mrb[0].mxu0
    %v6529 = vpop.f32.mrb[0].mxu0
    %v6530 = vpop.f32.mrb[0].mxu0
    %6531 = vdwg.mxu0
    %v6532 = vmul.f32 %v6100, %v6527
    %v6533 = vadd.f32 %v6437, %v6532
    %v6534 = vmax.f32 %v6533, 0.0
    %v6535 = vpack.c.bf16 %v6534, %v6534
    %v6537 = vsel %vm259, %v6535, 0
    %6539 = vmatprep.subr.bf16.mxu0 0
    %6540 = vmatpush1.bf16.msra.mxu0 %v438
    %6541 = vmatprep.subr.bf16.mxu0 0
    %6542 = vmatpush1.bf16.msra.mxu0 %v439
    %6543 = vmatprep.subr.bf16.mxu0 0
    %6544 = vmatpush1.bf16.msra.mxu0 0
    %6545 = vmatprep.subr.bf16.mxu0 0
    %6546 = vmatpush1.bf16.msra.mxu0 0
    %6547 = vmatprep.subr.bf16.mxu0 0
    %6548 = vmatpush1.bf16.msra.mxu0 0
    %6549 = vmatprep.subr.bf16.mxu0 0
    %6550 = vmatpush1.bf16.msra.mxu0 0
    %6551 = vmatprep.subr.bf16.mxu0 0
    %6552 = vmatpush1.bf16.msra.mxu0 0
    %6553 = vmatprep.subr.bf16.mxu0 0
    %6554 = vmatpush1.bf16.msra.mxu0 0
    %6555 = vmatprep.subr.bf16.mxu0 0
    %6556 = vmatpush1.bf16.msra.mxu0 0
    %6557 = vmatprep.subr.bf16.mxu0 0
    %6558 = vmatpush1.bf16.msra.mxu0 0
    %6559 = vmatprep.subr.bf16.mxu0 0
    %6560 = vmatpush1.bf16.msra.mxu0 0
    %6561 = vmatprep.subr.bf16.mxu0 0
    %6562 = vmatpush1.bf16.msra.mxu0 0
    %6563 = vmatprep.subr.bf16.mxu0 0
    %6564 = vmatpush1.bf16.msra.mxu0 0
    %6565 = vmatprep.subr.bf16.mxu0 0
    %6566 = vmatpush1.bf16.msra.mxu0 0
    %6567 = vmatprep.subr.bf16.mxu0 0
    %6568 = vmatpush1.bf16.msra.mxu0 0
    %6569 = vmatprep.subr.bf16.mxu0 0
    %6570 = vmatpush1.bf16.msra.mxu0 0
    %6571 = vmatprep.mubr.bf16.mxu0 0
    %6572 = vmatmul.mubr.bf16.gmra.mrb[0].mxu0 %v6537
    %v6573 = vpop.f32.mrb[0].mxu0
    %v6574 = vadd.f32 %v158, %v6573
    %v6575 = vpop.f32.mrb[0].mxu0
    %v6576 = vpop.f32.mrb[0].mxu0
    %v6577 = vpop.f32.mrb[0].mxu0
    %6578 = vdwg.mxu0
    %v6579 = vmax.f32 %v6574, 0.0
    %v6580 = vpack.c.bf16 %v6579, %v6579
    %v6582 = vsel %vm259, %v6580, 0
    %6584 = vmatprep.subr.bf16.mxu0 0
    %6585 = vmatpush1.bf16.msra.mxu0 %v495
    %6586 = vmatprep.subr.bf16.mxu0 0
    %6587 = vmatpush1.bf16.msra.mxu0 %v496
    %6588 = vmatprep.subr.bf16.mxu0 0
    %6589 = vmatpush1.bf16.msra.mxu0 0
    %6590 = vmatprep.subr.bf16.mxu0 0
    %6591 = vmatpush1.bf16.msra.mxu0 0
    %6592 = vmatprep.subr.bf16.mxu0 0
    %6593 = vmatpush1.bf16.msra.mxu0 0
    %6594 = vmatprep.subr.bf16.mxu0 0
    %6595 = vmatpush1.bf16.msra.mxu0 0
    %6596 = vmatprep.subr.bf16.mxu0 0
    %6597 = vmatpush1.bf16.msra.mxu0 0
    %6598 = vmatprep.subr.bf16.mxu0 0
    %6599 = vmatpush1.bf16.msra.mxu0 0
    %6600 = vmatprep.subr.bf16.mxu0 0
    %6601 = vmatpush1.bf16.msra.mxu0 0
    %6602 = vmatprep.subr.bf16.mxu0 0
    %6603 = vmatpush1.bf16.msra.mxu0 0
    %6604 = vmatprep.subr.bf16.mxu0 0
    %6605 = vmatpush1.bf16.msra.mxu0 0
    %6606 = vmatprep.subr.bf16.mxu0 0
    %6607 = vmatpush1.bf16.msra.mxu0 0
    %6608 = vmatprep.subr.bf16.mxu0 0
    %6609 = vmatpush1.bf16.msra.mxu0 0
    %6610 = vmatprep.subr.bf16.mxu0 0
    %6611 = vmatpush1.bf16.msra.mxu0 0
    %6612 = vmatprep.subr.bf16.mxu0 0
    %6613 = vmatpush1.bf16.msra.mxu0 0
    %6614 = vmatprep.subr.bf16.mxu0 0
    %6615 = vmatpush1.bf16.msra.mxu0 0
    %6616 = vmatprep.mubr.bf16.mxu0 0
    %6617 = vmatmul.mubr.bf16.gmra.mrb[0].mxu0 %v6582
    %v6618 = vpop.f32.mrb[0].mxu0
    %v6619 = vadd.f32 %v172, %v6618
    %v6620 = vpop.f32.mrb[0].mxu0
    %v6621 = vpop.f32.mrb[0].mxu0
    %v6622 = vpop.f32.mrb[0].mxu0
    %6623 = vdwg.mxu0
    %v6624 = vmul.f32 %v6100, %v6619
    %v6625 = vadd.f32 %v6437, %v6624
    %v6626 = vmax.f32 %v6625, 0.0
    %v6627 = vpack.c.bf16 %v6626, %v6626
    %v6629 = vsel %vm259, %v6627, 0
    %6631 = vmatprep.subr.bf16.mxu0 0
    %6632 = vmatpush1.bf16.msra.mxu0 %v438
    %6633 = vmatprep.subr.bf16.mxu0 0
    %6634 = vmatpush1.bf16.msra.mxu0 %v439
    %6635 = vmatprep.subr.bf16.mxu0 0
    %6636 = vmatpush1.bf16.msra.mxu0 0
    %6637 = vmatprep.subr.bf16.mxu0 0
    %6638 = vmatpush1.bf16.msra.mxu0 0
    %6639 = vmatprep.subr.bf16.mxu0 0
    %6640 = vmatpush1.bf16.msra.mxu0 0
    %6641 = vmatprep.subr.bf16.mxu0 0
    %6642 = vmatpush1.bf16.msra.mxu0 0
    %6643 = vmatprep.subr.bf16.mxu0 0
    %6644 = vmatpush1.bf16.msra.mxu0 0
    %6645 = vmatprep.subr.bf16.mxu0 0
    %6646 = vmatpush1.bf16.msra.mxu0 0
    %6647 = vmatprep.subr.bf16.mxu0 0
    %6648 = vmatpush1.bf16.msra.mxu0 0
    %6649 = vmatprep.subr.bf16.mxu0 0
    %6650 = vmatpush1.bf16.msra.mxu0 0
    %6651 = vmatprep.subr.bf16.mxu0 0
    %6652 = vmatpush1.bf16.msra.mxu0 0
    %6653 = vmatprep.subr.bf16.mxu0 0
    %6654 = vmatpush1.bf16.msra.mxu0 0
    %6655 = vmatprep.subr.bf16.mxu0 0
    %6656 = vmatpush1.bf16.msra.mxu0 0
    %6657 = vmatprep.subr.bf16.mxu0 0
    %6658 = vmatpush1.bf16.msra.mxu0 0
    %6659 = vmatprep.subr.bf16.mxu0 0
    %6660 = vmatpush1.bf16.msra.mxu0 0
    %6661 = vmatprep.subr.bf16.mxu0 0
    %6662 = vmatpush1.bf16.msra.mxu0 0
    %6663 = vmatprep.mubr.bf16.mxu0 0
    %6664 = vmatmul.mubr.bf16.gmra.mrb[0].mxu0 %v6629
    %v6665 = vpop.f32.mrb[0].mxu0
    %v6666 = vadd.f32 %v158, %v6665
    %v6667 = vpop.f32.mrb[0].mxu0
    %v6668 = vpop.f32.mrb[0].mxu0
    %v6669 = vpop.f32.mrb[0].mxu0
    %6670 = vdwg.mxu0
    %v6671 = vmax.f32 %v6666, 0.0
    %v6672 = vpack.c.bf16 %v6671, %v6671
    %v6674 = vsel %vm259, %v6672, 0
    %6676 = vmatprep.subr.bf16.mxu0 0
    %6677 = vmatpush1.bf16.msra.mxu0 %v495
    %6678 = vmatprep.subr.bf16.mxu0 0
    %6679 = vmatpush1.bf16.msra.mxu0 %v496
    %6680 = vmatprep.subr.bf16.mxu0 0
    %6681 = vmatpush1.bf16.msra.mxu0 0
    %6682 = vmatprep.subr.bf16.mxu0 0
    %6683 = vmatpush1.bf16.msra.mxu0 0
    %6684 = vmatprep.subr.bf16.mxu0 0
    %6685 = vmatpush1.bf16.msra.mxu0 0
    %6686 = vmatprep.subr.bf16.mxu0 0
    %6687 = vmatpush1.bf16.msra.mxu0 0
    %6688 = vmatprep.subr.bf16.mxu0 0
    %6689 = vmatpush1.bf16.msra.mxu0 0
    %6690 = vmatprep.subr.bf16.mxu0 0
    %6691 = vmatpush1.bf16.msra.mxu0 0
    %6692 = vmatprep.subr.bf16.mxu0 0
    %6693 = vmatpush1.bf16.msra.mxu0 0
    %6694 = vmatprep.subr.bf16.mxu0 0
    %6695 = vmatpush1.bf16.msra.mxu0 0
    %6696 = vmatprep.subr.bf16.mxu0 0
    %6697 = vmatpush1.bf16.msra.mxu0 0
    %6698 = vmatprep.subr.bf16.mxu0 0
    %6699 = vmatpush1.bf16.msra.mxu0 0
    %6700 = vmatprep.subr.bf16.mxu0 0
    %6701 = vmatpush1.bf16.msra.mxu0 0
    %6702 = vmatprep.subr.bf16.mxu0 0
    %6703 = vmatpush1.bf16.msra.mxu0 0
    %6704 = vmatprep.subr.bf16.mxu0 0
    %6705 = vmatpush1.bf16.msra.mxu0 0
    %6706 = vmatprep.subr.bf16.mxu0 0
    %6707 = vmatpush1.bf16.msra.mxu0 0
    %6708 = vmatprep.mubr.bf16.mxu0 0
    %6709 = vmatmul.mubr.bf16.gmra.mrb[0].mxu0 %v6674
    %v6710 = vpop.f32.mrb[0].mxu0
    %v6711 = vadd.f32 %v172, %v6710
    %v6712 = vpop.f32.mrb[0].mxu0
    %v6713 = vpop.f32.mrb[0].mxu0
    %v6714 = vpop.f32.mrb[0].mxu0
    %6715 = vdwg.mxu0
    %v6716 = vmul.f32 %v6285, %v6711
    %v6717 = vadd.f32 %v6437, %v6716
    %v6718 = vmax.f32 %v6717, 0.0
    %v6719 = vpack.c.bf16 %v6718, %v6718
    %v6721 = vsel %vm259, %v6719, 0
    %6723 = vmatprep.subr.bf16.mxu0 0
    %6724 = vmatpush1.bf16.msra.mxu0 %v438
    %6725 = vmatprep.subr.bf16.mxu0 0
    %6726 = vmatpush1.bf16.msra.mxu0 %v439
    %6727 = vmatprep.subr.bf16.mxu0 0
    %6728 = vmatpush1.bf16.msra.mxu0 0
    %6729 = vmatprep.subr.bf16.mxu0 0
    %6730 = vmatpush1.bf16.msra.mxu0 0
    %6731 = vmatprep.subr.bf16.mxu0 0
    %6732 = vmatpush1.bf16.msra.mxu0 0
    %6733 = vmatprep.subr.bf16.mxu0 0
    %6734 = vmatpush1.bf16.msra.mxu0 0
    %6735 = vmatprep.subr.bf16.mxu0 0
    %6736 = vmatpush1.bf16.msra.mxu0 0
    %6737 = vmatprep.subr.bf16.mxu0 0
    %6738 = vmatpush1.bf16.msra.mxu0 0
    %6739 = vmatprep.subr.bf16.mxu0 0
    %6740 = vmatpush1.bf16.msra.mxu0 0
    %6741 = vmatprep.subr.bf16.mxu0 0
    %6742 = vmatpush1.bf16.msra.mxu0 0
    %6743 = vmatprep.subr.bf16.mxu0 0
    %6744 = vmatpush1.bf16.msra.mxu0 0
    %6745 = vmatprep.subr.bf16.mxu0 0
    %6746 = vmatpush1.bf16.msra.mxu0 0
    %6747 = vmatprep.subr.bf16.mxu0 0
    %6748 = vmatpush1.bf16.msra.mxu0 0
    %6749 = vmatprep.subr.bf16.mxu0 0
    %6750 = vmatpush1.bf16.msra.mxu0 0
    %6751 = vmatprep.subr.bf16.mxu0 0
    %6752 = vmatpush1.bf16.msra.mxu0 0
    %6753 = vmatprep.subr.bf16.mxu0 0
    %6754 = vmatpush1.bf16.msra.mxu0 0
    %6755 = vmatprep.mubr.bf16.mxu0 0
    %6756 = vmatmul.mubr.bf16.gmra.mrb[0].mxu0 %v6721
    %v6757 = vpop.f32.mrb[0].mxu0
    %v6758 = vadd.f32 %v158, %v6757
    %v6759 = vpop.f32.mrb[0].mxu0
    %v6760 = vpop.f32.mrb[0].mxu0
    %v6761 = vpop.f32.mrb[0].mxu0
    %6762 = vdwg.mxu0
    %v6763 = vmax.f32 %v6758, 0.0
    %v6764 = vadd.f32 %v6579, %v6671
    %v6765 = vmul.f32 %v6764, 2.0
    %v6766 = vadd.f32 %v6487, %v6765
    %v6767 = vadd.f32 %v6766, %v6763
    %v6768 = vpack.c.bf16 %v6767, %v6767
    %v6770 = vsel %vm259, %v6768, 0
    %6772 = vmatprep.subr.bf16.mxu0 0
    %6773 = vmatpush1.bf16.msra.mxu0 %v789
    %6774 = vmatprep.subr.bf16.mxu0 0
    %6775 = vmatpush1.bf16.msra.mxu0 %v790
    %6776 = vmatprep.subr.bf16.mxu0 0
    %6777 = vmatpush1.bf16.msra.mxu0 0
    %6778 = vmatprep.subr.bf16.mxu0 0
    %6779 = vmatpush1.bf16.msra.mxu0 0
    %6780 = vmatprep.subr.bf16.mxu0 0
    %6781 = vmatpush1.bf16.msra.mxu0 0
    %6782 = vmatprep.subr.bf16.mxu0 0
    %6783 = vmatpush1.bf16.msra.mxu0 0
    %6784 = vmatprep.subr.bf16.mxu0 0
    %6785 = vmatpush1.bf16.msra.mxu0 0
    %6786 = vmatprep.subr.bf16.mxu0 0
    %6787 = vmatpush1.bf16.msra.mxu0 0
    %6788 = vmatprep.subr.bf16.mxu0 0
    %6789 = vmatpush1.bf16.msra.mxu0 0
    %6790 = vmatprep.subr.bf16.mxu0 0
    %6791 = vmatpush1.bf16.msra.mxu0 0
    %6792 = vmatprep.subr.bf16.mxu0 0
    %6793 = vmatpush1.bf16.msra.mxu0 0
    %6794 = vmatprep.subr.bf16.mxu0 0
    %6795 = vmatpush1.bf16.msra.mxu0 0
    %6796 = vmatprep.subr.bf16.mxu0 0
    %6797 = vmatpush1.bf16.msra.mxu0 0
    %6798 = vmatprep.subr.bf16.mxu0 0
    %6799 = vmatpush1.bf16.msra.mxu0 0
    %6800 = vmatprep.subr.bf16.mxu0 0
    %6801 = vmatpush1.bf16.msra.mxu0 0
    %6802 = vmatprep.subr.bf16.mxu0 0
    %6803 = vmatpush1.bf16.msra.mxu0 0
    %6804 = vmatprep.mubr.bf16.mxu0 0
    %6805 = vmatmul.mubr.bf16.gmra.mrb[0].mxu0 %v6770
    %v6806 = vpop.f32.mrb[0].mxu0
    %v6807 = vadd.f32 0.0, %v6806
    %v6808 = vpop.f32.mrb[0].mxu0
    %v6809 = vpop.f32.mrb[0].mxu0
    %v6810 = vpop.f32.mrb[0].mxu0
    %6811 = vdwg.mxu0
    %v6812 = vmul.f32 %v6382, %v6807
    %6814 = vrot.lane.b32.xlu0 %v6812, 32
    %v6815 = vpop.permute.xlu0 %6814
    %v6817 = vadd.f32 %v6394, %v6815
    %v6818 = vadd.f32 %v6817, %v6392
    %6820 = vrot.lane.b32.xlu0 %v6818, 96
    %v6821 = vpop.permute.xlu0 %6820
    %6823 = vst.msk [vmem:[#allocation3 + $0x20] sm:$0xf] %vm363, %v6821
    %s6824 = sld [smem:[#allocation4 + $0x9]]
    %s6825 = smul.f32 %s6824, 0.5
    %s6826 = smul.f32 %s6825, 0.5
    %s6827 = smul.f32 %s6825, 0.16666667
    %v6828 = vpack.c.bf16 %v6818, %v6818
    %6830 = vrot.lane.b32.xlu0 %v6828, 96
    %v6831 = vpop.permute.xlu0 %6830
    %v6833 = vsel %vm259, %v6831, 0
    %6835 = vmatprep.subr.bf16.mxu0 0
    %6836 = vmatpush1.bf16.msra.mxu0 %v381
    %6837 = vmatprep.subr.bf16.mxu0 0
    %6838 = vmatpush1.bf16.msra.mxu0 %v382
    %6839 = vmatprep.subr.bf16.mxu0 0
    %6840 = vmatpush1.bf16.msra.mxu0 0
    %6841 = vmatprep.subr.bf16.mxu0 0
    %6842 = vmatpush1.bf16.msra.mxu0 0
    %6843 = vmatprep.subr.bf16.mxu0 0
    %6844 = vmatpush1.bf16.msra.mxu0 0
    %6845 = vmatprep.subr.bf16.mxu0 0
    %6846 = vmatpush1.bf16.msra.mxu0 0
    %6847 = vmatprep.subr.bf16.mxu0 0
    %6848 = vmatpush1.bf16.msra.mxu0 0
    %6849 = vmatprep.subr.bf16.mxu0 0
    %6850 = vmatpush1.bf16.msra.mxu0 0
    %6851 = vmatprep.subr.bf16.mxu0 0
    %6852 = vmatpush1.bf16.msra.mxu0 0
    %6853 = vmatprep.subr.bf16.mxu0 0
    %6854 = vmatpush1.bf16.msra.mxu0 0
    %6855 = vmatprep.subr.bf16.mxu0 0
    %6856 = vmatpush1.bf16.msra.mxu0 0
    %6857 = vmatprep.subr.bf16.mxu0 0
    %6858 = vmatpush1.bf16.msra.mxu0 0
    %6859 = vmatprep.subr.bf16.mxu0 0
    %6860 = vmatpush1.bf16.msra.mxu0 0
    %6861 = vmatprep.subr.bf16.mxu0 0
    %6862 = vmatpush1.bf16.msra.mxu0 0
    %6863 = vmatprep.subr.bf16.mxu0 0
    %6864 = vmatpush1.bf16.msra.mxu0 0
    %6865 = vmatprep.subr.bf16.mxu0 0
    %6866 = vmatpush1.bf16.msra.mxu0 0
    %6867 = vmatprep.mubr.bf16.mxu0 0
    %6868 = vmatmul.mubr.bf16.gmra.mrb[0].mxu0 %v6833
    %v6869 = vpop.f32.mrb[0].mxu0
    %v6870 = vadd.f32 %v151, %v6869
    %v6871 = vpop.f32.mrb[0].mxu0
    %v6872 = vpop.f32.mrb[0].mxu0
    %v6873 = vpop.f32.mrb[0].mxu0
    %6874 = vdwg.mxu0
    %v6875 = vmax.f32 %v6870, 0.0
    %v6876 = vpack.c.bf16 %v6875, %v6875
    %v6878 = vsel %vm259, %v6876, 0
    %6880 = vmatprep.subr.bf16.mxu0 0
    %6881 = vmatpush1.bf16.msra.mxu0 %v438
    %6882 = vmatprep.subr.bf16.mxu0 0
    %6883 = vmatpush1.bf16.msra.mxu0 %v439
    %6884 = vmatprep.subr.bf16.mxu0 0
    %6885 = vmatpush1.bf16.msra.mxu0 0
    %6886 = vmatprep.subr.bf16.mxu0 0
    %6887 = vmatpush1.bf16.msra.mxu0 0
    %6888 = vmatprep.subr.bf16.mxu0 0
    %6889 = vmatpush1.bf16.msra.mxu0 0
    %6890 = vmatprep.subr.bf16.mxu0 0
    %6891 = vmatpush1.bf16.msra.mxu0 0
    %6892 = vmatprep.subr.bf16.mxu0 0
    %6893 = vmatpush1.bf16.msra.mxu0 0
    %6894 = vmatprep.subr.bf16.mxu0 0
    %6895 = vmatpush1.bf16.msra.mxu0 0
    %6896 = vmatprep.subr.bf16.mxu0 0
    %6897 = vmatpush1.bf16.msra.mxu0 0
    %6898 = vmatprep.subr.bf16.mxu0 0
    %6899 = vmatpush1.bf16.msra.mxu0 0
    %6900 = vmatprep.subr.bf16.mxu0 0
    %6901 = vmatpush1.bf16.msra.mxu0 0
    %6902 = vmatprep.subr.bf16.mxu0 0
    %6903 = vmatpush1.bf16.msra.mxu0 0
    %6904 = vmatprep.subr.bf16.mxu0 0
    %6905 = vmatpush1.bf16.msra.mxu0 0
    %6906 = vmatprep.subr.bf16.mxu0 0
    %6907 = vmatpush1.bf16.msra.mxu0 0
    %6908 = vmatprep.subr.bf16.mxu0 0
    %6909 = vmatpush1.bf16.msra.mxu0 0
    %6910 = vmatprep.subr.bf16.mxu0 0
    %6911 = vmatpush1.bf16.msra.mxu0 0
    %6912 = vmatprep.mubr.bf16.mxu0 0
    %6913 = vmatmul.mubr.bf16.gmra.mrb[0].mxu0 %v6878
    %v6914 = vpop.f32.mrb[0].mxu0
    %v6915 = vadd.f32 %v158, %v6914
    %v6916 = vpop.f32.mrb[0].mxu0
    %v6917 = vpop.f32.mrb[0].mxu0
    %v6918 = vpop.f32.mrb[0].mxu0
    %6919 = vdwg.mxu0
    %v6920 = vmax.f32 %v6915, 0.0
    %v6921 = vpack.c.bf16 %v6920, %v6920
    %v6923 = vsel %vm259, %v6921, 0
    %6925 = vmatprep.subr.bf16.mxu0 0
    %6926 = vmatpush1.bf16.msra.mxu0 %v495
    %6927 = vmatprep.subr.bf16.mxu0 0
    %6928 = vmatpush1.bf16.msra.mxu0 %v496
    %6929 = vmatprep.subr.bf16.mxu0 0
    %6930 = vmatpush1.bf16.msra.mxu0 0
    %6931 = vmatprep.subr.bf16.mxu0 0
    %6932 = vmatpush1.bf16.msra.mxu0 0
    %6933 = vmatprep.subr.bf16.mxu0 0
    %6934 = vmatpush1.bf16.msra.mxu0 0
    %6935 = vmatprep.subr.bf16.mxu0 0
    %6936 = vmatpush1.bf16.msra.mxu0 0
    %6937 = vmatprep.subr.bf16.mxu0 0
    %6938 = vmatpush1.bf16.msra.mxu0 0
    %6939 = vmatprep.subr.bf16.mxu0 0
    %6940 = vmatpush1.bf16.msra.mxu0 0
    %6941 = vmatprep.subr.bf16.mxu0 0
    %6942 = vmatpush1.bf16.msra.mxu0 0
    %6943 = vmatprep.subr.bf16.mxu0 0
    %6944 = vmatpush1.bf16.msra.mxu0 0
    %6945 = vmatprep.subr.bf16.mxu0 0
    %6946 = vmatpush1.bf16.msra.mxu0 0
    %6947 = vmatprep.subr.bf16.mxu0 0
    %6948 = vmatpush1.bf16.msra.mxu0 0
    %6949 = vmatprep.subr.bf16.mxu0 0
    %6950 = vmatpush1.bf16.msra.mxu0 0
    %6951 = vmatprep.subr.bf16.mxu0 0
    %6952 = vmatpush1.bf16.msra.mxu0 0
    %6953 = vmatprep.subr.bf16.mxu0 0
    %6954 = vmatpush1.bf16.msra.mxu0 0
    %6955 = vmatprep.subr.bf16.mxu0 0
    %6956 = vmatpush1.bf16.msra.mxu0 0
    %6957 = vmatprep.mubr.bf16.mxu0 0
    %6958 = vmatmul.mubr.bf16.gmra.mrb[0].mxu0 %v6923
    %v6959 = vpop.f32.mrb[0].mxu0
    %v6960 = vadd.f32 %v172, %v6959
    %v6961 = vpop.f32.mrb[0].mxu0
    %v6962 = vpop.f32.mrb[0].mxu0
    %v6963 = vpop.f32.mrb[0].mxu0
    %6964 = vdwg.mxu0
    %v6965 = vstv %s6826
    %v6966 = vmul.f32 %v6965, %v6960
    %v6967 = vadd.f32 %v6870, %v6966
    %v6968 = vmax.f32 %v6967, 0.0
    %v6969 = vpack.c.bf16 %v6968, %v6968
    %v6971 = vsel %vm259, %v6969, 0
    %6973 = vmatprep.subr.bf16.mxu0 0
    %6974 = vmatpush1.bf16.msra.mxu0 %v438
    %6975 = vmatprep.subr.bf16.mxu0 0
    %6976 = vmatpush1.bf16.msra.mxu0 %v439
    %6977 = vmatprep.subr.bf16.mxu0 0
    %6978 = vmatpush1.bf16.msra.mxu0 0
    %6979 = vmatprep.subr.bf16.mxu0 0
    %6980 = vmatpush1.bf16.msra.mxu0 0
    %6981 = vmatprep.subr.bf16.mxu0 0
    %6982 = vmatpush1.bf16.msra.mxu0 0
    %6983 = vmatprep.subr.bf16.mxu0 0
    %6984 = vmatpush1.bf16.msra.mxu0 0
    %6985 = vmatprep.subr.bf16.mxu0 0
    %6986 = vmatpush1.bf16.msra.mxu0 0
    %6987 = vmatprep.subr.bf16.mxu0 0
    %6988 = vmatpush1.bf16.msra.mxu0 0
    %6989 = vmatprep.subr.bf16.mxu0 0
    %6990 = vmatpush1.bf16.msra.mxu0 0
    %6991 = vmatprep.subr.bf16.mxu0 0
    %6992 = vmatpush1.bf16.msra.mxu0 0
    %6993 = vmatprep.subr.bf16.mxu0 0
    %6994 = vmatpush1.bf16.msra.mxu0 0
    %6995 = vmatprep.subr.bf16.mxu0 0
    %6996 = vmatpush1.bf16.msra.mxu0 0
    %6997 = vmatprep.subr.bf16.mxu0 0
    %6998 = vmatpush1.bf16.msra.mxu0 0
    %6999 = vmatprep.subr.bf16.mxu0 0
    %7000 = vmatpush1.bf16.msra.mxu0 0
    %7001 = vmatprep.subr.bf16.mxu0 0
    %7002 = vmatpush1.bf16.msra.mxu0 0
    %7003 = vmatprep.subr.bf16.mxu0 0
    %7004 = vmatpush1.bf16.msra.mxu0 0
    %7005 = vmatprep.mubr.bf16.mxu0 0
    %7006 = vmatmul.mubr.bf16.gmra.mrb[0].mxu0 %v6971
    %v7007 = vpop.f32.mrb[0].mxu0
    %v7008 = vadd.f32 %v158, %v7007
    %v7009 = vpop.f32.mrb[0].mxu0
    %v7010 = vpop.f32.mrb[0].mxu0
    %v7011 = vpop.f32.mrb[0].mxu0
    %7012 = vdwg.mxu0
    %v7013 = vmax.f32 %v7008, 0.0
    %v7014 = vpack.c.bf16 %v7013, %v7013
    %v7016 = vsel %vm259, %v7014, 0
    %7018 = vmatprep.subr.bf16.mxu0 0
    %7019 = vmatpush1.bf16.msra.mxu0 %v495
    %7020 = vmatprep.subr.bf16.mxu0 0
    %7021 = vmatpush1.bf16.msra.mxu0 %v496
    %7022 = vmatprep.subr.bf16.mxu0 0
    %7023 = vmatpush1.bf16.msra.mxu0 0
    %7024 = vmatprep.subr.bf16.mxu0 0
    %7025 = vmatpush1.bf16.msra.mxu0 0
    %7026 = vmatprep.subr.bf16.mxu0 0
    %7027 = vmatpush1.bf16.msra.mxu0 0
    %7028 = vmatprep.subr.bf16.mxu0 0
    %7029 = vmatpush1.bf16.msra.mxu0 0
    %7030 = vmatprep.subr.bf16.mxu0 0
    %7031 = vmatpush1.bf16.msra.mxu0 0
    %7032 = vmatprep.subr.bf16.mxu0 0
    %7033 = vmatpush1.bf16.msra.mxu0 0
    %7034 = vmatprep.subr.bf16.mxu0 0
    %7035 = vmatpush1.bf16.msra.mxu0 0
    %7036 = vmatprep.subr.bf16.mxu0 0
    %7037 = vmatpush1.bf16.msra.mxu0 0
    %7038 = vmatprep.subr.bf16.mxu0 0
    %7039 = vmatpush1.bf16.msra.mxu0 0
    %7040 = vmatprep.subr.bf16.mxu0 0
    %7041 = vmatpush1.bf16.msra.mxu0 0
    %7042 = vmatprep.subr.bf16.mxu0 0
    %7043 = vmatpush1.bf16.msra.mxu0 0
    %7044 = vmatprep.subr.bf16.mxu0 0
    %7045 = vmatpush1.bf16.msra.mxu0 0
    %7046 = vmatprep.subr.bf16.mxu0 0
    %7047 = vmatpush1.bf16.msra.mxu0 0
    %7048 = vmatprep.subr.bf16.mxu0 0
    %7049 = vmatpush1.bf16.msra.mxu0 0
    %7050 = vmatprep.mubr.bf16.mxu0 0
    %7051 = vmatmul.mubr.bf16.gmra.mrb[0].mxu0 %v7016
    %v7052 = vpop.f32.mrb[0].mxu0
    %v7053 = vadd.f32 %v172, %v7052
    %v7054 = vpop.f32.mrb[0].mxu0
    %v7055 = vpop.f32.mrb[0].mxu0
    %v7056 = vpop.f32.mrb[0].mxu0
    %7057 = vdwg.mxu0
    %v7058 = vmul.f32 %v6965, %v7053
    %v7059 = vadd.f32 %v6870, %v7058
    %v7060 = vmax.f32 %v7059, 0.0
    %v7061 = vpack.c.bf16 %v7060, %v7060
    %v7063 = vsel %vm259, %v7061, 0
    %7065 = vmatprep.subr.bf16.mxu0 0
    %7066 = vmatpush1.bf16.msra.mxu0 %v438
    %7067 = vmatprep.subr.bf16.mxu0 0
    %7068 = vmatpush1.bf16.msra.mxu0 %v439
    %7069 = vmatprep.subr.bf16.mxu0 0
    %7070 = vmatpush1.bf16.msra.mxu0 0
    %7071 = vmatprep.subr.bf16.mxu0 0
    %7072 = vmatpush1.bf16.msra.mxu0 0
    %7073 = vmatprep.subr.bf16.mxu0 0
    %7074 = vmatpush1.bf16.msra.mxu0 0
    %7075 = vmatprep.subr.bf16.mxu0 0
    %7076 = vmatpush1.bf16.msra.mxu0 0
    %7077 = vmatprep.subr.bf16.mxu0 0
    %7078 = vmatpush1.bf16.msra.mxu0 0
    %7079 = vmatprep.subr.bf16.mxu0 0
    %7080 = vmatpush1.bf16.msra.mxu0 0
    %7081 = vmatprep.subr.bf16.mxu0 0
    %7082 = vmatpush1.bf16.msra.mxu0 0
    %7083 = vmatprep.subr.bf16.mxu0 0
    %7084 = vmatpush1.bf16.msra.mxu0 0
    %7085 = vmatprep.subr.bf16.mxu0 0
    %7086 = vmatpush1.bf16.msra.mxu0 0
    %7087 = vmatprep.subr.bf16.mxu0 0
    %7088 = vmatpush1.bf16.msra.mxu0 0
    %7089 = vmatprep.subr.bf16.mxu0 0
    %7090 = vmatpush1.bf16.msra.mxu0 0
    %7091 = vmatprep.subr.bf16.mxu0 0
    %7092 = vmatpush1.bf16.msra.mxu0 0
    %7093 = vmatprep.subr.bf16.mxu0 0
    %7094 = vmatpush1.bf16.msra.mxu0 0
    %7095 = vmatprep.subr.bf16.mxu0 0
    %7096 = vmatpush1.bf16.msra.mxu0 0
    %7097 = vmatprep.mubr.bf16.mxu0 0
    %7098 = vmatmul.mubr.bf16.gmra.mrb[0].mxu0 %v7063
    %v7099 = vpop.f32.mrb[0].mxu0
    %v7100 = vadd.f32 %v158, %v7099
    %v7101 = vpop.f32.mrb[0].mxu0
    %v7102 = vpop.f32.mrb[0].mxu0
    %v7103 = vpop.f32.mrb[0].mxu0
    %7104 = vdwg.mxu0
    %v7105 = vmax.f32 %v7100, 0.0
    %v7106 = vpack.c.bf16 %v7105, %v7105
    %v7108 = vsel %vm259, %v7106, 0
    %7110 = vmatprep.subr.bf16.mxu0 0
    %7111 = vmatpush1.bf16.msra.mxu0 %v495
    %7112 = vmatprep.subr.bf16.mxu0 0
    %7113 = vmatpush1.bf16.msra.mxu0 %v496
    %7114 = vmatprep.subr.bf16.mxu0 0
    %7115 = vmatpush1.bf16.msra.mxu0 0
    %7116 = vmatprep.subr.bf16.mxu0 0
    %7117 = vmatpush1.bf16.msra.mxu0 0
    %7118 = vmatprep.subr.bf16.mxu0 0
    %7119 = vmatpush1.bf16.msra.mxu0 0
    %7120 = vmatprep.subr.bf16.mxu0 0
    %7121 = vmatpush1.bf16.msra.mxu0 0
    %7122 = vmatprep.subr.bf16.mxu0 0
    %7123 = vmatpush1.bf16.msra.mxu0 0
    %7124 = vmatprep.subr.bf16.mxu0 0
    %7125 = vmatpush1.bf16.msra.mxu0 0
    %7126 = vmatprep.subr.bf16.mxu0 0
    %7127 = vmatpush1.bf16.msra.mxu0 0
    %7128 = vmatprep.subr.bf16.mxu0 0
    %7129 = vmatpush1.bf16.msra.mxu0 0
    %7130 = vmatprep.subr.bf16.mxu0 0
    %7131 = vmatpush1.bf16.msra.mxu0 0
    %7132 = vmatprep.subr.bf16.mxu0 0
    %7133 = vmatpush1.bf16.msra.mxu0 0
    %7134 = vmatprep.subr.bf16.mxu0 0
    %7135 = vmatpush1.bf16.msra.mxu0 0
    %7136 = vmatprep.subr.bf16.mxu0 0
    %7137 = vmatpush1.bf16.msra.mxu0 0
    %7138 = vmatprep.subr.bf16.mxu0 0
    %7139 = vmatpush1.bf16.msra.mxu0 0
    %7140 = vmatprep.subr.bf16.mxu0 0
    %7141 = vmatpush1.bf16.msra.mxu0 0
    %7142 = vmatprep.mubr.bf16.mxu0 0
    %7143 = vmatmul.mubr.bf16.gmra.mrb[0].mxu0 %v7108
    %v7144 = vpop.f32.mrb[0].mxu0
    %v7145 = vadd.f32 %v172, %v7144
    %v7146 = vpop.f32.mrb[0].mxu0
    %v7147 = vpop.f32.mrb[0].mxu0
    %v7148 = vpop.f32.mrb[0].mxu0
    %7149 = vdwg.mxu0
    %v7150 = vstv %s6825
    %v7151 = vmul.f32 %v7150, %v7145
    %v7152 = vadd.f32 %v6870, %v7151
    %v7153 = vmax.f32 %v7152, 0.0
    %v7154 = vpack.c.bf16 %v7153, %v7153
    %v7156 = vsel %vm259, %v7154, 0
    %7158 = vmatprep.subr.bf16.mxu0 0
    %7159 = vmatpush1.bf16.msra.mxu0 %v438
    %7160 = vmatprep.subr.bf16.mxu0 0
    %7161 = vmatpush1.bf16.msra.mxu0 %v439
    %7162 = vmatprep.subr.bf16.mxu0 0
    %7163 = vmatpush1.bf16.msra.mxu0 0
    %7164 = vmatprep.subr.bf16.mxu0 0
    %7165 = vmatpush1.bf16.msra.mxu0 0
    %7166 = vmatprep.subr.bf16.mxu0 0
    %7167 = vmatpush1.bf16.msra.mxu0 0
    %7168 = vmatprep.subr.bf16.mxu0 0
    %7169 = vmatpush1.bf16.msra.mxu0 0
    %7170 = vmatprep.subr.bf16.mxu0 0
    %7171 = vmatpush1.bf16.msra.mxu0 0
    %7172 = vmatprep.subr.bf16.mxu0 0
    %7173 = vmatpush1.bf16.msra.mxu0 0
    %7174 = vmatprep.subr.bf16.mxu0 0
    %7175 = vmatpush1.bf16.msra.mxu0 0
    %7176 = vmatprep.subr.bf16.mxu0 0
    %7177 = vmatpush1.bf16.msra.mxu0 0
    %7178 = vmatprep.subr.bf16.mxu0 0
    %7179 = vmatpush1.bf16.msra.mxu0 0
    %7180 = vmatprep.subr.bf16.mxu0 0
    %7181 = vmatpush1.bf16.msra.mxu0 0
    %7182 = vmatprep.subr.bf16.mxu0 0
    %7183 = vmatpush1.bf16.msra.mxu0 0
    %7184 = vmatprep.subr.bf16.mxu0 0
    %7185 = vmatpush1.bf16.msra.mxu0 0
    %7186 = vmatprep.subr.bf16.mxu0 0
    %7187 = vmatpush1.bf16.msra.mxu0 0
    %7188 = vmatprep.subr.bf16.mxu0 0
    %7189 = vmatpush1.bf16.msra.mxu0 0
    %7190 = vmatprep.mubr.bf16.mxu0 0
    %7191 = vmatmul.mubr.bf16.gmra.mrb[0].mxu0 %v7156
    %v7192 = vpop.f32.mrb[0].mxu0
    %v7193 = vadd.f32 %v158, %v7192
    %v7194 = vpop.f32.mrb[0].mxu0
    %v7195 = vpop.f32.mrb[0].mxu0
    %v7196 = vpop.f32.mrb[0].mxu0
    %7197 = vdwg.mxu0
    %v7198 = vmax.f32 %v7193, 0.0
    %v7199 = vadd.f32 %v7013, %v7105
    %v7200 = vmul.f32 %v7199, 2.0
    %v7201 = vadd.f32 %v6920, %v7200
    %v7202 = vadd.f32 %v7201, %v7198
    %v7203 = vpack.c.bf16 %v7202, %v7202
    %v7205 = vsel %vm259, %v7203, 0
    %7207 = vmatprep.subr.bf16.mxu0 0
    %7208 = vmatpush1.bf16.msra.mxu0 %v789
    %7209 = vmatprep.subr.bf16.mxu0 0
    %7210 = vmatpush1.bf16.msra.mxu0 %v790
    %7211 = vmatprep.subr.bf16.mxu0 0
    %7212 = vmatpush1.bf16.msra.mxu0 0
    %7213 = vmatprep.subr.bf16.mxu0 0
    %7214 = vmatpush1.bf16.msra.mxu0 0
    %7215 = vmatprep.subr.bf16.mxu0 0
    %7216 = vmatpush1.bf16.msra.mxu0 0
    %7217 = vmatprep.subr.bf16.mxu0 0
    %7218 = vmatpush1.bf16.msra.mxu0 0
    %7219 = vmatprep.subr.bf16.mxu0 0
    %7220 = vmatpush1.bf16.msra.mxu0 0
    %7221 = vmatprep.subr.bf16.mxu0 0
    %7222 = vmatpush1.bf16.msra.mxu0 0
    %7223 = vmatprep.subr.bf16.mxu0 0
    %7224 = vmatpush1.bf16.msra.mxu0 0
    %7225 = vmatprep.subr.bf16.mxu0 0
    %7226 = vmatpush1.bf16.msra.mxu0 0
    %7227 = vmatprep.subr.bf16.mxu0 0
    %7228 = vmatpush1.bf16.msra.mxu0 0
    %7229 = vmatprep.subr.bf16.mxu0 0
    %7230 = vmatpush1.bf16.msra.mxu0 0
    %7231 = vmatprep.subr.bf16.mxu0 0
    %7232 = vmatpush1.bf16.msra.mxu0 0
    %7233 = vmatprep.subr.bf16.mxu0 0
    %7234 = vmatpush1.bf16.msra.mxu0 0
    %7235 = vmatprep.subr.bf16.mxu0 0
    %7236 = vmatpush1.bf16.msra.mxu0 0
    %7237 = vmatprep.subr.bf16.mxu0 0
    %7238 = vmatpush1.bf16.msra.mxu0 0
    %7239 = vmatprep.mubr.bf16.mxu0 0
    %7240 = vmatmul.mubr.bf16.gmra.mrb[0].mxu0 %v7205
    %v7241 = vpop.f32.mrb[0].mxu0
    %v7242 = vadd.f32 0.0, %v7241
    %v7243 = vpop.f32.mrb[0].mxu0
    %v7244 = vpop.f32.mrb[0].mxu0
    %v7245 = vpop.f32.mrb[0].mxu0
    %7246 = vdwg.mxu0
    %v7247 = vstv %s6827
    %v7248 = vmul.f32 %v7247, %v7242
    %7250 = vrot.lane.b32.xlu0 %v7248, 32
    %v7251 = vpop.permute.xlu0 %7250
    %v7253 = vadd.f32 %v6818, %v7251
    %v7254 = vmul.f32 %v7150, %v165
    %7256 = vrot.lane.b32.xlu0 %v7254, 32
    %v7257 = vpop.permute.xlu0 %7256
    %v7259 = vadd.f32 %v7253, %v7257
    %v7260 = vpack.c.bf16 %v7259, %v7259
    %7262 = vrot.lane.b32.xlu0 %v7260, 96
    %v7263 = vpop.permute.xlu0 %7262
    %v7265 = vsel %vm259, %v7263, 0
    %7267 = vmatprep.subr.bf16.mxu0 0
    %7268 = vmatpush1.bf16.msra.mxu0 %v381
    %7269 = vmatprep.subr.bf16.mxu0 0
    %7270 = vmatpush1.bf16.msra.mxu0 %v382
    %7271 = vmatprep.subr.bf16.mxu0 0
    %7272 = vmatpush1.bf16.msra.mxu0 0
    %7273 = vmatprep.subr.bf16.mxu0 0
    %7274 = vmatpush1.bf16.msra.mxu0 0
    %7275 = vmatprep.subr.bf16.mxu0 0
    %7276 = vmatpush1.bf16.msra.mxu0 0
    %7277 = vmatprep.subr.bf16.mxu0 0
    %7278 = vmatpush1.bf16.msra.mxu0 0
    %7279 = vmatprep.subr.bf16.mxu0 0
    %7280 = vmatpush1.bf16.msra.mxu0 0
    %7281 = vmatprep.subr.bf16.mxu0 0
    %7282 = vmatpush1.bf16.msra.mxu0 0
    %7283 = vmatprep.subr.bf16.mxu0 0
    %7284 = vmatpush1.bf16.msra.mxu0 0
    %7285 = vmatprep.subr.bf16.mxu0 0
    %7286 = vmatpush1.bf16.msra.mxu0 0
    %7287 = vmatprep.subr.bf16.mxu0 0
    %7288 = vmatpush1.bf16.msra.mxu0 0
    %7289 = vmatprep.subr.bf16.mxu0 0
    %7290 = vmatpush1.bf16.msra.mxu0 0
    %7291 = vmatprep.subr.bf16.mxu0 0
    %7292 = vmatpush1.bf16.msra.mxu0 0
    %7293 = vmatprep.subr.bf16.mxu0 0
    %7294 = vmatpush1.bf16.msra.mxu0 0
    %7295 = vmatprep.subr.bf16.mxu0 0
    %7296 = vmatpush1.bf16.msra.mxu0 0
    %7297 = vmatprep.subr.bf16.mxu0 0
    %7298 = vmatpush1.bf16.msra.mxu0 0
    %7299 = vmatprep.mubr.bf16.mxu0 0
    %7300 = vmatmul.mubr.bf16.gmra.mrb[0].mxu0 %v7265
    %v7301 = vpop.f32.mrb[0].mxu0
    %v7302 = vadd.f32 %v151, %v7301
    %v7303 = vpop.f32.mrb[0].mxu0
    %v7304 = vpop.f32.mrb[0].mxu0
    %v7305 = vpop.f32.mrb[0].mxu0
    %7306 = vdwg.mxu0
    %v7307 = vmax.f32 %v7302, 0.0
    %v7308 = vpack.c.bf16 %v7307, %v7307
    %v7310 = vsel %vm259, %v7308, 0
    %7312 = vmatprep.subr.bf16.mxu0 0
    %7313 = vmatpush1.bf16.msra.mxu0 %v438
    %7314 = vmatprep.subr.bf16.mxu0 0
    %7315 = vmatpush1.bf16.msra.mxu0 %v439
    %7316 = vmatprep.subr.bf16.mxu0 0
    %7317 = vmatpush1.bf16.msra.mxu0 0
    %7318 = vmatprep.subr.bf16.mxu0 0
    %7319 = vmatpush1.bf16.msra.mxu0 0
    %7320 = vmatprep.subr.bf16.mxu0 0
    %7321 = vmatpush1.bf16.msra.mxu0 0
    %7322 = vmatprep.subr.bf16.mxu0 0
    %7323 = vmatpush1.bf16.msra.mxu0 0
    %7324 = vmatprep.subr.bf16.mxu0 0
    %7325 = vmatpush1.bf16.msra.mxu0 0
    %7326 = vmatprep.subr.bf16.mxu0 0
    %7327 = vmatpush1.bf16.msra.mxu0 0
    %7328 = vmatprep.subr.bf16.mxu0 0
    %7329 = vmatpush1.bf16.msra.mxu0 0
    %7330 = vmatprep.subr.bf16.mxu0 0
    %7331 = vmatpush1.bf16.msra.mxu0 0
    %7332 = vmatprep.subr.bf16.mxu0 0
    %7333 = vmatpush1.bf16.msra.mxu0 0
    %7334 = vmatprep.subr.bf16.mxu0 0
    %7335 = vmatpush1.bf16.msra.mxu0 0
    %7336 = vmatprep.subr.bf16.mxu0 0
    %7337 = vmatpush1.bf16.msra.mxu0 0
    %7338 = vmatprep.subr.bf16.mxu0 0
    %7339 = vmatpush1.bf16.msra.mxu0 0
    %7340 = vmatprep.subr.bf16.mxu0 0
    %7341 = vmatpush1.bf16.msra.mxu0 0
    %7342 = vmatprep.subr.bf16.mxu0 0
    %7343 = vmatpush1.bf16.msra.mxu0 0
    %7344 = vmatprep.mubr.bf16.mxu0 0
    %7345 = vmatmul.mubr.bf16.gmra.mrb[0].mxu0 %v7310
    %v7346 = vpop.f32.mrb[0].mxu0
    %v7347 = vadd.f32 %v158, %v7346
    %v7348 = vpop.f32.mrb[0].mxu0
    %v7349 = vpop.f32.mrb[0].mxu0
    %v7350 = vpop.f32.mrb[0].mxu0
    %7351 = vdwg.mxu0
    %v7352 = vmax.f32 %v7347, 0.0
    %v7353 = vpack.c.bf16 %v7352, %v7352
    %v7355 = vsel %vm259, %v7353, 0
    %7357 = vmatprep.subr.bf16.mxu0 0
    %7358 = vmatpush1.bf16.msra.mxu0 %v495
    %7359 = vmatprep.subr.bf16.mxu0 0
    %7360 = vmatpush1.bf16.msra.mxu0 %v496
    %7361 = vmatprep.subr.bf16.mxu0 0
    %7362 = vmatpush1.bf16.msra.mxu0 0
    %7363 = vmatprep.subr.bf16.mxu0 0
    %7364 = vmatpush1.bf16.msra.mxu0 0
    %7365 = vmatprep.subr.bf16.mxu0 0
    %7366 = vmatpush1.bf16.msra.mxu0 0
    %7367 = vmatprep.subr.bf16.mxu0 0
    %7368 = vmatpush1.bf16.msra.mxu0 0
    %7369 = vmatprep.subr.bf16.mxu0 0
    %7370 = vmatpush1.bf16.msra.mxu0 0
    %7371 = vmatprep.subr.bf16.mxu0 0
    %7372 = vmatpush1.bf16.msra.mxu0 0
    %7373 = vmatprep.subr.bf16.mxu0 0
    %7374 = vmatpush1.bf16.msra.mxu0 0
    %7375 = vmatprep.subr.bf16.mxu0 0
    %7376 = vmatpush1.bf16.msra.mxu0 0
    %7377 = vmatprep.subr.bf16.mxu0 0
    %7378 = vmatpush1.bf16.msra.mxu0 0
    %7379 = vmatprep.subr.bf16.mxu0 0
    %7380 = vmatpush1.bf16.msra.mxu0 0
    %7381 = vmatprep.subr.bf16.mxu0 0
    %7382 = vmatpush1.bf16.msra.mxu0 0
    %7383 = vmatprep.subr.bf16.mxu0 0
    %7384 = vmatpush1.bf16.msra.mxu0 0
    %7385 = vmatprep.subr.bf16.mxu0 0
    %7386 = vmatpush1.bf16.msra.mxu0 0
    %7387 = vmatprep.subr.bf16.mxu0 0
    %7388 = vmatpush1.bf16.msra.mxu0 0
    %7389 = vmatprep.mubr.bf16.mxu0 0
    %7390 = vmatmul.mubr.bf16.gmra.mrb[0].mxu0 %v7355
    %v7391 = vpop.f32.mrb[0].mxu0
    %v7392 = vadd.f32 %v172, %v7391
    %v7393 = vpop.f32.mrb[0].mxu0
    %v7394 = vpop.f32.mrb[0].mxu0
    %v7395 = vpop.f32.mrb[0].mxu0
    %7396 = vdwg.mxu0
    %v7397 = vmul.f32 %v6965, %v7392
    %v7398 = vadd.f32 %v7302, %v7397
    %v7399 = vmax.f32 %v7398, 0.0
    %v7400 = vpack.c.bf16 %v7399, %v7399
    %v7402 = vsel %vm259, %v7400, 0
    %7404 = vmatprep.subr.bf16.mxu0 0
    %7405 = vmatpush1.bf16.msra.mxu0 %v438
    %7406 = vmatprep.subr.bf16.mxu0 0
    %7407 = vmatpush1.bf16.msra.mxu0 %v439
    %7408 = vmatprep.subr.bf16.mxu0 0
    %7409 = vmatpush1.bf16.msra.mxu0 0
    %7410 = vmatprep.subr.bf16.mxu0 0
    %7411 = vmatpush1.bf16.msra.mxu0 0
    %7412 = vmatprep.subr.bf16.mxu0 0
    %7413 = vmatpush1.bf16.msra.mxu0 0
    %7414 = vmatprep.subr.bf16.mxu0 0
    %7415 = vmatpush1.bf16.msra.mxu0 0
    %7416 = vmatprep.subr.bf16.mxu0 0
    %7417 = vmatpush1.bf16.msra.mxu0 0
    %7418 = vmatprep.subr.bf16.mxu0 0
    %7419 = vmatpush1.bf16.msra.mxu0 0
    %7420 = vmatprep.subr.bf16.mxu0 0
    %7421 = vmatpush1.bf16.msra.mxu0 0
    %7422 = vmatprep.subr.bf16.mxu0 0
    %7423 = vmatpush1.bf16.msra.mxu0 0
    %7424 = vmatprep.subr.bf16.mxu0 0
    %7425 = vmatpush1.bf16.msra.mxu0 0
    %7426 = vmatprep.subr.bf16.mxu0 0
    %7427 = vmatpush1.bf16.msra.mxu0 0
    %7428 = vmatprep.subr.bf16.mxu0 0
    %7429 = vmatpush1.bf16.msra.mxu0 0
    %7430 = vmatprep.subr.bf16.mxu0 0
    %7431 = vmatpush1.bf16.msra.mxu0 0
    %7432 = vmatprep.subr.bf16.mxu0 0
    %7433 = vmatpush1.bf16.msra.mxu0 0
    %7434 = vmatprep.subr.bf16.mxu0 0
    %7435 = vmatpush1.bf16.msra.mxu0 0
    %7436 = vmatprep.mubr.bf16.mxu0 0
    %7437 = vmatmul.mubr.bf16.gmra.mrb[0].mxu0 %v7402
    %v7438 = vpop.f32.mrb[0].mxu0
    %v7439 = vadd.f32 %v158, %v7438
    %v7440 = vpop.f32.mrb[0].mxu0
    %v7441 = vpop.f32.mrb[0].mxu0
    %v7442 = vpop.f32.mrb[0].mxu0
    %7443 = vdwg.mxu0
    %v7444 = vmax.f32 %v7439, 0.0
    %v7445 = vpack.c.bf16 %v7444, %v7444
    %v7447 = vsel %vm259, %v7445, 0
    %7449 = vmatprep.subr.bf16.mxu0 0
    %7450 = vmatpush1.bf16.msra.mxu0 %v495
    %7451 = vmatprep.subr.bf16.mxu0 0
    %7452 = vmatpush1.bf16.msra.mxu0 %v496
    %7453 = vmatprep.subr.bf16.mxu0 0
    %7454 = vmatpush1.bf16.msra.mxu0 0
    %7455 = vmatprep.subr.bf16.mxu0 0
    %7456 = vmatpush1.bf16.msra.mxu0 0
    %7457 = vmatprep.subr.bf16.mxu0 0
    %7458 = vmatpush1.bf16.msra.mxu0 0
    %7459 = vmatprep.subr.bf16.mxu0 0
    %7460 = vmatpush1.bf16.msra.mxu0 0
    %7461 = vmatprep.subr.bf16.mxu0 0
    %7462 = vmatpush1.bf16.msra.mxu0 0
    %7463 = vmatprep.subr.bf16.mxu0 0
    %7464 = vmatpush1.bf16.msra.mxu0 0
    %7465 = vmatprep.subr.bf16.mxu0 0
    %7466 = vmatpush1.bf16.msra.mxu0 0
    %7467 = vmatprep.subr.bf16.mxu0 0
    %7468 = vmatpush1.bf16.msra.mxu0 0
    %7469 = vmatprep.subr.bf16.mxu0 0
    %7470 = vmatpush1.bf16.msra.mxu0 0
    %7471 = vmatprep.subr.bf16.mxu0 0
    %7472 = vmatpush1.bf16.msra.mxu0 0
    %7473 = vmatprep.subr.bf16.mxu0 0
    %7474 = vmatpush1.bf16.msra.mxu0 0
    %7475 = vmatprep.subr.bf16.mxu0 0
    %7476 = vmatpush1.bf16.msra.mxu0 0
    %7477 = vmatprep.subr.bf16.mxu0 0
    %7478 = vmatpush1.bf16.msra.mxu0 0
    %7479 = vmatprep.subr.bf16.mxu0 0
    %7480 = vmatpush1.bf16.msra.mxu0 0
    %7481 = vmatprep.mubr.bf16.mxu0 0
    %7482 = vmatmul.mubr.bf16.gmra.mrb[0].mxu0 %v7447
    %v7483 = vpop.f32.mrb[0].mxu0
    %v7484 = vadd.f32 %v172, %v7483
    %v7485 = vpop.f32.mrb[0].mxu0
    %v7486 = vpop.f32.mrb[0].mxu0
    %v7487 = vpop.f32.mrb[0].mxu0
    %7488 = vdwg.mxu0
    %v7489 = vmul.f32 %v6965, %v7484
    %v7490 = vadd.f32 %v7302, %v7489
    %v7491 = vmax.f32 %v7490, 0.0
    %v7492 = vpack.c.bf16 %v7491, %v7491
    %v7494 = vsel %vm259, %v7492, 0
    %7496 = vmatprep.subr.bf16.mxu0 0
    %7497 = vmatpush1.bf16.msra.mxu0 %v438
    %7498 = vmatprep.subr.bf16.mxu0 0
    %7499 = vmatpush1.bf16.msra.mxu0 %v439
    %7500 = vmatprep.subr.bf16.mxu0 0
    %7501 = vmatpush1.bf16.msra.mxu0 0
    %7502 = vmatprep.subr.bf16.mxu0 0
    %7503 = vmatpush1.bf16.msra.mxu0 0
    %7504 = vmatprep.subr.bf16.mxu0 0
    %7505 = vmatpush1.bf16.msra.mxu0 0
    %7506 = vmatprep.subr.bf16.mxu0 0
    %7507 = vmatpush1.bf16.msra.mxu0 0
    %7508 = vmatprep.subr.bf16.mxu0 0
    %7509 = vmatpush1.bf16.msra.mxu0 0
    %7510 = vmatprep.subr.bf16.mxu0 0
    %7511 = vmatpush1.bf16.msra.mxu0 0
    %7512 = vmatprep.subr.bf16.mxu0 0
    %7513 = vmatpush1.bf16.msra.mxu0 0
    %7514 = vmatprep.subr.bf16.mxu0 0
    %7515 = vmatpush1.bf16.msra.mxu0 0
    %7516 = vmatprep.subr.bf16.mxu0 0
    %7517 = vmatpush1.bf16.msra.mxu0 0
    %7518 = vmatprep.subr.bf16.mxu0 0
    %7519 = vmatpush1.bf16.msra.mxu0 0
    %7520 = vmatprep.subr.bf16.mxu0 0
    %7521 = vmatpush1.bf16.msra.mxu0 0
    %7522 = vmatprep.subr.bf16.mxu0 0
    %7523 = vmatpush1.bf16.msra.mxu0 0
    %7524 = vmatprep.subr.bf16.mxu0 0
    %7525 = vmatpush1.bf16.msra.mxu0 0
    %7526 = vmatprep.subr.bf16.mxu0 0
    %7527 = vmatpush1.bf16.msra.mxu0 0
    %7528 = vmatprep.mubr.bf16.mxu0 0
    %7529 = vmatmul.mubr.bf16.gmra.mrb[0].mxu0 %v7494
    %v7530 = vpop.f32.mrb[0].mxu0
    %v7531 = vadd.f32 %v158, %v7530
    %v7532 = vpop.f32.mrb[0].mxu0
    %v7533 = vpop.f32.mrb[0].mxu0
    %v7534 = vpop.f32.mrb[0].mxu0
    %7535 = vdwg.mxu0
    %v7536 = vmax.f32 %v7531, 0.0
    %v7537 = vpack.c.bf16 %v7536, %v7536
    %v7539 = vsel %vm259, %v7537, 0
    %7541 = vmatprep.subr.bf16.mxu0 0
    %7542 = vmatpush1.bf16.msra.mxu0 %v495
    %7543 = vmatprep.subr.bf16.mxu0 0
    %7544 = vmatpush1.bf16.msra.mxu0 %v496
    %7545 = vmatprep.subr.bf16.mxu0 0
    %7546 = vmatpush1.bf16.msra.mxu0 0
    %7547 = vmatprep.subr.bf16.mxu0 0
    %7548 = vmatpush1.bf16.msra.mxu0 0
    %7549 = vmatprep.subr.bf16.mxu0 0
    %7550 = vmatpush1.bf16.msra.mxu0 0
    %7551 = vmatprep.subr.bf16.mxu0 0
    %7552 = vmatpush1.bf16.msra.mxu0 0
    %7553 = vmatprep.subr.bf16.mxu0 0
    %7554 = vmatpush1.bf16.msra.mxu0 0
    %7555 = vmatprep.subr.bf16.mxu0 0
    %7556 = vmatpush1.bf16.msra.mxu0 0
    %7557 = vmatprep.subr.bf16.mxu0 0
    %7558 = vmatpush1.bf16.msra.mxu0 0
    %7559 = vmatprep.subr.bf16.mxu0 0
    %7560 = vmatpush1.bf16.msra.mxu0 0
    %7561 = vmatprep.subr.bf16.mxu0 0
    %7562 = vmatpush1.bf16.msra.mxu0 0
    %7563 = vmatprep.subr.bf16.mxu0 0
    %7564 = vmatpush1.bf16.msra.mxu0 0
    %7565 = vmatprep.subr.bf16.mxu0 0
    %7566 = vmatpush1.bf16.msra.mxu0 0
    %7567 = vmatprep.subr.bf16.mxu0 0
    %7568 = vmatpush1.bf16.msra.mxu0 0
    %7569 = vmatprep.subr.bf16.mxu0 0
    %7570 = vmatpush1.bf16.msra.mxu0 0
    %7571 = vmatprep.subr.bf16.mxu0 0
    %7572 = vmatpush1.bf16.msra.mxu0 0
    %7573 = vmatprep.mubr.bf16.mxu0 0
    %7574 = vmatmul.mubr.bf16.gmra.mrb[0].mxu0 %v7539
    %v7575 = vpop.f32.mrb[0].mxu0
    %v7576 = vadd.f32 %v172, %v7575
    %v7577 = vpop.f32.mrb[0].mxu0
    %v7578 = vpop.f32.mrb[0].mxu0
    %v7579 = vpop.f32.mrb[0].mxu0
    %7580 = vdwg.mxu0
    %v7581 = vmul.f32 %v7150, %v7576
    %v7582 = vadd.f32 %v7302, %v7581
    %v7583 = vmax.f32 %v7582, 0.0
    %v7584 = vpack.c.bf16 %v7583, %v7583
    %v7586 = vsel %vm259, %v7584, 0
    %7588 = vmatprep.subr.bf16.mxu0 0
    %7589 = vmatpush1.bf16.msra.mxu0 %v438
    %7590 = vmatprep.subr.bf16.mxu0 0
    %7591 = vmatpush1.bf16.msra.mxu0 %v439
    %7592 = vmatprep.subr.bf16.mxu0 0
    %7593 = vmatpush1.bf16.msra.mxu0 0
    %7594 = vmatprep.subr.bf16.mxu0 0
    %7595 = vmatpush1.bf16.msra.mxu0 0
    %7596 = vmatprep.subr.bf16.mxu0 0
    %7597 = vmatpush1.bf16.msra.mxu0 0
    %7598 = vmatprep.subr.bf16.mxu0 0
    %7599 = vmatpush1.bf16.msra.mxu0 0
    %7600 = vmatprep.subr.bf16.mxu0 0
    %7601 = vmatpush1.bf16.msra.mxu0 0
    %7602 = vmatprep.subr.bf16.mxu0 0
    %7603 = vmatpush1.bf16.msra.mxu0 0
    %7604 = vmatprep.subr.bf16.mxu0 0
    %7605 = vmatpush1.bf16.msra.mxu0 0
    %7606 = vmatprep.subr.bf16.mxu0 0
    %7607 = vmatpush1.bf16.msra.mxu0 0
    %7608 = vmatprep.subr.bf16.mxu0 0
    %7609 = vmatpush1.bf16.msra.mxu0 0
    %7610 = vmatprep.subr.bf16.mxu0 0
    %7611 = vmatpush1.bf16.msra.mxu0 0
    %7612 = vmatprep.subr.bf16.mxu0 0
    %7613 = vmatpush1.bf16.msra.mxu0 0
    %7614 = vmatprep.subr.bf16.mxu0 0
    %7615 = vmatpush1.bf16.msra.mxu0 0
    %7616 = vmatprep.subr.bf16.mxu0 0
    %7617 = vmatpush1.bf16.msra.mxu0 0
    %7618 = vmatprep.subr.bf16.mxu0 0
    %7619 = vmatpush1.bf16.msra.mxu0 0
    %7620 = vmatprep.mubr.bf16.mxu0 0
    %7621 = vmatmul.mubr.bf16.gmra.mrb[0].mxu0 %v7586
    %v7622 = vpop.f32.mrb[0].mxu0
    %v7623 = vadd.f32 %v158, %v7622
    %v7624 = vpop.f32.mrb[0].mxu0
    %v7625 = vpop.f32.mrb[0].mxu0
    %v7626 = vpop.f32.mrb[0].mxu0
    %7627 = vdwg.mxu0
    %v7628 = vmax.f32 %v7623, 0.0
    %v7629 = vadd.f32 %v7444, %v7536
    %v7630 = vmul.f32 %v7629, 2.0
    %v7631 = vadd.f32 %v7352, %v7630
    %v7632 = vadd.f32 %v7631, %v7628
    %v7633 = vpack.c.bf16 %v7632, %v7632
    %v7635 = vsel %vm259, %v7633, 0
    %7637 = vmatprep.subr.bf16.mxu0 0
    %7638 = vmatpush1.bf16.msra.mxu0 %v789
    %7639 = vmatprep.subr.bf16.mxu0 0
    %7640 = vmatpush1.bf16.msra.mxu0 %v790
    %7641 = vmatprep.subr.bf16.mxu0 0
    %7642 = vmatpush1.bf16.msra.mxu0 0
    %7643 = vmatprep.subr.bf16.mxu0 0
    %7644 = vmatpush1.bf16.msra.mxu0 0
    %7645 = vmatprep.subr.bf16.mxu0 0
    %7646 = vmatpush1.bf16.msra.mxu0 0
    %7647 = vmatprep.subr.bf16.mxu0 0
    %7648 = vmatpush1.bf16.msra.mxu0 0
    %7649 = vmatprep.subr.bf16.mxu0 0
    %7650 = vmatpush1.bf16.msra.mxu0 0
    %7651 = vmatprep.subr.bf16.mxu0 0
    %7652 = vmatpush1.bf16.msra.mxu0 0
    %7653 = vmatprep.subr.bf16.mxu0 0
    %7654 = vmatpush1.bf16.msra.mxu0 0
    %7655 = vmatprep.subr.bf16.mxu0 0
    %7656 = vmatpush1.bf16.msra.mxu0 0
    %7657 = vmatprep.subr.bf16.mxu0 0
    %7658 = vmatpush1.bf16.msra.mxu0 0
    %7659 = vmatprep.subr.bf16.mxu0 0
    %7660 = vmatpush1.bf16.msra.mxu0 0
    %7661 = vmatprep.subr.bf16.mxu0 0
    %7662 = vmatpush1.bf16.msra.mxu0 0
    %7663 = vmatprep.subr.bf16.mxu0 0
    %7664 = vmatpush1.bf16.msra.mxu0 0
    %7665 = vmatprep.subr.bf16.mxu0 0
    %7666 = vmatpush1.bf16.msra.mxu0 0
    %7667 = vmatprep.subr.bf16.mxu0 0
    %7668 = vmatpush1.bf16.msra.mxu0 0
    %7669 = vmatprep.mubr.bf16.mxu0 0
    %7670 = vmatmul.mubr.bf16.gmra.mrb[0].mxu0 %v7635
    %v7671 = vpop.f32.mrb[0].mxu0
    %v7672 = vadd.f32 0.0, %v7671
    %v7673 = vpop.f32.mrb[0].mxu0
    %v7674 = vpop.f32.mrb[0].mxu0
    %v7675 = vpop.f32.mrb[0].mxu0
    %7676 = vdwg.mxu0
    %v7677 = vmul.f32 %v7247, %v7672
    %7679 = vrot.lane.b32.xlu0 %v7677, 32
    %v7680 = vpop.permute.xlu0 %7679
    %v7682 = vadd.f32 %v7259, %v7680
    %v7683 = vadd.f32 %v7682, %v7257
    %7685 = vrot.lane.b32.xlu0 %v7683, 96
    %v7686 = vpop.permute.xlu0 %7685
    %7688 = vst.msk [vmem:[#allocation3 + $0x24] sm:$0xf] %vm363, %v7686
    %v7689 = vld [vmem:[#allocation3] sm:$0xff]
    %v7690 = vld [vmem:[#allocation3 + $0x8] sm:$0xff]
    %v7691 = vld [vmem:[#allocation3 + $0x10] sm:$0xff]
    %v7692 = vld [vmem:[#allocation3 + $0x18] sm:$0xff]
    %v7693 = vld [vmem:[#allocation3 + $0x20] sm:$0xff]
    %v7694 = vpack.c.bf16 %v7690, %v7689
    %v7695 = vpack.c.bf16 %v7692, %v7691
    %v7696 = vpack.c.bf16 %v7693, %v7693
    %v7701 = vunpack.c.l.b16 %v112
    %v7702 = vunpack.c.l.b16 %v113
    %v7703 = vunpack.c.l.b16 %v114
    %v7704 = vunpack.c.l.b16 %v115
    %v7705 = vpack.c.b16 %v7702, %v7701
    %v7706 = vpack.c.b16 %v7704, %v7703
    %v7710 = vsel %vm259, %v7694, 0
    %v7713 = vsel %vm259, %v7695, 0
    %v7716 = vsel %vm259, %v7696, 0
    %7718 = vmatprep.subr.bf16.mxu0 0
    %7719 = vmatpush1.bf16.msra.mxu0 %v7705
    %7720 = vmatprep.subr.bf16.mxu0 0
    %7721 = vmatpush1.bf16.msra.mxu0 %v7706
    %7722 = vmatprep.subr.bf16.mxu0 0
    %7723 = vmatpush1.bf16.msra.mxu0 0
    %7724 = vmatprep.subr.bf16.mxu0 0
    %7725 = vmatpush1.bf16.msra.mxu0 0
    %7726 = vmatprep.subr.bf16.mxu0 0
    %7727 = vmatpush1.bf16.msra.mxu0 0
    %7728 = vmatprep.subr.bf16.mxu0 0
    %7729 = vmatpush1.bf16.msra.mxu0 0
    %7730 = vmatprep.subr.bf16.mxu0 0
    %7731 = vmatpush1.bf16.msra.mxu0 0
    %7732 = vmatprep.subr.bf16.mxu0 0
    %7733 = vmatpush1.bf16.msra.mxu0 0
    %7734 = vmatprep.subr.bf16.mxu0 0
    %7735 = vmatpush1.bf16.msra.mxu0 0
    %7736 = vmatprep.subr.bf16.mxu0 0
    %7737 = vmatpush1.bf16.msra.mxu0 0
    %7738 = vmatprep.subr.bf16.mxu0 0
    %7739 = vmatpush1.bf16.msra.mxu0 0
    %7740 = vmatprep.subr.bf16.mxu0 0
    %7741 = vmatpush1.bf16.msra.mxu0 0
    %7742 = vmatprep.subr.bf16.mxu0 0
    %7743 = vmatpush1.bf16.msra.mxu0 0
    %7744 = vmatprep.subr.bf16.mxu0 0
    %7745 = vmatpush1.bf16.msra.mxu0 0
    %7746 = vmatprep.subr.bf16.mxu0 0
    %7747 = vmatpush1.bf16.msra.mxu0 0
    %7748 = vmatprep.subr.bf16.mxu0 0
    %7749 = vmatpush1.bf16.msra.mxu0 0
    %7750 = vmatprep.mubr.bf16.mxu0 0
    %7751 = vmatmul.mubr.bf16.gmra.mrb[0].mxu0 %v7710
    %v7752 = vpop.f32.mrb[0].mxu0
    %v7753 = vadd.f32 %v179, %v7752
    %v7754 = vpop.f32.mrb[0].mxu0
    %v7755 = vpop.f32.mrb[0].mxu0
    %v7756 = vadd.f32 %v179, %v7755
    %v7757 = vpop.f32.mrb[0].mxu0
    %7758 = vmatprep.mubr.bf16.mxu0 0
    %7759 = vmatmul.mubr.bf16.gmra.mrb[0].mxu0 %v7713
    %v7760 = vpop.f32.mrb[0].mxu0
    %v7761 = vadd.f32 %v179, %v7760
    %v7762 = vpop.f32.mrb[0].mxu0
    %v7763 = vpop.f32.mrb[0].mxu0
    %v7764 = vadd.f32 %v179, %v7763
    %v7765 = vpop.f32.mrb[0].mxu0
    %7766 = vmatprep.mubr.bf16.mxu0 0
    %7767 = vmatmul.mubr.bf16.gmra.mrb[0].mxu0 %v7716
    %v7768 = vpop.f32.mrb[0].mxu0
    %v7769 = vadd.f32 %v179, %v7768
    %v7770 = vpop.f32.mrb[0].mxu0
    %v7771 = vpop.f32.mrb[0].mxu0
    %v7772 = vpop.f32.mrb[0].mxu0
    %7773 = vdwg.mxu0
    %v7774 = vmax.f32 %v7753, 0.0
    %v7775 = vmax.f32 %v7756, 0.0
    %v7776 = vmax.f32 %v7761, 0.0
    %v7777 = vmax.f32 %v7764, 0.0
    %v7778 = vmax.f32 %v7769, 0.0
    %v7779 = vpack.c.bf16 %v7775, %v7774
    %v7780 = vpack.c.bf16 %v7777, %v7776
    %v7781 = vpack.c.bf16 %v7778, %v7778
    %v7790 = vunpack.c.l.b16 %v116
    %v7791 = vunpack.c.l.b16 %v117
    %v7792 = vunpack.c.l.b16 %v118
    %v7793 = vunpack.c.l.b16 %v119
    %v7794 = vunpack.c.l.b16 %v120
    %v7795 = vunpack.c.l.b16 %v121
    %v7796 = vunpack.c.l.b16 %v122
    %v7797 = vunpack.c.l.b16 %v123
    %v7798 = vpack.c.b16 %v7791, %v7790
    %v7799 = vpack.c.b16 %v7793, %v7792
    %v7800 = vpack.c.b16 %v7795, %v7794
    %v7801 = vpack.c.b16 %v7797, %v7796
    %v7807 = vsel %vm290, %v7779, 0
    %v7810 = vsel %vm290, %v7780, 0
    %v7813 = vsel %vm290, %v7781, 0
    %7815 = vmatprep.subr.bf16.mxu0 0
    %7816 = vmatpush1.bf16.msra.mxu0 %v7798
    %7817 = vmatprep.subr.bf16.mxu0 0
    %7818 = vmatpush1.bf16.msra.mxu0 %v7799
    %7819 = vmatprep.subr.bf16.mxu0 0
    %7820 = vmatpush1.bf16.msra.mxu0 %v7800
    %7821 = vmatprep.subr.bf16.mxu0 0
    %7822 = vmatpush1.bf16.msra.mxu0 %v7801
    %7823 = vmatprep.subr.bf16.mxu0 0
    %7824 = vmatpush1.bf16.msra.mxu0 0
    %7825 = vmatprep.subr.bf16.mxu0 0
    %7826 = vmatpush1.bf16.msra.mxu0 0
    %7827 = vmatprep.subr.bf16.mxu0 0
    %7828 = vmatpush1.bf16.msra.mxu0 0
    %7829 = vmatprep.subr.bf16.mxu0 0
    %7830 = vmatpush1.bf16.msra.mxu0 0
    %7831 = vmatprep.subr.bf16.mxu0 0
    %7832 = vmatpush1.bf16.msra.mxu0 0
    %7833 = vmatprep.subr.bf16.mxu0 0
    %7834 = vmatpush1.bf16.msra.mxu0 0
    %7835 = vmatprep.subr.bf16.mxu0 0
    %7836 = vmatpush1.bf16.msra.mxu0 0
    %7837 = vmatprep.subr.bf16.mxu0 0
    %7838 = vmatpush1.bf16.msra.mxu0 0
    %7839 = vmatprep.subr.bf16.mxu0 0
    %7840 = vmatpush1.bf16.msra.mxu0 0
    %7841 = vmatprep.subr.bf16.mxu0 0
    %7842 = vmatpush1.bf16.msra.mxu0 0
    %7843 = vmatprep.subr.bf16.mxu0 0
    %7844 = vmatpush1.bf16.msra.mxu0 0
    %7845 = vmatprep.subr.bf16.mxu0 0
    %7846 = vmatpush1.bf16.msra.mxu0 0
    %7847 = vmatprep.mubr.bf16.mxu0 0
    %7848 = vmatmul.mubr.bf16.gmra.mrb[0].mxu0 %v7807
    %v7849 = vpop.f32.mrb[0].mxu0
    %v7850 = vadd.f32 %v186, %v7849
    %v7851 = vpop.f32.mrb[0].mxu0
    %v7852 = vpop.f32.mrb[0].mxu0
    %v7853 = vadd.f32 %v186, %v7852
    %v7854 = vpop.f32.mrb[0].mxu0
    %7855 = vmatprep.mubr.bf16.mxu0 0
    %7856 = vmatmul.mubr.bf16.gmra.mrb[0].mxu0 %v7810
    %v7857 = vpop.f32.mrb[0].mxu0
    %v7858 = vadd.f32 %v186, %v7857
    %v7859 = vpop.f32.mrb[0].mxu0
    %v7860 = vpop.f32.mrb[0].mxu0
    %v7861 = vadd.f32 %v186, %v7860
    %v7862 = vpop.f32.mrb[0].mxu0
    %7863 = vmatprep.mubr.bf16.mxu0 0
    %7864 = vmatmul.mubr.bf16.gmra.mrb[0].mxu0 %v7813
    %v7865 = vpop.f32.mrb[0].mxu0
    %v7866 = vadd.f32 %v186, %v7865
    %v7867 = vpop.f32.mrb[0].mxu0
    %v7868 = vpop.f32.mrb[0].mxu0
    %v7869 = vpop.f32.mrb[0].mxu0
    %7870 = vdwg.mxu0
    %v7871 = vmax.f32 %v7850, 0.0
    %v7872 = vmax.f32 %v7853, 0.0
    %v7873 = vmax.f32 %v7858, 0.0
    %v7874 = vmax.f32 %v7861, 0.0
    %v7875 = vmax.f32 %v7866, 0.0
    %v7876 = vpack.c.bf16 %v7872, %v7871
    %v7877 = vpack.c.bf16 %v7874, %v7873
    %v7878 = vpack.c.bf16 %v7875, %v7875
    %v7887 = vunpack.c.l.b16 %v124
    %v7888 = vunpack.c.l.b16 %v125
    %v7889 = vunpack.c.l.b16 %v126
    %v7890 = vunpack.c.l.b16 %v127
    %v7891 = vunpack.c.l.b16 %v128
    %v7892 = vunpack.c.l.b16 %v129
    %v7893 = vunpack.c.l.b16 %v130
    %v7894 = vunpack.c.l.b16 %v131
    %v7895 = vpack.c.b16 %v7888, %v7887
    %v7896 = vpack.c.b16 %v7890, %v7889
    %v7897 = vpack.c.b16 %v7892, %v7891
    %v7898 = vpack.c.b16 %v7894, %v7893
    %v7904 = vsel %vm290, %v7876, 0
    %v7907 = vsel %vm290, %v7877, 0
    %v7910 = vsel %vm290, %v7878, 0
    %7912 = vmatprep.subr.bf16.mxu0 0
    %7913 = vmatpush1.bf16.msra.mxu0 %v7895
    %7914 = vmatprep.subr.bf16.mxu0 0
    %7915 = vmatpush1.bf16.msra.mxu0 %v7896
    %7916 = vmatprep.subr.bf16.mxu0 0
    %7917 = vmatpush1.bf16.msra.mxu0 %v7897
    %7918 = vmatprep.subr.bf16.mxu0 0
    %7919 = vmatpush1.bf16.msra.mxu0 %v7898
    %7920 = vmatprep.subr.bf16.mxu0 0
    %7921 = vmatpush1.bf16.msra.mxu0 0
    %7922 = vmatprep.subr.bf16.mxu0 0
    %7923 = vmatpush1.bf16.msra.mxu0 0
    %7924 = vmatprep.subr.bf16.mxu0 0
    %7925 = vmatpush1.bf16.msra.mxu0 0
    %7926 = vmatprep.subr.bf16.mxu0 0
    %7927 = vmatpush1.bf16.msra.mxu0 0
    %7928 = vmatprep.subr.bf16.mxu0 0
    %7929 = vmatpush1.bf16.msra.mxu0 0
    %7930 = vmatprep.subr.bf16.mxu0 0
    %7931 = vmatpush1.bf16.msra.mxu0 0
    %7932 = vmatprep.subr.bf16.mxu0 0
    %7933 = vmatpush1.bf16.msra.mxu0 0
    %7934 = vmatprep.subr.bf16.mxu0 0
    %7935 = vmatpush1.bf16.msra.mxu0 0
    %7936 = vmatprep.subr.bf16.mxu0 0
    %7937 = vmatpush1.bf16.msra.mxu0 0
    %7938 = vmatprep.subr.bf16.mxu0 0
    %7939 = vmatpush1.bf16.msra.mxu0 0
    %7940 = vmatprep.subr.bf16.mxu0 0
    %7941 = vmatpush1.bf16.msra.mxu0 0
    %7942 = vmatprep.subr.bf16.mxu0 0
    %7943 = vmatpush1.bf16.msra.mxu0 0
    %7944 = vmatprep.mubr.bf16.mxu0 0
    %7945 = vmatmul.mubr.bf16.gmra.mrb[0].mxu0 %v7904
    %v7946 = vpop.f32.mrb[0].mxu0
    %v7947 = vadd.f32 %v193, %v7946
    %v7948 = vpop.f32.mrb[0].mxu0
    %v7949 = vpop.f32.mrb[0].mxu0
    %v7950 = vadd.f32 %v193, %v7949
    %v7951 = vpop.f32.mrb[0].mxu0
    %7952 = vmatprep.mubr.bf16.mxu0 0
    %7953 = vmatmul.mubr.bf16.gmra.mrb[0].mxu0 %v7907
    %v7954 = vpop.f32.mrb[0].mxu0
    %v7955 = vadd.f32 %v193, %v7954
    %v7956 = vpop.f32.mrb[0].mxu0
    %v7957 = vpop.f32.mrb[0].mxu0
    %v7958 = vadd.f32 %v193, %v7957
    %v7959 = vpop.f32.mrb[0].mxu0
    %7960 = vmatprep.mubr.bf16.mxu0 0
    %7961 = vmatmul.mubr.bf16.gmra.mrb[0].mxu0 %v7910
    %v7962 = vpop.f32.mrb[0].mxu0
    %v7963 = vadd.f32 %v193, %v7962
    %v7964 = vpop.f32.mrb[0].mxu0
    %v7965 = vpop.f32.mrb[0].mxu0
    %v7966 = vpop.f32.mrb[0].mxu0
    %7967 = vdwg.mxu0
    %7968 = vst.msk [vmem:[%s21] sm:$0xff] %vm200, %v7947
    %7969 = vst.msk [vmem:[%s21 + $0x8] sm:$0xff] %vm200, %v7950
    %7970 = vst.msk [vmem:[%s21 + $0x10] sm:$0xff] %vm200, %v7955
    %7971 = vst.msk [vmem:[%s21 + $0x18] sm:$0xff] %vm200, %v7958
    %7972 = vst.msk [vmem:[%s21 + $0x20] sm:$0xff] %vm200, %v7963
    %v7973 = vld [vmem:[%s0] sm:$0xff]
    %v7974 = vld [vmem:[%s0 + $0x8] sm:$0xff]
    %v7975 = vld [vmem:[%s0 + $0x10] sm:$0xff]
    %v7976 = vsub.f32 %v7947, %v7973
    %v7977 = vsub.f32 %v7950, %v7974
    %v7978 = vsub.f32 %v7955, %v7975
    %v7979 = vld [vmem:[%s1] sm:$0xff]
    %v7980 = vld [vmem:[%s1 + $0x8] sm:$0xff]
    %v7981 = vsub.f32 %v7958, %v7979
    %v7982 = vsub.f32 %v7963, %v7980
    %v7983 = vmul.f32 %v7976, %v7976
    %v7984 = vmul.f32 %v7977, %v7977
    %v7985 = vmul.f32 %v7978, %v7978
    %v7986 = vsel %vm200, %v7983, 0.0
    %v7987 = vsel %vm200, %v7984, 0.0
    %v7988 = vadd.f32 %v7986, %v7987
    %v7989 = vsel %vm200, %v7985, 0.0
    %v7990 = vadd.f32 %v7988, %v7989
    %7991 = vadd.xlane.f32.xlu0 %v7990
    %v7992 = vpop.xlane.xlu0 %7991
    %v7993 = vrot.slane %v7992, 4
    %v7994 = vadd.f32 %v7992, %v7993
    %v7995 = vrot.slane %v7994, 2
    %v7996 = vadd.f32 %v7994, %v7995
    %v7997 = vrot.slane %v7996, 1
    %v7998 = vadd.f32 %v7996, %v7997
    %s7999 = vtos %v7998
    %s8000 = smul.f32 %s7999, 0.0052083335
    %s8001 = scalar_lea.smem [#allocation7], 0
    %8002 = sst [smem:[%s8001]] %s8000
    %v8003 = vmul.f32 %v7981, %v7981
    %v8004 = vmul.f32 %v7982, %v7982
    %v8005 = vsel %vm200, %v8003, 0.0
    %v8006 = vsel %vm200, %v8004, 0.0
    %v8007 = vadd.f32 %v8005, %v8006
    %8008 = vadd.xlane.f32.xlu0 %v8007
    %v8009 = vpop.xlane.xlu0 %8008
    %v8010 = vrot.slane %v8009, 4
    %v8011 = vadd.f32 %v8009, %v8010
    %v8012 = vrot.slane %v8011, 2
    %v8013 = vadd.f32 %v8011, %v8012
    %v8014 = vrot.slane %v8013, 1
    %v8015 = vadd.f32 %v8013, %v8014
    %s8016 = vtos %v8015
    %s8017 = smul.f32 %s8016, 0.0078125
    %s8018 = scalar_lea.smem [#allocation8], 0
    %8019 = sst [smem:[%s8018]] %s8017
    // Predicated region
    $region90: #{ode_rnn_forward.1} parent=1 // pred_check
      _
    $region91: #{ode_rnn_forward.1} parent=1 // pred_check_branch
      %8021 = sbr.rel (0) target = $region93
    $region92: #{ode_rnn_forward.1} parent=1 // pred_region
      _
    $region93: #{ode_rnn_forward.1} parent=1 // pred_fallthru
      _
    // Predicated region
    $region94: #{ode_rnn_forward.1} parent=1 // pred_check
      _
    $region95: #{ode_rnn_forward.1} parent=1 // pred_check_branch
      %8023 = sbr.rel (0) target = $region97
    $region96: #{ode_rnn_forward.1} parent=1 // pred_region
      %s8025 = ssub.s32 16, 16
      %8026 = vsyncadd [#allocation5], %s8025
      %8029 = dma.smem_to_hbm [#allocation7], 16, %s22, [#allocation5]
    $region97: #{ode_rnn_forward.1} parent=1 // pred_fallthru
      _
    // Predicated region
    $region98: #{ode_rnn_forward.1} parent=1 // pred_check
      _
    $region99: #{ode_rnn_forward.1} parent=1 // pred_check_branch
      %8031 = sbr.rel (0) target = $region101
    $region100: #{ode_rnn_forward.1} parent=1 // pred_region
      %s8033 = ssub.s32 16, 16
      %8034 = vsyncadd [#allocation9], %s8033
      %8037 = dma.smem_to_hbm [#allocation8], 16, %s23, [#allocation9]
    $region101: #{ode_rnn_forward.1} parent=1 // pred_fallthru
      _
    // Predicated region
    $region102: #{ode_rnn_forward.1} parent=1 // pred_check
      _
    $region103: #{ode_rnn_forward.1} parent=1 // pred_check_branch
      %8039 = sbr.rel (0) target = $region105
    $region104: #{ode_rnn_forward.1} parent=1 // pred_region
      _
    $region105: #{ode_rnn_forward.1} parent=1 // pred_fallthru
      _
    // Predicated region
    $region106: #{ode_rnn_forward.1} parent=1 // pred_check
      _
    $region107: #{ode_rnn_forward.1} parent=1 // pred_check_branch
      %8041 = sbr.rel (0) target = $region109
    $region108: #{ode_rnn_forward.1} parent=1 // pred_region
      %8042 = dma.done [#allocation5], 16
    $region109: #{ode_rnn_forward.1} parent=1 // pred_fallthru
      _
    // Predicated region
    $region110: #{ode_rnn_forward.1} parent=1 // pred_check
      _
    $region111: #{ode_rnn_forward.1} parent=1 // pred_check_branch
      %8044 = sbr.rel (0) target = $region113
    $region112: #{ode_rnn_forward.1} parent=1 // pred_region
      %8045 = dma.done [#allocation9], 16
    $region113: #{ode_rnn_forward.1} parent=1 // pred_fallthru
      _
    %8046 = sfence
    %8047 = vsyncpa [#allocation5], 1
    %8048 = vsyncpa [#allocation9], 1
    %8049 = vsyncpa [#allocation6], 1

</llo_original>
